<compile_context>
chip_gen: v5e
topology: v5e:2x2
jax: 0.10.0
libtpu: 0.0.40
codegen_flags: <defaults>
</compile_context>

<pallas_src>
import math
import jax
import jax.numpy as jnp
from jax import lax
from jax.experimental import pallas as pl
from jax.experimental.pallas import tpu as pltpu


def _make_stagenet_kernel(*, V, C, G, D, H, W, stage_idx, attn_temp,
                          depth_interval_ratio):
    HW = H * W
    DP = D * HW
    CG = C // G
    VS = V - 1
    CH = C * H
    f32 = jnp.float32
    inv_sqrt_C = 1.0 / math.sqrt(C)
    inv_V = 1.0 / V
    s_scale = (1.0 / CG) / attn_temp

    def to_flat(a):          # (D, HW) -> (1, D*HW), col = d*HW + p
        return jnp.concatenate([a[d:d + 1, :] for d in range(D)], axis=1)

    def to_dhw(x):           # (1, D*HW) -> (D, HW)
        return jnp.concatenate([x[:, d * HW:(d + 1) * HW] for d in range(D)],
                               axis=0)

    def softmax_d(x):        # softmax over the depth (sublane) axis of (D, HW)
        m = jnp.max(x, axis=0, keepdims=True)
        e = jnp.exp(x - m)
        z = jnp.sum(e, axis=0, keepdims=True)
        return e * pl.reciprocal(z)

    def kernel(ref_ref, src_ref, dh_ref, mask_ref, xy_ref, regw_ref, varw_ref,
               rt_ref, bias_ref, maps_o, pvol_o):
        b = pl.program_id(0)

        ref = ref_ref[0, :, :]                                   # (C, HW)
        ref_tiled = jnp.concatenate([ref] * D, axis=1)           # (C, D*HW)
        dh = dh_ref[0, :, :]                                     # (D, HW)
        mask = mask_ref[0, :, :]                                 # (1, HW)
        xpix = xy_ref[0:1, :]                                    # (1, HW)
        ypix = xy_ref[1:2, :]                                    # (1, HW)
        regw = regw_ref[...]                                     # (C, 1)
        varw = varw_ref[...]                                     # (C, 1)

        w_iota = lax.broadcasted_iota(jnp.int32, (W, DP), 0)
        h_iota = lax.broadcasted_iota(jnp.int32, (H, DP), 0)

        # accumulators
        var_sum = ref_tiled                                      # (C, D*HW)
        var_sq = ref_tiled * ref_tiled                           # (C, D*HW)
        cws = jnp.full((D, HW), 1e-8, f32)                       # cor weight sum
        cr_acc = jnp.zeros((D, HW), f32)                         # weighted cor feats

        for v in range(VS):        # small number of source views; unrolled
            base = v * 12
            r = [rt_ref[b, base + k] for k in range(9)]
            t = [rt_ref[b, base + 9 + k] for k in range(3)]
            rx = r[0] * xpix + r[1] * ypix + r[2]                # (1, HW)
            ry = r[3] * xpix + r[4] * ypix + r[5]
            rz = r[6] * xpix + r[7] * ypix + r[8]

            # homography + bilinear weights, all in (D, HW) layout
            pz = rz * dh + t[2]
            inv_pz = pl.reciprocal(pz)                           # exact (coords)
            gx = (rx * dh + t[0]) * inv_pz
            gy = (ry * dh + t[1]) * inv_pz

            x0 = jnp.floor(gx); fx = gx - x0; x1 = x0 + 1.0
            y0 = jnp.floor(gy); fy = gy - y0; y1 = y0 + 1.0
            vx0 = (x0 >= 0.0) & (x0 <= W - 1.0)
            vx1 = (x1 >= 0.0) & (x1 <= W - 1.0)
            vy0 = (y0 >= 0.0) & (y0 <= H - 1.0)
            vy1 = (y1 >= 0.0) & (y1 <= H - 1.0)
            wx0 = jnp.where(vx0, 1.0 - fx, 0.0)
            wx1 = jnp.where(vx1, fx, 0.0)
            wy0 = jnp.where(vy0, 1.0 - fy, 0.0)
            wy1 = jnp.where(vy1, fy, 0.0)
            x0i = jnp.where(vx0, x0, 0.0).astype(jnp.int32)
            x1i = jnp.where(vx1, x1, 0.0).astype(jnp.int32)
            y0i = jnp.where(vy0, y0, 0.0).astype(jnp.int32)
            y1i = jnp.where(vy1, y1, 0.0).astype(jnp.int32)

            # bridge per-depth weights to the lane-flat layout for the one-hots
            ohx = (jnp.where(w_iota == to_flat(x0i), to_flat(wx0), 0.0) +
                   jnp.where(w_iota == to_flat(x1i), to_flat(wx1), 0.0))   # (W, DP)
            wy_t = (jnp.where(h_iota == to_flat(y0i), to_flat(wy0), 0.0) +
                    jnp.where(h_iota == to_flat(y1i), to_flat(wy1), 0.0))  # (H, DP)

            # x-gather for all depth hypotheses: one f32 MXU matmul per view
            src_v = src_ref[0, v * CH:(v + 1) * CH, :]           # (C*H, W), row=c*H+h
            sx = jnp.dot(src_v, ohx, preferred_element_type=f32)  # (C*H, DP)

            # y-combine: dense multiply + sublane reduction over H
            sx3 = sx.reshape(C, H, DP)
            warped = jnp.sum(sx3 * wy_t.reshape(1, H, DP), axis=1)  # (C, DP)

            # variance cost-volume accumulation
            var_sum = var_sum + warped
            var_sq = var_sq + warped * warped

            # group-wise correlation (group pooling folded into the channel
            # weight column) + per-view depth-softmax attention
            prod = warped * ref_tiled                            # (C, DP)
            s_d = to_dhw(jnp.sum(prod, axis=0, keepdims=True) * s_scale)
            pw_d = to_dhw(jnp.sum(prod * regw, axis=0, keepdims=True))
            cw = softmax_d(s_d) * inv_sqrt_C                     # (D, HW)
            cws = cws + cw
            cr_acc = cr_acc + cw * pw_d

        # TODO(synk): regnet / var_reg are external 3D CNN regularizers passed
        # into forward(); approximated by a deterministic 1x1x1 conv (channel/
        # group weighted reduction) with in-script weights.
        cost_reg = cr_acc * pl.reciprocal(cws) + bias_ref[0]     # (D, HW)

        mean = var_sum * inv_V
        variance = var_sq * inv_V - mean * mean                  # (C, DP)
        var_cost = (to_dhw(jnp.sum(variance * varw, axis=0, keepdims=True))
                    + bias_ref[1])                               # (D, HW)

        sim_prob = softmax_d(cost_reg)
        var_prob = softmax_d(var_cost)

        if stage_idx == 0:
            prob = (1.0 - mask) * sim_prob + mask * var_prob     # mask bcast over D
        else:
            prob = softmax_d(sim_prob * var_prob)

        # confidences and first-argmax depth gather: axis-0 reductions
        pconf = jnp.max(prob, axis=0, keepdims=True)             # (1, HW)
        vconf = jnp.max(var_prob, axis=0, keepdims=True)
        sconf = jnp.max(sim_prob, axis=0, keepdims=True)

        d_iota = lax.broadcasted_iota(jnp.int32, (D, HW), 0)
        first = jnp.min(jnp.where(prob >= pconf, d_iota, D), axis=0,
                        keepdims=True)                           # first max index
        sel = (d_iota == first).astype(f32)
        depth = jnp.sum(dh * sel, axis=0, keepdims=True)         # (1, HW)
        # F.interpolate(scale_factor=1, bilinear, align_corners=True) == identity

        # hard-coded hypothesis indices 1, 2 mirror the PyTorch reference (D>=3)
        last_itv = pl.reciprocal(dh[2:3, :]) - pl.reciprocal(dh[1:2, :])
        inv_depth = pl.reciprocal(depth)
        inv_min = inv_depth + depth_interval_ratio * last_itv
        inv_max = inv_depth - depth_interval_ratio * last_itv

        pad = jnp.zeros((1, HW), f32)
        maps_o[0, :, :] = jnp.concatenate(
            [depth, pconf, vconf, sconf, last_itv, inv_min, inv_max, pad], axis=0)
        pvol_o[0, :, :] = prob

    return kernel


def stagenet_forward(stage_idx, features, proj_matrices, depth_hypo, text_mask,
                     reg_params, var_params, attn_temp=2.0,
                     depth_interval_ratio=0.5):
    V = len(features)
    B, C, H, W = features[0].shape
    D = depth_hypo.shape[1]
    HW = H * W
    G = reg_params.shape[-1] - 1
    VS = V - 1
    CG = C // G
    assert C % G == 0 and D >= 3

    # --- glue: compose projection matrices (tiny 4x4 math, stays in plain JAX) ---
    pm = proj_matrices.astype(jnp.float32)

    def compose(view):
        ext = pm[:, view, 0]                             # (B,4,4) extrinsics
        K = pm[:, view, 1, :3, :3]                       # (B,3,3) intrinsics
        top = jnp.einsum('bij,bjk->bik', K, ext[:, :3, :4])
        return ext.at[:, :3, :4].set(top)

    ref_inv = jnp.linalg.inv(compose(0))
    rts = []
    for s in range(1, V):
        proj = jnp.einsum('bij,bjk->bik', compose(s), ref_inv)   # (B,4,4)
        rot = proj[:, :3, :3].reshape(B, 9)
        trans = proj[:, :3, 3]
        rts.append(jnp.concatenate([rot, trans], axis=1))        # (B,12)
    rot_trans = jnp.concatenate(rts, axis=1).astype(jnp.float32)  # (B, VS*12)

    ref_feat = features[0].reshape(B, C, HW).astype(jnp.float32)
    # source features (B, VS*C*H, W): row index = (v*C + c)*H + h (natural order)
    src_feat = jnp.stack(features[1:], axis=1).reshape(B, VS * C * H, W)
    src_feat = src_feat.astype(jnp.float32)
    dh = depth_hypo.reshape(B, D, HW).astype(jnp.float32)         # D on sublanes
    mask = text_mask.astype(jnp.float32).reshape(B, 1, HW)

    # pixel-coordinate grid (x, y), lane order p = y*W + x
    xs = jnp.tile(jnp.arange(W, dtype=jnp.float32), (H,))
    ys = jnp.repeat(jnp.arange(H, dtype=jnp.float32), W)
    xy = jnp.stack([xs, ys], axis=0)                              # (2, HW)

    # per-channel regularizer weight columns (group weight / CG) + bias scalars
    regw_col = (jnp.repeat(reg_params[0, :G].astype(jnp.float32), CG)
                / CG).reshape(C, 1)
    varw_col = var_params[0, :C].astype(jnp.float32).reshape(C, 1)
    biases = jnp.stack([reg_params[0, G], var_params[0, C]]).astype(jnp.float32)

    kernel = _make_stagenet_kernel(V=V, C=C, G=G, D=D, H=H, W=W,
                                   stage_idx=stage_idx, attn_temp=attn_temp,
                                   depth_interval_ratio=depth_interval_ratio)

    NMAPS_PAD = 8  # 7 maps + 1 padding row -> dense 8-sublane store
    maps, pvol = pl.pallas_call(
        kernel,
        out_shape=(jax.ShapeDtypeStruct((B, NMAPS_PAD, HW), jnp.float32),
                   jax.ShapeDtypeStruct((B, D, HW), jnp.float32)),
        grid=(B,),
        in_specs=[
            pl.BlockSpec((1, C, HW), lambda b: (b, 0, 0)),          # ref feature
            pl.BlockSpec((1, VS * C * H, W), lambda b: (b, 0, 0)),  # src features
            pl.BlockSpec((1, D, HW), lambda b: (b, 0, 0)),          # depth hypos
            pl.BlockSpec((1, 1, HW), lambda b: (b, 0, 0)),          # text mask
            pl.BlockSpec((2, HW), lambda b: (0, 0)),                # pixel grid
            pl.BlockSpec((C, 1), lambda b: (0, 0)),                 # reg weights
            pl.BlockSpec((C, 1), lambda b: (0, 0)),                 # var weights
            pl.BlockSpec(memory_space=pltpu.MemorySpace.SMEM),      # rot/trans
            pl.BlockSpec(memory_space=pltpu.MemorySpace.SMEM),      # biases
        ],
        out_specs=(
            pl.BlockSpec((1, NMAPS_PAD, HW), lambda b: (b, 0, 0)),
            pl.BlockSpec((1, D, HW), lambda b: (b, 0, 0)),
        ),
        compiler_params=pltpu.CompilerParams(
            dimension_semantics=("parallel",),
            vmem_limit_bytes=32 * 1024 * 1024),
    )(ref_feat, src_feat, dh, mask, xy, regw_col, varw_col, rot_trans, biases)

    maps = maps[:, :7].reshape(B, 7, H, W)
    prob_volume = pvol.reshape(B, D, H, W)
    return {
        'depth': maps[:, 0],
        'photometric_confidence': maps[:, 1],
        'var_photometric_confidence': maps[:, 2],
        'sim_photometric_confidence': maps[:, 3],
        'depth_hypo': depth_hypo,
        'prob_volume': prob_volume,
        'last_depth_itv': maps[:, 4],
        'text_mask': text_mask.astype(jnp.float32),
        'inverse_min_depth': maps[:, 5],
        'inverse_max_depth': maps[:, 6],
    }


if __name__ == "__main__":
    key = jax.random.PRNGKey(0)
    B, V, C, G, D, H, W = 2, 3, 8, 4, 4, 16, 16
    k1, k2, k3 = jax.random.split(key, 3)

    features = [0.5 * jax.random.normal(jax.random.fold_in(k1, i), (B, C, H, W),
                                        jnp.float32) for i in range(V)]

    base = jnp.linspace(1.0, 2.0, D, dtype=jnp.float32).reshape(1, D, 1, 1)
    depth_hypo = base + 0.05 * jax.random.uniform(k2, (B, D, H, W), jnp.float32)

    # proj_matrices: (B, V, 2, 4, 4); [:, :, 0]=extrinsics, [:, :, 1][:3,:3]=intrinsics
    f = 12.0
    K = jnp.array([[f, 0., (W - 1) / 2., 0.],
                   [0., f, (H - 1) / 2., 0.],
                   [0., 0., 1., 0.],
                   [0., 0., 0., 1.]], jnp.float32)
    views = []
    for v in range(V):
        ext = jnp.eye(4, dtype=jnp.float32)
        if v > 0:
            ext = ext.at[0, 3].set(0.05 * v).at[1, 3].set(-0.03 * v)
        views.append(jnp.stack([ext, K], axis=0))
    proj_matrices = jnp.broadcast_to(jnp.stack(views, axis=0)[None], (B, V, 2, 4, 4))

    text_mask = (jax.random.uniform(k3, (B, H, W)) > 0.5).astype(jnp.float32)

    # deterministic synthetic regularizer weights (1x1x1 conv + bias)
    reg_params = (0.1 * jnp.arange(1, G + 2, dtype=jnp.float32)).reshape(1, G + 1)
    sign = jnp.where(jnp.arange(C + 1) % 2 == 0, 1.0, -1.0)
    var_params = (0.05 * jnp.arange(1, C + 2) * sign).reshape(1, C + 1).astype(jnp.float32)

    out = stagenet_forward(0, features, proj_matrices, depth_hypo, text_mask,
                           reg_params, var_params, attn_temp=2.0,
                           depth_interval_ratio=0.5)
    jax.block_until_ready(out)

    assert out['depth'].shape == (B, H, W)
    assert out['prob_volume'].shape == (B, D, H, W)
    assert bool(jnp.all(jnp.isfinite(out['prob_volume'])))
    assert bool(jnp.all(jnp.isfinite(out['depth'])))
    assert bool(jnp.allclose(out['prob_volume'].sum(axis=1), 1.0, atol=1e-3))
    print("KERNEL_OK")
</pallas_src>

<mosaic_0001>
module attributes {stable_mosaic.version = 11 : i64} {
  func.func @kernel(%arg0: i32, %arg1: memref<1x8x256xf32, #tpu.memory_space<vmem>>, %arg2: memref<1x256x16xf32, #tpu.memory_space<vmem>>, %arg3: memref<1x4x256xf32, #tpu.memory_space<vmem>>, %arg4: memref<1x1x256xf32, #tpu.memory_space<vmem>>, %arg5: memref<2x256xf32, #tpu.memory_space<vmem>>, %arg6: memref<8x1xf32, #tpu.memory_space<vmem>>, %arg7: memref<8x1xf32, #tpu.memory_space<vmem>>, %arg8: memref<2x24xf32, #tpu.memory_space<smem>>, %arg9: memref<2xf32, #tpu.memory_space<smem>>, %arg10: memref<1x8x256xf32, #tpu.memory_space<vmem>>, %arg11: memref<1x4x256xf32, #tpu.memory_space<vmem>>) attributes {dimension_semantics = [#tpu.dimension_semantics<parallel>], iteration_bounds = array<i64: 2>, scalar_prefetch = 0 : i64, scratch_operands = 0 : i64, tpu.core_type = #tpu.core_type<tc>, window_params = [{transform_indices = @transform_0, window_bounds = array<i64: 1, 8, 256>}, {transform_indices = @transform_1, window_bounds = array<i64: 1, 256, 16>}, {transform_indices = @transform_2, window_bounds = array<i64: 1, 4, 256>}, {transform_indices = @transform_3, window_bounds = array<i64: 1, 1, 256>}, {pipeline_mode = #tpu.pipeline_mode<synchronous>, transform_indices = @transform_4, window_bounds = array<i64: 2, 256>}, {pipeline_mode = #tpu.pipeline_mode<synchronous>, transform_indices = @transform_5, window_bounds = array<i64: 8, 1>}, {pipeline_mode = #tpu.pipeline_mode<synchronous>, transform_indices = @transform_6, window_bounds = array<i64: 8, 1>}, {transform_indices = @transform_7, window_bounds = array<i64: 2, 24>}, {transform_indices = @transform_8, window_bounds = array<i64: 2>}, {transform_indices = @transform_9, window_bounds = array<i64: 1, 8, 256>}, {transform_indices = @transform_10, window_bounds = array<i64: 1, 4, 256>}]} {
    %c0 = arith.constant 0 : index
    %c0_0 = arith.constant 0 : index
    %c0_1 = arith.constant 0 : index
    %0 = vector.load %arg1[%c0, %c0_0, %c0_1] : memref<1x8x256xf32, #tpu.memory_space<vmem>>, vector<1x8x256xf32>
    %1 = vector.shape_cast %0 : vector<1x8x256xf32> to vector<8x256xf32>
    %2 = tpu.concatenate %1, %1, %1, %1 in 1 : vector<8x256xf32>, vector<8x256xf32>, vector<8x256xf32>, vector<8x256xf32> -> vector<8x1024xf32>
    %c0_2 = arith.constant 0 : index
    %c0_3 = arith.constant 0 : index
    %c0_4 = arith.constant 0 : index
    %3 = vector.load %arg3[%c0_2, %c0_3, %c0_4] : memref<1x4x256xf32, #tpu.memory_space<vmem>>, vector<1x4x256xf32>
    %4 = vector.shape_cast %3 : vector<1x4x256xf32> to vector<4x256xf32>
    %c0_5 = arith.constant 0 : index
    %c0_6 = arith.constant 0 : index
    %c0_7 = arith.constant 0 : index
    %5 = vector.load %arg4[%c0_5, %c0_6, %c0_7] : memref<1x1x256xf32, #tpu.memory_space<vmem>>, vector<1x1x256xf32>
    %6 = vector.shape_cast %5 : vector<1x1x256xf32> to vector<1x256xf32>
    %c0_8 = arith.constant 0 : index
    %c0_9 = arith.constant 0 : index
    %7 = vector.load %arg5[%c0_8, %c0_9] : memref<2x256xf32, #tpu.memory_space<vmem>>, vector<1x256xf32>
    %c1 = arith.constant 1 : index
    %c0_10 = arith.constant 0 : index
    %8 = vector.load %arg5[%c1, %c0_10] : memref<2x256xf32, #tpu.memory_space<vmem>>, vector<1x256xf32>
    %c0_11 = arith.constant 0 : index
    %c0_12 = arith.constant 0 : index
    %9 = vector.load %arg6[%c0_11, %c0_12] : memref<8x1xf32, #tpu.memory_space<vmem>>, vector<8x1xf32>
    %c0_13 = arith.constant 0 : index
    %c0_14 = arith.constant 0 : index
    %10 = vector.load %arg7[%c0_13, %c0_14] : memref<8x1xf32, #tpu.memory_space<vmem>>, vector<8x1xf32>
    %11 = tpu.iota {dimensions = array<i32: 0>} : vector<16x1024xi32>
    %12 = tpu.iota {dimensions = array<i32: 0>} : vector<16x1024xi32>
    %13 = arith.mulf %2, %2 : vector<8x1024xf32>
    %cst = arith.constant 9.99999993E-9 : f32
    %14 = vector.broadcast %cst : f32 to vector<4x256xf32>
    %cst_15 = arith.constant 0.000000e+00 : f32
    %15 = vector.broadcast %cst_15 : f32 to vector<4x256xf32>
    %16 = arith.index_cast %arg0 : i32 to index
    %c0_16 = arith.constant 0 : index
    %17 = memref.load %arg8[%16, %c0_16] : memref<2x24xf32, #tpu.memory_space<smem>>
    %18 = arith.index_cast %arg0 : i32 to index
    %c1_17 = arith.constant 1 : index
    %19 = memref.load %arg8[%18, %c1_17] : memref<2x24xf32, #tpu.memory_space<smem>>
    %20 = arith.index_cast %arg0 : i32 to index
    %c2 = arith.constant 2 : index
    %21 = memref.load %arg8[%20, %c2] : memref<2x24xf32, #tpu.memory_space<smem>>
    %22 = arith.index_cast %arg0 : i32 to index
    %c3 = arith.constant 3 : index
    %23 = memref.load %arg8[%22, %c3] : memref<2x24xf32, #tpu.memory_space<smem>>
    %24 = arith.index_cast %arg0 : i32 to index
    %c4 = arith.constant 4 : index
    %25 = memref.load %arg8[%24, %c4] : memref<2x24xf32, #tpu.memory_space<smem>>
    %26 = arith.index_cast %arg0 : i32 to index
    %c5 = arith.constant 5 : index
    %27 = memref.load %arg8[%26, %c5] : memref<2x24xf32, #tpu.memory_space<smem>>
    %28 = arith.index_cast %arg0 : i32 to index
    %c6 = arith.constant 6 : index
    %29 = memref.load %arg8[%28, %c6] : memref<2x24xf32, #tpu.memory_space<smem>>
    %30 = arith.index_cast %arg0 : i32 to index
    %c7 = arith.constant 7 : index
    %31 = memref.load %arg8[%30, %c7] : memref<2x24xf32, #tpu.memory_space<smem>>
    %32 = arith.index_cast %arg0 : i32 to index
    %c8 = arith.constant 8 : index
    %33 = memref.load %arg8[%32, %c8] : memref<2x24xf32, #tpu.memory_space<smem>>
    %34 = arith.index_cast %arg0 : i32 to index
    %c9 = arith.constant 9 : index
    %35 = memref.load %arg8[%34, %c9] : memref<2x24xf32, #tpu.memory_space<smem>>
    %36 = arith.index_cast %arg0 : i32 to index
    %c10 = arith.constant 10 : index
    %37 = memref.load %arg8[%36, %c10] : memref<2x24xf32, #tpu.memory_space<smem>>
    %38 = arith.index_cast %arg0 : i32 to index
    %c11 = arith.constant 11 : index
    %39 = memref.load %arg8[%38, %c11] : memref<2x24xf32, #tpu.memory_space<smem>>
    %40 = vector.broadcast %17 : f32 to vector<1x256xf32>
    %41 = arith.mulf %40, %7 : vector<1x256xf32>
    %42 = vector.broadcast %19 : f32 to vector<1x256xf32>
    %43 = arith.mulf %42, %8 : vector<1x256xf32>
    %44 = arith.addf %41, %43 : vector<1x256xf32>
    %45 = vector.broadcast %21 : f32 to vector<1x256xf32>
    %46 = arith.addf %44, %45 : vector<1x256xf32>
    %47 = vector.broadcast %23 : f32 to vector<1x256xf32>
    %48 = arith.mulf %47, %7 : vector<1x256xf32>
    %49 = vector.broadcast %25 : f32 to vector<1x256xf32>
    %50 = arith.mulf %49, %8 : vector<1x256xf32>
    %51 = arith.addf %48, %50 : vector<1x256xf32>
    %52 = vector.broadcast %27 : f32 to vector<1x256xf32>
    %53 = arith.addf %51, %52 : vector<1x256xf32>
    %54 = vector.broadcast %29 : f32 to vector<1x256xf32>
    %55 = arith.mulf %54, %7 : vector<1x256xf32>
    %56 = vector.broadcast %31 : f32 to vector<1x256xf32>
    %57 = arith.mulf %56, %8 : vector<1x256xf32>
    %58 = arith.addf %55, %57 : vector<1x256xf32>
    %59 = vector.broadcast %33 : f32 to vector<1x256xf32>
    %60 = arith.addf %58, %59 : vector<1x256xf32>
    %61 = vector.broadcast %60 : vector<1x256xf32> to vector<4x256xf32>
    %62 = arith.mulf %61, %4 : vector<4x256xf32>
    %63 = vector.broadcast %39 : f32 to vector<4x256xf32>
    %64 = arith.addf %62, %63 : vector<4x256xf32>
    %65 = tpu.reciprocal %64 : vector<4x256xf32> -> vector<4x256xf32>
    %66 = vector.broadcast %46 : vector<1x256xf32> to vector<4x256xf32>
    %67 = arith.mulf %66, %4 : vector<4x256xf32>
    %68 = vector.broadcast %35 : f32 to vector<4x256xf32>
    %69 = arith.addf %67, %68 : vector<4x256xf32>
    %70 = arith.mulf %69, %65 : vector<4x256xf32>
    %71 = vector.broadcast %53 : vector<1x256xf32> to vector<4x256xf32>
    %72 = arith.mulf %71, %4 : vector<4x256xf32>
    %73 = vector.broadcast %37 : f32 to vector<4x256xf32>
    %74 = arith.addf %72, %73 : vector<4x256xf32>
    %75 = arith.mulf %74, %65 : vector<4x256xf32>
    %76 = math.floor %70 : vector<4x256xf32>
    %77 = arith.subf %70, %76 : vector<4x256xf32>
    %cst_18 = arith.constant 1.000000e+00 : f32
    %78 = vector.broadcast %cst_18 : f32 to vector<4x256xf32>
    %79 = arith.addf %76, %78 : vector<4x256xf32>
    %80 = math.floor %75 : vector<4x256xf32>
    %81 = arith.subf %75, %80 : vector<4x256xf32>
    %cst_19 = arith.constant 1.000000e+00 : f32
    %82 = vector.broadcast %cst_19 : f32 to vector<4x256xf32>
    %83 = arith.addf %80, %82 : vector<4x256xf32>
    %cst_20 = arith.constant 0.000000e+00 : f32
    %84 = vector.broadcast %cst_20 : f32 to vector<4x256xf32>
    %85 = arith.cmpf oge, %76, %84 : vector<4x256xf32>
    %cst_21 = arith.constant 1.500000e+01 : f32
    %86 = vector.broadcast %cst_21 : f32 to vector<4x256xf32>
    %87 = arith.cmpf ole, %76, %86 : vector<4x256xf32>
    %88 = arith.andi %85, %87 : vector<4x256xi1>
    %cst_22 = arith.constant 0.000000e+00 : f32
    %89 = vector.broadcast %cst_22 : f32 to vector<4x256xf32>
    %90 = arith.cmpf oge, %79, %89 : vector<4x256xf32>
    %cst_23 = arith.constant 1.500000e+01 : f32
    %91 = vector.broadcast %cst_23 : f32 to vector<4x256xf32>
    %92 = arith.cmpf ole, %79, %91 : vector<4x256xf32>
    %93 = arith.andi %90, %92 : vector<4x256xi1>
    %cst_24 = arith.constant 0.000000e+00 : f32
    %94 = vector.broadcast %cst_24 : f32 to vector<4x256xf32>
    %95 = arith.cmpf oge, %80, %94 : vector<4x256xf32>
    %cst_25 = arith.constant 1.500000e+01 : f32
    %96 = vector.broadcast %cst_25 : f32 to vector<4x256xf32>
    %97 = arith.cmpf ole, %80, %96 : vector<4x256xf32>
    %98 = arith.andi %95, %97 : vector<4x256xi1>
    %cst_26 = arith.constant 0.000000e+00 : f32
    %99 = vector.broadcast %cst_26 : f32 to vector<4x256xf32>
    %100 = arith.cmpf oge, %83, %99 : vector<4x256xf32>
    %cst_27 = arith.constant 1.500000e+01 : f32
    %101 = vector.broadcast %cst_27 : f32 to vector<4x256xf32>
    %102 = arith.cmpf ole, %83, %101 : vector<4x256xf32>
    %103 = arith.andi %100, %102 : vector<4x256xi1>
    %cst_28 = arith.constant 1.000000e+00 : f32
    %104 = vector.broadcast %cst_28 : f32 to vector<4x256xf32>
    %105 = arith.subf %104, %77 : vector<4x256xf32>
    %cst_29 = arith.constant 0.000000e+00 : f32
    %106 = vector.broadcast %cst_29 : f32 to vector<4x256xf32>
    %107 = arith.select %88, %105, %106 : vector<4x256xi1>, vector<4x256xf32>
    %cst_30 = arith.constant 0.000000e+00 : f32
    %108 = vector.broadcast %cst_30 : f32 to vector<4x256xf32>
    %109 = arith.select %93, %77, %108 : vector<4x256xi1>, vector<4x256xf32>
    %cst_31 = arith.constant 1.000000e+00 : f32
    %110 = vector.broadcast %cst_31 : f32 to vector<4x256xf32>
    %111 = arith.subf %110, %81 : vector<4x256xf32>
    %cst_32 = arith.constant 0.000000e+00 : f32
    %112 = vector.broadcast %cst_32 : f32 to vector<4x256xf32>
    %113 = arith.select %98, %111, %112 : vector<4x256xi1>, vector<4x256xf32>
    %cst_33 = arith.constant 0.000000e+00 : f32
    %114 = vector.broadcast %cst_33 : f32 to vector<4x256xf32>
    %115 = arith.select %103, %81, %114 : vector<4x256xi1>, vector<4x256xf32>
    %cst_34 = arith.constant 0.000000e+00 : f32
    %116 = vector.broadcast %cst_34 : f32 to vector<4x256xf32>
    %117 = arith.select %88, %76, %116 : vector<4x256xi1>, vector<4x256xf32>
    %118 = arith.fptosi %117 : vector<4x256xf32> to vector<4x256xi32>
    %cst_35 = arith.constant 0.000000e+00 : f32
    %119 = vector.broadcast %cst_35 : f32 to vector<4x256xf32>
    %120 = arith.select %93, %79, %119 : vector<4x256xi1>, vector<4x256xf32>
    %121 = arith.fptosi %120 : vector<4x256xf32> to vector<4x256xi32>
    %cst_36 = arith.constant 0.000000e+00 : f32
    %122 = vector.broadcast %cst_36 : f32 to vector<4x256xf32>
    %123 = arith.select %98, %80, %122 : vector<4x256xi1>, vector<4x256xf32>
    %124 = arith.fptosi %123 : vector<4x256xf32> to vector<4x256xi32>
    %cst_37 = arith.constant 0.000000e+00 : f32
    %125 = vector.broadcast %cst_37 : f32 to vector<4x256xf32>
    %126 = arith.select %103, %83, %125 : vector<4x256xi1>, vector<4x256xf32>
    %127 = arith.fptosi %126 : vector<4x256xf32> to vector<4x256xi32>
    %128 = vector.extract_strided_slice %118 {offsets = [0, 0], sizes = [1, 256], strides = [1, 1]} : vector<4x256xi32> to vector<1x256xi32>
    %129 = vector.extract_strided_slice %118 {offsets = [1, 0], sizes = [1, 256], strides = [1, 1]} : vector<4x256xi32> to vector<1x256xi32>
    %130 = vector.extract_strided_slice %118 {offsets = [2, 0], sizes = [1, 256], strides = [1, 1]} : vector<4x256xi32> to vector<1x256xi32>
    %131 = vector.extract_strided_slice %118 {offsets = [3, 0], sizes = [1, 256], strides = [1, 1]} : vector<4x256xi32> to vector<1x256xi32>
    %132 = tpu.concatenate %128, %129, %130, %131 in 1 : vector<1x256xi32>, vector<1x256xi32>, vector<1x256xi32>, vector<1x256xi32> -> vector<1x1024xi32>
    %133 = vector.broadcast %132 : vector<1x1024xi32> to vector<16x1024xi32>
    %134 = arith.cmpi eq, %11, %133 : vector<16x1024xi32>
    %135 = vector.extract_strided_slice %107 {offsets = [0, 0], sizes = [1, 256], strides = [1, 1]} : vector<4x256xf32> to vector<1x256xf32>
    %136 = vector.extract_strided_slice %107 {offsets = [1, 0], sizes = [1, 256], strides = [1, 1]} : vector<4x256xf32> to vector<1x256xf32>
    %137 = vector.extract_strided_slice %107 {offsets = [2, 0], sizes = [1, 256], strides = [1, 1]} : vector<4x256xf32> to vector<1x256xf32>
    %138 = vector.extract_strided_slice %107 {offsets = [3, 0], sizes = [1, 256], strides = [1, 1]} : vector<4x256xf32> to vector<1x256xf32>
    %139 = tpu.concatenate %135, %136, %137, %138 in 1 : vector<1x256xf32>, vector<1x256xf32>, vector<1x256xf32>, vector<1x256xf32> -> vector<1x1024xf32>
    %cst_38 = arith.constant 0.000000e+00 : f32
    %140 = vector.shape_cast %139 : vector<1x1024xf32> to vector<1x1024xf32>
    %141 = vector.broadcast %140 : vector<1x1024xf32> to vector<16x1024xf32>
    %142 = vector.broadcast %cst_38 : f32 to vector<16x1024xf32>
    %143 = arith.select %134, %141, %142 : vector<16x1024xi1>, vector<16x1024xf32>
    %144 = vector.extract_strided_slice %121 {offsets = [0, 0], sizes = [1, 256], strides = [1, 1]} : vector<4x256xi32> to vector<1x256xi32>
    %145 = vector.extract_strided_slice %121 {offsets = [1, 0], sizes = [1, 256], strides = [1, 1]} : vector<4x256xi32> to vector<1x256xi32>
    %146 = vector.extract_strided_slice %121 {offsets = [2, 0], sizes = [1, 256], strides = [1, 1]} : vector<4x256xi32> to vector<1x256xi32>
    %147 = vector.extract_strided_slice %121 {offsets = [3, 0], sizes = [1, 256], strides = [1, 1]} : vector<4x256xi32> to vector<1x256xi32>
    %148 = tpu.concatenate %144, %145, %146, %147 in 1 : vector<1x256xi32>, vector<1x256xi32>, vector<1x256xi32>, vector<1x256xi32> -> vector<1x1024xi32>
    %149 = vector.broadcast %148 : vector<1x1024xi32> to vector<16x1024xi32>
    %150 = arith.cmpi eq, %11, %149 : vector<16x1024xi32>
    %151 = vector.extract_strided_slice %109 {offsets = [0, 0], sizes = [1, 256], strides = [1, 1]} : vector<4x256xf32> to vector<1x256xf32>
    %152 = vector.extract_strided_slice %109 {offsets = [1, 0], sizes = [1, 256], strides = [1, 1]} : vector<4x256xf32> to vector<1x256xf32>
    %153 = vector.extract_strided_slice %109 {offsets = [2, 0], sizes = [1, 256], strides = [1, 1]} : vector<4x256xf32> to vector<1x256xf32>
    %154 = vector.extract_strided_slice %109 {offsets = [3, 0], sizes = [1, 256], strides = [1, 1]} : vector<4x256xf32> to vector<1x256xf32>
    %155 = tpu.concatenate %151, %152, %153, %154 in 1 : vector<1x256xf32>, vector<1x256xf32>, vector<1x256xf32>, vector<1x256xf32> -> vector<1x1024xf32>
    %cst_39 = arith.constant 0.000000e+00 : f32
    %156 = vector.shape_cast %155 : vector<1x1024xf32> to vector<1x1024xf32>
    %157 = vector.broadcast %156 : vector<1x1024xf32> to vector<16x1024xf32>
    %158 = vector.broadcast %cst_39 : f32 to vector<16x1024xf32>
    %159 = arith.select %150, %157, %158 : vector<16x1024xi1>, vector<16x1024xf32>
    %160 = arith.addf %143, %159 : vector<16x1024xf32>
    %161 = vector.extract_strided_slice %124 {offsets = [0, 0], sizes = [1, 256], strides = [1, 1]} : vector<4x256xi32> to vector<1x256xi32>
    %162 = vector.extract_strided_slice %124 {offsets = [1, 0], sizes = [1, 256], strides = [1, 1]} : vector<4x256xi32> to vector<1x256xi32>
    %163 = vector.extract_strided_slice %124 {offsets = [2, 0], sizes = [1, 256], strides = [1, 1]} : vector<4x256xi32> to vector<1x256xi32>
    %164 = vector.extract_strided_slice %124 {offsets = [3, 0], sizes = [1, 256], strides = [1, 1]} : vector<4x256xi32> to vector<1x256xi32>
    %165 = tpu.concatenate %161, %162, %163, %164 in 1 : vector<1x256xi32>, vector<1x256xi32>, vector<1x256xi32>, vector<1x256xi32> -> vector<1x1024xi32>
    %166 = vector.broadcast %165 : vector<1x1024xi32> to vector<16x1024xi32>
    %167 = arith.cmpi eq, %12, %166 : vector<16x1024xi32>
    %168 = vector.extract_strided_slice %113 {offsets = [0, 0], sizes = [1, 256], strides = [1, 1]} : vector<4x256xf32> to vector<1x256xf32>
    %169 = vector.extract_strided_slice %113 {offsets = [1, 0], sizes = [1, 256], strides = [1, 1]} : vector<4x256xf32> to vector<1x256xf32>
    %170 = vector.extract_strided_slice %113 {offsets = [2, 0], sizes = [1, 256], strides = [1, 1]} : vector<4x256xf32> to vector<1x256xf32>
    %171 = vector.extract_strided_slice %113 {offsets = [3, 0], sizes = [1, 256], strides = [1, 1]} : vector<4x256xf32> to vector<1x256xf32>
    %172 = tpu.concatenate %168, %169, %170, %171 in 1 : vector<1x256xf32>, vector<1x256xf32>, vector<1x256xf32>, vector<1x256xf32> -> vector<1x1024xf32>
    %cst_40 = arith.constant 0.000000e+00 : f32
    %173 = vector.shape_cast %172 : vector<1x1024xf32> to vector<1x1024xf32>
    %174 = vector.broadcast %173 : vector<1x1024xf32> to vector<16x1024xf32>
    %175 = vector.broadcast %cst_40 : f32 to vector<16x1024xf32>
    %176 = arith.select %167, %174, %175 : vector<16x1024xi1>, vector<16x1024xf32>
    %177 = vector.extract_strided_slice %127 {offsets = [0, 0], sizes = [1, 256], strides = [1, 1]} : vector<4x256xi32> to vector<1x256xi32>
    %178 = vector.extract_strided_slice %127 {offsets = [1, 0], sizes = [1, 256], strides = [1, 1]} : vector<4x256xi32> to vector<1x256xi32>
    %179 = vector.extract_strided_slice %127 {offsets = [2, 0], sizes = [1, 256], strides = [1, 1]} : vector<4x256xi32> to vector<1x256xi32>
    %180 = vector.extract_strided_slice %127 {offsets = [3, 0], sizes = [1, 256], strides = [1, 1]} : vector<4x256xi32> to vector<1x256xi32>
    %181 = tpu.concatenate %177, %178, %179, %180 in 1 : vector<1x256xi32>, vector<1x256xi32>, vector<1x256xi32>, vector<1x256xi32> -> vector<1x1024xi32>
    %182 = vector.broadcast %181 : vector<1x1024xi32> to vector<16x1024xi32>
    %183 = arith.cmpi eq, %12, %182 : vector<16x1024xi32>
    %184 = vector.extract_strided_slice %115 {offsets = [0, 0], sizes = [1, 256], strides = [1, 1]} : vector<4x256xf32> to vector<1x256xf32>
    %185 = vector.extract_strided_slice %115 {offsets = [1, 0], sizes = [1, 256], strides = [1, 1]} : vector<4x256xf32> to vector<1x256xf32>
    %186 = vector.extract_strided_slice %115 {offsets = [2, 0], sizes = [1, 256], strides = [1, 1]} : vector<4x256xf32> to vector<1x256xf32>
    %187 = vector.extract_strided_slice %115 {offsets = [3, 0], sizes = [1, 256], strides = [1, 1]} : vector<4x256xf32> to vector<1x256xf32>
    %188 = tpu.concatenate %184, %185, %186, %187 in 1 : vector<1x256xf32>, vector<1x256xf32>, vector<1x256xf32>, vector<1x256xf32> -> vector<1x1024xf32>
    %cst_41 = arith.constant 0.000000e+00 : f32
    %189 = vector.shape_cast %188 : vector<1x1024xf32> to vector<1x1024xf32>
    %190 = vector.broadcast %189 : vector<1x1024xf32> to vector<16x1024xf32>
    %191 = vector.broadcast %cst_41 : f32 to vector<16x1024xf32>
    %192 = arith.select %183, %190, %191 : vector<16x1024xi1>, vector<16x1024xf32>
    %193 = arith.addf %176, %192 : vector<16x1024xf32>
    %c0_42 = arith.constant 0 : index
    %c0_43 = arith.constant 0 : index
    %c0_44 = arith.constant 0 : index
    %194 = vector.load %arg2[%c0_42, %c0_43, %c0_44] : memref<1x256x16xf32, #tpu.memory_space<vmem>>, vector<1x128x16xf32>
    %195 = vector.shape_cast %194 : vector<1x128x16xf32> to vector<128x16xf32>
    %cst_45 = arith.constant dense<0.000000e+00> : vector<128x1024xf32>
    %196 = tpu.matmul %195, %160, %cst_45 {dimension_numbers = #tpu.dot_dimension_numbers<[1], [0], [0], [1], [0, 0, 1, 1], [], []>} : vector<128x16xf32>, vector<16x1024xf32>, vector<128x1024xf32> -> vector<128x1024xf32>
    %197 = vector.shape_cast %196 : vector<128x1024xf32> to vector<8x16x1024xf32>
    %198 = vector.shape_cast %193 : vector<16x1024xf32> to vector<1x16x1024xf32>
    %199 = vector.broadcast %198 : vector<1x16x1024xf32> to vector<8x16x1024xf32>
    %200 = arith.mulf %197, %199 : vector<8x16x1024xf32>
    %cst_46 = arith.constant dense<0.000000e+00> : vector<8x1024xf32>
    %201 = vector.multi_reduction <add>, %200, %cst_46 [1] : vector<8x16x1024xf32> to vector<8x1024xf32>
    %202 = arith.addf %2, %201 : vector<8x1024xf32>
    %203 = arith.mulf %201, %201 : vector<8x1024xf32>
    %204 = arith.addf %13, %203 : vector<8x1024xf32>
    %205 = arith.mulf %201, %2 : vector<8x1024xf32>
    %cst_47 = arith.constant dense<0.000000e+00> : vector<1024xf32>
    %206 = vector.multi_reduction <add>, %205, %cst_47 [0] : vector<8x1024xf32> to vector<1024xf32>
    %207 = vector.shape_cast %206 : vector<1024xf32> to vector<1x1024xf32>
    %cst_48 = arith.constant 2.500000e-01 : f32
    %208 = vector.broadcast %cst_48 : f32 to vector<1x1024xf32>
    %209 = arith.mulf %207, %208 : vector<1x1024xf32>
    %210 = vector.extract_strided_slice %209 {offsets = [0, 0], sizes = [1, 256], strides = [1, 1]} : vector<1x1024xf32> to vector<1x256xf32>
    %211 = vector.extract_strided_slice %209 {offsets = [0, 256], sizes = [1, 256], strides = [1, 1]} : vector<1x1024xf32> to vector<1x256xf32>
    %212 = vector.extract_strided_slice %209 {offsets = [0, 512], sizes = [1, 256], strides = [1, 1]} : vector<1x1024xf32> to vector<1x256xf32>
    %213 = vector.extract_strided_slice %209 {offsets = [0, 768], sizes = [1, 256], strides = [1, 1]} : vector<1x1024xf32> to vector<1x256xf32>
    %214 = tpu.concatenate %210, %211, %212, %213 in 0 : vector<1x256xf32>, vector<1x256xf32>, vector<1x256xf32>, vector<1x256xf32> -> vector<4x256xf32>
    %215 = vector.broadcast %9 : vector<8x1xf32> to vector<8x1024xf32>
    %216 = arith.mulf %205, %215 : vector<8x1024xf32>
    %cst_49 = arith.constant dense<0.000000e+00> : vector<1024xf32>
    %217 = vector.multi_reduction <add>, %216, %cst_49 [0] : vector<8x1024xf32> to vector<1024xf32>
    %218 = vector.shape_cast %217 : vector<1024xf32> to vector<1x1024xf32>
    %219 = vector.extract_strided_slice %218 {offsets = [0, 0], sizes = [1, 256], strides = [1, 1]} : vector<1x1024xf32> to vector<1x256xf32>
    %220 = vector.extract_strided_slice %218 {offsets = [0, 256], sizes = [1, 256], strides = [1, 1]} : vector<1x1024xf32> to vector<1x256xf32>
    %221 = vector.extract_strided_slice %218 {offsets = [0, 512], sizes = [1, 256], strides = [1, 1]} : vector<1x1024xf32> to vector<1x256xf32>
    %222 = vector.extract_strided_slice %218 {offsets = [0, 768], sizes = [1, 256], strides = [1, 1]} : vector<1x1024xf32> to vector<1x256xf32>
    %223 = tpu.concatenate %219, %220, %221, %222 in 0 : vector<1x256xf32>, vector<1x256xf32>, vector<1x256xf32>, vector<1x256xf32> -> vector<4x256xf32>
    %cst_50 = arith.constant dense<0xFF800000> : vector<256xf32>
    %224 = vector.multi_reduction <maximumf>, %214, %cst_50 [0] : vector<4x256xf32> to vector<256xf32>
    %225 = vector.shape_cast %224 : vector<256xf32> to vector<1x256xf32>
    %226 = vector.broadcast %225 : vector<1x256xf32> to vector<4x256xf32>
    %227 = arith.subf %214, %226 : vector<4x256xf32>
    %228 = math.exp %227 : vector<4x256xf32>
    %cst_51 = arith.constant dense<0.000000e+00> : vector<256xf32>
    %229 = vector.multi_reduction <add>, %228, %cst_51 [0] : vector<4x256xf32> to vector<256xf32>
    %230 = vector.shape_cast %229 : vector<256xf32> to vector<1x256xf32>
    %231 = tpu.reciprocal %230 : vector<1x256xf32> -> vector<1x256xf32>
    %232 = vector.broadcast %231 : vector<1x256xf32> to vector<4x256xf32>
    %233 = arith.mulf %228, %232 : vector<4x256xf32>
    %cst_52 = arith.constant 0.353553385 : f32
    %234 = vector.broadcast %cst_52 : f32 to vector<4x256xf32>
    %235 = arith.mulf %233, %234 : vector<4x256xf32>
    %236 = arith.addf %14, %235 : vector<4x256xf32>
    %237 = arith.mulf %235, %223 : vector<4x256xf32>
    %238 = arith.addf %15, %237 : vector<4x256xf32>
    %239 = arith.index_cast %arg0 : i32 to index
    %c12 = arith.constant 12 : index
    %240 = memref.load %arg8[%239, %c12] : memref<2x24xf32, #tpu.memory_space<smem>>
    %241 = arith.index_cast %arg0 : i32 to index
    %c13 = arith.constant 13 : index
    %242 = memref.load %arg8[%241, %c13] : memref<2x24xf32, #tpu.memory_space<smem>>
    %243 = arith.index_cast %arg0 : i32 to index
    %c14 = arith.constant 14 : index
    %244 = memref.load %arg8[%243, %c14] : memref<2x24xf32, #tpu.memory_space<smem>>
    %245 = arith.index_cast %arg0 : i32 to index
    %c15 = arith.constant 15 : index
    %246 = memref.load %arg8[%245, %c15] : memref<2x24xf32, #tpu.memory_space<smem>>
    %247 = arith.index_cast %arg0 : i32 to index
    %c16 = arith.constant 16 : index
    %248 = memref.load %arg8[%247, %c16] : memref<2x24xf32, #tpu.memory_space<smem>>
    %249 = arith.index_cast %arg0 : i32 to index
    %c17 = arith.constant 17 : index
    %250 = memref.load %arg8[%249, %c17] : memref<2x24xf32, #tpu.memory_space<smem>>
    %251 = arith.index_cast %arg0 : i32 to index
    %c18 = arith.constant 18 : index
    %252 = memref.load %arg8[%251, %c18] : memref<2x24xf32, #tpu.memory_space<smem>>
    %253 = arith.index_cast %arg0 : i32 to index
    %c19 = arith.constant 19 : index
    %254 = memref.load %arg8[%253, %c19] : memref<2x24xf32, #tpu.memory_space<smem>>
    %255 = arith.index_cast %arg0 : i32 to index
    %c20 = arith.constant 20 : index
    %256 = memref.load %arg8[%255, %c20] : memref<2x24xf32, #tpu.memory_space<smem>>
    %257 = arith.index_cast %arg0 : i32 to index
    %c21 = arith.constant 21 : index
    %258 = memref.load %arg8[%257, %c21] : memref<2x24xf32, #tpu.memory_space<smem>>
    %259 = arith.index_cast %arg0 : i32 to index
    %c22 = arith.constant 22 : index
    %260 = memref.load %arg8[%259, %c22] : memref<2x24xf32, #tpu.memory_space<smem>>
    %261 = arith.index_cast %arg0 : i32 to index
    %c23 = arith.constant 23 : index
    %262 = memref.load %arg8[%261, %c23] : memref<2x24xf32, #tpu.memory_space<smem>>
    %263 = vector.broadcast %240 : f32 to vector<1x256xf32>
    %264 = arith.mulf %263, %7 : vector<1x256xf32>
    %265 = vector.broadcast %242 : f32 to vector<1x256xf32>
    %266 = arith.mulf %265, %8 : vector<1x256xf32>
    %267 = arith.addf %264, %266 : vector<1x256xf32>
    %268 = vector.broadcast %244 : f32 to vector<1x256xf32>
    %269 = arith.addf %267, %268 : vector<1x256xf32>
    %270 = vector.broadcast %246 : f32 to vector<1x256xf32>
    %271 = arith.mulf %270, %7 : vector<1x256xf32>
    %272 = vector.broadcast %248 : f32 to vector<1x256xf32>
    %273 = arith.mulf %272, %8 : vector<1x256xf32>
    %274 = arith.addf %271, %273 : vector<1x256xf32>
    %275 = vector.broadcast %250 : f32 to vector<1x256xf32>
    %276 = arith.addf %274, %275 : vector<1x256xf32>
    %277 = vector.broadcast %252 : f32 to vector<1x256xf32>
    %278 = arith.mulf %277, %7 : vector<1x256xf32>
    %279 = vector.broadcast %254 : f32 to vector<1x256xf32>
    %280 = arith.mulf %279, %8 : vector<1x256xf32>
    %281 = arith.addf %278, %280 : vector<1x256xf32>
    %282 = vector.broadcast %256 : f32 to vector<1x256xf32>
    %283 = arith.addf %281, %282 : vector<1x256xf32>
    %284 = vector.broadcast %283 : vector<1x256xf32> to vector<4x256xf32>
    %285 = arith.mulf %284, %4 : vector<4x256xf32>
    %286 = vector.broadcast %262 : f32 to vector<4x256xf32>
    %287 = arith.addf %285, %286 : vector<4x256xf32>
    %288 = tpu.reciprocal %287 : vector<4x256xf32> -> vector<4x256xf32>
    %289 = vector.broadcast %269 : vector<1x256xf32> to vector<4x256xf32>
    %290 = arith.mulf %289, %4 : vector<4x256xf32>
    %291 = vector.broadcast %258 : f32 to vector<4x256xf32>
    %292 = arith.addf %290, %291 : vector<4x256xf32>
    %293 = arith.mulf %292, %288 : vector<4x256xf32>
    %294 = vector.broadcast %276 : vector<1x256xf32> to vector<4x256xf32>
    %295 = arith.mulf %294, %4 : vector<4x256xf32>
    %296 = vector.broadcast %260 : f32 to vector<4x256xf32>
    %297 = arith.addf %295, %296 : vector<4x256xf32>
    %298 = arith.mulf %297, %288 : vector<4x256xf32>
    %299 = math.floor %293 : vector<4x256xf32>
    %300 = arith.subf %293, %299 : vector<4x256xf32>
    %cst_53 = arith.constant 1.000000e+00 : f32
    %301 = vector.broadcast %cst_53 : f32 to vector<4x256xf32>
    %302 = arith.addf %299, %301 : vector<4x256xf32>
    %303 = math.floor %298 : vector<4x256xf32>
    %304 = arith.subf %298, %303 : vector<4x256xf32>
    %cst_54 = arith.constant 1.000000e+00 : f32
    %305 = vector.broadcast %cst_54 : f32 to vector<4x256xf32>
    %306 = arith.addf %303, %305 : vector<4x256xf32>
    %cst_55 = arith.constant 0.000000e+00 : f32
    %307 = vector.broadcast %cst_55 : f32 to vector<4x256xf32>
    %308 = arith.cmpf oge, %299, %307 : vector<4x256xf32>
    %cst_56 = arith.constant 1.500000e+01 : f32
    %309 = vector.broadcast %cst_56 : f32 to vector<4x256xf32>
    %310 = arith.cmpf ole, %299, %309 : vector<4x256xf32>
    %311 = arith.andi %308, %310 : vector<4x256xi1>
    %cst_57 = arith.constant 0.000000e+00 : f32
    %312 = vector.broadcast %cst_57 : f32 to vector<4x256xf32>
    %313 = arith.cmpf oge, %302, %312 : vector<4x256xf32>
    %cst_58 = arith.constant 1.500000e+01 : f32
    %314 = vector.broadcast %cst_58 : f32 to vector<4x256xf32>
    %315 = arith.cmpf ole, %302, %314 : vector<4x256xf32>
    %316 = arith.andi %313, %315 : vector<4x256xi1>
    %cst_59 = arith.constant 0.000000e+00 : f32
    %317 = vector.broadcast %cst_59 : f32 to vector<4x256xf32>
    %318 = arith.cmpf oge, %303, %317 : vector<4x256xf32>
    %cst_60 = arith.constant 1.500000e+01 : f32
    %319 = vector.broadcast %cst_60 : f32 to vector<4x256xf32>
    %320 = arith.cmpf ole, %303, %319 : vector<4x256xf32>
    %321 = arith.andi %318, %320 : vector<4x256xi1>
    %cst_61 = arith.constant 0.000000e+00 : f32
    %322 = vector.broadcast %cst_61 : f32 to vector<4x256xf32>
    %323 = arith.cmpf oge, %306, %322 : vector<4x256xf32>
    %cst_62 = arith.constant 1.500000e+01 : f32
    %324 = vector.broadcast %cst_62 : f32 to vector<4x256xf32>
    %325 = arith.cmpf ole, %306, %324 : vector<4x256xf32>
    %326 = arith.andi %323, %325 : vector<4x256xi1>
    %cst_63 = arith.constant 1.000000e+00 : f32
    %327 = vector.broadcast %cst_63 : f32 to vector<4x256xf32>
    %328 = arith.subf %327, %300 : vector<4x256xf32>
    %cst_64 = arith.constant 0.000000e+00 : f32
    %329 = vector.broadcast %cst_64 : f32 to vector<4x256xf32>
    %330 = arith.select %311, %328, %329 : vector<4x256xi1>, vector<4x256xf32>
    %cst_65 = arith.constant 0.000000e+00 : f32
    %331 = vector.broadcast %cst_65 : f32 to vector<4x256xf32>
    %332 = arith.select %316, %300, %331 : vector<4x256xi1>, vector<4x256xf32>
    %cst_66 = arith.constant 1.000000e+00 : f32
    %333 = vector.broadcast %cst_66 : f32 to vector<4x256xf32>
    %334 = arith.subf %333, %304 : vector<4x256xf32>
    %cst_67 = arith.constant 0.000000e+00 : f32
    %335 = vector.broadcast %cst_67 : f32 to vector<4x256xf32>
    %336 = arith.select %321, %334, %335 : vector<4x256xi1>, vector<4x256xf32>
    %cst_68 = arith.constant 0.000000e+00 : f32
    %337 = vector.broadcast %cst_68 : f32 to vector<4x256xf32>
    %338 = arith.select %326, %304, %337 : vector<4x256xi1>, vector<4x256xf32>
    %cst_69 = arith.constant 0.000000e+00 : f32
    %339 = vector.broadcast %cst_69 : f32 to vector<4x256xf32>
    %340 = arith.select %311, %299, %339 : vector<4x256xi1>, vector<4x256xf32>
    %341 = arith.fptosi %340 : vector<4x256xf32> to vector<4x256xi32>
    %cst_70 = arith.constant 0.000000e+00 : f32
    %342 = vector.broadcast %cst_70 : f32 to vector<4x256xf32>
    %343 = arith.select %316, %302, %342 : vector<4x256xi1>, vector<4x256xf32>
    %344 = arith.fptosi %343 : vector<4x256xf32> to vector<4x256xi32>
    %cst_71 = arith.constant 0.000000e+00 : f32
    %345 = vector.broadcast %cst_71 : f32 to vector<4x256xf32>
    %346 = arith.select %321, %303, %345 : vector<4x256xi1>, vector<4x256xf32>
    %347 = arith.fptosi %346 : vector<4x256xf32> to vector<4x256xi32>
    %cst_72 = arith.constant 0.000000e+00 : f32
    %348 = vector.broadcast %cst_72 : f32 to vector<4x256xf32>
    %349 = arith.select %326, %306, %348 : vector<4x256xi1>, vector<4x256xf32>
    %350 = arith.fptosi %349 : vector<4x256xf32> to vector<4x256xi32>
    %351 = vector.extract_strided_slice %341 {offsets = [0, 0], sizes = [1, 256], strides = [1, 1]} : vector<4x256xi32> to vector<1x256xi32>
    %352 = vector.extract_strided_slice %341 {offsets = [1, 0], sizes = [1, 256], strides = [1, 1]} : vector<4x256xi32> to vector<1x256xi32>
    %353 = vector.extract_strided_slice %341 {offsets = [2, 0], sizes = [1, 256], strides = [1, 1]} : vector<4x256xi32> to vector<1x256xi32>
    %354 = vector.extract_strided_slice %341 {offsets = [3, 0], sizes = [1, 256], strides = [1, 1]} : vector<4x256xi32> to vector<1x256xi32>
    %355 = tpu.concatenate %351, %352, %353, %354 in 1 : vector<1x256xi32>, vector<1x256xi32>, vector<1x256xi32>, vector<1x256xi32> -> vector<1x1024xi32>
    %356 = vector.broadcast %355 : vector<1x1024xi32> to vector<16x1024xi32>
    %357 = arith.cmpi eq, %11, %356 : vector<16x1024xi32>
    %358 = vector.extract_strided_slice %330 {offsets = [0, 0], sizes = [1, 256], strides = [1, 1]} : vector<4x256xf32> to vector<1x256xf32>
    %359 = vector.extract_strided_slice %330 {offsets = [1, 0], sizes = [1, 256], strides = [1, 1]} : vector<4x256xf32> to vector<1x256xf32>
    %360 = vector.extract_strided_slice %330 {offsets = [2, 0], sizes = [1, 256], strides = [1, 1]} : vector<4x256xf32> to vector<1x256xf32>
    %361 = vector.extract_strided_slice %330 {offsets = [3, 0], sizes = [1, 256], strides = [1, 1]} : vector<4x256xf32> to vector<1x256xf32>
    %362 = tpu.concatenate %358, %359, %360, %361 in 1 : vector<1x256xf32>, vector<1x256xf32>, vector<1x256xf32>, vector<1x256xf32> -> vector<1x1024xf32>
    %cst_73 = arith.constant 0.000000e+00 : f32
    %363 = vector.shape_cast %362 : vector<1x1024xf32> to vector<1x1024xf32>
    %364 = vector.broadcast %363 : vector<1x1024xf32> to vector<16x1024xf32>
    %365 = vector.broadcast %cst_73 : f32 to vector<16x1024xf32>
    %366 = arith.select %357, %364, %365 : vector<16x1024xi1>, vector<16x1024xf32>
    %367 = vector.extract_strided_slice %344 {offsets = [0, 0], sizes = [1, 256], strides = [1, 1]} : vector<4x256xi32> to vector<1x256xi32>
    %368 = vector.extract_strided_slice %344 {offsets = [1, 0], sizes = [1, 256], strides = [1, 1]} : vector<4x256xi32> to vector<1x256xi32>
    %369 = vector.extract_strided_slice %344 {offsets = [2, 0], sizes = [1, 256], strides = [1, 1]} : vector<4x256xi32> to vector<1x256xi32>
    %370 = vector.extract_strided_slice %344 {offsets = [3, 0], sizes = [1, 256], strides = [1, 1]} : vector<4x256xi32> to vector<1x256xi32>
    %371 = tpu.concatenate %367, %368, %369, %370 in 1 : vector<1x256xi32>, vector<1x256xi32>, vector<1x256xi32>, vector<1x256xi32> -> vector<1x1024xi32>
    %372 = vector.broadcast %371 : vector<1x1024xi32> to vector<16x1024xi32>
    %373 = arith.cmpi eq, %11, %372 : vector<16x1024xi32>
    %374 = vector.extract_strided_slice %332 {offsets = [0, 0], sizes = [1, 256], strides = [1, 1]} : vector<4x256xf32> to vector<1x256xf32>
    %375 = vector.extract_strided_slice %332 {offsets = [1, 0], sizes = [1, 256], strides = [1, 1]} : vector<4x256xf32> to vector<1x256xf32>
    %376 = vector.extract_strided_slice %332 {offsets = [2, 0], sizes = [1, 256], strides = [1, 1]} : vector<4x256xf32> to vector<1x256xf32>
    %377 = vector.extract_strided_slice %332 {offsets = [3, 0], sizes = [1, 256], strides = [1, 1]} : vector<4x256xf32> to vector<1x256xf32>
    %378 = tpu.concatenate %374, %375, %376, %377 in 1 : vector<1x256xf32>, vector<1x256xf32>, vector<1x256xf32>, vector<1x256xf32> -> vector<1x1024xf32>
    %cst_74 = arith.constant 0.000000e+00 : f32
    %379 = vector.shape_cast %378 : vector<1x1024xf32> to vector<1x1024xf32>
    %380 = vector.broadcast %379 : vector<1x1024xf32> to vector<16x1024xf32>
    %381 = vector.broadcast %cst_74 : f32 to vector<16x1024xf32>
    %382 = arith.select %373, %380, %381 : vector<16x1024xi1>, vector<16x1024xf32>
    %383 = arith.addf %366, %382 : vector<16x1024xf32>
    %384 = vector.extract_strided_slice %347 {offsets = [0, 0], sizes = [1, 256], strides = [1, 1]} : vector<4x256xi32> to vector<1x256xi32>
    %385 = vector.extract_strided_slice %347 {offsets = [1, 0], sizes = [1, 256], strides = [1, 1]} : vector<4x256xi32> to vector<1x256xi32>
    %386 = vector.extract_strided_slice %347 {offsets = [2, 0], sizes = [1, 256], strides = [1, 1]} : vector<4x256xi32> to vector<1x256xi32>
    %387 = vector.extract_strided_slice %347 {offsets = [3, 0], sizes = [1, 256], strides = [1, 1]} : vector<4x256xi32> to vector<1x256xi32>
    %388 = tpu.concatenate %384, %385, %386, %387 in 1 : vector<1x256xi32>, vector<1x256xi32>, vector<1x256xi32>, vector<1x256xi32> -> vector<1x1024xi32>
    %389 = vector.broadcast %388 : vector<1x1024xi32> to vector<16x1024xi32>
    %390 = arith.cmpi eq, %12, %389 : vector<16x1024xi32>
    %391 = vector.extract_strided_slice %336 {offsets = [0, 0], sizes = [1, 256], strides = [1, 1]} : vector<4x256xf32> to vector<1x256xf32>
    %392 = vector.extract_strided_slice %336 {offsets = [1, 0], sizes = [1, 256], strides = [1, 1]} : vector<4x256xf32> to vector<1x256xf32>
    %393 = vector.extract_strided_slice %336 {offsets = [2, 0], sizes = [1, 256], strides = [1, 1]} : vector<4x256xf32> to vector<1x256xf32>
    %394 = vector.extract_strided_slice %336 {offsets = [3, 0], sizes = [1, 256], strides = [1, 1]} : vector<4x256xf32> to vector<1x256xf32>
    %395 = tpu.concatenate %391, %392, %393, %394 in 1 : vector<1x256xf32>, vector<1x256xf32>, vector<1x256xf32>, vector<1x256xf32> -> vector<1x1024xf32>
    %cst_75 = arith.constant 0.000000e+00 : f32
    %396 = vector.shape_cast %395 : vector<1x1024xf32> to vector<1x1024xf32>
    %397 = vector.broadcast %396 : vector<1x1024xf32> to vector<16x1024xf32>
    %398 = vector.broadcast %cst_75 : f32 to vector<16x1024xf32>
    %399 = arith.select %390, %397, %398 : vector<16x1024xi1>, vector<16x1024xf32>
    %400 = vector.extract_strided_slice %350 {offsets = [0, 0], sizes = [1, 256], strides = [1, 1]} : vector<4x256xi32> to vector<1x256xi32>
    %401 = vector.extract_strided_slice %350 {offsets = [1, 0], sizes = [1, 256], strides = [1, 1]} : vector<4x256xi32> to vector<1x256xi32>
    %402 = vector.extract_strided_slice %350 {offsets = [2, 0], sizes = [1, 256], strides = [1, 1]} : vector<4x256xi32> to vector<1x256xi32>
    %403 = vector.extract_strided_slice %350 {offsets = [3, 0], sizes = [1, 256], strides = [1, 1]} : vector<4x256xi32> to vector<1x256xi32>
    %404 = tpu.concatenate %400, %401, %402, %403 in 1 : vector<1x256xi32>, vector<1x256xi32>, vector<1x256xi32>, vector<1x256xi32> -> vector<1x1024xi32>
    %405 = vector.broadcast %404 : vector<1x1024xi32> to vector<16x1024xi32>
    %406 = arith.cmpi eq, %12, %405 : vector<16x1024xi32>
    %407 = vector.extract_strided_slice %338 {offsets = [0, 0], sizes = [1, 256], strides = [1, 1]} : vector<4x256xf32> to vector<1x256xf32>
    %408 = vector.extract_strided_slice %338 {offsets = [1, 0], sizes = [1, 256], strides = [1, 1]} : vector<4x256xf32> to vector<1x256xf32>
    %409 = vector.extract_strided_slice %338 {offsets = [2, 0], sizes = [1, 256], strides = [1, 1]} : vector<4x256xf32> to vector<1x256xf32>
    %410 = vector.extract_strided_slice %338 {offsets = [3, 0], sizes = [1, 256], strides = [1, 1]} : vector<4x256xf32> to vector<1x256xf32>
    %411 = tpu.concatenate %407, %408, %409, %410 in 1 : vector<1x256xf32>, vector<1x256xf32>, vector<1x256xf32>, vector<1x256xf32> -> vector<1x1024xf32>
    %cst_76 = arith.constant 0.000000e+00 : f32
    %412 = vector.shape_cast %411 : vector<1x1024xf32> to vector<1x1024xf32>
    %413 = vector.broadcast %412 : vector<1x1024xf32> to vector<16x1024xf32>
    %414 = vector.broadcast %cst_76 : f32 to vector<16x1024xf32>
    %415 = arith.select %406, %413, %414 : vector<16x1024xi1>, vector<16x1024xf32>
    %416 = arith.addf %399, %415 : vector<16x1024xf32>
    %c0_77 = arith.constant 0 : index
    %c128 = arith.constant 128 : index
    %c0_78 = arith.constant 0 : index
    %417 = vector.load %arg2[%c0_77, %c128, %c0_78] : memref<1x256x16xf32, #tpu.memory_space<vmem>>, vector<1x128x16xf32>
    %418 = vector.shape_cast %417 : vector<1x128x16xf32> to vector<128x16xf32>
    %cst_79 = arith.constant dense<0.000000e+00> : vector<128x1024xf32>
    %419 = tpu.matmul %418, %383, %cst_79 {dimension_numbers = #tpu.dot_dimension_numbers<[1], [0], [0], [1], [0, 0, 1, 1], [], []>} : vector<128x16xf32>, vector<16x1024xf32>, vector<128x1024xf32> -> vector<128x1024xf32>
    %420 = vector.shape_cast %419 : vector<128x1024xf32> to vector<8x16x1024xf32>
    %421 = vector.shape_cast %416 : vector<16x1024xf32> to vector<1x16x1024xf32>
    %422 = vector.broadcast %421 : vector<1x16x1024xf32> to vector<8x16x1024xf32>
    %423 = arith.mulf %420, %422 : vector<8x16x1024xf32>
    %cst_80 = arith.constant dense<0.000000e+00> : vector<8x1024xf32>
    %424 = vector.multi_reduction <add>, %423, %cst_80 [1] : vector<8x16x1024xf32> to vector<8x1024xf32>
    %425 = arith.addf %202, %424 : vector<8x1024xf32>
    %426 = arith.mulf %424, %424 : vector<8x1024xf32>
    %427 = arith.addf %204, %426 : vector<8x1024xf32>
    %428 = arith.mulf %424, %2 : vector<8x1024xf32>
    %cst_81 = arith.constant dense<0.000000e+00> : vector<1024xf32>
    %429 = vector.multi_reduction <add>, %428, %cst_81 [0] : vector<8x1024xf32> to vector<1024xf32>
    %430 = vector.shape_cast %429 : vector<1024xf32> to vector<1x1024xf32>
    %cst_82 = arith.constant 2.500000e-01 : f32
    %431 = vector.broadcast %cst_82 : f32 to vector<1x1024xf32>
    %432 = arith.mulf %430, %431 : vector<1x1024xf32>
    %433 = vector.extract_strided_slice %432 {offsets = [0, 0], sizes = [1, 256], strides = [1, 1]} : vector<1x1024xf32> to vector<1x256xf32>
    %434 = vector.extract_strided_slice %432 {offsets = [0, 256], sizes = [1, 256], strides = [1, 1]} : vector<1x1024xf32> to vector<1x256xf32>
    %435 = vector.extract_strided_slice %432 {offsets = [0, 512], sizes = [1, 256], strides = [1, 1]} : vector<1x1024xf32> to vector<1x256xf32>
    %436 = vector.extract_strided_slice %432 {offsets = [0, 768], sizes = [1, 256], strides = [1, 1]} : vector<1x1024xf32> to vector<1x256xf32>
    %437 = tpu.concatenate %433, %434, %435, %436 in 0 : vector<1x256xf32>, vector<1x256xf32>, vector<1x256xf32>, vector<1x256xf32> -> vector<4x256xf32>
    %438 = vector.broadcast %9 : vector<8x1xf32> to vector<8x1024xf32>
    %439 = arith.mulf %428, %438 : vector<8x1024xf32>
    %cst_83 = arith.constant dense<0.000000e+00> : vector<1024xf32>
    %440 = vector.multi_reduction <add>, %439, %cst_83 [0] : vector<8x1024xf32> to vector<1024xf32>
    %441 = vector.shape_cast %440 : vector<1024xf32> to vector<1x1024xf32>
    %442 = vector.extract_strided_slice %441 {offsets = [0, 0], sizes = [1, 256], strides = [1, 1]} : vector<1x1024xf32> to vector<1x256xf32>
    %443 = vector.extract_strided_slice %441 {offsets = [0, 256], sizes = [1, 256], strides = [1, 1]} : vector<1x1024xf32> to vector<1x256xf32>
    %444 = vector.extract_strided_slice %441 {offsets = [0, 512], sizes = [1, 256], strides = [1, 1]} : vector<1x1024xf32> to vector<1x256xf32>
    %445 = vector.extract_strided_slice %441 {offsets = [0, 768], sizes = [1, 256], strides = [1, 1]} : vector<1x1024xf32> to vector<1x256xf32>
    %446 = tpu.concatenate %442, %443, %444, %445 in 0 : vector<1x256xf32>, vector<1x256xf32>, vector<1x256xf32>, vector<1x256xf32> -> vector<4x256xf32>
    %cst_84 = arith.constant dense<0xFF800000> : vector<256xf32>
    %447 = vector.multi_reduction <maximumf>, %437, %cst_84 [0] : vector<4x256xf32> to vector<256xf32>
    %448 = vector.shape_cast %447 : vector<256xf32> to vector<1x256xf32>
    %449 = vector.broadcast %448 : vector<1x256xf32> to vector<4x256xf32>
    %450 = arith.subf %437, %449 : vector<4x256xf32>
    %451 = math.exp %450 : vector<4x256xf32>
    %cst_85 = arith.constant dense<0.000000e+00> : vector<256xf32>
    %452 = vector.multi_reduction <add>, %451, %cst_85 [0] : vector<4x256xf32> to vector<256xf32>
    %453 = vector.shape_cast %452 : vector<256xf32> to vector<1x256xf32>
    %454 = tpu.reciprocal %453 : vector<1x256xf32> -> vector<1x256xf32>
    %455 = vector.broadcast %454 : vector<1x256xf32> to vector<4x256xf32>
    %456 = arith.mulf %451, %455 : vector<4x256xf32>
    %cst_86 = arith.constant 0.353553385 : f32
    %457 = vector.broadcast %cst_86 : f32 to vector<4x256xf32>
    %458 = arith.mulf %456, %457 : vector<4x256xf32>
    %459 = arith.addf %236, %458 : vector<4x256xf32>
    %460 = arith.mulf %458, %446 : vector<4x256xf32>
    %461 = arith.addf %238, %460 : vector<4x256xf32>
    %462 = tpu.reciprocal %459 : vector<4x256xf32> -> vector<4x256xf32>
    %463 = arith.mulf %461, %462 : vector<4x256xf32>
    %c0_87 = arith.constant 0 : index
    %464 = memref.load %arg9[%c0_87] : memref<2xf32, #tpu.memory_space<smem>>
    %465 = vector.broadcast %464 : f32 to vector<4x256xf32>
    %466 = arith.addf %463, %465 : vector<4x256xf32>
    %cst_88 = arith.constant 0.333333343 : f32
    %467 = vector.broadcast %cst_88 : f32 to vector<8x1024xf32>
    %468 = arith.mulf %425, %467 : vector<8x1024xf32>
    %cst_89 = arith.constant 0.333333343 : f32
    %469 = vector.broadcast %cst_89 : f32 to vector<8x1024xf32>
    %470 = arith.mulf %427, %469 : vector<8x1024xf32>
    %471 = arith.mulf %468, %468 : vector<8x1024xf32>
    %472 = arith.subf %470, %471 : vector<8x1024xf32>
    %473 = vector.broadcast %10 : vector<8x1xf32> to vector<8x1024xf32>
    %474 = arith.mulf %472, %473 : vector<8x1024xf32>
    %cst_90 = arith.constant dense<0.000000e+00> : vector<1024xf32>
    %475 = vector.multi_reduction <add>, %474, %cst_90 [0] : vector<8x1024xf32> to vector<1024xf32>
    %476 = vector.shape_cast %475 : vector<1024xf32> to vector<1x1024xf32>
    %477 = vector.extract_strided_slice %476 {offsets = [0, 0], sizes = [1, 256], strides = [1, 1]} : vector<1x1024xf32> to vector<1x256xf32>
    %478 = vector.extract_strided_slice %476 {offsets = [0, 256], sizes = [1, 256], strides = [1, 1]} : vector<1x1024xf32> to vector<1x256xf32>
    %479 = vector.extract_strided_slice %476 {offsets = [0, 512], sizes = [1, 256], strides = [1, 1]} : vector<1x1024xf32> to vector<1x256xf32>
    %480 = vector.extract_strided_slice %476 {offsets = [0, 768], sizes = [1, 256], strides = [1, 1]} : vector<1x1024xf32> to vector<1x256xf32>
    %481 = tpu.concatenate %477, %478, %479, %480 in 0 : vector<1x256xf32>, vector<1x256xf32>, vector<1x256xf32>, vector<1x256xf32> -> vector<4x256xf32>
    %c1_91 = arith.constant 1 : index
    %482 = memref.load %arg9[%c1_91] : memref<2xf32, #tpu.memory_space<smem>>
    %483 = vector.broadcast %482 : f32 to vector<4x256xf32>
    %484 = arith.addf %481, %483 : vector<4x256xf32>
    %cst_92 = arith.constant dense<0xFF800000> : vector<256xf32>
    %485 = vector.multi_reduction <maximumf>, %466, %cst_92 [0] : vector<4x256xf32> to vector<256xf32>
    %486 = vector.shape_cast %485 : vector<256xf32> to vector<1x256xf32>
    %487 = vector.broadcast %486 : vector<1x256xf32> to vector<4x256xf32>
    %488 = arith.subf %466, %487 : vector<4x256xf32>
    %489 = math.exp %488 : vector<4x256xf32>
    %cst_93 = arith.constant dense<0.000000e+00> : vector<256xf32>
    %490 = vector.multi_reduction <add>, %489, %cst_93 [0] : vector<4x256xf32> to vector<256xf32>
    %491 = vector.shape_cast %490 : vector<256xf32> to vector<1x256xf32>
    %492 = tpu.reciprocal %491 : vector<1x256xf32> -> vector<1x256xf32>
    %493 = vector.broadcast %492 : vector<1x256xf32> to vector<4x256xf32>
    %494 = arith.mulf %489, %493 : vector<4x256xf32>
    %cst_94 = arith.constant dense<0xFF800000> : vector<256xf32>
    %495 = vector.multi_reduction <maximumf>, %484, %cst_94 [0] : vector<4x256xf32> to vector<256xf32>
    %496 = vector.shape_cast %495 : vector<256xf32> to vector<1x256xf32>
    %497 = vector.broadcast %496 : vector<1x256xf32> to vector<4x256xf32>
    %498 = arith.subf %484, %497 : vector<4x256xf32>
    %499 = math.exp %498 : vector<4x256xf32>
    %cst_95 = arith.constant dense<0.000000e+00> : vector<256xf32>
    %500 = vector.multi_reduction <add>, %499, %cst_95 [0] : vector<4x256xf32> to vector<256xf32>
    %501 = vector.shape_cast %500 : vector<256xf32> to vector<1x256xf32>
    %502 = tpu.reciprocal %501 : vector<1x256xf32> -> vector<1x256xf32>
    %503 = vector.broadcast %502 : vector<1x256xf32> to vector<4x256xf32>
    %504 = arith.mulf %499, %503 : vector<4x256xf32>
    %cst_96 = arith.constant 1.000000e+00 : f32
    %505 = vector.broadcast %cst_96 : f32 to vector<1x256xf32>
    %506 = arith.subf %505, %6 : vector<1x256xf32>
    %507 = vector.broadcast %506 : vector<1x256xf32> to vector<4x256xf32>
    %508 = arith.mulf %507, %494 : vector<4x256xf32>
    %509 = vector.broadcast %6 : vector<1x256xf32> to vector<4x256xf32>
    %510 = arith.mulf %509, %504 : vector<4x256xf32>
    %511 = arith.addf %508, %510 : vector<4x256xf32>
    %cst_97 = arith.constant dense<0xFF800000> : vector<256xf32>
    %512 = vector.multi_reduction <maximumf>, %511, %cst_97 [0] : vector<4x256xf32> to vector<256xf32>
    %513 = vector.shape_cast %512 : vector<256xf32> to vector<1x256xf32>
    %cst_98 = arith.constant dense<0xFF800000> : vector<256xf32>
    %514 = vector.multi_reduction <maximumf>, %504, %cst_98 [0] : vector<4x256xf32> to vector<256xf32>
    %515 = vector.shape_cast %514 : vector<256xf32> to vector<1x256xf32>
    %cst_99 = arith.constant dense<0xFF800000> : vector<256xf32>
    %516 = vector.multi_reduction <maximumf>, %494, %cst_99 [0] : vector<4x256xf32> to vector<256xf32>
    %517 = vector.shape_cast %516 : vector<256xf32> to vector<1x256xf32>
    %518 = tpu.iota {dimensions = array<i32: 0>} : vector<4x256xi32>
    %519 = vector.broadcast %513 : vector<1x256xf32> to vector<4x256xf32>
    %520 = arith.cmpf oge, %511, %519 : vector<4x256xf32>
    %c4_i32 = arith.constant 4 : i32
    %521 = vector.broadcast %c4_i32 : i32 to vector<4x256xi32>
    %522 = arith.select %520, %518, %521 : vector<4x256xi1>, vector<4x256xi32>
    %cst_100 = arith.constant dense<2147483647> : vector<256xi32>
    %523 = vector.multi_reduction <minsi>, %522, %cst_100 [0] : vector<4x256xi32> to vector<256xi32>
    %524 = vector.shape_cast %523 : vector<256xi32> to vector<1x256xi32>
    %525 = vector.broadcast %524 : vector<1x256xi32> to vector<4x256xi32>
    %526 = arith.cmpi eq, %518, %525 : vector<4x256xi32>
    %527 = arith.extui %526 : vector<4x256xi1> to vector<4x256xi32>
    %528 = arith.sitofp %527 : vector<4x256xi32> to vector<4x256xf32>
    %529 = arith.mulf %4, %528 : vector<4x256xf32>
    %cst_101 = arith.constant dense<0.000000e+00> : vector<256xf32>
    %530 = vector.multi_reduction <add>, %529, %cst_101 [0] : vector<4x256xf32> to vector<256xf32>
    %531 = vector.shape_cast %530 : vector<256xf32> to vector<1x256xf32>
    %532 = vector.extract_strided_slice %4 {offsets = [2, 0], sizes = [1, 256], strides = [1, 1]} : vector<4x256xf32> to vector<1x256xf32>
    %533 = tpu.reciprocal %532 : vector<1x256xf32> -> vector<1x256xf32>
    %534 = vector.extract_strided_slice %4 {offsets = [1, 0], sizes = [1, 256], strides = [1, 1]} : vector<4x256xf32> to vector<1x256xf32>
    %535 = tpu.reciprocal %534 : vector<1x256xf32> -> vector<1x256xf32>
    %536 = arith.subf %533, %535 : vector<1x256xf32>
    %537 = tpu.reciprocal %531 : vector<1x256xf32> -> vector<1x256xf32>
    %cst_102 = arith.constant 5.000000e-01 : f32
    %538 = vector.broadcast %cst_102 : f32 to vector<1x256xf32>
    %539 = arith.mulf %538, %536 : vector<1x256xf32>
    %540 = arith.addf %537, %539 : vector<1x256xf32>
    %cst_103 = arith.constant 5.000000e-01 : f32
    %541 = vector.broadcast %cst_103 : f32 to vector<1x256xf32>
    %542 = arith.mulf %541, %536 : vector<1x256xf32>
    %543 = arith.subf %537, %542 : vector<1x256xf32>
    %cst_104 = arith.constant 0.000000e+00 : f32
    %544 = vector.broadcast %cst_104 : f32 to vector<1x256xf32>
    %545 = tpu.concatenate %531, %513, %515, %517, %536, %540, %543, %544 in 0 : vector<1x256xf32>, vector<1x256xf32>, vector<1x256xf32>, vector<1x256xf32>, vector<1x256xf32>, vector<1x256xf32>, vector<1x256xf32>, vector<1x256xf32> -> vector<8x256xf32>
    %c0_105 = arith.constant 0 : index
    %c0_106 = arith.constant 0 : index
    %c0_107 = arith.constant 0 : index
    %546 = vector.load %arg10[%c0_105, %c0_106, %c0_107] : memref<1x8x256xf32, #tpu.memory_space<vmem>>, vector<1x8x256xf32>
    %547 = vector.shape_cast %546 : vector<1x8x256xf32> to vector<8x256xf32>
    %548 = vector.shape_cast %545 : vector<8x256xf32> to vector<1x8x256xf32>
    tpu.vector_store %arg10[%c0_105, %c0_106, %c0_107], %548 {strides = array<i32>} : memref<1x8x256xf32, #tpu.memory_space<vmem>>, vector<1x8x256xf32>,
    %c0_108 = arith.constant 0 : index
    %c0_109 = arith.constant 0 : index
    %c0_110 = arith.constant 0 : index
    %549 = vector.load %arg11[%c0_108, %c0_109, %c0_110] : memref<1x4x256xf32, #tpu.memory_space<vmem>>, vector<1x4x256xf32>
    %550 = vector.shape_cast %549 : vector<1x4x256xf32> to vector<4x256xf32>
    %551 = vector.shape_cast %511 : vector<4x256xf32> to vector<1x4x256xf32>
    tpu.vector_store %arg11[%c0_108, %c0_109, %c0_110], %551 {strides = array<i32>} : memref<1x4x256xf32, #tpu.memory_space<vmem>>, vector<1x4x256xf32>,
    return
  }
  func.func @transform_0(%arg0: i32) -> (i32, i32, i32) {
    %c0_i32 = arith.constant 0 : i32
    %c0_i32_0 = arith.constant 0 : i32
    %c0_i32_1 = arith.constant 0 : i32
    return %arg0, %c0_i32, %c0_i32_0 : i32, i32, i32
  }
  func.func @transform_1(%arg0: i32) -> (i32, i32, i32) {
    %c0_i32 = arith.constant 0 : i32
    %c0_i32_0 = arith.constant 0 : i32
    %c0_i32_1 = arith.constant 0 : i32
    return %arg0, %c0_i32, %c0_i32_0 : i32, i32, i32
  }
  func.func @transform_2(%arg0: i32) -> (i32, i32, i32) {
    %c0_i32 = arith.constant 0 : i32
    %c0_i32_0 = arith.constant 0 : i32
    %c0_i32_1 = arith.constant 0 : i32
    return %arg0, %c0_i32, %c0_i32_0 : i32, i32, i32
  }
  func.func @transform_3(%arg0: i32) -> (i32, i32, i32) {
    %c0_i32 = arith.constant 0 : i32
    %c0_i32_0 = arith.constant 0 : i32
    %c0_i32_1 = arith.constant 0 : i32
    return %arg0, %c0_i32, %c0_i32_0 : i32, i32, i32
  }
  func.func @transform_4(%arg0: i32) -> (i32, i32) {
    %c0_i32 = arith.constant 0 : i32
    %c0_i32_0 = arith.constant 0 : i32
    %c0_i32_1 = arith.constant 0 : i32
    return %c0_i32, %c0_i32_0 : i32, i32
  }
  func.func @transform_5(%arg0: i32) -> (i32, i32) {
    %c0_i32 = arith.constant 0 : i32
    %c0_i32_0 = arith.constant 0 : i32
    %c0_i32_1 = arith.constant 0 : i32
    return %c0_i32, %c0_i32_0 : i32, i32
  }
  func.func @transform_6(%arg0: i32) -> (i32, i32) {
    %c0_i32 = arith.constant 0 : i32
    %c0_i32_0 = arith.constant 0 : i32
    %c0_i32_1 = arith.constant 0 : i32
    return %c0_i32, %c0_i32_0 : i32, i32
  }
  func.func @transform_7(%arg0: i32) -> (i32, i32) {
    %c0_i32 = arith.constant 0 : i32
    %c0_i32_0 = arith.constant 0 : i32
    %c0_i32_1 = arith.constant 0 : i32
    return %c0_i32, %c0_i32_0 : i32, i32
  }
  func.func @transform_8(%arg0: i32) -> i32 {
    %c0_i32 = arith.constant 0 : i32
    %c0_i32_0 = arith.constant 0 : i32
    return %c0_i32 : i32
  }
  func.func @transform_9(%arg0: i32) -> (i32, i32, i32) {
    %c0_i32 = arith.constant 0 : i32
    %c0_i32_0 = arith.constant 0 : i32
    %c0_i32_1 = arith.constant 0 : i32
    return %arg0, %c0_i32, %c0_i32_0 : i32, i32, i32
  }
  func.func @transform_10(%arg0: i32) -> (i32, i32, i32) {
    %c0_i32 = arith.constant 0 : i32
    %c0_i32_0 = arith.constant 0 : i32
    %c0_i32_1 = arith.constant 0 : i32
    return %arg0, %c0_i32, %c0_i32_0 : i32, i32, i32
  }
}

</mosaic_0001>

<llo_original>
// kernel: tpu_custom_call.1
$region0: #{tpu_custom_call.1}
  #allocation0 [shape = 'u32[]', space=smem, size = 0x4, offset = 0x4, fixed_abs, tag = 'smem constant byte address 0x4 - core index']
  #allocation1 [shape = 'u32[72,128]{1,0:T(1,128)}', space=vmem, size = 0x9000, scoped, tag = 'internal scratch']
  %s0 = inlined_call_operand.vmem [shape: f32[2,8,256], index: 0, kind: input, shape index: {}]
  %s1 = inlined_call_operand.vmem [shape: f32[2,256,16], index: 1, kind: input, shape index: {}]
  %s2 = inlined_call_operand.vmem [shape: f32[2,4,256], index: 2, kind: input, shape index: {}]
  %s3 = inlined_call_operand.vmem [shape: f32[2,1,256], index: 3, kind: input, shape index: {}]
  %s4 = inlined_call_operand.vmem [shape: f32[2,256], index: 4, kind: input, shape index: {}]
  %s5 = inlined_call_operand.vmem [shape: f32[8,1], index: 5, kind: input, shape index: {}]
  %s6 = inlined_call_operand.vmem [shape: f32[8,1], index: 6, kind: input, shape index: {}]
  %s7 = inlined_call_operand.vmem [shape: f32[2,24], index: 7, kind: input, shape index: {}]
  %s8 = inlined_call_operand.vmem [shape: f32[2], index: 8, kind: input, shape index: {}]
  %s9 = inlined_call_operand.hbm [shape: f32[2,8,256], index: 9, kind: output, shape index: {0}]
  %s10 = inlined_call_operand.hbm [shape: f32[2,4,256], index: 10, kind: output, shape index: {1}]
  %11 = xla_tuple %s9, %s10
  %s12 = sld [smem:[#allocation0]]
  $region85: #{tpu_custom_call.1} parent=0
    _
  %s14 = ssub.s32 1, %s12
  %s15 = scalar_select 0, %s14, %s12
  $region1: #{tpu_custom_call.1} parent=0
    #allocation2 [shape = 'u8[1024]{0}', space=smem, size = 0x400, scoped, tag = 'input window, operand 7, single buffered']
    #allocation3 [shape = 's32[2]{0}', space=sflag, size = 0x8, scoped, tag = 'scoped memory for tpu_custom_call.1']
    #allocation4 [shape = 's32[2]{0}', space=sflag, size = 0x8, scoped, tag = 'scoped memory for tpu_custom_call.1']
    #allocation5 [shape = 'u8[512]{0}', space=smem, size = 0x200, scoped, tag = 'input window, operand 8, single buffered']
    #allocation6 [shape = 's32[1]{0}', space=sflag, size = 0x4, scoped, tag = 'scoped memory for tpu_custom_call.1']
    #allocation7 [shape = 'u8[16384]{0}', space=vmem, size = 0x4000, scoped, tag = 'output window, operand 0']
    #allocation8 [shape = 'u8[8192]{0}', space=vmem, size = 0x2000, scoped, tag = 'output window, operand 1']
    #allocation9 [shape = 's32[2]{0}', space=sflag, size = 0x8, scoped, tag = 'scoped memory for tpu_custom_call.1']
    %16 = vsyncpa [#allocation4], 0
    %17 = vsyncpa [#allocation6], 0
    %18 = vsyncpa [#allocation3], 0
    %s19 = scalar_lea.sflag [#allocation3], 1
    %20 = vsyncpa %s19, 0
    %21 = vsyncpa [#allocation9], 0
    %s22 = scalar_lea.sflag [#allocation9], 1
    %23 = vsyncpa %s22, 0
    loop: start=0, step=1, limit=4
    $region2: #{tpu_custom_call.1} parent=1 // loop_pre_header
      _
    $region3: #{tpu_custom_call.1} parent=1 // loop_header
      %s25 = sphi 0, %s29
      %p26 = scmp.ge.s32.totalorder %s25, 4
      %s35 = sphi 0, %s37
      %s38 = sphi 0, %s35
      %s39 = sphi 0, %s38
      %s55 = sphi 0, %s39
      %s61 = sphi 0, %s63
      %s64 = sphi 0, %s61
      %s65 = sphi 0, %s64
      %s81 = sphi 0, %s65
      %s87 = sphi 0, %s89
      %s90 = sphi 0, %s87
      %s91 = sphi 0, %s90
      %s107 = sphi 0, %s91
      %s113 = sphi 0, %s115
      %s116 = sphi 0, %s113
      %s117 = sphi 0, %s116
      %s133 = sphi 0, %s117
      %s137 = sphi 0, %s137
      %s139 = sphi 0, %s137
      %s140 = sphi 0, %s139
      %s154 = sphi 0, %s140
      %s158 = sphi 0, %s158
      %s160 = sphi 0, %s158
      %s161 = sphi 0, %s160
      %s175 = sphi 0, %s161
      %s179 = sphi 0, %s179
      %s181 = sphi 0, %s179
      %s182 = sphi 0, %s181
      %s196 = sphi 0, %s182
      %s200 = sphi 0, %s200
      %s202 = sphi 0, %s200
      %s203 = sphi 0, %s202
      %s217 = sphi 0, %s203
      %s221 = sphi 0, %s221
      %s223 = sphi 0, %s221
      %s224 = sphi 0, %s223
      %s238 = sphi 0, %s224
      %s244 = sphi 0, %s246
      %s247 = sphi 0, %s244
      %s248 = sphi 0, %s247
      %s264 = sphi 0, %s248
      %s270 = sphi 0, %s272
      %s273 = sphi 0, %s270
      %s274 = sphi 0, %s273
      %s290 = sphi 0, %s274
    $region4: #{tpu_custom_call.1} parent=1 // loop_header_branch
      %28 = sbr.rel (%p26) target = $region8
    $region5: #{tpu_custom_call.1} parent=1 // loop_body
      %s30 = ssub.s32 %s25, 1
      %s31 = ssub.s32 %s25, 2
      %s32 = sadd.s32 %s25, 1
      %s33 = ssub.s32 %s25, %s32
      %p34 = scmp.eq.s32.totalorder %s33, 0
      %s36 = sadd.s32 %s35, 1
      %s37 = scalar_select %p34, %s35, %s36
      %p40 = pneg %p34
      %p41 = scmp.eq.s32.totalorder %s25, 1
      %p42 = por %p40, %p41
      %p43 = scmp.ne.s32.totalorder %s35, %s38
      %p44 = scmp.eq.s32.totalorder %s25, 0
      %p45 = por %p43, %p44
      %p46 = scmp.ne.s32.totalorder %s35, %s38
      %p47 = scmp.eq.s32.totalorder %s30, 1
      %p48 = por %p46, %p47
      %p49 = scmp.ne.s32.totalorder %s38, %s39
      %p50 = scmp.eq.s32.totalorder %s30, 0
      %p51 = por %p49, %p50
      %p52 = scmp.ne.s32.totalorder %s38, %s39
      %p53 = scmp.eq.s32.totalorder %s31, 1
      %p54 = por %p52, %p53
      %p56 = scmp.ne.s32.totalorder %s39, %s55
      %p57 = scmp.eq.s32.totalorder %s31, 0
      %p58 = por %p56, %p57
      %s59 = ssub.s32 %s25, %s32
      %p60 = scmp.eq.s32.totalorder %s59, 0
      %s62 = sadd.s32 %s61, 1
      %s63 = scalar_select %p60, %s61, %s62
      %p66 = pneg %p60
      %p67 = scmp.eq.s32.totalorder %s25, 1
      %p68 = por %p66, %p67
      %p69 = scmp.ne.s32.totalorder %s61, %s64
      %p70 = scmp.eq.s32.totalorder %s25, 0
      %p71 = por %p69, %p70
      %p72 = scmp.ne.s32.totalorder %s61, %s64
      %p73 = scmp.eq.s32.totalorder %s30, 1
      %p74 = por %p72, %p73
      %p75 = scmp.ne.s32.totalorder %s64, %s65
      %p76 = scmp.eq.s32.totalorder %s30, 0
      %p77 = por %p75, %p76
      %p78 = scmp.ne.s32.totalorder %s64, %s65
      %p79 = scmp.eq.s32.totalorder %s31, 1
      %p80 = por %p78, %p79
      %p82 = scmp.ne.s32.totalorder %s65, %s81
      %p83 = scmp.eq.s32.totalorder %s31, 0
      %p84 = por %p82, %p83
      %s85 = ssub.s32 %s25, %s32
      %p86 = scmp.eq.s32.totalorder %s85, 0
      %s88 = sadd.s32 %s87, 1
      %s89 = scalar_select %p86, %s87, %s88
      %p92 = pneg %p86
      %p93 = scmp.eq.s32.totalorder %s25, 1
      %p94 = por %p92, %p93
      %p95 = scmp.ne.s32.totalorder %s87, %s90
      %p96 = scmp.eq.s32.totalorder %s25, 0
      %p97 = por %p95, %p96
      %p98 = scmp.ne.s32.totalorder %s87, %s90
      %p99 = scmp.eq.s32.totalorder %s30, 1
      %p100 = por %p98, %p99
      %p101 = scmp.ne.s32.totalorder %s90, %s91
      %p102 = scmp.eq.s32.totalorder %s30, 0
      %p103 = por %p101, %p102
      %p104 = scmp.ne.s32.totalorder %s90, %s91
      %p105 = scmp.eq.s32.totalorder %s31, 1
      %p106 = por %p104, %p105
      %p108 = scmp.ne.s32.totalorder %s91, %s107
      %p109 = scmp.eq.s32.totalorder %s31, 0
      %p110 = por %p108, %p109
      %s111 = ssub.s32 %s25, %s32
      %p112 = scmp.eq.s32.totalorder %s111, 0
      %s114 = sadd.s32 %s113, 1
      %s115 = scalar_select %p112, %s113, %s114
      %p118 = pneg %p112
      %p119 = scmp.eq.s32.totalorder %s25, 1
      %p120 = por %p118, %p119
      %p121 = scmp.ne.s32.totalorder %s113, %s116
      %p122 = scmp.eq.s32.totalorder %s25, 0
      %p123 = por %p121, %p122
      %p124 = scmp.ne.s32.totalorder %s113, %s116
      %p125 = scmp.eq.s32.totalorder %s30, 1
      %p126 = por %p124, %p125
      %p127 = scmp.ne.s32.totalorder %s116, %s117
      %p128 = scmp.eq.s32.totalorder %s30, 0
      %p129 = por %p127, %p128
      %p130 = scmp.ne.s32.totalorder %s116, %s117
      %p131 = scmp.eq.s32.totalorder %s31, 1
      %p132 = por %p130, %p131
      %p134 = scmp.ne.s32.totalorder %s117, %s133
      %p135 = scmp.eq.s32.totalorder %s31, 0
      %p136 = por %p134, %p135
      %s138 = sadd.s32 %s137, 1
      %p141 = scmp.eq.s32.totalorder %s25, 1
      %p142 = scmp.ne.s32.totalorder %s137, %s139
      %p143 = scmp.eq.s32.totalorder %s25, 0
      %p144 = por %p142, %p143
      %p145 = scmp.ne.s32.totalorder %s137, %s139
      %p146 = scmp.eq.s32.totalorder %s30, 1
      %p147 = por %p145, %p146
      %p148 = scmp.ne.s32.totalorder %s139, %s140
      %p149 = scmp.eq.s32.totalorder %s30, 0
      %p150 = por %p148, %p149
      %p151 = scmp.ne.s32.totalorder %s139, %s140
      %p152 = scmp.eq.s32.totalorder %s31, 1
      %p153 = por %p151, %p152
      %p155 = scmp.ne.s32.totalorder %s140, %s154
      %p156 = scmp.eq.s32.totalorder %s31, 0
      %p157 = por %p155, %p156
      %s159 = sadd.s32 %s158, 1
      %p162 = scmp.eq.s32.totalorder %s25, 1
      %p163 = scmp.ne.s32.totalorder %s158, %s160
      %p164 = scmp.eq.s32.totalorder %s25, 0
      %p165 = por %p163, %p164
      %p166 = scmp.ne.s32.totalorder %s158, %s160
      %p167 = scmp.eq.s32.totalorder %s30, 1
      %p168 = por %p166, %p167
      %p169 = scmp.ne.s32.totalorder %s160, %s161
      %p170 = scmp.eq.s32.totalorder %s30, 0
      %p171 = por %p169, %p170
      %p172 = scmp.ne.s32.totalorder %s160, %s161
      %p173 = scmp.eq.s32.totalorder %s31, 1
      %p174 = por %p172, %p173
      %p176 = scmp.ne.s32.totalorder %s161, %s175
      %p177 = scmp.eq.s32.totalorder %s31, 0
      %p178 = por %p176, %p177
      %s180 = sadd.s32 %s179, 1
      %p183 = scmp.eq.s32.totalorder %s25, 1
      %p184 = scmp.ne.s32.totalorder %s179, %s181
      %p185 = scmp.eq.s32.totalorder %s25, 0
      %p186 = por %p184, %p185
      %p187 = scmp.ne.s32.totalorder %s179, %s181
      %p188 = scmp.eq.s32.totalorder %s30, 1
      %p189 = por %p187, %p188
      %p190 = scmp.ne.s32.totalorder %s181, %s182
      %p191 = scmp.eq.s32.totalorder %s30, 0
      %p192 = por %p190, %p191
      %p193 = scmp.ne.s32.totalorder %s181, %s182
      %p194 = scmp.eq.s32.totalorder %s31, 1
      %p195 = por %p193, %p194
      %p197 = scmp.ne.s32.totalorder %s182, %s196
      %p198 = scmp.eq.s32.totalorder %s31, 0
      %p199 = por %p197, %p198
      %s201 = sadd.s32 %s200, 1
      %p204 = scmp.eq.s32.totalorder %s25, 1
      %p205 = scmp.ne.s32.totalorder %s200, %s202
      %p206 = scmp.eq.s32.totalorder %s25, 0
      %p207 = por %p205, %p206
      %p208 = scmp.ne.s32.totalorder %s200, %s202
      %p209 = scmp.eq.s32.totalorder %s30, 1
      %p210 = por %p208, %p209
      %p211 = scmp.ne.s32.totalorder %s202, %s203
      %p212 = scmp.eq.s32.totalorder %s30, 0
      %p213 = por %p211, %p212
      %p214 = scmp.ne.s32.totalorder %s202, %s203
      %p215 = scmp.eq.s32.totalorder %s31, 1
      %p216 = por %p214, %p215
      %p218 = scmp.ne.s32.totalorder %s203, %s217
      %p219 = scmp.eq.s32.totalorder %s31, 0
      %p220 = por %p218, %p219
      %s222 = sadd.s32 %s221, 1
      %p225 = scmp.eq.s32.totalorder %s25, 1
      %p226 = scmp.ne.s32.totalorder %s221, %s223
      %p227 = scmp.eq.s32.totalorder %s25, 0
      %p228 = por %p226, %p227
      %p229 = scmp.ne.s32.totalorder %s221, %s223
      %p230 = scmp.eq.s32.totalorder %s30, 1
      %p231 = por %p229, %p230
      %p232 = scmp.ne.s32.totalorder %s223, %s224
      %p233 = scmp.eq.s32.totalorder %s30, 0
      %p234 = por %p232, %p233
      %p235 = scmp.ne.s32.totalorder %s223, %s224
      %p236 = scmp.eq.s32.totalorder %s31, 1
      %p237 = por %p235, %p236
      %p239 = scmp.ne.s32.totalorder %s224, %s238
      %p240 = scmp.eq.s32.totalorder %s31, 0
      %p241 = por %p239, %p240
      %s242 = ssub.s32 %s25, %s32
      %p243 = scmp.eq.s32.totalorder %s242, 0
      %s245 = sadd.s32 %s244, 1
      %s246 = scalar_select %p243, %s244, %s245
      %p249 = pneg %p243
      %p250 = scmp.eq.s32.totalorder %s25, 1
      %p251 = por %p249, %p250
      %p252 = scmp.ne.s32.totalorder %s244, %s247
      %p253 = scmp.eq.s32.totalorder %s25, 0
      %p254 = por %p252, %p253
      %p255 = scmp.ne.s32.totalorder %s244, %s247
      %p256 = scmp.eq.s32.totalorder %s30, 1
      %p257 = por %p255, %p256
      %p258 = scmp.ne.s32.totalorder %s247, %s248
      %p259 = scmp.eq.s32.totalorder %s30, 0
      %p260 = por %p258, %p259
      %p261 = scmp.ne.s32.totalorder %s247, %s248
      %p262 = scmp.eq.s32.totalorder %s31, 1
      %p263 = por %p261, %p262
      %p265 = scmp.ne.s32.totalorder %s248, %s264
      %p266 = scmp.eq.s32.totalorder %s31, 0
      %p267 = por %p265, %p266
      %s268 = ssub.s32 %s25, %s32
      %p269 = scmp.eq.s32.totalorder %s268, 0
      %s271 = sadd.s32 %s270, 1
      %s272 = scalar_select %p269, %s270, %s271
      %p275 = pneg %p269
      %p276 = scmp.eq.s32.totalorder %s25, 1
      %p277 = por %p275, %p276
      %p278 = scmp.ne.s32.totalorder %s270, %s273
      %p279 = scmp.eq.s32.totalorder %s25, 0
      %p280 = por %p278, %p279
      %p281 = scmp.ne.s32.totalorder %s270, %s273
      %p282 = scmp.eq.s32.totalorder %s30, 1
      %p283 = por %p281, %p282
      %p284 = scmp.ne.s32.totalorder %s273, %s274
      %p285 = scmp.eq.s32.totalorder %s30, 0
      %p286 = por %p284, %p285
      %p287 = scmp.ne.s32.totalorder %s273, %s274
      %p288 = scmp.eq.s32.totalorder %s31, 1
      %p289 = por %p287, %p288
      %p291 = scmp.ne.s32.totalorder %s274, %s290
      %p292 = scmp.eq.s32.totalorder %s31, 0
      %p293 = por %p291, %p292
      %p294 = scmp.le.s32.totalorder 1, %s25
      %p295 = scmp.lt.s32.totalorder %s25, 3
      %p296 = pnand %p294, %p295
      %p297 = pneg %p296
      // Predicated region
      $region9: #{tpu_custom_call.1} parent=5 // pred_check
        _
      $region10: #{tpu_custom_call.1} parent=5 // pred_check_branch
        %299 = sbr.rel (%p296) target = $region12
      $region11: #{tpu_custom_call.1} parent=5 // pred_region
        %s300 = ssub.s32 %s25, 1
        // Predicated region
        $region13: #{tpu_custom_call.1} parent=11 // pred_check
          %p301 = pneg %p150
        $region14: #{tpu_custom_call.1} parent=11 // pred_check_branch
          %303 = sbr.rel (%p301) target = $region16
        $region15: #{tpu_custom_call.1} parent=11 // pred_region
          _
        $region16: #{tpu_custom_call.1} parent=11 // pred_fallthru
          _
        // Predicated region
        $region17: #{tpu_custom_call.1} parent=11 // pred_check
          %p304 = pneg %p171
        $region18: #{tpu_custom_call.1} parent=11 // pred_check_branch
          %306 = sbr.rel (%p304) target = $region20
        $region19: #{tpu_custom_call.1} parent=11 // pred_region
          _
        $region20: #{tpu_custom_call.1} parent=11 // pred_fallthru
          _
        // Predicated region
        $region21: #{tpu_custom_call.1} parent=11 // pred_check
          %p307 = pneg %p192
        $region22: #{tpu_custom_call.1} parent=11 // pred_check_branch
          %309 = sbr.rel (%p307) target = $region24
        $region23: #{tpu_custom_call.1} parent=11 // pred_region
          _
        $region24: #{tpu_custom_call.1} parent=11 // pred_fallthru
          _
        // Predicated region
        $region25: #{tpu_custom_call.1} parent=11 // pred_check
          %p310 = pneg %p213
        $region26: #{tpu_custom_call.1} parent=11 // pred_check_branch
          %312 = sbr.rel (%p310) target = $region28
        $region27: #{tpu_custom_call.1} parent=11 // pred_region
          %314 = vsyncadd [#allocation4], 0
          %s316 = sshll.u32 %s7, 4
          %s317 = int_to_ptr.vmem [resolvable:$true] %s316
          %319 = dma.vmem_to_smem %s317, 32, [#allocation2], [#allocation4]
        $region28: #{tpu_custom_call.1} parent=11 // pred_fallthru
          _
        // Predicated region
        $region29: #{tpu_custom_call.1} parent=11 // pred_check
          %p320 = pneg %p234
        $region30: #{tpu_custom_call.1} parent=11 // pred_check_branch
          %322 = sbr.rel (%p320) target = $region32
        $region31: #{tpu_custom_call.1} parent=11 // pred_region
          %324 = vsyncadd [#allocation6], 0
          %s326 = sshll.u32 %s8, 4
          %s327 = int_to_ptr.vmem [resolvable:$true] %s326
          %329 = dma.vmem_to_smem %s327, 16, [#allocation5], [#allocation6]
        $region32: #{tpu_custom_call.1} parent=11 // pred_fallthru
          _
      $region12: #{tpu_custom_call.1} parent=5 // pred_fallthru
        _
      %p330 = scmp.lt.s32.totalorder %s25, 2
      // Predicated region
      $region33: #{tpu_custom_call.1} parent=5 // pred_check
        %p331 = pneg %p330
      $region34: #{tpu_custom_call.1} parent=5 // pred_check_branch
        %333 = sbr.rel (%p331) target = $region36
      $region35: #{tpu_custom_call.1} parent=5 // pred_region
        // Predicated region
        $region37: #{tpu_custom_call.1} parent=35 // pred_check
          %p334 = pneg %p45
        $region38: #{tpu_custom_call.1} parent=35 // pred_check_branch
          %336 = sbr.rel (%p334) target = $region40
        $region39: #{tpu_custom_call.1} parent=35 // pred_region
          %p337 = scmp.lt.s32.totalorder %s25, 1
          %s338 = scalar_select %p337, %s25, 1
          %s339 = smul.addr %s338, 2
          %s340 = smul.addr %s339, 8
          %s341 = scalar_lea.vmem %s0, %s340
        $region40: #{tpu_custom_call.1} parent=35 // pred_fallthru
          _
        // Predicated region
        $region41: #{tpu_custom_call.1} parent=35 // pred_check
          %p342 = pneg %p71
        $region42: #{tpu_custom_call.1} parent=35 // pred_check_branch
          %344 = sbr.rel (%p342) target = $region44
        $region43: #{tpu_custom_call.1} parent=35 // pred_region
          %p345 = scmp.lt.s32.totalorder %s25, 1
          %s346 = scalar_select %p345, %s25, 1
          %s347 = smul.addr %s346, 32
          %s348 = smul.addr %s347, 8
          %s349 = scalar_lea.vmem %s1, %s348
        $region44: #{tpu_custom_call.1} parent=35 // pred_fallthru
          _
        // Predicated region
        $region45: #{tpu_custom_call.1} parent=35 // pred_check
          %p350 = pneg %p97
        $region46: #{tpu_custom_call.1} parent=35 // pred_check_branch
          %352 = sbr.rel (%p350) target = $region48
        $region47: #{tpu_custom_call.1} parent=35 // pred_region
          %p353 = scmp.lt.s32.totalorder %s25, 1
          %s354 = scalar_select %p353, %s25, 1
          %s355 = smul.addr %s354, 2
          %s356 = smul.addr %s355, 4
          %s357 = scalar_lea.vmem %s2, %s356
        $region48: #{tpu_custom_call.1} parent=35 // pred_fallthru
          _
        // Predicated region
        $region49: #{tpu_custom_call.1} parent=35 // pred_check
          %p358 = pneg %p123
        $region50: #{tpu_custom_call.1} parent=35 // pred_check_branch
          %360 = sbr.rel (%p358) target = $region52
        $region51: #{tpu_custom_call.1} parent=35 // pred_region
          %p361 = scmp.lt.s32.totalorder %s25, 1
          %s362 = scalar_select %p361, %s25, 1
          %s363 = smul.addr %s362, 2
          %s364 = scalar_lea.vmem %s3, %s363
        $region52: #{tpu_custom_call.1} parent=35 // pred_fallthru
          _
      $region36: #{tpu_custom_call.1} parent=5 // pred_fallthru
        _
      %p365 = scmp.le.s32.totalorder 1, %s25
      %p366 = scmp.lt.s32.totalorder %s25, 3
      %p367 = pnand %p365, %p366
      %p368 = pneg %p367
      // Predicated region
      $region53: #{tpu_custom_call.1} parent=5 // pred_check
        _
      $region54: #{tpu_custom_call.1} parent=5 // pred_check_branch
        %370 = sbr.rel (%p367) target = $region56
      $region55: #{tpu_custom_call.1} parent=5 // pred_region
        %s371 = ssub.s32 %s25, 1
        // Predicated region
        $region57: #{tpu_custom_call.1} parent=55 // pred_check
          %p372 = pneg %p213
        $region58: #{tpu_custom_call.1} parent=55 // pred_check_branch
          %374 = sbr.rel (%p372) target = $region60
        $region59: #{tpu_custom_call.1} parent=55 // pred_region
          %376 = dma.done [#allocation4], 32
        $region60: #{tpu_custom_call.1} parent=55 // pred_fallthru
          _
        // Predicated region
        $region61: #{tpu_custom_call.1} parent=55 // pred_check
          %p377 = pneg %p234
        $region62: #{tpu_custom_call.1} parent=55 // pred_check_branch
          %379 = sbr.rel (%p377) target = $region64
        $region63: #{tpu_custom_call.1} parent=55 // pred_region
          %381 = dma.done [#allocation6], 16
        $region64: #{tpu_custom_call.1} parent=55 // pred_fallthru
          _
        %382 = sfence
        %p383 = scmp.lt.s32.totalorder %s30, 1
        %s384 = scalar_select %p383, %s30, 1
        %s385 = smul.addr %s384, 2
        %s386 = smul.addr %s385, 8
        %s387 = scalar_lea.vmem %s0, %s386
        %p388 = pneg %p51
        %p389 = pneg %p48
        %p390 = scmp.lt.s32.totalorder %s30, 1
        %s391 = scalar_select %p390, %s30, 1
        %s392 = smul.addr %s391, 32
        %s393 = smul.addr %s392, 8
        %s394 = scalar_lea.vmem %s1, %s393
        %p395 = pneg %p77
        %p396 = pneg %p74
        %p397 = scmp.lt.s32.totalorder %s30, 1
        %s398 = scalar_select %p397, %s30, 1
        %s399 = smul.addr %s398, 2
        %s400 = smul.addr %s399, 4
        %s401 = scalar_lea.vmem %s2, %s400
        %p402 = pneg %p103
        %p403 = pneg %p100
        %p404 = scmp.lt.s32.totalorder %s30, 1
        %s405 = scalar_select %p404, %s30, 1
        %s406 = smul.addr %s405, 2
        %s407 = scalar_lea.vmem %s3, %s406
        %p408 = pneg %p129
        %p409 = pneg %p126
        %p410 = pneg %p150
        %p411 = pneg %p147
        %p412 = pneg %p171
        %p413 = pneg %p168
        %p414 = pneg %p192
        %p415 = pneg %p189
        %p416 = pneg %p213
        %p417 = pneg %p210
        %p418 = pneg %p234
        %p419 = pneg %p231
        %p420 = pneg %p260
        %p421 = pneg %p257
        %s422 = sand.u32 %s247, 1
        %s423 = scalar_lea.sflag [#allocation3], %s422
        %s424 = sand.u32 %s247, 1
        %s425 = smul.addr %s424, 16
        %s426 = scalar_lea.vmem [#allocation7], %s425
        %p427 = pneg %p286
        %p428 = pneg %p283
        %s429 = sand.u32 %s273, 1
        %s430 = scalar_lea.sflag [#allocation9], %s429
        %s431 = sand.u32 %s273, 1
        %s432 = smul.addr %s431, 8
        %s433 = scalar_lea.vmem [#allocation8], %s432
        %p434 = scmp.lt.s32.totalorder %s30, 1
        %s435 = scalar_select %p434, %s30, 1
        %s436 = smul.addr %s435, 2
        %s437 = smul.addr %s436, 8
        %s438 = scalar_lea.vmem %s0, %s437
        %p439 = scmp.lt.s32.totalorder %s30, 1
        %s440 = scalar_select %p439, %s30, 1
        %s441 = smul.addr %s440, 32
        %s442 = smul.addr %s441, 8
        %s443 = scalar_lea.vmem %s1, %s442
        %p444 = scmp.lt.s32.totalorder %s30, 1
        %s445 = scalar_select %p444, %s30, 1
        %s446 = smul.addr %s445, 2
        %s447 = smul.addr %s446, 4
        %s448 = scalar_lea.vmem %s2, %s447
        %p449 = scmp.lt.s32.totalorder %s30, 1
        %s450 = scalar_select %p449, %s30, 1
        %s451 = smul.addr %s450, 2
        %s452 = scalar_lea.vmem %s3, %s451
        %v453 = vld [vmem:[%s438] sm:$0xff]
        %v454 = vld [vmem:[%s438 + $0x8] sm:$0xff]
        %v455 = vld [vmem:[%s448] sm:$0xff]
        %v456 = vld [vmem:[%s452] sm:$0x3]
        %v457 = vld [vmem:[%s4] ss:$2 sm:$0x3]
        %s458 = scalar_lea.vmem %s4, 1
        %v459 = vld [vmem:[%s458] ss:$2 sm:$0x3]
        %v460 = vld [vmem:[%s5] sm:$0xff]
        %v461 = vld [vmem:[%s6] sm:$0xff]
        %v462 = vlaneseq
        %v463 = vshrl.u32 %v462, 7
        %v464 = vadd.s32 %v463, 8
        %v465 = vmul.f32 %v453, %v453
        %v466 = vmul.f32 %v454, %v454
        %s467 = smul.u32 %s30, 128
        %s468 = sld [smem:[#allocation2 + %s467]]
        %s469 = sadd.s32 %s467, 1
        %s470 = sld [smem:[#allocation2 + %s469]]
        %s471 = sadd.s32 %s467, 2
        %s472 = sld [smem:[#allocation2 + %s471]]
        %s473 = sadd.s32 %s467, 3
        %s474 = sld [smem:[#allocation2 + %s473]]
        %s475 = sadd.s32 %s467, 4
        %s476 = sld [smem:[#allocation2 + %s475]]
        %s477 = sadd.s32 %s467, 5
        %s478 = sld [smem:[#allocation2 + %s477]]
        %s479 = sadd.s32 %s467, 6
        %s480 = sld [smem:[#allocation2 + %s479]]
        %s481 = sadd.s32 %s467, 7
        %s482 = sld [smem:[#allocation2 + %s481]]
        %s483 = sadd.s32 %s467, 8
        %s484 = sld [smem:[#allocation2 + %s483]]
        %s485 = sadd.s32 %s467, 9
        %s486 = sld [smem:[#allocation2 + %s485]]
        %s487 = sadd.s32 %s467, 10
        %s488 = sld [smem:[#allocation2 + %s487]]
        %s489 = sadd.s32 %s467, 11
        %s490 = sld [smem:[#allocation2 + %s489]]
        %v491 = vstv %s468
        %v492 = vmul.f32 %v491, %v457
        %v493 = vstv %s470
        %v494 = vmul.f32 %v493, %v459
        %v495 = vadd.f32 %v492, %v494
        %v496 = vstv %s472
        %v497 = vadd.f32 %v495, %v496
        %v498 = vstv %s474
        %v499 = vmul.f32 %v498, %v457
        %v500 = vstv %s476
        %v501 = vmul.f32 %v500, %v459
        %v502 = vadd.f32 %v499, %v501
        %v503 = vstv %s478
        %v504 = vadd.f32 %v502, %v503
        %v505 = vstv %s480
        %v506 = vmul.f32 %v505, %v457
        %v507 = vstv %s482
        %v508 = vmul.f32 %v507, %v459
        %v509 = vadd.f32 %v506, %v508
        %v510 = vstv %s484
        %v511 = vadd.f32 %v509, %v510
        %v513 = vperm.slane %v511, 0
        %v514 = vperm.slane %v511, 1
        %518 = vst [vmem:[#allocation1] ss:$2 sm:$0xff] %v455
        %v519 = vld.sshfl [vmem:[#allocation1] sm:$0xff pattern:$0x75316420]
        %v520 = vld.sshfl [vmem:[#allocation1 + $0x8] sm:$0xff pattern:$0x75316420]
        %v523 = vmul.f32 %v513, %v519
        %v524 = vmul.f32 %v514, %v520
        %v525 = vstv %s490
        %v526 = vadd.f32 %v523, %v525
        %v527 = vadd.f32 %v524, %v525
        %v528 = vrcp.pop %v526
        %v529 = vmul.f32 %v526, %v528
        %v530 = vsub.f32 1.0, %v529
        %v531 = vmul.f32 %v528, %v530
        %v532 = vadd.f32 %v528, %v531
        %vm533 = vweird.f32 %v526
        %vm534 = vweird.f32 %v528
        %vm535 = vmor %vm533, %vm534
        %v536 = vsel %vm535, %v528, %v532
        %v537 = vand.u32 2147483647, %v526
        %vm538 = vcmp.eq.f32.partialorder %v537, 8.507059e+37
        %v539 = vand.u32 %v526, 2147483648
        %v540 = vor.u32 1.1754944e-38, %v539
        %v541 = vsel %vm538, %v540, %v536
        %v542 = vrcp.pop %v527
        %v543 = vmul.f32 %v527, %v542
        %v544 = vsub.f32 1.0, %v543
        %v545 = vmul.f32 %v542, %v544
        %v546 = vadd.f32 %v542, %v545
        %vm547 = vweird.f32 %v527
        %vm548 = vweird.f32 %v542
        %vm549 = vmor %vm547, %vm548
        %v550 = vsel %vm549, %v542, %v546
        %v551 = vand.u32 2147483647, %v527
        %vm552 = vcmp.eq.f32.partialorder %v551, 8.507059e+37
        %v553 = vand.u32 %v527, 2147483648
        %v554 = vor.u32 1.1754944e-38, %v553
        %v555 = vsel %vm552, %v554, %v550
        %v557 = vperm.slane %v497, 0
        %v558 = vperm.slane %v497, 1
        %561 = vst [vmem:[#allocation1] ss:$2 sm:$0xff] %v455
        %v562 = vld.sshfl [vmem:[#allocation1] sm:$0xff pattern:$0x75316420]
        %v563 = vld.sshfl [vmem:[#allocation1 + $0x8] sm:$0xff pattern:$0x75316420]
        %v566 = vmul.f32 %v557, %v562
        %v567 = vmul.f32 %v558, %v563
        %v568 = vstv %s486
        %v569 = vadd.f32 %v566, %v568
        %v570 = vadd.f32 %v567, %v568
        %v571 = vmul.f32 %v569, %v541
        %v572 = vmul.f32 %v570, %v555
        %v574 = vperm.slane %v504, 0
        %v575 = vperm.slane %v504, 1
        %578 = vst [vmem:[#allocation1] ss:$2 sm:$0xff] %v455
        %v579 = vld.sshfl [vmem:[#allocation1] sm:$0xff pattern:$0x75316420]
        %v580 = vld.sshfl [vmem:[#allocation1 + $0x8] sm:$0xff pattern:$0x75316420]
        %v583 = vmul.f32 %v574, %v579
        %v584 = vmul.f32 %v575, %v580
        %v585 = vstv %s488
        %v586 = vadd.f32 %v583, %v585
        %v587 = vadd.f32 %v584, %v585
        %v588 = vmul.f32 %v586, %v541
        %v589 = vmul.f32 %v587, %v555
        %v590 = vfloor.f32 %v571
        %v591 = vfloor.f32 %v572
        %v592 = vsub.f32 %v571, %v590
        %v593 = vsub.f32 %v572, %v591
        %v594 = vadd.f32 %v590, 1.0
        %v595 = vadd.f32 %v591, 1.0
        %v596 = vfloor.f32 %v588
        %v597 = vfloor.f32 %v589
        %v598 = vsub.f32 %v588, %v596
        %v599 = vsub.f32 %v589, %v597
        %v600 = vadd.f32 %v596, 1.0
        %v601 = vadd.f32 %v597, 1.0
        %vm602 = vcmp.ge.f32.partialorder %v590, 0.0
        %vm603 = vcmp.ge.f32.partialorder %v591, 0.0
        %vm604 = vcmp.le.f32.partialorder %v590, 15.0
        %vm605 = vcmp.le.f32.partialorder %v591, 15.0
        %vm606 = vmand %vm602, %vm604
        %vm607 = vmand %vm603, %vm605
        %vm608 = vcmp.ge.f32.partialorder %v594, 0.0
        %vm609 = vcmp.ge.f32.partialorder %v595, 0.0
        %vm610 = vcmp.le.f32.partialorder %v594, 15.0
        %vm611 = vcmp.le.f32.partialorder %v595, 15.0
        %vm612 = vmand %vm608, %vm610
        %vm613 = vmand %vm609, %vm611
        %vm614 = vcmp.ge.f32.partialorder %v596, 0.0
        %vm615 = vcmp.ge.f32.partialorder %v597, 0.0
        %vm616 = vcmp.le.f32.partialorder %v596, 15.0
        %vm617 = vcmp.le.f32.partialorder %v597, 15.0
        %vm618 = vmand %vm614, %vm616
        %vm619 = vmand %vm615, %vm617
        %vm620 = vcmp.ge.f32.partialorder %v600, 0.0
        %vm621 = vcmp.ge.f32.partialorder %v601, 0.0
        %vm622 = vcmp.le.f32.partialorder %v600, 15.0
        %vm623 = vcmp.le.f32.partialorder %v601, 15.0
        %vm624 = vmand %vm620, %vm622
        %vm625 = vmand %vm621, %vm623
        %v626 = vsub.f32 1.0, %v592
        %v627 = vsub.f32 1.0, %v593
        %v628 = vsel %vm606, %v626, 0.0
        %v629 = vsel %vm607, %v627, 0.0
        %v630 = vsel %vm612, %v592, 0.0
        %v631 = vsel %vm613, %v593, 0.0
        %v632 = vsub.f32 1.0, %v598
        %v633 = vsub.f32 1.0, %v599
        %v634 = vsel %vm618, %v632, 0.0
        %v635 = vsel %vm619, %v633, 0.0
        %v636 = vsel %vm624, %v598, 0.0
        %v637 = vsel %vm625, %v599, 0.0
        %v638 = vsel %vm606, %v590, 0.0
        %v639 = vsel %vm607, %v591, 0.0
        %v640 = vcvt.f32.s32.to.zero.pseudo %v638
        %v641 = vcvt.f32.s32.to.zero.pseudo %v639
        %v642 = vsel %vm612, %v594, 0.0
        %v643 = vsel %vm613, %v595, 0.0
        %v644 = vcvt.f32.s32.to.zero.pseudo %v642
        %v645 = vcvt.f32.s32.to.zero.pseudo %v643
        %v646 = vsel %vm618, %v596, 0.0
        %v647 = vsel %vm619, %v597, 0.0
        %v648 = vcvt.f32.s32.to.zero.pseudo %v646
        %v649 = vcvt.f32.s32.to.zero.pseudo %v647
        %v650 = vsel %vm624, %v600, 0.0
        %v651 = vsel %vm625, %v601, 0.0
        %v652 = vcvt.f32.s32.to.zero.pseudo %v650
        %v653 = vcvt.f32.s32.to.zero.pseudo %v651
        %v654 = vrot.slane %v640, 1
        %v655 = vrot.slane %v641, 1
        %v656 = vrot.slane %v640, 2
        %v657 = vrot.slane %v641, 2
        %v658 = vrot.slane %v640, 3
        %v659 = vrot.slane %v641, 3
        %v660 = vperm.slane %v640, 0
        %v661 = vperm.slane %v641, 0
        %v662 = vperm.slane %v654, 0
        %v663 = vperm.slane %v655, 0
        %v664 = vperm.slane %v656, 0
        %v665 = vperm.slane %v657, 0
        %v666 = vperm.slane %v658, 0
        %v667 = vperm.slane %v659, 0
        %vm668 = vcmp.eq.s32.totalorder %v463, %v660
        %vm669 = vcmp.eq.s32.totalorder %v463, %v661
        %vm670 = vcmp.eq.s32.totalorder %v463, %v662
        %vm671 = vcmp.eq.s32.totalorder %v463, %v663
        %vm672 = vcmp.eq.s32.totalorder %v463, %v664
        %vm673 = vcmp.eq.s32.totalorder %v463, %v665
        %vm674 = vcmp.eq.s32.totalorder %v463, %v666
        %vm675 = vcmp.eq.s32.totalorder %v463, %v667
        %vm676 = vcmp.eq.s32.totalorder %v464, %v660
        %vm677 = vcmp.eq.s32.totalorder %v464, %v661
        %vm678 = vcmp.eq.s32.totalorder %v464, %v662
        %vm679 = vcmp.eq.s32.totalorder %v464, %v663
        %vm680 = vcmp.eq.s32.totalorder %v464, %v664
        %vm681 = vcmp.eq.s32.totalorder %v464, %v665
        %vm682 = vcmp.eq.s32.totalorder %v464, %v666
        %vm683 = vcmp.eq.s32.totalorder %v464, %v667
        %v686 = vrot.slane %v628, 1
        %v687 = vrot.slane %v629, 1
        %v690 = vrot.slane %v628, 2
        %v691 = vrot.slane %v629, 2
        %v694 = vrot.slane %v628, 3
        %v695 = vrot.slane %v629, 3
        %v698 = vperm.slane %v628, 0
        %v699 = vperm.slane %v629, 0
        %v700 = vperm.slane %v686, 0
        %v701 = vperm.slane %v687, 0
        %v702 = vperm.slane %v690, 0
        %v703 = vperm.slane %v691, 0
        %v704 = vperm.slane %v694, 0
        %v705 = vperm.slane %v695, 0
        %v706 = vsel %vm668, %v698, 0.0
        %v707 = vsel %vm669, %v699, 0.0
        %v708 = vsel %vm670, %v700, 0.0
        %v709 = vsel %vm671, %v701, 0.0
        %v710 = vsel %vm672, %v702, 0.0
        %v711 = vsel %vm673, %v703, 0.0
        %v712 = vsel %vm674, %v704, 0.0
        %v713 = vsel %vm675, %v705, 0.0
        %v714 = vsel %vm676, %v698, 0.0
        %v715 = vsel %vm677, %v699, 0.0
        %v716 = vsel %vm678, %v700, 0.0
        %v717 = vsel %vm679, %v701, 0.0
        %v718 = vsel %vm680, %v702, 0.0
        %v719 = vsel %vm681, %v703, 0.0
        %v720 = vsel %vm682, %v704, 0.0
        %v721 = vsel %vm683, %v705, 0.0
        %v722 = vrot.slane %v644, 1
        %v723 = vrot.slane %v645, 1
        %v724 = vrot.slane %v644, 2
        %v725 = vrot.slane %v645, 2
        %v726 = vrot.slane %v644, 3
        %v727 = vrot.slane %v645, 3
        %v728 = vperm.slane %v644, 0
        %v729 = vperm.slane %v645, 0
        %v730 = vperm.slane %v722, 0
        %v731 = vperm.slane %v723, 0
        %v732 = vperm.slane %v724, 0
        %v733 = vperm.slane %v725, 0
        %v734 = vperm.slane %v726, 0
        %v735 = vperm.slane %v727, 0
        %vm736 = vcmp.eq.s32.totalorder %v463, %v728
        %vm737 = vcmp.eq.s32.totalorder %v463, %v729
        %vm738 = vcmp.eq.s32.totalorder %v463, %v730
        %vm739 = vcmp.eq.s32.totalorder %v463, %v731
        %vm740 = vcmp.eq.s32.totalorder %v463, %v732
        %vm741 = vcmp.eq.s32.totalorder %v463, %v733
        %vm742 = vcmp.eq.s32.totalorder %v463, %v734
        %vm743 = vcmp.eq.s32.totalorder %v463, %v735
        %vm744 = vcmp.eq.s32.totalorder %v464, %v728
        %vm745 = vcmp.eq.s32.totalorder %v464, %v729
        %vm746 = vcmp.eq.s32.totalorder %v464, %v730
        %vm747 = vcmp.eq.s32.totalorder %v464, %v731
        %vm748 = vcmp.eq.s32.totalorder %v464, %v732
        %vm749 = vcmp.eq.s32.totalorder %v464, %v733
        %vm750 = vcmp.eq.s32.totalorder %v464, %v734
        %vm751 = vcmp.eq.s32.totalorder %v464, %v735
        %v754 = vrot.slane %v630, 1
        %v755 = vrot.slane %v631, 1
        %v758 = vrot.slane %v630, 2
        %v759 = vrot.slane %v631, 2
        %v762 = vrot.slane %v630, 3
        %v763 = vrot.slane %v631, 3
        %v766 = vperm.slane %v630, 0
        %v767 = vperm.slane %v631, 0
        %v768 = vperm.slane %v754, 0
        %v769 = vperm.slane %v755, 0
        %v770 = vperm.slane %v758, 0
        %v771 = vperm.slane %v759, 0
        %v772 = vperm.slane %v762, 0
        %v773 = vperm.slane %v763, 0
        %v774 = vsel %vm736, %v766, 0.0
        %v775 = vsel %vm737, %v767, 0.0
        %v776 = vsel %vm738, %v768, 0.0
        %v777 = vsel %vm739, %v769, 0.0
        %v778 = vsel %vm740, %v770, 0.0
        %v779 = vsel %vm741, %v771, 0.0
        %v780 = vsel %vm742, %v772, 0.0
        %v781 = vsel %vm743, %v773, 0.0
        %v782 = vsel %vm744, %v766, 0.0
        %v783 = vsel %vm745, %v767, 0.0
        %v784 = vsel %vm746, %v768, 0.0
        %v785 = vsel %vm747, %v769, 0.0
        %v786 = vsel %vm748, %v770, 0.0
        %v787 = vsel %vm749, %v771, 0.0
        %v788 = vsel %vm750, %v772, 0.0
        %v789 = vsel %vm751, %v773, 0.0
        %v790 = vadd.f32 %v706, %v774
        %v791 = vadd.f32 %v707, %v775
        %v792 = vadd.f32 %v708, %v776
        %v793 = vadd.f32 %v709, %v777
        %v794 = vadd.f32 %v710, %v778
        %v795 = vadd.f32 %v711, %v779
        %v796 = vadd.f32 %v712, %v780
        %v797 = vadd.f32 %v713, %v781
        %v798 = vadd.f32 %v714, %v782
        %v799 = vadd.f32 %v715, %v783
        %v800 = vadd.f32 %v716, %v784
        %v801 = vadd.f32 %v717, %v785
        %v802 = vadd.f32 %v718, %v786
        %v803 = vadd.f32 %v719, %v787
        %v804 = vadd.f32 %v720, %v788
        %v805 = vadd.f32 %v721, %v789
        %v806 = vrot.slane %v648, 1
        %v807 = vrot.slane %v649, 1
        %v808 = vrot.slane %v648, 2
        %v809 = vrot.slane %v649, 2
        %v810 = vrot.slane %v648, 3
        %v811 = vrot.slane %v649, 3
        %v812 = vperm.slane %v648, 0
        %v813 = vperm.slane %v649, 0
        %v814 = vperm.slane %v806, 0
        %v815 = vperm.slane %v807, 0
        %v816 = vperm.slane %v808, 0
        %v817 = vperm.slane %v809, 0
        %v818 = vperm.slane %v810, 0
        %v819 = vperm.slane %v811, 0
        %vm820 = vcmp.eq.s32.totalorder %v463, %v812
        %vm821 = vcmp.eq.s32.totalorder %v463, %v813
        %vm822 = vcmp.eq.s32.totalorder %v463, %v814
        %vm823 = vcmp.eq.s32.totalorder %v463, %v815
        %vm824 = vcmp.eq.s32.totalorder %v463, %v816
        %vm825 = vcmp.eq.s32.totalorder %v463, %v817
        %vm826 = vcmp.eq.s32.totalorder %v463, %v818
        %vm827 = vcmp.eq.s32.totalorder %v463, %v819
        %vm828 = vcmp.eq.s32.totalorder %v464, %v812
        %vm829 = vcmp.eq.s32.totalorder %v464, %v813
        %vm830 = vcmp.eq.s32.totalorder %v464, %v814
        %vm831 = vcmp.eq.s32.totalorder %v464, %v815
        %vm832 = vcmp.eq.s32.totalorder %v464, %v816
        %vm833 = vcmp.eq.s32.totalorder %v464, %v817
        %vm834 = vcmp.eq.s32.totalorder %v464, %v818
        %vm835 = vcmp.eq.s32.totalorder %v464, %v819
        %v838 = vrot.slane %v634, 1
        %v839 = vrot.slane %v635, 1
        %v842 = vrot.slane %v634, 2
        %v843 = vrot.slane %v635, 2
        %v846 = vrot.slane %v634, 3
        %v847 = vrot.slane %v635, 3
        %v850 = vperm.slane %v634, 0
        %v851 = vperm.slane %v635, 0
        %v852 = vperm.slane %v838, 0
        %v853 = vperm.slane %v839, 0
        %v854 = vperm.slane %v842, 0
        %v855 = vperm.slane %v843, 0
        %v856 = vperm.slane %v846, 0
        %v857 = vperm.slane %v847, 0
        %v858 = vsel %vm820, %v850, 0.0
        %v859 = vsel %vm821, %v851, 0.0
        %v860 = vsel %vm822, %v852, 0.0
        %v861 = vsel %vm823, %v853, 0.0
        %v862 = vsel %vm824, %v854, 0.0
        %v863 = vsel %vm825, %v855, 0.0
        %v864 = vsel %vm826, %v856, 0.0
        %v865 = vsel %vm827, %v857, 0.0
        %v866 = vsel %vm828, %v850, 0.0
        %v867 = vsel %vm829, %v851, 0.0
        %v868 = vsel %vm830, %v852, 0.0
        %v869 = vsel %vm831, %v853, 0.0
        %v870 = vsel %vm832, %v854, 0.0
        %v871 = vsel %vm833, %v855, 0.0
        %v872 = vsel %vm834, %v856, 0.0
        %v873 = vsel %vm835, %v857, 0.0
        %v874 = vrot.slane %v652, 1
        %v875 = vrot.slane %v653, 1
        %v876 = vrot.slane %v652, 2
        %v877 = vrot.slane %v653, 2
        %v878 = vrot.slane %v652, 3
        %v879 = vrot.slane %v653, 3
        %v880 = vperm.slane %v652, 0
        %v881 = vperm.slane %v653, 0
        %v882 = vperm.slane %v874, 0
        %v883 = vperm.slane %v875, 0
        %v884 = vperm.slane %v876, 0
        %v885 = vperm.slane %v877, 0
        %v886 = vperm.slane %v878, 0
        %v887 = vperm.slane %v879, 0
        %vm888 = vcmp.eq.s32.totalorder %v463, %v880
        %vm889 = vcmp.eq.s32.totalorder %v463, %v881
        %vm890 = vcmp.eq.s32.totalorder %v463, %v882
        %vm891 = vcmp.eq.s32.totalorder %v463, %v883
        %vm892 = vcmp.eq.s32.totalorder %v463, %v884
        %vm893 = vcmp.eq.s32.totalorder %v463, %v885
        %vm894 = vcmp.eq.s32.totalorder %v463, %v886
        %vm895 = vcmp.eq.s32.totalorder %v463, %v887
        %vm896 = vcmp.eq.s32.totalorder %v464, %v880
        %vm897 = vcmp.eq.s32.totalorder %v464, %v881
        %vm898 = vcmp.eq.s32.totalorder %v464, %v882
        %vm899 = vcmp.eq.s32.totalorder %v464, %v883
        %vm900 = vcmp.eq.s32.totalorder %v464, %v884
        %vm901 = vcmp.eq.s32.totalorder %v464, %v885
        %vm902 = vcmp.eq.s32.totalorder %v464, %v886
        %vm903 = vcmp.eq.s32.totalorder %v464, %v887
        %v906 = vrot.slane %v636, 1
        %v907 = vrot.slane %v637, 1
        %v910 = vrot.slane %v636, 2
        %v911 = vrot.slane %v637, 2
        %v914 = vrot.slane %v636, 3
        %v915 = vrot.slane %v637, 3
        %v918 = vperm.slane %v636, 0
        %v919 = vperm.slane %v637, 0
        %v920 = vperm.slane %v906, 0
        %v921 = vperm.slane %v907, 0
        %v922 = vperm.slane %v910, 0
        %v923 = vperm.slane %v911, 0
        %v924 = vperm.slane %v914, 0
        %v925 = vperm.slane %v915, 0
        %v926 = vsel %vm888, %v918, 0.0
        %v927 = vsel %vm889, %v919, 0.0
        %v928 = vsel %vm890, %v920, 0.0
        %v929 = vsel %vm891, %v921, 0.0
        %v930 = vsel %vm892, %v922, 0.0
        %v931 = vsel %vm893, %v923, 0.0
        %v932 = vsel %vm894, %v924, 0.0
        %v933 = vsel %vm895, %v925, 0.0
        %v934 = vsel %vm896, %v918, 0.0
        %v935 = vsel %vm897, %v919, 0.0
        %v936 = vsel %vm898, %v920, 0.0
        %v937 = vsel %vm899, %v921, 0.0
        %v938 = vsel %vm900, %v922, 0.0
        %v939 = vsel %vm901, %v923, 0.0
        %v940 = vsel %vm902, %v924, 0.0
        %v941 = vsel %vm903, %v925, 0.0
        %v942 = vadd.f32 %v858, %v926
        %v943 = vadd.f32 %v859, %v927
        %v944 = vadd.f32 %v860, %v928
        %v945 = vadd.f32 %v861, %v929
        %v946 = vadd.f32 %v862, %v930
        %v947 = vadd.f32 %v863, %v931
        %v948 = vadd.f32 %v864, %v932
        %v949 = vadd.f32 %v865, %v933
        %v950 = vadd.f32 %v866, %v934
        %v951 = vadd.f32 %v867, %v935
        %v952 = vadd.f32 %v868, %v936
        %v953 = vadd.f32 %v869, %v937
        %v954 = vadd.f32 %v870, %v938
        %v955 = vadd.f32 %v871, %v939
        %v956 = vadd.f32 %v872, %v940
        %v957 = vadd.f32 %v873, %v941
        %v958 = vld [vmem:[%s443] sm:$0xff]
        %v959 = vld [vmem:[%s443 + $0x8] sm:$0xff]
        %v960 = vld [vmem:[%s443 + $0x10] sm:$0xff]
        %v961 = vld [vmem:[%s443 + $0x18] sm:$0xff]
        %v962 = vld [vmem:[%s443 + $0x20] sm:$0xff]
        %v963 = vld [vmem:[%s443 + $0x28] sm:$0xff]
        %v964 = vld [vmem:[%s443 + $0x30] sm:$0xff]
        %v965 = vld [vmem:[%s443 + $0x38] sm:$0xff]
        %v966 = vld [vmem:[%s443 + $0x40] sm:$0xff]
        %v967 = vld [vmem:[%s443 + $0x48] sm:$0xff]
        %v968 = vld [vmem:[%s443 + $0x50] sm:$0xff]
        %v969 = vld [vmem:[%s443 + $0x58] sm:$0xff]
        %v970 = vld [vmem:[%s443 + $0x60] sm:$0xff]
        %v971 = vld [vmem:[%s443 + $0x68] sm:$0xff]
        %v972 = vld [vmem:[%s443 + $0x70] sm:$0xff]
        %v973 = vld [vmem:[%s443 + $0x78] sm:$0xff]
        %vm974 = vcmask 130048
        %v976 = vsel %vm974, %v958, 0
        %v979 = vsel %vm974, %v959, 0
        %v982 = vsel %vm974, %v960, 0
        %v985 = vsel %vm974, %v961, 0
        %v988 = vsel %vm974, %v962, 0
        %v991 = vsel %vm974, %v963, 0
        %v994 = vsel %vm974, %v964, 0
        %v997 = vsel %vm974, %v965, 0
        %v1000 = vsel %vm974, %v966, 0
        %v1003 = vsel %vm974, %v967, 0
        %v1006 = vsel %vm974, %v968, 0
        %v1009 = vsel %vm974, %v969, 0
        %v1012 = vsel %vm974, %v970, 0
        %v1015 = vsel %vm974, %v971, 0
        %v1018 = vsel %vm974, %v972, 0
        %v1021 = vsel %vm974, %v973, 0
        %1023 = vmatpush.msra.mxu0 0.0
        %1024 = vmatpush.msra.mxu0 0.0
        %1025 = vmatpush.msra.mxu0 0.0
        %1026 = vmatpush.msra.mxu0 0.0
        %1027 = vmatpush.msra.mxu0 0.0
        %1028 = vmatpush.msra.mxu0 0.0
        %1029 = vmatpush.msra.mxu0 0.0
        %1030 = vmatpush.msra.mxu0 0.0
        %1031 = vmatpush.msra.mxu0 0.0
        %1032 = vmatpush.msra.mxu0 0.0
        %1033 = vmatpush.msra.mxu0 0.0
        %1034 = vmatpush.msra.mxu0 0.0
        %1035 = vmatpush.msra.mxu0 0.0
        %1036 = vmatpush.msra.mxu0 0.0
        %1037 = vmatpush.msra.mxu0 %v798
        %1038 = vmatpush.msra.mxu0 %v790
        %1039 = vmatmul.f32.gmra.mxu0 %v976
        %v1040 = vpop.f32.mrf.mxu0
        %v1041 = vadd.f32 0.0, %v1040
        %1042 = vmatmul.f32.gmra.mxu0 %v979
        %v1043 = vpop.f32.mrf.mxu0
        %v1044 = vadd.f32 0.0, %v1043
        %1045 = vmatmul.f32.gmra.mxu0 %v982
        %v1046 = vpop.f32.mrf.mxu0
        %v1047 = vadd.f32 0.0, %v1046
        %1048 = vmatmul.f32.gmra.mxu0 %v985
        %v1049 = vpop.f32.mrf.mxu0
        %v1050 = vadd.f32 0.0, %v1049
        %1051 = vmatmul.f32.gmra.mxu0 %v988
        %v1052 = vpop.f32.mrf.mxu0
        %v1053 = vadd.f32 0.0, %v1052
        %1054 = vmatmul.f32.gmra.mxu0 %v991
        %v1055 = vpop.f32.mrf.mxu0
        %v1056 = vadd.f32 0.0, %v1055
        %1057 = vmatmul.f32.gmra.mxu0 %v994
        %v1058 = vpop.f32.mrf.mxu0
        %v1059 = vadd.f32 0.0, %v1058
        %1060 = vmatmul.f32.gmra.mxu0 %v997
        %v1061 = vpop.f32.mrf.mxu0
        %v1062 = vadd.f32 0.0, %v1061
        %1063 = vmatmul.f32.gmra.mxu0 %v1000
        %v1064 = vpop.f32.mrf.mxu0
        %v1065 = vadd.f32 0.0, %v1064
        %1066 = vmatmul.f32.gmra.mxu0 %v1003
        %v1067 = vpop.f32.mrf.mxu0
        %v1068 = vadd.f32 0.0, %v1067
        %1069 = vmatmul.f32.gmra.mxu0 %v1006
        %v1070 = vpop.f32.mrf.mxu0
        %v1071 = vadd.f32 0.0, %v1070
        %1072 = vmatmul.f32.gmra.mxu0 %v1009
        %v1073 = vpop.f32.mrf.mxu0
        %v1074 = vadd.f32 0.0, %v1073
        %1075 = vmatmul.f32.gmra.mxu0 %v1012
        %v1076 = vpop.f32.mrf.mxu0
        %v1077 = vadd.f32 0.0, %v1076
        %1078 = vmatmul.f32.gmra.mxu0 %v1015
        %v1079 = vpop.f32.mrf.mxu0
        %v1080 = vadd.f32 0.0, %v1079
        %1081 = vmatmul.f32.gmra.mxu0 %v1018
        %v1082 = vpop.f32.mrf.mxu0
        %v1083 = vadd.f32 0.0, %v1082
        %1084 = vmatmul.f32.gmra.mxu0 %v1021
        %v1085 = vpop.f32.mrf.mxu0
        %v1086 = vadd.f32 0.0, %v1085
        %1087 = vdwg.mxu0
        %1088 = vmatpush.msra.mxu0 0.0
        %1089 = vmatpush.msra.mxu0 0.0
        %1090 = vmatpush.msra.mxu0 0.0
        %1091 = vmatpush.msra.mxu0 0.0
        %1092 = vmatpush.msra.mxu0 0.0
        %1093 = vmatpush.msra.mxu0 0.0
        %1094 = vmatpush.msra.mxu0 0.0
        %1095 = vmatpush.msra.mxu0 0.0
        %1096 = vmatpush.msra.mxu0 0.0
        %1097 = vmatpush.msra.mxu0 0.0
        %1098 = vmatpush.msra.mxu0 0.0
        %1099 = vmatpush.msra.mxu0 0.0
        %1100 = vmatpush.msra.mxu0 0.0
        %1101 = vmatpush.msra.mxu0 0.0
        %1102 = vmatpush.msra.mxu0 %v799
        %1103 = vmatpush.msra.mxu0 %v791
        %1104 = vmatmul.f32.gmra.mxu0 %v976
        %v1105 = vpop.f32.mrf.mxu0
        %v1106 = vadd.f32 0.0, %v1105
        %1107 = vmatmul.f32.gmra.mxu0 %v979
        %v1108 = vpop.f32.mrf.mxu0
        %v1109 = vadd.f32 0.0, %v1108
        %1110 = vmatmul.f32.gmra.mxu0 %v982
        %v1111 = vpop.f32.mrf.mxu0
        %v1112 = vadd.f32 0.0, %v1111
        %1113 = vmatmul.f32.gmra.mxu0 %v985
        %v1114 = vpop.f32.mrf.mxu0
        %v1115 = vadd.f32 0.0, %v1114
        %1116 = vmatmul.f32.gmra.mxu0 %v988
        %v1117 = vpop.f32.mrf.mxu0
        %v1118 = vadd.f32 0.0, %v1117
        %1119 = vmatmul.f32.gmra.mxu0 %v991
        %v1120 = vpop.f32.mrf.mxu0
        %v1121 = vadd.f32 0.0, %v1120
        %1122 = vmatmul.f32.gmra.mxu0 %v994
        %v1123 = vpop.f32.mrf.mxu0
        %v1124 = vadd.f32 0.0, %v1123
        %1125 = vmatmul.f32.gmra.mxu0 %v997
        %v1126 = vpop.f32.mrf.mxu0
        %v1127 = vadd.f32 0.0, %v1126
        %1128 = vmatmul.f32.gmra.mxu0 %v1000
        %v1129 = vpop.f32.mrf.mxu0
        %v1130 = vadd.f32 0.0, %v1129
        %1131 = vmatmul.f32.gmra.mxu0 %v1003
        %v1132 = vpop.f32.mrf.mxu0
        %v1133 = vadd.f32 0.0, %v1132
        %1134 = vmatmul.f32.gmra.mxu0 %v1006
        %v1135 = vpop.f32.mrf.mxu0
        %v1136 = vadd.f32 0.0, %v1135
        %1137 = vmatmul.f32.gmra.mxu0 %v1009
        %v1138 = vpop.f32.mrf.mxu0
        %v1139 = vadd.f32 0.0, %v1138
        %1140 = vmatmul.f32.gmra.mxu0 %v1012
        %v1141 = vpop.f32.mrf.mxu0
        %v1142 = vadd.f32 0.0, %v1141
        %1143 = vmatmul.f32.gmra.mxu0 %v1015
        %v1144 = vpop.f32.mrf.mxu0
        %v1145 = vadd.f32 0.0, %v1144
        %1146 = vmatmul.f32.gmra.mxu0 %v1018
        %v1147 = vpop.f32.mrf.mxu0
        %v1148 = vadd.f32 0.0, %v1147
        %1149 = vmatmul.f32.gmra.mxu0 %v1021
        %v1150 = vpop.f32.mrf.mxu0
        %v1151 = vadd.f32 0.0, %v1150
        %1152 = vdwg.mxu0
        %1153 = vmatpush.msra.mxu0 0.0
        %1154 = vmatpush.msra.mxu0 0.0
        %1155 = vmatpush.msra.mxu0 0.0
        %1156 = vmatpush.msra.mxu0 0.0
        %1157 = vmatpush.msra.mxu0 0.0
        %1158 = vmatpush.msra.mxu0 0.0
        %1159 = vmatpush.msra.mxu0 0.0
        %1160 = vmatpush.msra.mxu0 0.0
        %1161 = vmatpush.msra.mxu0 0.0
        %1162 = vmatpush.msra.mxu0 0.0
        %1163 = vmatpush.msra.mxu0 0.0
        %1164 = vmatpush.msra.mxu0 0.0
        %1165 = vmatpush.msra.mxu0 0.0
        %1166 = vmatpush.msra.mxu0 0.0
        %1167 = vmatpush.msra.mxu0 %v800
        %1168 = vmatpush.msra.mxu0 %v792
        %1169 = vmatmul.f32.gmra.mxu0 %v976
        %v1170 = vpop.f32.mrf.mxu0
        %v1171 = vadd.f32 0.0, %v1170
        %1172 = vmatmul.f32.gmra.mxu0 %v979
        %v1173 = vpop.f32.mrf.mxu0
        %v1174 = vadd.f32 0.0, %v1173
        %1175 = vmatmul.f32.gmra.mxu0 %v982
        %v1176 = vpop.f32.mrf.mxu0
        %v1177 = vadd.f32 0.0, %v1176
        %1178 = vmatmul.f32.gmra.mxu0 %v985
        %v1179 = vpop.f32.mrf.mxu0
        %v1180 = vadd.f32 0.0, %v1179
        %1181 = vmatmul.f32.gmra.mxu0 %v988
        %v1182 = vpop.f32.mrf.mxu0
        %v1183 = vadd.f32 0.0, %v1182
        %1184 = vmatmul.f32.gmra.mxu0 %v991
        %v1185 = vpop.f32.mrf.mxu0
        %v1186 = vadd.f32 0.0, %v1185
        %1187 = vmatmul.f32.gmra.mxu0 %v994
        %v1188 = vpop.f32.mrf.mxu0
        %v1189 = vadd.f32 0.0, %v1188
        %1190 = vmatmul.f32.gmra.mxu0 %v997
        %v1191 = vpop.f32.mrf.mxu0
        %v1192 = vadd.f32 0.0, %v1191
        %1193 = vmatmul.f32.gmra.mxu0 %v1000
        %v1194 = vpop.f32.mrf.mxu0
        %v1195 = vadd.f32 0.0, %v1194
        %1196 = vmatmul.f32.gmra.mxu0 %v1003
        %v1197 = vpop.f32.mrf.mxu0
        %v1198 = vadd.f32 0.0, %v1197
        %1199 = vmatmul.f32.gmra.mxu0 %v1006
        %v1200 = vpop.f32.mrf.mxu0
        %v1201 = vadd.f32 0.0, %v1200
        %1202 = vmatmul.f32.gmra.mxu0 %v1009
        %v1203 = vpop.f32.mrf.mxu0
        %v1204 = vadd.f32 0.0, %v1203
        %1205 = vmatmul.f32.gmra.mxu0 %v1012
        %v1206 = vpop.f32.mrf.mxu0
        %v1207 = vadd.f32 0.0, %v1206
        %1208 = vmatmul.f32.gmra.mxu0 %v1015
        %v1209 = vpop.f32.mrf.mxu0
        %v1210 = vadd.f32 0.0, %v1209
        %1211 = vmatmul.f32.gmra.mxu0 %v1018
        %v1212 = vpop.f32.mrf.mxu0
        %v1213 = vadd.f32 0.0, %v1212
        %1214 = vmatmul.f32.gmra.mxu0 %v1021
        %v1215 = vpop.f32.mrf.mxu0
        %v1216 = vadd.f32 0.0, %v1215
        %1217 = vdwg.mxu0
        %1218 = vmatpush.msra.mxu0 0.0
        %1219 = vmatpush.msra.mxu0 0.0
        %1220 = vmatpush.msra.mxu0 0.0
        %1221 = vmatpush.msra.mxu0 0.0
        %1222 = vmatpush.msra.mxu0 0.0
        %1223 = vmatpush.msra.mxu0 0.0
        %1224 = vmatpush.msra.mxu0 0.0
        %1225 = vmatpush.msra.mxu0 0.0
        %1226 = vmatpush.msra.mxu0 0.0
        %1227 = vmatpush.msra.mxu0 0.0
        %1228 = vmatpush.msra.mxu0 0.0
        %1229 = vmatpush.msra.mxu0 0.0
        %1230 = vmatpush.msra.mxu0 0.0
        %1231 = vmatpush.msra.mxu0 0.0
        %1232 = vmatpush.msra.mxu0 %v801
        %1233 = vmatpush.msra.mxu0 %v793
        %1234 = vmatmul.f32.gmra.mxu0 %v976
        %v1235 = vpop.f32.mrf.mxu0
        %v1236 = vadd.f32 0.0, %v1235
        %1237 = vmatmul.f32.gmra.mxu0 %v979
        %v1238 = vpop.f32.mrf.mxu0
        %v1239 = vadd.f32 0.0, %v1238
        %1240 = vmatmul.f32.gmra.mxu0 %v982
        %v1241 = vpop.f32.mrf.mxu0
        %v1242 = vadd.f32 0.0, %v1241
        %1243 = vmatmul.f32.gmra.mxu0 %v985
        %v1244 = vpop.f32.mrf.mxu0
        %v1245 = vadd.f32 0.0, %v1244
        %1246 = vmatmul.f32.gmra.mxu0 %v988
        %v1247 = vpop.f32.mrf.mxu0
        %v1248 = vadd.f32 0.0, %v1247
        %1249 = vmatmul.f32.gmra.mxu0 %v991
        %v1250 = vpop.f32.mrf.mxu0
        %v1251 = vadd.f32 0.0, %v1250
        %1252 = vmatmul.f32.gmra.mxu0 %v994
        %v1253 = vpop.f32.mrf.mxu0
        %v1254 = vadd.f32 0.0, %v1253
        %1255 = vmatmul.f32.gmra.mxu0 %v997
        %v1256 = vpop.f32.mrf.mxu0
        %v1257 = vadd.f32 0.0, %v1256
        %1258 = vmatmul.f32.gmra.mxu0 %v1000
        %v1259 = vpop.f32.mrf.mxu0
        %v1260 = vadd.f32 0.0, %v1259
        %1261 = vmatmul.f32.gmra.mxu0 %v1003
        %v1262 = vpop.f32.mrf.mxu0
        %v1263 = vadd.f32 0.0, %v1262
        %1264 = vmatmul.f32.gmra.mxu0 %v1006
        %v1265 = vpop.f32.mrf.mxu0
        %v1266 = vadd.f32 0.0, %v1265
        %1267 = vmatmul.f32.gmra.mxu0 %v1009
        %v1268 = vpop.f32.mrf.mxu0
        %v1269 = vadd.f32 0.0, %v1268
        %1270 = vmatmul.f32.gmra.mxu0 %v1012
        %v1271 = vpop.f32.mrf.mxu0
        %v1272 = vadd.f32 0.0, %v1271
        %1273 = vmatmul.f32.gmra.mxu0 %v1015
        %v1274 = vpop.f32.mrf.mxu0
        %v1275 = vadd.f32 0.0, %v1274
        %1276 = vmatmul.f32.gmra.mxu0 %v1018
        %v1277 = vpop.f32.mrf.mxu0
        %v1278 = vadd.f32 0.0, %v1277
        %1279 = vmatmul.f32.gmra.mxu0 %v1021
        %v1280 = vpop.f32.mrf.mxu0
        %v1281 = vadd.f32 0.0, %v1280
        %1282 = vdwg.mxu0
        %1283 = vmatpush.msra.mxu0 0.0
        %1284 = vmatpush.msra.mxu0 0.0
        %1285 = vmatpush.msra.mxu0 0.0
        %1286 = vmatpush.msra.mxu0 0.0
        %1287 = vmatpush.msra.mxu0 0.0
        %1288 = vmatpush.msra.mxu0 0.0
        %1289 = vmatpush.msra.mxu0 0.0
        %1290 = vmatpush.msra.mxu0 0.0
        %1291 = vmatpush.msra.mxu0 0.0
        %1292 = vmatpush.msra.mxu0 0.0
        %1293 = vmatpush.msra.mxu0 0.0
        %1294 = vmatpush.msra.mxu0 0.0
        %1295 = vmatpush.msra.mxu0 0.0
        %1296 = vmatpush.msra.mxu0 0.0
        %1297 = vmatpush.msra.mxu0 %v802
        %1298 = vmatpush.msra.mxu0 %v794
        %1299 = vmatmul.f32.gmra.mxu0 %v976
        %v1300 = vpop.f32.mrf.mxu0
        %v1301 = vadd.f32 0.0, %v1300
        %1302 = vmatmul.f32.gmra.mxu0 %v979
        %v1303 = vpop.f32.mrf.mxu0
        %v1304 = vadd.f32 0.0, %v1303
        %1305 = vmatmul.f32.gmra.mxu0 %v982
        %v1306 = vpop.f32.mrf.mxu0
        %v1307 = vadd.f32 0.0, %v1306
        %1308 = vmatmul.f32.gmra.mxu0 %v985
        %v1309 = vpop.f32.mrf.mxu0
        %v1310 = vadd.f32 0.0, %v1309
        %1311 = vmatmul.f32.gmra.mxu0 %v988
        %v1312 = vpop.f32.mrf.mxu0
        %v1313 = vadd.f32 0.0, %v1312
        %1314 = vmatmul.f32.gmra.mxu0 %v991
        %v1315 = vpop.f32.mrf.mxu0
        %v1316 = vadd.f32 0.0, %v1315
        %1317 = vmatmul.f32.gmra.mxu0 %v994
        %v1318 = vpop.f32.mrf.mxu0
        %v1319 = vadd.f32 0.0, %v1318
        %1320 = vmatmul.f32.gmra.mxu0 %v997
        %v1321 = vpop.f32.mrf.mxu0
        %v1322 = vadd.f32 0.0, %v1321
        %1323 = vmatmul.f32.gmra.mxu0 %v1000
        %v1324 = vpop.f32.mrf.mxu0
        %v1325 = vadd.f32 0.0, %v1324
        %1326 = vmatmul.f32.gmra.mxu0 %v1003
        %v1327 = vpop.f32.mrf.mxu0
        %v1328 = vadd.f32 0.0, %v1327
        %1329 = vmatmul.f32.gmra.mxu0 %v1006
        %v1330 = vpop.f32.mrf.mxu0
        %v1331 = vadd.f32 0.0, %v1330
        %1332 = vmatmul.f32.gmra.mxu0 %v1009
        %v1333 = vpop.f32.mrf.mxu0
        %v1334 = vadd.f32 0.0, %v1333
        %1335 = vmatmul.f32.gmra.mxu0 %v1012
        %v1336 = vpop.f32.mrf.mxu0
        %v1337 = vadd.f32 0.0, %v1336
        %1338 = vmatmul.f32.gmra.mxu0 %v1015
        %v1339 = vpop.f32.mrf.mxu0
        %v1340 = vadd.f32 0.0, %v1339
        %1341 = vmatmul.f32.gmra.mxu0 %v1018
        %v1342 = vpop.f32.mrf.mxu0
        %v1343 = vadd.f32 0.0, %v1342
        %1344 = vmatmul.f32.gmra.mxu0 %v1021
        %v1345 = vpop.f32.mrf.mxu0
        %v1346 = vadd.f32 0.0, %v1345
        %1347 = vdwg.mxu0
        %1348 = vmatpush.msra.mxu0 0.0
        %1349 = vmatpush.msra.mxu0 0.0
        %1350 = vmatpush.msra.mxu0 0.0
        %1351 = vmatpush.msra.mxu0 0.0
        %1352 = vmatpush.msra.mxu0 0.0
        %1353 = vmatpush.msra.mxu0 0.0
        %1354 = vmatpush.msra.mxu0 0.0
        %1355 = vmatpush.msra.mxu0 0.0
        %1356 = vmatpush.msra.mxu0 0.0
        %1357 = vmatpush.msra.mxu0 0.0
        %1358 = vmatpush.msra.mxu0 0.0
        %1359 = vmatpush.msra.mxu0 0.0
        %1360 = vmatpush.msra.mxu0 0.0
        %1361 = vmatpush.msra.mxu0 0.0
        %1362 = vmatpush.msra.mxu0 %v803
        %1363 = vmatpush.msra.mxu0 %v795
        %1364 = vmatmul.f32.gmra.mxu0 %v976
        %v1365 = vpop.f32.mrf.mxu0
        %v1366 = vadd.f32 0.0, %v1365
        %1367 = vmatmul.f32.gmra.mxu0 %v979
        %v1368 = vpop.f32.mrf.mxu0
        %v1369 = vadd.f32 0.0, %v1368
        %1370 = vmatmul.f32.gmra.mxu0 %v982
        %v1371 = vpop.f32.mrf.mxu0
        %v1372 = vadd.f32 0.0, %v1371
        %1373 = vmatmul.f32.gmra.mxu0 %v985
        %v1374 = vpop.f32.mrf.mxu0
        %v1375 = vadd.f32 0.0, %v1374
        %1376 = vmatmul.f32.gmra.mxu0 %v988
        %v1377 = vpop.f32.mrf.mxu0
        %v1378 = vadd.f32 0.0, %v1377
        %1379 = vmatmul.f32.gmra.mxu0 %v991
        %v1380 = vpop.f32.mrf.mxu0
        %v1381 = vadd.f32 0.0, %v1380
        %1382 = vmatmul.f32.gmra.mxu0 %v994
        %v1383 = vpop.f32.mrf.mxu0
        %v1384 = vadd.f32 0.0, %v1383
        %1385 = vmatmul.f32.gmra.mxu0 %v997
        %v1386 = vpop.f32.mrf.mxu0
        %v1387 = vadd.f32 0.0, %v1386
        %1388 = vmatmul.f32.gmra.mxu0 %v1000
        %v1389 = vpop.f32.mrf.mxu0
        %v1390 = vadd.f32 0.0, %v1389
        %1391 = vmatmul.f32.gmra.mxu0 %v1003
        %v1392 = vpop.f32.mrf.mxu0
        %v1393 = vadd.f32 0.0, %v1392
        %1394 = vmatmul.f32.gmra.mxu0 %v1006
        %v1395 = vpop.f32.mrf.mxu0
        %v1396 = vadd.f32 0.0, %v1395
        %1397 = vmatmul.f32.gmra.mxu0 %v1009
        %v1398 = vpop.f32.mrf.mxu0
        %v1399 = vadd.f32 0.0, %v1398
        %1400 = vmatmul.f32.gmra.mxu0 %v1012
        %v1401 = vpop.f32.mrf.mxu0
        %v1402 = vadd.f32 0.0, %v1401
        %1403 = vmatmul.f32.gmra.mxu0 %v1015
        %v1404 = vpop.f32.mrf.mxu0
        %v1405 = vadd.f32 0.0, %v1404
        %1406 = vmatmul.f32.gmra.mxu0 %v1018
        %v1407 = vpop.f32.mrf.mxu0
        %v1408 = vadd.f32 0.0, %v1407
        %1409 = vmatmul.f32.gmra.mxu0 %v1021
        %v1410 = vpop.f32.mrf.mxu0
        %v1411 = vadd.f32 0.0, %v1410
        %1412 = vdwg.mxu0
        %1413 = vmatpush.msra.mxu0 0.0
        %1414 = vmatpush.msra.mxu0 0.0
        %1415 = vmatpush.msra.mxu0 0.0
        %1416 = vmatpush.msra.mxu0 0.0
        %1417 = vmatpush.msra.mxu0 0.0
        %1418 = vmatpush.msra.mxu0 0.0
        %1419 = vmatpush.msra.mxu0 0.0
        %1420 = vmatpush.msra.mxu0 0.0
        %1421 = vmatpush.msra.mxu0 0.0
        %1422 = vmatpush.msra.mxu0 0.0
        %1423 = vmatpush.msra.mxu0 0.0
        %1424 = vmatpush.msra.mxu0 0.0
        %1425 = vmatpush.msra.mxu0 0.0
        %1426 = vmatpush.msra.mxu0 0.0
        %1427 = vmatpush.msra.mxu0 %v804
        %1428 = vmatpush.msra.mxu0 %v796
        %1429 = vmatmul.f32.gmra.mxu0 %v976
        %v1430 = vpop.f32.mrf.mxu0
        %v1431 = vadd.f32 0.0, %v1430
        %1432 = vmatmul.f32.gmra.mxu0 %v979
        %v1433 = vpop.f32.mrf.mxu0
        %v1434 = vadd.f32 0.0, %v1433
        %1435 = vmatmul.f32.gmra.mxu0 %v982
        %v1436 = vpop.f32.mrf.mxu0
        %v1437 = vadd.f32 0.0, %v1436
        %1438 = vmatmul.f32.gmra.mxu0 %v985
        %v1439 = vpop.f32.mrf.mxu0
        %v1440 = vadd.f32 0.0, %v1439
        %1441 = vmatmul.f32.gmra.mxu0 %v988
        %v1442 = vpop.f32.mrf.mxu0
        %v1443 = vadd.f32 0.0, %v1442
        %1444 = vmatmul.f32.gmra.mxu0 %v991
        %v1445 = vpop.f32.mrf.mxu0
        %v1446 = vadd.f32 0.0, %v1445
        %1447 = vmatmul.f32.gmra.mxu0 %v994
        %v1448 = vpop.f32.mrf.mxu0
        %v1449 = vadd.f32 0.0, %v1448
        %1450 = vmatmul.f32.gmra.mxu0 %v997
        %v1451 = vpop.f32.mrf.mxu0
        %v1452 = vadd.f32 0.0, %v1451
        %1453 = vmatmul.f32.gmra.mxu0 %v1000
        %v1454 = vpop.f32.mrf.mxu0
        %v1455 = vadd.f32 0.0, %v1454
        %1456 = vmatmul.f32.gmra.mxu0 %v1003
        %v1457 = vpop.f32.mrf.mxu0
        %v1458 = vadd.f32 0.0, %v1457
        %1459 = vmatmul.f32.gmra.mxu0 %v1006
        %v1460 = vpop.f32.mrf.mxu0
        %v1461 = vadd.f32 0.0, %v1460
        %1462 = vmatmul.f32.gmra.mxu0 %v1009
        %v1463 = vpop.f32.mrf.mxu0
        %v1464 = vadd.f32 0.0, %v1463
        %1465 = vmatmul.f32.gmra.mxu0 %v1012
        %v1466 = vpop.f32.mrf.mxu0
        %v1467 = vadd.f32 0.0, %v1466
        %1468 = vmatmul.f32.gmra.mxu0 %v1015
        %v1469 = vpop.f32.mrf.mxu0
        %v1470 = vadd.f32 0.0, %v1469
        %1471 = vmatmul.f32.gmra.mxu0 %v1018
        %v1472 = vpop.f32.mrf.mxu0
        %v1473 = vadd.f32 0.0, %v1472
        %1474 = vmatmul.f32.gmra.mxu0 %v1021
        %v1475 = vpop.f32.mrf.mxu0
        %v1476 = vadd.f32 0.0, %v1475
        %1477 = vdwg.mxu0
        %1478 = vmatpush.msra.mxu0 0.0
        %1479 = vmatpush.msra.mxu0 0.0
        %1480 = vmatpush.msra.mxu0 0.0
        %1481 = vmatpush.msra.mxu0 0.0
        %1482 = vmatpush.msra.mxu0 0.0
        %1483 = vmatpush.msra.mxu0 0.0
        %1484 = vmatpush.msra.mxu0 0.0
        %1485 = vmatpush.msra.mxu0 0.0
        %1486 = vmatpush.msra.mxu0 0.0
        %1487 = vmatpush.msra.mxu0 0.0
        %1488 = vmatpush.msra.mxu0 0.0
        %1489 = vmatpush.msra.mxu0 0.0
        %1490 = vmatpush.msra.mxu0 0.0
        %1491 = vmatpush.msra.mxu0 0.0
        %1492 = vmatpush.msra.mxu0 %v805
        %1493 = vmatpush.msra.mxu0 %v797
        %1494 = vmatmul.f32.gmra.mxu0 %v976
        %v1495 = vpop.f32.mrf.mxu0
        %v1496 = vadd.f32 0.0, %v1495
        %1497 = vmatmul.f32.gmra.mxu0 %v979
        %v1498 = vpop.f32.mrf.mxu0
        %v1499 = vadd.f32 0.0, %v1498
        %1500 = vmatmul.f32.gmra.mxu0 %v982
        %v1501 = vpop.f32.mrf.mxu0
        %v1502 = vadd.f32 0.0, %v1501
        %1503 = vmatmul.f32.gmra.mxu0 %v985
        %v1504 = vpop.f32.mrf.mxu0
        %v1505 = vadd.f32 0.0, %v1504
        %1506 = vmatmul.f32.gmra.mxu0 %v988
        %v1507 = vpop.f32.mrf.mxu0
        %v1508 = vadd.f32 0.0, %v1507
        %1509 = vmatmul.f32.gmra.mxu0 %v991
        %v1510 = vpop.f32.mrf.mxu0
        %v1511 = vadd.f32 0.0, %v1510
        %1512 = vmatmul.f32.gmra.mxu0 %v994
        %v1513 = vpop.f32.mrf.mxu0
        %v1514 = vadd.f32 0.0, %v1513
        %1515 = vmatmul.f32.gmra.mxu0 %v997
        %v1516 = vpop.f32.mrf.mxu0
        %v1517 = vadd.f32 0.0, %v1516
        %1518 = vmatmul.f32.gmra.mxu0 %v1000
        %v1519 = vpop.f32.mrf.mxu0
        %v1520 = vadd.f32 0.0, %v1519
        %1521 = vmatmul.f32.gmra.mxu0 %v1003
        %v1522 = vpop.f32.mrf.mxu0
        %v1523 = vadd.f32 0.0, %v1522
        %1524 = vmatmul.f32.gmra.mxu0 %v1006
        %v1525 = vpop.f32.mrf.mxu0
        %v1526 = vadd.f32 0.0, %v1525
        %1527 = vmatmul.f32.gmra.mxu0 %v1009
        %v1528 = vpop.f32.mrf.mxu0
        %v1529 = vadd.f32 0.0, %v1528
        %1530 = vmatmul.f32.gmra.mxu0 %v1012
        %v1531 = vpop.f32.mrf.mxu0
        %v1532 = vadd.f32 0.0, %v1531
        %1533 = vmatmul.f32.gmra.mxu0 %v1015
        %v1534 = vpop.f32.mrf.mxu0
        %v1535 = vadd.f32 0.0, %v1534
        %1536 = vmatmul.f32.gmra.mxu0 %v1018
        %v1537 = vpop.f32.mrf.mxu0
        %v1538 = vadd.f32 0.0, %v1537
        %1539 = vmatmul.f32.gmra.mxu0 %v1021
        %v1540 = vpop.f32.mrf.mxu0
        %v1541 = vadd.f32 0.0, %v1540
        %1542 = vdwg.mxu0
        %v1543 = vmul.f32 %v1041, %v942
        %v1544 = vmul.f32 %v1106, %v943
        %v1545 = vmul.f32 %v1171, %v944
        %v1546 = vmul.f32 %v1236, %v945
        %v1547 = vmul.f32 %v1301, %v946
        %v1548 = vmul.f32 %v1366, %v947
        %v1549 = vmul.f32 %v1431, %v948
        %v1550 = vmul.f32 %v1496, %v949
        %v1551 = vmul.f32 %v1044, %v950
        %v1552 = vmul.f32 %v1109, %v951
        %v1553 = vmul.f32 %v1174, %v952
        %v1554 = vmul.f32 %v1239, %v953
        %v1555 = vmul.f32 %v1304, %v954
        %v1556 = vmul.f32 %v1369, %v955
        %v1557 = vmul.f32 %v1434, %v956
        %v1558 = vmul.f32 %v1499, %v957
        %v1559 = vmul.f32 %v1047, %v942
        %v1560 = vmul.f32 %v1112, %v943
        %v1561 = vmul.f32 %v1177, %v944
        %v1562 = vmul.f32 %v1242, %v945
        %v1563 = vmul.f32 %v1307, %v946
        %v1564 = vmul.f32 %v1372, %v947
        %v1565 = vmul.f32 %v1437, %v948
        %v1566 = vmul.f32 %v1502, %v949
        %v1567 = vmul.f32 %v1050, %v950
        %v1568 = vmul.f32 %v1115, %v951
        %v1569 = vmul.f32 %v1180, %v952
        %v1570 = vmul.f32 %v1245, %v953
        %v1571 = vmul.f32 %v1310, %v954
        %v1572 = vmul.f32 %v1375, %v955
        %v1573 = vmul.f32 %v1440, %v956
        %v1574 = vmul.f32 %v1505, %v957
        %v1575 = vmul.f32 %v1053, %v942
        %v1576 = vmul.f32 %v1118, %v943
        %v1577 = vmul.f32 %v1183, %v944
        %v1578 = vmul.f32 %v1248, %v945
        %v1579 = vmul.f32 %v1313, %v946
        %v1580 = vmul.f32 %v1378, %v947
        %v1581 = vmul.f32 %v1443, %v948
        %v1582 = vmul.f32 %v1508, %v949
        %v1583 = vmul.f32 %v1056, %v950
        %v1584 = vmul.f32 %v1121, %v951
        %v1585 = vmul.f32 %v1186, %v952
        %v1586 = vmul.f32 %v1251, %v953
        %v1587 = vmul.f32 %v1316, %v954
        %v1588 = vmul.f32 %v1381, %v955
        %v1589 = vmul.f32 %v1446, %v956
        %v1590 = vmul.f32 %v1511, %v957
        %v1591 = vmul.f32 %v1059, %v942
        %v1592 = vmul.f32 %v1124, %v943
        %v1593 = vmul.f32 %v1189, %v944
        %v1594 = vmul.f32 %v1254, %v945
        %v1595 = vmul.f32 %v1319, %v946
        %v1596 = vmul.f32 %v1384, %v947
        %v1597 = vmul.f32 %v1449, %v948
        %v1598 = vmul.f32 %v1514, %v949
        %v1599 = vmul.f32 %v1062, %v950
        %v1600 = vmul.f32 %v1127, %v951
        %v1601 = vmul.f32 %v1192, %v952
        %v1602 = vmul.f32 %v1257, %v953
        %v1603 = vmul.f32 %v1322, %v954
        %v1604 = vmul.f32 %v1387, %v955
        %v1605 = vmul.f32 %v1452, %v956
        %v1606 = vmul.f32 %v1517, %v957
        %v1607 = vmul.f32 %v1065, %v942
        %v1608 = vmul.f32 %v1130, %v943
        %v1609 = vmul.f32 %v1195, %v944
        %v1610 = vmul.f32 %v1260, %v945
        %v1611 = vmul.f32 %v1325, %v946
        %v1612 = vmul.f32 %v1390, %v947
        %v1613 = vmul.f32 %v1455, %v948
        %v1614 = vmul.f32 %v1520, %v949
        %v1615 = vmul.f32 %v1068, %v950
        %v1616 = vmul.f32 %v1133, %v951
        %v1617 = vmul.f32 %v1198, %v952
        %v1618 = vmul.f32 %v1263, %v953
        %v1619 = vmul.f32 %v1328, %v954
        %v1620 = vmul.f32 %v1393, %v955
        %v1621 = vmul.f32 %v1458, %v956
        %v1622 = vmul.f32 %v1523, %v957
        %v1623 = vmul.f32 %v1071, %v942
        %v1624 = vmul.f32 %v1136, %v943
        %v1625 = vmul.f32 %v1201, %v944
        %v1626 = vmul.f32 %v1266, %v945
        %v1627 = vmul.f32 %v1331, %v946
        %v1628 = vmul.f32 %v1396, %v947
        %v1629 = vmul.f32 %v1461, %v948
        %v1630 = vmul.f32 %v1526, %v949
        %v1631 = vmul.f32 %v1074, %v950
        %v1632 = vmul.f32 %v1139, %v951
        %v1633 = vmul.f32 %v1204, %v952
        %v1634 = vmul.f32 %v1269, %v953
        %v1635 = vmul.f32 %v1334, %v954
        %v1636 = vmul.f32 %v1399, %v955
        %v1637 = vmul.f32 %v1464, %v956
        %v1638 = vmul.f32 %v1529, %v957
        %v1639 = vmul.f32 %v1077, %v942
        %v1640 = vmul.f32 %v1142, %v943
        %v1641 = vmul.f32 %v1207, %v944
        %v1642 = vmul.f32 %v1272, %v945
        %v1643 = vmul.f32 %v1337, %v946
        %v1644 = vmul.f32 %v1402, %v947
        %v1645 = vmul.f32 %v1467, %v948
        %v1646 = vmul.f32 %v1532, %v949
        %v1647 = vmul.f32 %v1080, %v950
        %v1648 = vmul.f32 %v1145, %v951
        %v1649 = vmul.f32 %v1210, %v952
        %v1650 = vmul.f32 %v1275, %v953
        %v1651 = vmul.f32 %v1340, %v954
        %v1652 = vmul.f32 %v1405, %v955
        %v1653 = vmul.f32 %v1470, %v956
        %v1654 = vmul.f32 %v1535, %v957
        %v1655 = vmul.f32 %v1083, %v942
        %v1656 = vmul.f32 %v1148, %v943
        %v1657 = vmul.f32 %v1213, %v944
        %v1658 = vmul.f32 %v1278, %v945
        %v1659 = vmul.f32 %v1343, %v946
        %v1660 = vmul.f32 %v1408, %v947
        %v1661 = vmul.f32 %v1473, %v948
        %v1662 = vmul.f32 %v1538, %v949
        %v1663 = vmul.f32 %v1086, %v950
        %v1664 = vmul.f32 %v1151, %v951
        %v1665 = vmul.f32 %v1216, %v952
        %v1666 = vmul.f32 %v1281, %v953
        %v1667 = vmul.f32 %v1346, %v954
        %v1668 = vmul.f32 %v1411, %v955
        %v1669 = vmul.f32 %v1476, %v956
        %v1670 = vmul.f32 %v1541, %v957
        %v1671 = vadd.f32 %v1543, %v1551
        %v1672 = vrot.slane %v1671, 4
        %v1673 = vadd.f32 %v1671, %v1672
        %v1674 = vrot.slane %v1673, 2
        %v1675 = vadd.f32 %v1673, %v1674
        %v1676 = vrot.slane %v1675, 1
        %v1677 = vadd.f32 %v1675, %v1676
        %v1678 = vadd.f32 %v1544, %v1552
        %v1679 = vrot.slane %v1678, 4
        %v1680 = vadd.f32 %v1678, %v1679
        %v1681 = vrot.slane %v1680, 2
        %v1682 = vadd.f32 %v1680, %v1681
        %v1683 = vrot.slane %v1682, 1
        %v1684 = vadd.f32 %v1682, %v1683
        %v1685 = vadd.f32 %v1545, %v1553
        %v1686 = vrot.slane %v1685, 4
        %v1687 = vadd.f32 %v1685, %v1686
        %v1688 = vrot.slane %v1687, 2
        %v1689 = vadd.f32 %v1687, %v1688
        %v1690 = vrot.slane %v1689, 1
        %v1691 = vadd.f32 %v1689, %v1690
        %v1692 = vadd.f32 %v1546, %v1554
        %v1693 = vrot.slane %v1692, 4
        %v1694 = vadd.f32 %v1692, %v1693
        %v1695 = vrot.slane %v1694, 2
        %v1696 = vadd.f32 %v1694, %v1695
        %v1697 = vrot.slane %v1696, 1
        %v1698 = vadd.f32 %v1696, %v1697
        %v1699 = vadd.f32 %v1547, %v1555
        %v1700 = vrot.slane %v1699, 4
        %v1701 = vadd.f32 %v1699, %v1700
        %v1702 = vrot.slane %v1701, 2
        %v1703 = vadd.f32 %v1701, %v1702
        %v1704 = vrot.slane %v1703, 1
        %v1705 = vadd.f32 %v1703, %v1704
        %v1706 = vadd.f32 %v1548, %v1556
        %v1707 = vrot.slane %v1706, 4
        %v1708 = vadd.f32 %v1706, %v1707
        %v1709 = vrot.slane %v1708, 2
        %v1710 = vadd.f32 %v1708, %v1709
        %v1711 = vrot.slane %v1710, 1
        %v1712 = vadd.f32 %v1710, %v1711
        %v1713 = vadd.f32 %v1549, %v1557
        %v1714 = vrot.slane %v1713, 4
        %v1715 = vadd.f32 %v1713, %v1714
        %v1716 = vrot.slane %v1715, 2
        %v1717 = vadd.f32 %v1715, %v1716
        %v1718 = vrot.slane %v1717, 1
        %v1719 = vadd.f32 %v1717, %v1718
        %v1720 = vadd.f32 %v1550, %v1558
        %v1721 = vrot.slane %v1720, 4
        %v1722 = vadd.f32 %v1720, %v1721
        %v1723 = vrot.slane %v1722, 2
        %v1724 = vadd.f32 %v1722, %v1723
        %v1725 = vrot.slane %v1724, 1
        %v1726 = vadd.f32 %v1724, %v1725
        %v1727 = vadd.f32 %v1559, %v1567
        %v1728 = vrot.slane %v1727, 4
        %v1729 = vadd.f32 %v1727, %v1728
        %v1730 = vrot.slane %v1729, 2
        %v1731 = vadd.f32 %v1729, %v1730
        %v1732 = vrot.slane %v1731, 1
        %v1733 = vadd.f32 %v1731, %v1732
        %v1734 = vadd.f32 %v1560, %v1568
        %v1735 = vrot.slane %v1734, 4
        %v1736 = vadd.f32 %v1734, %v1735
        %v1737 = vrot.slane %v1736, 2
        %v1738 = vadd.f32 %v1736, %v1737
        %v1739 = vrot.slane %v1738, 1
        %v1740 = vadd.f32 %v1738, %v1739
        %v1741 = vadd.f32 %v1561, %v1569
        %v1742 = vrot.slane %v1741, 4
        %v1743 = vadd.f32 %v1741, %v1742
        %v1744 = vrot.slane %v1743, 2
        %v1745 = vadd.f32 %v1743, %v1744
        %v1746 = vrot.slane %v1745, 1
        %v1747 = vadd.f32 %v1745, %v1746
        %v1748 = vadd.f32 %v1562, %v1570
        %v1749 = vrot.slane %v1748, 4
        %v1750 = vadd.f32 %v1748, %v1749
        %v1751 = vrot.slane %v1750, 2
        %v1752 = vadd.f32 %v1750, %v1751
        %v1753 = vrot.slane %v1752, 1
        %v1754 = vadd.f32 %v1752, %v1753
        %v1755 = vadd.f32 %v1563, %v1571
        %v1756 = vrot.slane %v1755, 4
        %v1757 = vadd.f32 %v1755, %v1756
        %v1758 = vrot.slane %v1757, 2
        %v1759 = vadd.f32 %v1757, %v1758
        %v1760 = vrot.slane %v1759, 1
        %v1761 = vadd.f32 %v1759, %v1760
        %v1762 = vadd.f32 %v1564, %v1572
        %v1763 = vrot.slane %v1762, 4
        %v1764 = vadd.f32 %v1762, %v1763
        %v1765 = vrot.slane %v1764, 2
        %v1766 = vadd.f32 %v1764, %v1765
        %v1767 = vrot.slane %v1766, 1
        %v1768 = vadd.f32 %v1766, %v1767
        %v1769 = vadd.f32 %v1565, %v1573
        %v1770 = vrot.slane %v1769, 4
        %v1771 = vadd.f32 %v1769, %v1770
        %v1772 = vrot.slane %v1771, 2
        %v1773 = vadd.f32 %v1771, %v1772
        %v1774 = vrot.slane %v1773, 1
        %v1775 = vadd.f32 %v1773, %v1774
        %v1776 = vadd.f32 %v1566, %v1574
        %v1777 = vrot.slane %v1776, 4
        %v1778 = vadd.f32 %v1776, %v1777
        %v1779 = vrot.slane %v1778, 2
        %v1780 = vadd.f32 %v1778, %v1779
        %v1781 = vrot.slane %v1780, 1
        %v1782 = vadd.f32 %v1780, %v1781
        %v1783 = vadd.f32 %v1575, %v1583
        %v1784 = vrot.slane %v1783, 4
        %v1785 = vadd.f32 %v1783, %v1784
        %v1786 = vrot.slane %v1785, 2
        %v1787 = vadd.f32 %v1785, %v1786
        %v1788 = vrot.slane %v1787, 1
        %v1789 = vadd.f32 %v1787, %v1788
        %v1790 = vadd.f32 %v1576, %v1584
        %v1791 = vrot.slane %v1790, 4
        %v1792 = vadd.f32 %v1790, %v1791
        %v1793 = vrot.slane %v1792, 2
        %v1794 = vadd.f32 %v1792, %v1793
        %v1795 = vrot.slane %v1794, 1
        %v1796 = vadd.f32 %v1794, %v1795
        %v1797 = vadd.f32 %v1577, %v1585
        %v1798 = vrot.slane %v1797, 4
        %v1799 = vadd.f32 %v1797, %v1798
        %v1800 = vrot.slane %v1799, 2
        %v1801 = vadd.f32 %v1799, %v1800
        %v1802 = vrot.slane %v1801, 1
        %v1803 = vadd.f32 %v1801, %v1802
        %v1804 = vadd.f32 %v1578, %v1586
        %v1805 = vrot.slane %v1804, 4
        %v1806 = vadd.f32 %v1804, %v1805
        %v1807 = vrot.slane %v1806, 2
        %v1808 = vadd.f32 %v1806, %v1807
        %v1809 = vrot.slane %v1808, 1
        %v1810 = vadd.f32 %v1808, %v1809
        %v1811 = vadd.f32 %v1579, %v1587
        %v1812 = vrot.slane %v1811, 4
        %v1813 = vadd.f32 %v1811, %v1812
        %v1814 = vrot.slane %v1813, 2
        %v1815 = vadd.f32 %v1813, %v1814
        %v1816 = vrot.slane %v1815, 1
        %v1817 = vadd.f32 %v1815, %v1816
        %v1818 = vadd.f32 %v1580, %v1588
        %v1819 = vrot.slane %v1818, 4
        %v1820 = vadd.f32 %v1818, %v1819
        %v1821 = vrot.slane %v1820, 2
        %v1822 = vadd.f32 %v1820, %v1821
        %v1823 = vrot.slane %v1822, 1
        %v1824 = vadd.f32 %v1822, %v1823
        %v1825 = vadd.f32 %v1581, %v1589
        %v1826 = vrot.slane %v1825, 4
        %v1827 = vadd.f32 %v1825, %v1826
        %v1828 = vrot.slane %v1827, 2
        %v1829 = vadd.f32 %v1827, %v1828
        %v1830 = vrot.slane %v1829, 1
        %v1831 = vadd.f32 %v1829, %v1830
        %v1832 = vadd.f32 %v1582, %v1590
        %v1833 = vrot.slane %v1832, 4
        %v1834 = vadd.f32 %v1832, %v1833
        %v1835 = vrot.slane %v1834, 2
        %v1836 = vadd.f32 %v1834, %v1835
        %v1837 = vrot.slane %v1836, 1
        %v1838 = vadd.f32 %v1836, %v1837
        %v1839 = vadd.f32 %v1591, %v1599
        %v1840 = vrot.slane %v1839, 4
        %v1841 = vadd.f32 %v1839, %v1840
        %v1842 = vrot.slane %v1841, 2
        %v1843 = vadd.f32 %v1841, %v1842
        %v1844 = vrot.slane %v1843, 1
        %v1845 = vadd.f32 %v1843, %v1844
        %v1846 = vadd.f32 %v1592, %v1600
        %v1847 = vrot.slane %v1846, 4
        %v1848 = vadd.f32 %v1846, %v1847
        %v1849 = vrot.slane %v1848, 2
        %v1850 = vadd.f32 %v1848, %v1849
        %v1851 = vrot.slane %v1850, 1
        %v1852 = vadd.f32 %v1850, %v1851
        %v1853 = vadd.f32 %v1593, %v1601
        %v1854 = vrot.slane %v1853, 4
        %v1855 = vadd.f32 %v1853, %v1854
        %v1856 = vrot.slane %v1855, 2
        %v1857 = vadd.f32 %v1855, %v1856
        %v1858 = vrot.slane %v1857, 1
        %v1859 = vadd.f32 %v1857, %v1858
        %v1860 = vadd.f32 %v1594, %v1602
        %v1861 = vrot.slane %v1860, 4
        %v1862 = vadd.f32 %v1860, %v1861
        %v1863 = vrot.slane %v1862, 2
        %v1864 = vadd.f32 %v1862, %v1863
        %v1865 = vrot.slane %v1864, 1
        %v1866 = vadd.f32 %v1864, %v1865
        %v1867 = vadd.f32 %v1595, %v1603
        %v1868 = vrot.slane %v1867, 4
        %v1869 = vadd.f32 %v1867, %v1868
        %v1870 = vrot.slane %v1869, 2
        %v1871 = vadd.f32 %v1869, %v1870
        %v1872 = vrot.slane %v1871, 1
        %v1873 = vadd.f32 %v1871, %v1872
        %v1874 = vadd.f32 %v1596, %v1604
        %v1875 = vrot.slane %v1874, 4
        %v1876 = vadd.f32 %v1874, %v1875
        %v1877 = vrot.slane %v1876, 2
        %v1878 = vadd.f32 %v1876, %v1877
        %v1879 = vrot.slane %v1878, 1
        %v1880 = vadd.f32 %v1878, %v1879
        %v1881 = vadd.f32 %v1597, %v1605
        %v1882 = vrot.slane %v1881, 4
        %v1883 = vadd.f32 %v1881, %v1882
        %v1884 = vrot.slane %v1883, 2
        %v1885 = vadd.f32 %v1883, %v1884
        %v1886 = vrot.slane %v1885, 1
        %v1887 = vadd.f32 %v1885, %v1886
        %v1888 = vadd.f32 %v1598, %v1606
        %v1889 = vrot.slane %v1888, 4
        %v1890 = vadd.f32 %v1888, %v1889
        %v1891 = vrot.slane %v1890, 2
        %v1892 = vadd.f32 %v1890, %v1891
        %v1893 = vrot.slane %v1892, 1
        %v1894 = vadd.f32 %v1892, %v1893
        %v1895 = vadd.f32 %v1607, %v1615
        %v1896 = vrot.slane %v1895, 4
        %v1897 = vadd.f32 %v1895, %v1896
        %v1898 = vrot.slane %v1897, 2
        %v1899 = vadd.f32 %v1897, %v1898
        %v1900 = vrot.slane %v1899, 1
        %v1901 = vadd.f32 %v1899, %v1900
        %v1902 = vadd.f32 %v1608, %v1616
        %v1903 = vrot.slane %v1902, 4
        %v1904 = vadd.f32 %v1902, %v1903
        %v1905 = vrot.slane %v1904, 2
        %v1906 = vadd.f32 %v1904, %v1905
        %v1907 = vrot.slane %v1906, 1
        %v1908 = vadd.f32 %v1906, %v1907
        %v1909 = vadd.f32 %v1609, %v1617
        %v1910 = vrot.slane %v1909, 4
        %v1911 = vadd.f32 %v1909, %v1910
        %v1912 = vrot.slane %v1911, 2
        %v1913 = vadd.f32 %v1911, %v1912
        %v1914 = vrot.slane %v1913, 1
        %v1915 = vadd.f32 %v1913, %v1914
        %v1916 = vadd.f32 %v1610, %v1618
        %v1917 = vrot.slane %v1916, 4
        %v1918 = vadd.f32 %v1916, %v1917
        %v1919 = vrot.slane %v1918, 2
        %v1920 = vadd.f32 %v1918, %v1919
        %v1921 = vrot.slane %v1920, 1
        %v1922 = vadd.f32 %v1920, %v1921
        %v1923 = vadd.f32 %v1611, %v1619
        %v1924 = vrot.slane %v1923, 4
        %v1925 = vadd.f32 %v1923, %v1924
        %v1926 = vrot.slane %v1925, 2
        %v1927 = vadd.f32 %v1925, %v1926
        %v1928 = vrot.slane %v1927, 1
        %v1929 = vadd.f32 %v1927, %v1928
        %v1930 = vadd.f32 %v1612, %v1620
        %v1931 = vrot.slane %v1930, 4
        %v1932 = vadd.f32 %v1930, %v1931
        %v1933 = vrot.slane %v1932, 2
        %v1934 = vadd.f32 %v1932, %v1933
        %v1935 = vrot.slane %v1934, 1
        %v1936 = vadd.f32 %v1934, %v1935
        %v1937 = vadd.f32 %v1613, %v1621
        %v1938 = vrot.slane %v1937, 4
        %v1939 = vadd.f32 %v1937, %v1938
        %v1940 = vrot.slane %v1939, 2
        %v1941 = vadd.f32 %v1939, %v1940
        %v1942 = vrot.slane %v1941, 1
        %v1943 = vadd.f32 %v1941, %v1942
        %v1944 = vadd.f32 %v1614, %v1622
        %v1945 = vrot.slane %v1944, 4
        %v1946 = vadd.f32 %v1944, %v1945
        %v1947 = vrot.slane %v1946, 2
        %v1948 = vadd.f32 %v1946, %v1947
        %v1949 = vrot.slane %v1948, 1
        %v1950 = vadd.f32 %v1948, %v1949
        %v1951 = vadd.f32 %v1623, %v1631
        %v1952 = vrot.slane %v1951, 4
        %v1953 = vadd.f32 %v1951, %v1952
        %v1954 = vrot.slane %v1953, 2
        %v1955 = vadd.f32 %v1953, %v1954
        %v1956 = vrot.slane %v1955, 1
        %v1957 = vadd.f32 %v1955, %v1956
        %v1958 = vadd.f32 %v1624, %v1632
        %v1959 = vrot.slane %v1958, 4
        %v1960 = vadd.f32 %v1958, %v1959
        %v1961 = vrot.slane %v1960, 2
        %v1962 = vadd.f32 %v1960, %v1961
        %v1963 = vrot.slane %v1962, 1
        %v1964 = vadd.f32 %v1962, %v1963
        %v1965 = vadd.f32 %v1625, %v1633
        %v1966 = vrot.slane %v1965, 4
        %v1967 = vadd.f32 %v1965, %v1966
        %v1968 = vrot.slane %v1967, 2
        %v1969 = vadd.f32 %v1967, %v1968
        %v1970 = vrot.slane %v1969, 1
        %v1971 = vadd.f32 %v1969, %v1970
        %v1972 = vadd.f32 %v1626, %v1634
        %v1973 = vrot.slane %v1972, 4
        %v1974 = vadd.f32 %v1972, %v1973
        %v1975 = vrot.slane %v1974, 2
        %v1976 = vadd.f32 %v1974, %v1975
        %v1977 = vrot.slane %v1976, 1
        %v1978 = vadd.f32 %v1976, %v1977
        %v1979 = vadd.f32 %v1627, %v1635
        %v1980 = vrot.slane %v1979, 4
        %v1981 = vadd.f32 %v1979, %v1980
        %v1982 = vrot.slane %v1981, 2
        %v1983 = vadd.f32 %v1981, %v1982
        %v1984 = vrot.slane %v1983, 1
        %v1985 = vadd.f32 %v1983, %v1984
        %v1986 = vadd.f32 %v1628, %v1636
        %v1987 = vrot.slane %v1986, 4
        %v1988 = vadd.f32 %v1986, %v1987
        %v1989 = vrot.slane %v1988, 2
        %v1990 = vadd.f32 %v1988, %v1989
        %v1991 = vrot.slane %v1990, 1
        %v1992 = vadd.f32 %v1990, %v1991
        %v1993 = vadd.f32 %v1629, %v1637
        %v1994 = vrot.slane %v1993, 4
        %v1995 = vadd.f32 %v1993, %v1994
        %v1996 = vrot.slane %v1995, 2
        %v1997 = vadd.f32 %v1995, %v1996
        %v1998 = vrot.slane %v1997, 1
        %v1999 = vadd.f32 %v1997, %v1998
        %v2000 = vadd.f32 %v1630, %v1638
        %v2001 = vrot.slane %v2000, 4
        %v2002 = vadd.f32 %v2000, %v2001
        %v2003 = vrot.slane %v2002, 2
        %v2004 = vadd.f32 %v2002, %v2003
        %v2005 = vrot.slane %v2004, 1
        %v2006 = vadd.f32 %v2004, %v2005
        %v2007 = vadd.f32 %v1639, %v1647
        %v2008 = vrot.slane %v2007, 4
        %v2009 = vadd.f32 %v2007, %v2008
        %v2010 = vrot.slane %v2009, 2
        %v2011 = vadd.f32 %v2009, %v2010
        %v2012 = vrot.slane %v2011, 1
        %v2013 = vadd.f32 %v2011, %v2012
        %v2014 = vadd.f32 %v1640, %v1648
        %v2015 = vrot.slane %v2014, 4
        %v2016 = vadd.f32 %v2014, %v2015
        %v2017 = vrot.slane %v2016, 2
        %v2018 = vadd.f32 %v2016, %v2017
        %v2019 = vrot.slane %v2018, 1
        %v2020 = vadd.f32 %v2018, %v2019
        %v2021 = vadd.f32 %v1641, %v1649
        %v2022 = vrot.slane %v2021, 4
        %v2023 = vadd.f32 %v2021, %v2022
        %v2024 = vrot.slane %v2023, 2
        %v2025 = vadd.f32 %v2023, %v2024
        %v2026 = vrot.slane %v2025, 1
        %v2027 = vadd.f32 %v2025, %v2026
        %v2028 = vadd.f32 %v1642, %v1650
        %v2029 = vrot.slane %v2028, 4
        %v2030 = vadd.f32 %v2028, %v2029
        %v2031 = vrot.slane %v2030, 2
        %v2032 = vadd.f32 %v2030, %v2031
        %v2033 = vrot.slane %v2032, 1
        %v2034 = vadd.f32 %v2032, %v2033
        %v2035 = vadd.f32 %v1643, %v1651
        %v2036 = vrot.slane %v2035, 4
        %v2037 = vadd.f32 %v2035, %v2036
        %v2038 = vrot.slane %v2037, 2
        %v2039 = vadd.f32 %v2037, %v2038
        %v2040 = vrot.slane %v2039, 1
        %v2041 = vadd.f32 %v2039, %v2040
        %v2042 = vadd.f32 %v1644, %v1652
        %v2043 = vrot.slane %v2042, 4
        %v2044 = vadd.f32 %v2042, %v2043
        %v2045 = vrot.slane %v2044, 2
        %v2046 = vadd.f32 %v2044, %v2045
        %v2047 = vrot.slane %v2046, 1
        %v2048 = vadd.f32 %v2046, %v2047
        %v2049 = vadd.f32 %v1645, %v1653
        %v2050 = vrot.slane %v2049, 4
        %v2051 = vadd.f32 %v2049, %v2050
        %v2052 = vrot.slane %v2051, 2
        %v2053 = vadd.f32 %v2051, %v2052
        %v2054 = vrot.slane %v2053, 1
        %v2055 = vadd.f32 %v2053, %v2054
        %v2056 = vadd.f32 %v1646, %v1654
        %v2057 = vrot.slane %v2056, 4
        %v2058 = vadd.f32 %v2056, %v2057
        %v2059 = vrot.slane %v2058, 2
        %v2060 = vadd.f32 %v2058, %v2059
        %v2061 = vrot.slane %v2060, 1
        %v2062 = vadd.f32 %v2060, %v2061
        %v2063 = vadd.f32 %v1655, %v1663
        %v2064 = vrot.slane %v2063, 4
        %v2065 = vadd.f32 %v2063, %v2064
        %v2066 = vrot.slane %v2065, 2
        %v2067 = vadd.f32 %v2065, %v2066
        %v2068 = vrot.slane %v2067, 1
        %v2069 = vadd.f32 %v2067, %v2068
        %v2070 = vadd.f32 %v1656, %v1664
        %v2071 = vrot.slane %v2070, 4
        %v2072 = vadd.f32 %v2070, %v2071
        %v2073 = vrot.slane %v2072, 2
        %v2074 = vadd.f32 %v2072, %v2073
        %v2075 = vrot.slane %v2074, 1
        %v2076 = vadd.f32 %v2074, %v2075
        %v2077 = vadd.f32 %v1657, %v1665
        %v2078 = vrot.slane %v2077, 4
        %v2079 = vadd.f32 %v2077, %v2078
        %v2080 = vrot.slane %v2079, 2
        %v2081 = vadd.f32 %v2079, %v2080
        %v2082 = vrot.slane %v2081, 1
        %v2083 = vadd.f32 %v2081, %v2082
        %v2084 = vadd.f32 %v1658, %v1666
        %v2085 = vrot.slane %v2084, 4
        %v2086 = vadd.f32 %v2084, %v2085
        %v2087 = vrot.slane %v2086, 2
        %v2088 = vadd.f32 %v2086, %v2087
        %v2089 = vrot.slane %v2088, 1
        %v2090 = vadd.f32 %v2088, %v2089
        %v2091 = vadd.f32 %v1659, %v1667
        %v2092 = vrot.slane %v2091, 4
        %v2093 = vadd.f32 %v2091, %v2092
        %v2094 = vrot.slane %v2093, 2
        %v2095 = vadd.f32 %v2093, %v2094
        %v2096 = vrot.slane %v2095, 1
        %v2097 = vadd.f32 %v2095, %v2096
        %v2098 = vadd.f32 %v1660, %v1668
        %v2099 = vrot.slane %v2098, 4
        %v2100 = vadd.f32 %v2098, %v2099
        %v2101 = vrot.slane %v2100, 2
        %v2102 = vadd.f32 %v2100, %v2101
        %v2103 = vrot.slane %v2102, 1
        %v2104 = vadd.f32 %v2102, %v2103
        %v2105 = vadd.f32 %v1661, %v1669
        %v2106 = vrot.slane %v2105, 4
        %v2107 = vadd.f32 %v2105, %v2106
        %v2108 = vrot.slane %v2107, 2
        %v2109 = vadd.f32 %v2107, %v2108
        %v2110 = vrot.slane %v2109, 1
        %v2111 = vadd.f32 %v2109, %v2110
        %v2112 = vadd.f32 %v1662, %v1670
        %v2113 = vrot.slane %v2112, 4
        %v2114 = vadd.f32 %v2112, %v2113
        %v2115 = vrot.slane %v2114, 2
        %v2116 = vadd.f32 %v2114, %v2115
        %v2117 = vrot.slane %v2116, 1
        %v2118 = vadd.f32 %v2116, %v2117
        %vm2183 = vcmask 1041409
        %v2184 = vsel %vm2183, %v1733, %v1677
        %vm2185 = vcmask 1042434
        %v2186 = vsel %vm2185, %v1789, %v2184
        %vm2187 = vcmask 1043459
        %v2188 = vsel %vm2187, %v1845, %v2186
        %vm2189 = vcmask 1044484
        %v2190 = vsel %vm2189, %v1901, %v2188
        %vm2191 = vcmask 1045509
        %v2192 = vsel %vm2191, %v1957, %v2190
        %vm2193 = vcmask 1046534
        %v2194 = vsel %vm2193, %v2013, %v2192
        %vm2195 = vcmask 1047559
        %v2196 = vsel %vm2195, %v2069, %v2194
        %v2197 = vsel %vm2183, %v1740, %v1684
        %v2198 = vsel %vm2185, %v1796, %v2197
        %v2199 = vsel %vm2187, %v1852, %v2198
        %v2200 = vsel %vm2189, %v1908, %v2199
        %v2201 = vsel %vm2191, %v1964, %v2200
        %v2202 = vsel %vm2193, %v2020, %v2201
        %v2203 = vsel %vm2195, %v2076, %v2202
        %v2204 = vsel %vm2183, %v1747, %v1691
        %v2205 = vsel %vm2185, %v1803, %v2204
        %v2206 = vsel %vm2187, %v1859, %v2205
        %v2207 = vsel %vm2189, %v1915, %v2206
        %v2208 = vsel %vm2191, %v1971, %v2207
        %v2209 = vsel %vm2193, %v2027, %v2208
        %v2210 = vsel %vm2195, %v2083, %v2209
        %v2211 = vsel %vm2183, %v1754, %v1698
        %v2212 = vsel %vm2185, %v1810, %v2211
        %v2213 = vsel %vm2187, %v1866, %v2212
        %v2214 = vsel %vm2189, %v1922, %v2213
        %v2215 = vsel %vm2191, %v1978, %v2214
        %v2216 = vsel %vm2193, %v2034, %v2215
        %v2217 = vsel %vm2195, %v2090, %v2216
        %v2218 = vsel %vm2183, %v1761, %v1705
        %v2219 = vsel %vm2185, %v1817, %v2218
        %v2220 = vsel %vm2187, %v1873, %v2219
        %v2221 = vsel %vm2189, %v1929, %v2220
        %v2222 = vsel %vm2191, %v1985, %v2221
        %v2223 = vsel %vm2193, %v2041, %v2222
        %v2224 = vsel %vm2195, %v2097, %v2223
        %v2225 = vsel %vm2183, %v1768, %v1712
        %v2226 = vsel %vm2185, %v1824, %v2225
        %v2227 = vsel %vm2187, %v1880, %v2226
        %v2228 = vsel %vm2189, %v1936, %v2227
        %v2229 = vsel %vm2191, %v1992, %v2228
        %v2230 = vsel %vm2193, %v2048, %v2229
        %v2231 = vsel %vm2195, %v2104, %v2230
        %v2232 = vsel %vm2183, %v1775, %v1719
        %v2233 = vsel %vm2185, %v1831, %v2232
        %v2234 = vsel %vm2187, %v1887, %v2233
        %v2235 = vsel %vm2189, %v1943, %v2234
        %v2236 = vsel %vm2191, %v1999, %v2235
        %v2237 = vsel %vm2193, %v2055, %v2236
        %v2238 = vsel %vm2195, %v2111, %v2237
        %v2239 = vsel %vm2183, %v1782, %v1726
        %v2240 = vsel %vm2185, %v1838, %v2239
        %v2241 = vsel %vm2187, %v1894, %v2240
        %v2242 = vsel %vm2189, %v1950, %v2241
        %v2243 = vsel %vm2191, %v2006, %v2242
        %v2244 = vsel %vm2193, %v2062, %v2243
        %v2245 = vsel %vm2195, %v2118, %v2244
        %v2254 = vadd.f32 %v453, %v2196
        %v2255 = vadd.f32 %v454, %v2203
        %v2256 = vadd.f32 %v453, %v2210
        %v2257 = vadd.f32 %v454, %v2217
        %v2258 = vadd.f32 %v453, %v2224
        %v2259 = vadd.f32 %v454, %v2231
        %v2260 = vadd.f32 %v453, %v2238
        %v2261 = vadd.f32 %v454, %v2245
        %v2262 = vmul.f32 %v1677, %v1677
        %v2263 = vmul.f32 %v1684, %v1684
        %v2264 = vmul.f32 %v1691, %v1691
        %v2265 = vmul.f32 %v1698, %v1698
        %v2266 = vmul.f32 %v1705, %v1705
        %v2267 = vmul.f32 %v1712, %v1712
        %v2268 = vmul.f32 %v1719, %v1719
        %v2269 = vmul.f32 %v1726, %v1726
        %v2270 = vmul.f32 %v1733, %v1733
        %v2271 = vmul.f32 %v1740, %v1740
        %v2272 = vmul.f32 %v1747, %v1747
        %v2273 = vmul.f32 %v1754, %v1754
        %v2274 = vmul.f32 %v1761, %v1761
        %v2275 = vmul.f32 %v1768, %v1768
        %v2276 = vmul.f32 %v1775, %v1775
        %v2277 = vmul.f32 %v1782, %v1782
        %v2278 = vmul.f32 %v1789, %v1789
        %v2279 = vmul.f32 %v1796, %v1796
        %v2280 = vmul.f32 %v1803, %v1803
        %v2281 = vmul.f32 %v1810, %v1810
        %v2282 = vmul.f32 %v1817, %v1817
        %v2283 = vmul.f32 %v1824, %v1824
        %v2284 = vmul.f32 %v1831, %v1831
        %v2285 = vmul.f32 %v1838, %v1838
        %v2286 = vmul.f32 %v1845, %v1845
        %v2287 = vmul.f32 %v1852, %v1852
        %v2288 = vmul.f32 %v1859, %v1859
        %v2289 = vmul.f32 %v1866, %v1866
        %v2290 = vmul.f32 %v1873, %v1873
        %v2291 = vmul.f32 %v1880, %v1880
        %v2292 = vmul.f32 %v1887, %v1887
        %v2293 = vmul.f32 %v1894, %v1894
        %v2294 = vmul.f32 %v1901, %v1901
        %v2295 = vmul.f32 %v1908, %v1908
        %v2296 = vmul.f32 %v1915, %v1915
        %v2297 = vmul.f32 %v1922, %v1922
        %v2298 = vmul.f32 %v1929, %v1929
        %v2299 = vmul.f32 %v1936, %v1936
        %v2300 = vmul.f32 %v1943, %v1943
        %v2301 = vmul.f32 %v1950, %v1950
        %v2302 = vmul.f32 %v1957, %v1957
        %v2303 = vmul.f32 %v1964, %v1964
        %v2304 = vmul.f32 %v1971, %v1971
        %v2305 = vmul.f32 %v1978, %v1978
        %v2306 = vmul.f32 %v1985, %v1985
        %v2307 = vmul.f32 %v1992, %v1992
        %v2308 = vmul.f32 %v1999, %v1999
        %v2309 = vmul.f32 %v2006, %v2006
        %v2310 = vmul.f32 %v2013, %v2013
        %v2311 = vmul.f32 %v2020, %v2020
        %v2312 = vmul.f32 %v2027, %v2027
        %v2313 = vmul.f32 %v2034, %v2034
        %v2314 = vmul.f32 %v2041, %v2041
        %v2315 = vmul.f32 %v2048, %v2048
        %v2316 = vmul.f32 %v2055, %v2055
        %v2317 = vmul.f32 %v2062, %v2062
        %v2318 = vmul.f32 %v2069, %v2069
        %v2319 = vmul.f32 %v2076, %v2076
        %v2320 = vmul.f32 %v2083, %v2083
        %v2321 = vmul.f32 %v2090, %v2090
        %v2322 = vmul.f32 %v2097, %v2097
        %v2323 = vmul.f32 %v2104, %v2104
        %v2324 = vmul.f32 %v2111, %v2111
        %v2325 = vmul.f32 %v2118, %v2118
        %v2390 = vsel %vm2183, %v2270, %v2262
        %v2391 = vsel %vm2185, %v2278, %v2390
        %v2392 = vsel %vm2187, %v2286, %v2391
        %v2393 = vsel %vm2189, %v2294, %v2392
        %v2394 = vsel %vm2191, %v2302, %v2393
        %v2395 = vsel %vm2193, %v2310, %v2394
        %v2396 = vsel %vm2195, %v2318, %v2395
        %v2397 = vsel %vm2183, %v2271, %v2263
        %v2398 = vsel %vm2185, %v2279, %v2397
        %v2399 = vsel %vm2187, %v2287, %v2398
        %v2400 = vsel %vm2189, %v2295, %v2399
        %v2401 = vsel %vm2191, %v2303, %v2400
        %v2402 = vsel %vm2193, %v2311, %v2401
        %v2403 = vsel %vm2195, %v2319, %v2402
        %v2404 = vsel %vm2183, %v2272, %v2264
        %v2405 = vsel %vm2185, %v2280, %v2404
        %v2406 = vsel %vm2187, %v2288, %v2405
        %v2407 = vsel %vm2189, %v2296, %v2406
        %v2408 = vsel %vm2191, %v2304, %v2407
        %v2409 = vsel %vm2193, %v2312, %v2408
        %v2410 = vsel %vm2195, %v2320, %v2409
        %v2411 = vsel %vm2183, %v2273, %v2265
        %v2412 = vsel %vm2185, %v2281, %v2411
        %v2413 = vsel %vm2187, %v2289, %v2412
        %v2414 = vsel %vm2189, %v2297, %v2413
        %v2415 = vsel %vm2191, %v2305, %v2414
        %v2416 = vsel %vm2193, %v2313, %v2415
        %v2417 = vsel %vm2195, %v2321, %v2416
        %v2418 = vsel %vm2183, %v2274, %v2266
        %v2419 = vsel %vm2185, %v2282, %v2418
        %v2420 = vsel %vm2187, %v2290, %v2419
        %v2421 = vsel %vm2189, %v2298, %v2420
        %v2422 = vsel %vm2191, %v2306, %v2421
        %v2423 = vsel %vm2193, %v2314, %v2422
        %v2424 = vsel %vm2195, %v2322, %v2423
        %v2425 = vsel %vm2183, %v2275, %v2267
        %v2426 = vsel %vm2185, %v2283, %v2425
        %v2427 = vsel %vm2187, %v2291, %v2426
        %v2428 = vsel %vm2189, %v2299, %v2427
        %v2429 = vsel %vm2191, %v2307, %v2428
        %v2430 = vsel %vm2193, %v2315, %v2429
        %v2431 = vsel %vm2195, %v2323, %v2430
        %v2432 = vsel %vm2183, %v2276, %v2268
        %v2433 = vsel %vm2185, %v2284, %v2432
        %v2434 = vsel %vm2187, %v2292, %v2433
        %v2435 = vsel %vm2189, %v2300, %v2434
        %v2436 = vsel %vm2191, %v2308, %v2435
        %v2437 = vsel %vm2193, %v2316, %v2436
        %v2438 = vsel %vm2195, %v2324, %v2437
        %v2439 = vsel %vm2183, %v2277, %v2269
        %v2440 = vsel %vm2185, %v2285, %v2439
        %v2441 = vsel %vm2187, %v2293, %v2440
        %v2442 = vsel %vm2189, %v2301, %v2441
        %v2443 = vsel %vm2191, %v2309, %v2442
        %v2444 = vsel %vm2193, %v2317, %v2443
        %v2445 = vsel %vm2195, %v2325, %v2444
        %v2454 = vadd.f32 %v465, %v2396
        %v2455 = vadd.f32 %v466, %v2403
        %v2456 = vadd.f32 %v465, %v2410
        %v2457 = vadd.f32 %v466, %v2417
        %v2458 = vadd.f32 %v465, %v2424
        %v2459 = vadd.f32 %v466, %v2431
        %v2460 = vadd.f32 %v465, %v2438
        %v2461 = vadd.f32 %v466, %v2445
        %v2464 = vrot.slane %v453, 1
        %v2465 = vrot.slane %v454, 1
        %v2466 = vrot.slane %v453, 2
        %v2467 = vrot.slane %v454, 2
        %v2468 = vrot.slane %v453, 3
        %v2469 = vrot.slane %v454, 3
        %v2470 = vrot.slane %v453, 4
        %v2471 = vrot.slane %v454, 4
        %v2472 = vrot.slane %v453, 5
        %v2473 = vrot.slane %v454, 5
        %v2474 = vrot.slane %v453, 6
        %v2475 = vrot.slane %v454, 6
        %v2476 = vrot.slane %v453, 7
        %v2477 = vrot.slane %v454, 7
        %v2494 = vmul.f32 %v1677, %v453
        %v2495 = vmul.f32 %v1684, %v454
        %v2496 = vmul.f32 %v1691, %v453
        %v2497 = vmul.f32 %v1698, %v454
        %v2498 = vmul.f32 %v1705, %v453
        %v2499 = vmul.f32 %v1712, %v454
        %v2500 = vmul.f32 %v1719, %v453
        %v2501 = vmul.f32 %v1726, %v454
        %v2502 = vmul.f32 %v1733, %v2464
        %v2503 = vmul.f32 %v1740, %v2465
        %v2504 = vmul.f32 %v1747, %v2464
        %v2505 = vmul.f32 %v1754, %v2465
        %v2506 = vmul.f32 %v1761, %v2464
        %v2507 = vmul.f32 %v1768, %v2465
        %v2508 = vmul.f32 %v1775, %v2464
        %v2509 = vmul.f32 %v1782, %v2465
        %v2510 = vmul.f32 %v1789, %v2466
        %v2511 = vmul.f32 %v1796, %v2467
        %v2512 = vmul.f32 %v1803, %v2466
        %v2513 = vmul.f32 %v1810, %v2467
        %v2514 = vmul.f32 %v1817, %v2466
        %v2515 = vmul.f32 %v1824, %v2467
        %v2516 = vmul.f32 %v1831, %v2466
        %v2517 = vmul.f32 %v1838, %v2467
        %v2518 = vmul.f32 %v1845, %v2468
        %v2519 = vmul.f32 %v1852, %v2469
        %v2520 = vmul.f32 %v1859, %v2468
        %v2521 = vmul.f32 %v1866, %v2469
        %v2522 = vmul.f32 %v1873, %v2468
        %v2523 = vmul.f32 %v1880, %v2469
        %v2524 = vmul.f32 %v1887, %v2468
        %v2525 = vmul.f32 %v1894, %v2469
        %v2526 = vmul.f32 %v1901, %v2470
        %v2527 = vmul.f32 %v1908, %v2471
        %v2528 = vmul.f32 %v1915, %v2470
        %v2529 = vmul.f32 %v1922, %v2471
        %v2530 = vmul.f32 %v1929, %v2470
        %v2531 = vmul.f32 %v1936, %v2471
        %v2532 = vmul.f32 %v1943, %v2470
        %v2533 = vmul.f32 %v1950, %v2471
        %v2534 = vmul.f32 %v1957, %v2472
        %v2535 = vmul.f32 %v1964, %v2473
        %v2536 = vmul.f32 %v1971, %v2472
        %v2537 = vmul.f32 %v1978, %v2473
        %v2538 = vmul.f32 %v1985, %v2472
        %v2539 = vmul.f32 %v1992, %v2473
        %v2540 = vmul.f32 %v1999, %v2472
        %v2541 = vmul.f32 %v2006, %v2473
        %v2542 = vmul.f32 %v2013, %v2474
        %v2543 = vmul.f32 %v2020, %v2475
        %v2544 = vmul.f32 %v2027, %v2474
        %v2545 = vmul.f32 %v2034, %v2475
        %v2546 = vmul.f32 %v2041, %v2474
        %v2547 = vmul.f32 %v2048, %v2475
        %v2548 = vmul.f32 %v2055, %v2474
        %v2549 = vmul.f32 %v2062, %v2475
        %v2550 = vmul.f32 %v2069, %v2476
        %v2551 = vmul.f32 %v2076, %v2477
        %v2552 = vmul.f32 %v2083, %v2476
        %v2553 = vmul.f32 %v2090, %v2477
        %v2554 = vmul.f32 %v2097, %v2476
        %v2555 = vmul.f32 %v2104, %v2477
        %v2556 = vmul.f32 %v2111, %v2476
        %v2557 = vmul.f32 %v2118, %v2477
        %v2622 = vrot.slane %v2502, 7
        %v2623 = vsel %vm2183, %v2622, %v2494
        %v2624 = vrot.slane %v2510, 6
        %v2625 = vsel %vm2185, %v2624, %v2623
        %v2626 = vrot.slane %v2518, 5
        %v2627 = vsel %vm2187, %v2626, %v2625
        %v2628 = vrot.slane %v2526, 4
        %v2629 = vsel %vm2189, %v2628, %v2627
        %v2630 = vrot.slane %v2534, 3
        %v2631 = vsel %vm2191, %v2630, %v2629
        %v2632 = vrot.slane %v2542, 2
        %v2633 = vsel %vm2193, %v2632, %v2631
        %v2634 = vrot.slane %v2550, 1
        %v2635 = vsel %vm2195, %v2634, %v2633
        %v2636 = vrot.slane %v2503, 7
        %v2637 = vsel %vm2183, %v2636, %v2495
        %v2638 = vrot.slane %v2511, 6
        %v2639 = vsel %vm2185, %v2638, %v2637
        %v2640 = vrot.slane %v2519, 5
        %v2641 = vsel %vm2187, %v2640, %v2639
        %v2642 = vrot.slane %v2527, 4
        %v2643 = vsel %vm2189, %v2642, %v2641
        %v2644 = vrot.slane %v2535, 3
        %v2645 = vsel %vm2191, %v2644, %v2643
        %v2646 = vrot.slane %v2543, 2
        %v2647 = vsel %vm2193, %v2646, %v2645
        %v2648 = vrot.slane %v2551, 1
        %v2649 = vsel %vm2195, %v2648, %v2647
        %v2650 = vrot.slane %v2504, 7
        %v2651 = vsel %vm2183, %v2650, %v2496
        %v2652 = vrot.slane %v2512, 6
        %v2653 = vsel %vm2185, %v2652, %v2651
        %v2654 = vrot.slane %v2520, 5
        %v2655 = vsel %vm2187, %v2654, %v2653
        %v2656 = vrot.slane %v2528, 4
        %v2657 = vsel %vm2189, %v2656, %v2655
        %v2658 = vrot.slane %v2536, 3
        %v2659 = vsel %vm2191, %v2658, %v2657
        %v2660 = vrot.slane %v2544, 2
        %v2661 = vsel %vm2193, %v2660, %v2659
        %v2662 = vrot.slane %v2552, 1
        %v2663 = vsel %vm2195, %v2662, %v2661
        %v2664 = vrot.slane %v2505, 7
        %v2665 = vsel %vm2183, %v2664, %v2497
        %v2666 = vrot.slane %v2513, 6
        %v2667 = vsel %vm2185, %v2666, %v2665
        %v2668 = vrot.slane %v2521, 5
        %v2669 = vsel %vm2187, %v2668, %v2667
        %v2670 = vrot.slane %v2529, 4
        %v2671 = vsel %vm2189, %v2670, %v2669
        %v2672 = vrot.slane %v2537, 3
        %v2673 = vsel %vm2191, %v2672, %v2671
        %v2674 = vrot.slane %v2545, 2
        %v2675 = vsel %vm2193, %v2674, %v2673
        %v2676 = vrot.slane %v2553, 1
        %v2677 = vsel %vm2195, %v2676, %v2675
        %v2678 = vrot.slane %v2506, 7
        %v2679 = vsel %vm2183, %v2678, %v2498
        %v2680 = vrot.slane %v2514, 6
        %v2681 = vsel %vm2185, %v2680, %v2679
        %v2682 = vrot.slane %v2522, 5
        %v2683 = vsel %vm2187, %v2682, %v2681
        %v2684 = vrot.slane %v2530, 4
        %v2685 = vsel %vm2189, %v2684, %v2683
        %v2686 = vrot.slane %v2538, 3
        %v2687 = vsel %vm2191, %v2686, %v2685
        %v2688 = vrot.slane %v2546, 2
        %v2689 = vsel %vm2193, %v2688, %v2687
        %v2690 = vrot.slane %v2554, 1
        %v2691 = vsel %vm2195, %v2690, %v2689
        %v2692 = vrot.slane %v2507, 7
        %v2693 = vsel %vm2183, %v2692, %v2499
        %v2694 = vrot.slane %v2515, 6
        %v2695 = vsel %vm2185, %v2694, %v2693
        %v2696 = vrot.slane %v2523, 5
        %v2697 = vsel %vm2187, %v2696, %v2695
        %v2698 = vrot.slane %v2531, 4
        %v2699 = vsel %vm2189, %v2698, %v2697
        %v2700 = vrot.slane %v2539, 3
        %v2701 = vsel %vm2191, %v2700, %v2699
        %v2702 = vrot.slane %v2547, 2
        %v2703 = vsel %vm2193, %v2702, %v2701
        %v2704 = vrot.slane %v2555, 1
        %v2705 = vsel %vm2195, %v2704, %v2703
        %v2706 = vrot.slane %v2508, 7
        %v2707 = vsel %vm2183, %v2706, %v2500
        %v2708 = vrot.slane %v2516, 6
        %v2709 = vsel %vm2185, %v2708, %v2707
        %v2710 = vrot.slane %v2524, 5
        %v2711 = vsel %vm2187, %v2710, %v2709
        %v2712 = vrot.slane %v2532, 4
        %v2713 = vsel %vm2189, %v2712, %v2711
        %v2714 = vrot.slane %v2540, 3
        %v2715 = vsel %vm2191, %v2714, %v2713
        %v2716 = vrot.slane %v2548, 2
        %v2717 = vsel %vm2193, %v2716, %v2715
        %v2718 = vrot.slane %v2556, 1
        %v2719 = vsel %vm2195, %v2718, %v2717
        %v2720 = vrot.slane %v2509, 7
        %v2721 = vsel %vm2183, %v2720, %v2501
        %v2722 = vrot.slane %v2517, 6
        %v2723 = vsel %vm2185, %v2722, %v2721
        %v2724 = vrot.slane %v2525, 5
        %v2725 = vsel %vm2187, %v2724, %v2723
        %v2726 = vrot.slane %v2533, 4
        %v2727 = vsel %vm2189, %v2726, %v2725
        %v2728 = vrot.slane %v2541, 3
        %v2729 = vsel %vm2191, %v2728, %v2727
        %v2730 = vrot.slane %v2549, 2
        %v2731 = vsel %vm2193, %v2730, %v2729
        %v2732 = vrot.slane %v2557, 1
        %v2733 = vsel %vm2195, %v2732, %v2731
        %v2742 = vrot.slane %v2635, 4
        %v2743 = vadd.f32 %v2635, %v2742
        %v2744 = vrot.slane %v2743, 2
        %v2745 = vadd.f32 %v2743, %v2744
        %v2746 = vrot.slane %v2745, 1
        %v2747 = vadd.f32 %v2745, %v2746
        %v2748 = vrot.slane %v2649, 4
        %v2749 = vadd.f32 %v2649, %v2748
        %v2750 = vrot.slane %v2749, 2
        %v2751 = vadd.f32 %v2749, %v2750
        %v2752 = vrot.slane %v2751, 1
        %v2753 = vadd.f32 %v2751, %v2752
        %v2754 = vrot.slane %v2663, 4
        %v2755 = vadd.f32 %v2663, %v2754
        %v2756 = vrot.slane %v2755, 2
        %v2757 = vadd.f32 %v2755, %v2756
        %v2758 = vrot.slane %v2757, 1
        %v2759 = vadd.f32 %v2757, %v2758
        %v2760 = vrot.slane %v2677, 4
        %v2761 = vadd.f32 %v2677, %v2760
        %v2762 = vrot.slane %v2761, 2
        %v2763 = vadd.f32 %v2761, %v2762
        %v2764 = vrot.slane %v2763, 1
        %v2765 = vadd.f32 %v2763, %v2764
        %v2766 = vrot.slane %v2691, 4
        %v2767 = vadd.f32 %v2691, %v2766
        %v2768 = vrot.slane %v2767, 2
        %v2769 = vadd.f32 %v2767, %v2768
        %v2770 = vrot.slane %v2769, 1
        %v2771 = vadd.f32 %v2769, %v2770
        %v2772 = vrot.slane %v2705, 4
        %v2773 = vadd.f32 %v2705, %v2772
        %v2774 = vrot.slane %v2773, 2
        %v2775 = vadd.f32 %v2773, %v2774
        %v2776 = vrot.slane %v2775, 1
        %v2777 = vadd.f32 %v2775, %v2776
        %v2778 = vrot.slane %v2719, 4
        %v2779 = vadd.f32 %v2719, %v2778
        %v2780 = vrot.slane %v2779, 2
        %v2781 = vadd.f32 %v2779, %v2780
        %v2782 = vrot.slane %v2781, 1
        %v2783 = vadd.f32 %v2781, %v2782
        %v2784 = vrot.slane %v2733, 4
        %v2785 = vadd.f32 %v2733, %v2784
        %v2786 = vrot.slane %v2785, 2
        %v2787 = vadd.f32 %v2785, %v2786
        %v2788 = vrot.slane %v2787, 1
        %v2789 = vadd.f32 %v2787, %v2788
        %v2790 = vmul.f32 %v2747, 0.25
        %v2791 = vmul.f32 %v2753, 0.25
        %v2792 = vmul.f32 %v2759, 0.25
        %v2793 = vmul.f32 %v2765, 0.25
        %v2794 = vmul.f32 %v2771, 0.25
        %v2795 = vmul.f32 %v2777, 0.25
        %v2796 = vmul.f32 %v2783, 0.25
        %v2797 = vmul.f32 %v2789, 0.25
        %v2800 = vrot.slane %v2792, 7
        %v2801 = vrot.slane %v2793, 7
        %v2806 = vrot.slane %v2794, 6
        %v2807 = vrot.slane %v2795, 6
        %v2812 = vrot.slane %v2796, 5
        %v2813 = vrot.slane %v2797, 5
        %vm2816 = vcmask 1040384
        %v2817 = vsel %vm2816, %v2790, %v2800
        %v2818 = vsel %vm2816, %v2791, %v2801
        %vm2819 = vcmask 1041408
        %v2820 = vsel %vm2819, %v2817, %v2806
        %v2821 = vsel %vm2819, %v2818, %v2807
        %vm2822 = vcmask 1042432
        %v2823 = vsel %vm2822, %v2820, %v2812
        %v2824 = vsel %vm2822, %v2821, %v2813
        %2826 = vset.pattern.permute.xlu0 0
        %2827 = vperm.xlu0 %2826, %v460
        %v2828 = vpop.permute.xlu0 %2827
        %v2829 = vrot.slane %v2828, 1
        %v2830 = vrot.slane %v2828, 2
        %v2831 = vrot.slane %v2828, 3
        %v2832 = vrot.slane %v2828, 4
        %v2833 = vrot.slane %v2828, 5
        %v2834 = vrot.slane %v2828, 6
        %v2835 = vrot.slane %v2828, 7
        %v2844 = vmul.f32 %v2494, %v2828
        %v2845 = vmul.f32 %v2495, %v2828
        %v2846 = vmul.f32 %v2496, %v2828
        %v2847 = vmul.f32 %v2497, %v2828
        %v2848 = vmul.f32 %v2498, %v2828
        %v2849 = vmul.f32 %v2499, %v2828
        %v2850 = vmul.f32 %v2500, %v2828
        %v2851 = vmul.f32 %v2501, %v2828
        %v2852 = vmul.f32 %v2502, %v2829
        %v2853 = vmul.f32 %v2503, %v2829
        %v2854 = vmul.f32 %v2504, %v2829
        %v2855 = vmul.f32 %v2505, %v2829
        %v2856 = vmul.f32 %v2506, %v2829
        %v2857 = vmul.f32 %v2507, %v2829
        %v2858 = vmul.f32 %v2508, %v2829
        %v2859 = vmul.f32 %v2509, %v2829
        %v2860 = vmul.f32 %v2510, %v2830
        %v2861 = vmul.f32 %v2511, %v2830
        %v2862 = vmul.f32 %v2512, %v2830
        %v2863 = vmul.f32 %v2513, %v2830
        %v2864 = vmul.f32 %v2514, %v2830
        %v2865 = vmul.f32 %v2515, %v2830
        %v2866 = vmul.f32 %v2516, %v2830
        %v2867 = vmul.f32 %v2517, %v2830
        %v2868 = vmul.f32 %v2518, %v2831
        %v2869 = vmul.f32 %v2519, %v2831
        %v2870 = vmul.f32 %v2520, %v2831
        %v2871 = vmul.f32 %v2521, %v2831
        %v2872 = vmul.f32 %v2522, %v2831
        %v2873 = vmul.f32 %v2523, %v2831
        %v2874 = vmul.f32 %v2524, %v2831
        %v2875 = vmul.f32 %v2525, %v2831
        %v2876 = vmul.f32 %v2526, %v2832
        %v2877 = vmul.f32 %v2527, %v2832
        %v2878 = vmul.f32 %v2528, %v2832
        %v2879 = vmul.f32 %v2529, %v2832
        %v2880 = vmul.f32 %v2530, %v2832
        %v2881 = vmul.f32 %v2531, %v2832
        %v2882 = vmul.f32 %v2532, %v2832
        %v2883 = vmul.f32 %v2533, %v2832
        %v2884 = vmul.f32 %v2534, %v2833
        %v2885 = vmul.f32 %v2535, %v2833
        %v2886 = vmul.f32 %v2536, %v2833
        %v2887 = vmul.f32 %v2537, %v2833
        %v2888 = vmul.f32 %v2538, %v2833
        %v2889 = vmul.f32 %v2539, %v2833
        %v2890 = vmul.f32 %v2540, %v2833
        %v2891 = vmul.f32 %v2541, %v2833
        %v2892 = vmul.f32 %v2542, %v2834
        %v2893 = vmul.f32 %v2543, %v2834
        %v2894 = vmul.f32 %v2544, %v2834
        %v2895 = vmul.f32 %v2545, %v2834
        %v2896 = vmul.f32 %v2546, %v2834
        %v2897 = vmul.f32 %v2547, %v2834
        %v2898 = vmul.f32 %v2548, %v2834
        %v2899 = vmul.f32 %v2549, %v2834
        %v2900 = vmul.f32 %v2550, %v2835
        %v2901 = vmul.f32 %v2551, %v2835
        %v2902 = vmul.f32 %v2552, %v2835
        %v2903 = vmul.f32 %v2553, %v2835
        %v2904 = vmul.f32 %v2554, %v2835
        %v2905 = vmul.f32 %v2555, %v2835
        %v2906 = vmul.f32 %v2556, %v2835
        %v2907 = vmul.f32 %v2557, %v2835
        %v2972 = vrot.slane %v2852, 7
        %v2973 = vsel %vm2183, %v2972, %v2844
        %v2974 = vrot.slane %v2860, 6
        %v2975 = vsel %vm2185, %v2974, %v2973
        %v2976 = vrot.slane %v2868, 5
        %v2977 = vsel %vm2187, %v2976, %v2975
        %v2978 = vrot.slane %v2876, 4
        %v2979 = vsel %vm2189, %v2978, %v2977
        %v2980 = vrot.slane %v2884, 3
        %v2981 = vsel %vm2191, %v2980, %v2979
        %v2982 = vrot.slane %v2892, 2
        %v2983 = vsel %vm2193, %v2982, %v2981
        %v2984 = vrot.slane %v2900, 1
        %v2985 = vsel %vm2195, %v2984, %v2983
        %v2986 = vrot.slane %v2853, 7
        %v2987 = vsel %vm2183, %v2986, %v2845
        %v2988 = vrot.slane %v2861, 6
        %v2989 = vsel %vm2185, %v2988, %v2987
        %v2990 = vrot.slane %v2869, 5
        %v2991 = vsel %vm2187, %v2990, %v2989
        %v2992 = vrot.slane %v2877, 4
        %v2993 = vsel %vm2189, %v2992, %v2991
        %v2994 = vrot.slane %v2885, 3
        %v2995 = vsel %vm2191, %v2994, %v2993
        %v2996 = vrot.slane %v2893, 2
        %v2997 = vsel %vm2193, %v2996, %v2995
        %v2998 = vrot.slane %v2901, 1
        %v2999 = vsel %vm2195, %v2998, %v2997
        %v3000 = vrot.slane %v2854, 7
        %v3001 = vsel %vm2183, %v3000, %v2846
        %v3002 = vrot.slane %v2862, 6
        %v3003 = vsel %vm2185, %v3002, %v3001
        %v3004 = vrot.slane %v2870, 5
        %v3005 = vsel %vm2187, %v3004, %v3003
        %v3006 = vrot.slane %v2878, 4
        %v3007 = vsel %vm2189, %v3006, %v3005
        %v3008 = vrot.slane %v2886, 3
        %v3009 = vsel %vm2191, %v3008, %v3007
        %v3010 = vrot.slane %v2894, 2
        %v3011 = vsel %vm2193, %v3010, %v3009
        %v3012 = vrot.slane %v2902, 1
        %v3013 = vsel %vm2195, %v3012, %v3011
        %v3014 = vrot.slane %v2855, 7
        %v3015 = vsel %vm2183, %v3014, %v2847
        %v3016 = vrot.slane %v2863, 6
        %v3017 = vsel %vm2185, %v3016, %v3015
        %v3018 = vrot.slane %v2871, 5
        %v3019 = vsel %vm2187, %v3018, %v3017
        %v3020 = vrot.slane %v2879, 4
        %v3021 = vsel %vm2189, %v3020, %v3019
        %v3022 = vrot.slane %v2887, 3
        %v3023 = vsel %vm2191, %v3022, %v3021
        %v3024 = vrot.slane %v2895, 2
        %v3025 = vsel %vm2193, %v3024, %v3023
        %v3026 = vrot.slane %v2903, 1
        %v3027 = vsel %vm2195, %v3026, %v3025
        %v3028 = vrot.slane %v2856, 7
        %v3029 = vsel %vm2183, %v3028, %v2848
        %v3030 = vrot.slane %v2864, 6
        %v3031 = vsel %vm2185, %v3030, %v3029
        %v3032 = vrot.slane %v2872, 5
        %v3033 = vsel %vm2187, %v3032, %v3031
        %v3034 = vrot.slane %v2880, 4
        %v3035 = vsel %vm2189, %v3034, %v3033
        %v3036 = vrot.slane %v2888, 3
        %v3037 = vsel %vm2191, %v3036, %v3035
        %v3038 = vrot.slane %v2896, 2
        %v3039 = vsel %vm2193, %v3038, %v3037
        %v3040 = vrot.slane %v2904, 1
        %v3041 = vsel %vm2195, %v3040, %v3039
        %v3042 = vrot.slane %v2857, 7
        %v3043 = vsel %vm2183, %v3042, %v2849
        %v3044 = vrot.slane %v2865, 6
        %v3045 = vsel %vm2185, %v3044, %v3043
        %v3046 = vrot.slane %v2873, 5
        %v3047 = vsel %vm2187, %v3046, %v3045
        %v3048 = vrot.slane %v2881, 4
        %v3049 = vsel %vm2189, %v3048, %v3047
        %v3050 = vrot.slane %v2889, 3
        %v3051 = vsel %vm2191, %v3050, %v3049
        %v3052 = vrot.slane %v2897, 2
        %v3053 = vsel %vm2193, %v3052, %v3051
        %v3054 = vrot.slane %v2905, 1
        %v3055 = vsel %vm2195, %v3054, %v3053
        %v3056 = vrot.slane %v2858, 7
        %v3057 = vsel %vm2183, %v3056, %v2850
        %v3058 = vrot.slane %v2866, 6
        %v3059 = vsel %vm2185, %v3058, %v3057
        %v3060 = vrot.slane %v2874, 5
        %v3061 = vsel %vm2187, %v3060, %v3059
        %v3062 = vrot.slane %v2882, 4
        %v3063 = vsel %vm2189, %v3062, %v3061
        %v3064 = vrot.slane %v2890, 3
        %v3065 = vsel %vm2191, %v3064, %v3063
        %v3066 = vrot.slane %v2898, 2
        %v3067 = vsel %vm2193, %v3066, %v3065
        %v3068 = vrot.slane %v2906, 1
        %v3069 = vsel %vm2195, %v3068, %v3067
        %v3070 = vrot.slane %v2859, 7
        %v3071 = vsel %vm2183, %v3070, %v2851
        %v3072 = vrot.slane %v2867, 6
        %v3073 = vsel %vm2185, %v3072, %v3071
        %v3074 = vrot.slane %v2875, 5
        %v3075 = vsel %vm2187, %v3074, %v3073
        %v3076 = vrot.slane %v2883, 4
        %v3077 = vsel %vm2189, %v3076, %v3075
        %v3078 = vrot.slane %v2891, 3
        %v3079 = vsel %vm2191, %v3078, %v3077
        %v3080 = vrot.slane %v2899, 2
        %v3081 = vsel %vm2193, %v3080, %v3079
        %v3082 = vrot.slane %v2907, 1
        %v3083 = vsel %vm2195, %v3082, %v3081
        %v3092 = vrot.slane %v2985, 4
        %v3093 = vadd.f32 %v2985, %v3092
        %v3094 = vrot.slane %v3093, 2
        %v3095 = vadd.f32 %v3093, %v3094
        %v3096 = vrot.slane %v3095, 1
        %v3097 = vadd.f32 %v3095, %v3096
        %v3098 = vrot.slane %v2999, 4
        %v3099 = vadd.f32 %v2999, %v3098
        %v3100 = vrot.slane %v3099, 2
        %v3101 = vadd.f32 %v3099, %v3100
        %v3102 = vrot.slane %v3101, 1
        %v3103 = vadd.f32 %v3101, %v3102
        %v3104 = vrot.slane %v3013, 4
        %v3105 = vadd.f32 %v3013, %v3104
        %v3106 = vrot.slane %v3105, 2
        %v3107 = vadd.f32 %v3105, %v3106
        %v3108 = vrot.slane %v3107, 1
        %v3109 = vadd.f32 %v3107, %v3108
        %v3110 = vrot.slane %v3027, 4
        %v3111 = vadd.f32 %v3027, %v3110
        %v3112 = vrot.slane %v3111, 2
        %v3113 = vadd.f32 %v3111, %v3112
        %v3114 = vrot.slane %v3113, 1
        %v3115 = vadd.f32 %v3113, %v3114
        %v3116 = vrot.slane %v3041, 4
        %v3117 = vadd.f32 %v3041, %v3116
        %v3118 = vrot.slane %v3117, 2
        %v3119 = vadd.f32 %v3117, %v3118
        %v3120 = vrot.slane %v3119, 1
        %v3121 = vadd.f32 %v3119, %v3120
        %v3122 = vrot.slane %v3055, 4
        %v3123 = vadd.f32 %v3055, %v3122
        %v3124 = vrot.slane %v3123, 2
        %v3125 = vadd.f32 %v3123, %v3124
        %v3126 = vrot.slane %v3125, 1
        %v3127 = vadd.f32 %v3125, %v3126
        %v3128 = vrot.slane %v3069, 4
        %v3129 = vadd.f32 %v3069, %v3128
        %v3130 = vrot.slane %v3129, 2
        %v3131 = vadd.f32 %v3129, %v3130
        %v3132 = vrot.slane %v3131, 1
        %v3133 = vadd.f32 %v3131, %v3132
        %v3134 = vrot.slane %v3083, 4
        %v3135 = vadd.f32 %v3083, %v3134
        %v3136 = vrot.slane %v3135, 2
        %v3137 = vadd.f32 %v3135, %v3136
        %v3138 = vrot.slane %v3137, 1
        %v3139 = vadd.f32 %v3137, %v3138
        %v3142 = vrot.slane %v3109, 7
        %v3143 = vrot.slane %v3115, 7
        %v3148 = vrot.slane %v3121, 6
        %v3149 = vrot.slane %v3127, 6
        %v3154 = vrot.slane %v3133, 5
        %v3155 = vrot.slane %v3139, 5
        %v3158 = vsel %vm2816, %v3097, %v3142
        %v3159 = vsel %vm2816, %v3103, %v3143
        %v3160 = vsel %vm2819, %v3158, %v3148
        %v3161 = vsel %vm2819, %v3159, %v3149
        %v3162 = vsel %vm2822, %v3160, %v3154
        %v3163 = vsel %vm2822, %v3161, %v3155
        %vm3164 = vcmask 1043456
        %v3165 = vsel %vm3164, %v2823, -inf
        %v3166 = vrot.slane %v3165, 4
        %v3167 = vmax.f32 %v3165, %v3166
        %v3168 = vrot.slane %v3167, 2
        %v3169 = vmax.f32 %v3167, %v3168
        %v3170 = vrot.slane %v3169, 1
        %v3171 = vmax.f32 %v3169, %v3170
        %v3172 = vsel %vm3164, %v2824, -inf
        %v3173 = vrot.slane %v3172, 4
        %v3174 = vmax.f32 %v3172, %v3173
        %v3175 = vrot.slane %v3174, 2
        %v3176 = vmax.f32 %v3174, %v3175
        %v3177 = vrot.slane %v3176, 1
        %v3178 = vmax.f32 %v3176, %v3177
        %v3179 = vsub.f32 %v2823, %v3171
        %v3180 = vsub.f32 %v2824, %v3178
        %v3181 = vmul.f32 %v3179, 1.442695
        %v3182 = vpow.pop %v3181
        %v3183 = vmul.f32 %v3180, 1.442695
        %v3184 = vpow.pop %v3183
        %v3185 = vsel %vm3164, %v3182, 0.0
        %v3186 = vrot.slane %v3185, 4
        %v3187 = vadd.f32 %v3185, %v3186
        %v3188 = vrot.slane %v3187, 2
        %v3189 = vadd.f32 %v3187, %v3188
        %v3190 = vrot.slane %v3189, 1
        %v3191 = vadd.f32 %v3189, %v3190
        %v3192 = vsel %vm3164, %v3184, 0.0
        %v3193 = vrot.slane %v3192, 4
        %v3194 = vadd.f32 %v3192, %v3193
        %v3195 = vrot.slane %v3194, 2
        %v3196 = vadd.f32 %v3194, %v3195
        %v3197 = vrot.slane %v3196, 1
        %v3198 = vadd.f32 %v3196, %v3197
        %v3199 = vrcp.pop %v3191
        %v3200 = vmul.f32 %v3191, %v3199
        %v3201 = vsub.f32 1.0, %v3200
        %v3202 = vmul.f32 %v3199, %v3201
        %v3203 = vadd.f32 %v3199, %v3202
        %vm3204 = vweird.f32 %v3191
        %vm3205 = vweird.f32 %v3199
        %vm3206 = vmor %vm3204, %vm3205
        %v3207 = vsel %vm3206, %v3199, %v3203
        %v3208 = vand.u32 2147483647, %v3191
        %vm3209 = vcmp.eq.f32.partialorder %v3208, 8.507059e+37
        %v3210 = vand.u32 %v3191, 2147483648
        %v3211 = vor.u32 1.1754944e-38, %v3210
        %v3212 = vsel %vm3209, %v3211, %v3207
        %v3213 = vrcp.pop %v3198
        %v3214 = vmul.f32 %v3198, %v3213
        %v3215 = vsub.f32 1.0, %v3214
        %v3216 = vmul.f32 %v3213, %v3215
        %v3217 = vadd.f32 %v3213, %v3216
        %vm3218 = vweird.f32 %v3198
        %vm3219 = vweird.f32 %v3213
        %vm3220 = vmor %vm3218, %vm3219
        %v3221 = vsel %vm3220, %v3213, %v3217
        %v3222 = vand.u32 2147483647, %v3198
        %vm3223 = vcmp.eq.f32.partialorder %v3222, 8.507059e+37
        %v3224 = vand.u32 %v3198, 2147483648
        %v3225 = vor.u32 1.1754944e-38, %v3224
        %v3226 = vsel %vm3223, %v3225, %v3221
        %v3227 = vmul.f32 %v3182, %v3212
        %v3228 = vmul.f32 %v3184, %v3226
        %v3229 = vmul.f32 %v3227, 0.35355338
        %v3230 = vmul.f32 %v3228, 0.35355338
        %v3231 = vadd.f32 %v3229, 1e-08
        %v3232 = vadd.f32 %v3230, 1e-08
        %v3233 = vmul.f32 %v3229, %v3162
        %v3234 = vmul.f32 %v3230, %v3163
        %v3235 = vadd.f32 %v3233, 0.0
        %v3236 = vadd.f32 %v3234, 0.0
        %s3237 = sadd.s32 %s467, 12
        %s3238 = sld [smem:[#allocation2 + %s3237]]
        %s3239 = sadd.s32 %s467, 13
        %s3240 = sld [smem:[#allocation2 + %s3239]]
        %s3241 = sadd.s32 %s467, 14
        %s3242 = sld [smem:[#allocation2 + %s3241]]
        %s3243 = sadd.s32 %s467, 15
        %s3244 = sld [smem:[#allocation2 + %s3243]]
        %s3245 = sadd.s32 %s467, 16
        %s3246 = sld [smem:[#allocation2 + %s3245]]
        %s3247 = sadd.s32 %s467, 17
        %s3248 = sld [smem:[#allocation2 + %s3247]]
        %s3249 = sadd.s32 %s467, 18
        %s3250 = sld [smem:[#allocation2 + %s3249]]
        %s3251 = sadd.s32 %s467, 19
        %s3252 = sld [smem:[#allocation2 + %s3251]]
        %s3253 = sadd.s32 %s467, 20
        %s3254 = sld [smem:[#allocation2 + %s3253]]
        %s3255 = sadd.s32 %s467, 21
        %s3256 = sld [smem:[#allocation2 + %s3255]]
        %s3257 = sadd.s32 %s467, 22
        %s3258 = sld [smem:[#allocation2 + %s3257]]
        %s3259 = sadd.s32 %s467, 23
        %s3260 = sld [smem:[#allocation2 + %s3259]]
        %v3261 = vstv %s3238
        %v3262 = vmul.f32 %v3261, %v457
        %v3263 = vstv %s3240
        %v3264 = vmul.f32 %v3263, %v459
        %v3265 = vadd.f32 %v3262, %v3264
        %v3266 = vstv %s3242
        %v3267 = vadd.f32 %v3265, %v3266
        %v3268 = vstv %s3244
        %v3269 = vmul.f32 %v3268, %v457
        %v3270 = vstv %s3246
        %v3271 = vmul.f32 %v3270, %v459
        %v3272 = vadd.f32 %v3269, %v3271
        %v3273 = vstv %s3248
        %v3274 = vadd.f32 %v3272, %v3273
        %v3275 = vstv %s3250
        %v3276 = vmul.f32 %v3275, %v457
        %v3277 = vstv %s3252
        %v3278 = vmul.f32 %v3277, %v459
        %v3279 = vadd.f32 %v3276, %v3278
        %v3280 = vstv %s3254
        %v3281 = vadd.f32 %v3279, %v3280
        %v3283 = vperm.slane %v3281, 0
        %v3284 = vperm.slane %v3281, 1
        %3287 = vst [vmem:[#allocation1] ss:$2 sm:$0xff] %v455
        %v3288 = vld.sshfl [vmem:[#allocation1] sm:$0xff pattern:$0x75316420]
        %v3289 = vld.sshfl [vmem:[#allocation1 + $0x8] sm:$0xff pattern:$0x75316420]
        %v3292 = vmul.f32 %v3283, %v3288
        %v3293 = vmul.f32 %v3284, %v3289
        %v3294 = vstv %s3260
        %v3295 = vadd.f32 %v3292, %v3294
        %v3296 = vadd.f32 %v3293, %v3294
        %v3297 = vrcp.pop %v3295
        %v3298 = vmul.f32 %v3295, %v3297
        %v3299 = vsub.f32 1.0, %v3298
        %v3300 = vmul.f32 %v3297, %v3299
        %v3301 = vadd.f32 %v3297, %v3300
        %vm3302 = vweird.f32 %v3295
        %vm3303 = vweird.f32 %v3297
        %vm3304 = vmor %vm3302, %vm3303
        %v3305 = vsel %vm3304, %v3297, %v3301
        %v3306 = vand.u32 2147483647, %v3295
        %vm3307 = vcmp.eq.f32.partialorder %v3306, 8.507059e+37
        %v3308 = vand.u32 %v3295, 2147483648
        %v3309 = vor.u32 1.1754944e-38, %v3308
        %v3310 = vsel %vm3307, %v3309, %v3305
        %v3311 = vrcp.pop %v3296
        %v3312 = vmul.f32 %v3296, %v3311
        %v3313 = vsub.f32 1.0, %v3312
        %v3314 = vmul.f32 %v3311, %v3313
        %v3315 = vadd.f32 %v3311, %v3314
        %vm3316 = vweird.f32 %v3296
        %vm3317 = vweird.f32 %v3311
        %vm3318 = vmor %vm3316, %vm3317
        %v3319 = vsel %vm3318, %v3311, %v3315
        %v3320 = vand.u32 2147483647, %v3296
        %vm3321 = vcmp.eq.f32.partialorder %v3320, 8.507059e+37
        %v3322 = vand.u32 %v3296, 2147483648
        %v3323 = vor.u32 1.1754944e-38, %v3322
        %v3324 = vsel %vm3321, %v3323, %v3319
        %v3326 = vperm.slane %v3267, 0
        %v3327 = vperm.slane %v3267, 1
        %3330 = vst [vmem:[#allocation1] ss:$2 sm:$0xff] %v455
        %v3331 = vld.sshfl [vmem:[#allocation1] sm:$0xff pattern:$0x75316420]
        %v3332 = vld.sshfl [vmem:[#allocation1 + $0x8] sm:$0xff pattern:$0x75316420]
        %v3335 = vmul.f32 %v3326, %v3331
        %v3336 = vmul.f32 %v3327, %v3332
        %v3337 = vstv %s3256
        %v3338 = vadd.f32 %v3335, %v3337
        %v3339 = vadd.f32 %v3336, %v3337
        %v3340 = vmul.f32 %v3338, %v3310
        %v3341 = vmul.f32 %v3339, %v3324
        %v3343 = vperm.slane %v3274, 0
        %v3344 = vperm.slane %v3274, 1
        %3347 = vst [vmem:[#allocation1] ss:$2 sm:$0xff] %v455
        %v3348 = vld.sshfl [vmem:[#allocation1] sm:$0xff pattern:$0x75316420]
        %v3349 = vld.sshfl [vmem:[#allocation1 + $0x8] sm:$0xff pattern:$0x75316420]
        %v3352 = vmul.f32 %v3343, %v3348
        %v3353 = vmul.f32 %v3344, %v3349
        %v3354 = vstv %s3258
        %v3355 = vadd.f32 %v3352, %v3354
        %v3356 = vadd.f32 %v3353, %v3354
        %v3357 = vmul.f32 %v3355, %v3310
        %v3358 = vmul.f32 %v3356, %v3324
        %v3359 = vfloor.f32 %v3340
        %v3360 = vfloor.f32 %v3341
        %v3361 = vsub.f32 %v3340, %v3359
        %v3362 = vsub.f32 %v3341, %v3360
        %v3363 = vadd.f32 %v3359, 1.0
        %v3364 = vadd.f32 %v3360, 1.0
        %v3365 = vfloor.f32 %v3357
        %v3366 = vfloor.f32 %v3358
        %v3367 = vsub.f32 %v3357, %v3365
        %v3368 = vsub.f32 %v3358, %v3366
        %v3369 = vadd.f32 %v3365, 1.0
        %v3370 = vadd.f32 %v3366, 1.0
        %vm3371 = vcmp.ge.f32.partialorder %v3359, 0.0
        %vm3372 = vcmp.ge.f32.partialorder %v3360, 0.0
        %vm3373 = vcmp.le.f32.partialorder %v3359, 15.0
        %vm3374 = vcmp.le.f32.partialorder %v3360, 15.0
        %vm3375 = vmand %vm3371, %vm3373
        %vm3376 = vmand %vm3372, %vm3374
        %vm3377 = vcmp.ge.f32.partialorder %v3363, 0.0
        %vm3378 = vcmp.ge.f32.partialorder %v3364, 0.0
        %vm3379 = vcmp.le.f32.partialorder %v3363, 15.0
        %vm3380 = vcmp.le.f32.partialorder %v3364, 15.0
        %vm3381 = vmand %vm3377, %vm3379
        %vm3382 = vmand %vm3378, %vm3380
        %vm3383 = vcmp.ge.f32.partialorder %v3365, 0.0
        %vm3384 = vcmp.ge.f32.partialorder %v3366, 0.0
        %vm3385 = vcmp.le.f32.partialorder %v3365, 15.0
        %vm3386 = vcmp.le.f32.partialorder %v3366, 15.0
        %vm3387 = vmand %vm3383, %vm3385
        %vm3388 = vmand %vm3384, %vm3386
        %vm3389 = vcmp.ge.f32.partialorder %v3369, 0.0
        %vm3390 = vcmp.ge.f32.partialorder %v3370, 0.0
        %vm3391 = vcmp.le.f32.partialorder %v3369, 15.0
        %vm3392 = vcmp.le.f32.partialorder %v3370, 15.0
        %vm3393 = vmand %vm3389, %vm3391
        %vm3394 = vmand %vm3390, %vm3392
        %v3395 = vsub.f32 1.0, %v3361
        %v3396 = vsub.f32 1.0, %v3362
        %v3397 = vsel %vm3375, %v3395, 0.0
        %v3398 = vsel %vm3376, %v3396, 0.0
        %v3399 = vsel %vm3381, %v3361, 0.0
        %v3400 = vsel %vm3382, %v3362, 0.0
        %v3401 = vsub.f32 1.0, %v3367
        %v3402 = vsub.f32 1.0, %v3368
        %v3403 = vsel %vm3387, %v3401, 0.0
        %v3404 = vsel %vm3388, %v3402, 0.0
        %v3405 = vsel %vm3393, %v3367, 0.0
        %v3406 = vsel %vm3394, %v3368, 0.0
        %v3407 = vsel %vm3375, %v3359, 0.0
        %v3408 = vsel %vm3376, %v3360, 0.0
        %v3409 = vcvt.f32.s32.to.zero.pseudo %v3407
        %v3410 = vcvt.f32.s32.to.zero.pseudo %v3408
        %v3411 = vsel %vm3381, %v3363, 0.0
        %v3412 = vsel %vm3382, %v3364, 0.0
        %v3413 = vcvt.f32.s32.to.zero.pseudo %v3411
        %v3414 = vcvt.f32.s32.to.zero.pseudo %v3412
        %v3415 = vsel %vm3387, %v3365, 0.0
        %v3416 = vsel %vm3388, %v3366, 0.0
        %v3417 = vcvt.f32.s32.to.zero.pseudo %v3415
        %v3418 = vcvt.f32.s32.to.zero.pseudo %v3416
        %v3419 = vsel %vm3393, %v3369, 0.0
        %v3420 = vsel %vm3394, %v3370, 0.0
        %v3421 = vcvt.f32.s32.to.zero.pseudo %v3419
        %v3422 = vcvt.f32.s32.to.zero.pseudo %v3420
        %v3423 = vrot.slane %v3409, 1
        %v3424 = vrot.slane %v3410, 1
        %v3425 = vrot.slane %v3409, 2
        %v3426 = vrot.slane %v3410, 2
        %v3427 = vrot.slane %v3409, 3
        %v3428 = vrot.slane %v3410, 3
        %v3429 = vperm.slane %v3409, 0
        %v3430 = vperm.slane %v3410, 0
        %v3431 = vperm.slane %v3423, 0
        %v3432 = vperm.slane %v3424, 0
        %v3433 = vperm.slane %v3425, 0
        %v3434 = vperm.slane %v3426, 0
        %v3435 = vperm.slane %v3427, 0
        %v3436 = vperm.slane %v3428, 0
        %vm3437 = vcmp.eq.s32.totalorder %v463, %v3429
        %vm3438 = vcmp.eq.s32.totalorder %v463, %v3430
        %vm3439 = vcmp.eq.s32.totalorder %v463, %v3431
        %vm3440 = vcmp.eq.s32.totalorder %v463, %v3432
        %vm3441 = vcmp.eq.s32.totalorder %v463, %v3433
        %vm3442 = vcmp.eq.s32.totalorder %v463, %v3434
        %vm3443 = vcmp.eq.s32.totalorder %v463, %v3435
        %vm3444 = vcmp.eq.s32.totalorder %v463, %v3436
        %vm3445 = vcmp.eq.s32.totalorder %v464, %v3429
        %vm3446 = vcmp.eq.s32.totalorder %v464, %v3430
        %vm3447 = vcmp.eq.s32.totalorder %v464, %v3431
        %vm3448 = vcmp.eq.s32.totalorder %v464, %v3432
        %vm3449 = vcmp.eq.s32.totalorder %v464, %v3433
        %vm3450 = vcmp.eq.s32.totalorder %v464, %v3434
        %vm3451 = vcmp.eq.s32.totalorder %v464, %v3435
        %vm3452 = vcmp.eq.s32.totalorder %v464, %v3436
        %v3455 = vrot.slane %v3397, 1
        %v3456 = vrot.slane %v3398, 1
        %v3459 = vrot.slane %v3397, 2
        %v3460 = vrot.slane %v3398, 2
        %v3463 = vrot.slane %v3397, 3
        %v3464 = vrot.slane %v3398, 3
        %v3467 = vperm.slane %v3397, 0
        %v3468 = vperm.slane %v3398, 0
        %v3469 = vperm.slane %v3455, 0
        %v3470 = vperm.slane %v3456, 0
        %v3471 = vperm.slane %v3459, 0
        %v3472 = vperm.slane %v3460, 0
        %v3473 = vperm.slane %v3463, 0
        %v3474 = vperm.slane %v3464, 0
        %v3475 = vsel %vm3437, %v3467, 0.0
        %v3476 = vsel %vm3438, %v3468, 0.0
        %v3477 = vsel %vm3439, %v3469, 0.0
        %v3478 = vsel %vm3440, %v3470, 0.0
        %v3479 = vsel %vm3441, %v3471, 0.0
        %v3480 = vsel %vm3442, %v3472, 0.0
        %v3481 = vsel %vm3443, %v3473, 0.0
        %v3482 = vsel %vm3444, %v3474, 0.0
        %v3483 = vsel %vm3445, %v3467, 0.0
        %v3484 = vsel %vm3446, %v3468, 0.0
        %v3485 = vsel %vm3447, %v3469, 0.0
        %v3486 = vsel %vm3448, %v3470, 0.0
        %v3487 = vsel %vm3449, %v3471, 0.0
        %v3488 = vsel %vm3450, %v3472, 0.0
        %v3489 = vsel %vm3451, %v3473, 0.0
        %v3490 = vsel %vm3452, %v3474, 0.0
        %v3491 = vrot.slane %v3413, 1
        %v3492 = vrot.slane %v3414, 1
        %v3493 = vrot.slane %v3413, 2
        %v3494 = vrot.slane %v3414, 2
        %v3495 = vrot.slane %v3413, 3
        %v3496 = vrot.slane %v3414, 3
        %v3497 = vperm.slane %v3413, 0
        %v3498 = vperm.slane %v3414, 0
        %v3499 = vperm.slane %v3491, 0
        %v3500 = vperm.slane %v3492, 0
        %v3501 = vperm.slane %v3493, 0
        %v3502 = vperm.slane %v3494, 0
        %v3503 = vperm.slane %v3495, 0
        %v3504 = vperm.slane %v3496, 0
        %vm3505 = vcmp.eq.s32.totalorder %v463, %v3497
        %vm3506 = vcmp.eq.s32.totalorder %v463, %v3498
        %vm3507 = vcmp.eq.s32.totalorder %v463, %v3499
        %vm3508 = vcmp.eq.s32.totalorder %v463, %v3500
        %vm3509 = vcmp.eq.s32.totalorder %v463, %v3501
        %vm3510 = vcmp.eq.s32.totalorder %v463, %v3502
        %vm3511 = vcmp.eq.s32.totalorder %v463, %v3503
        %vm3512 = vcmp.eq.s32.totalorder %v463, %v3504
        %vm3513 = vcmp.eq.s32.totalorder %v464, %v3497
        %vm3514 = vcmp.eq.s32.totalorder %v464, %v3498
        %vm3515 = vcmp.eq.s32.totalorder %v464, %v3499
        %vm3516 = vcmp.eq.s32.totalorder %v464, %v3500
        %vm3517 = vcmp.eq.s32.totalorder %v464, %v3501
        %vm3518 = vcmp.eq.s32.totalorder %v464, %v3502
        %vm3519 = vcmp.eq.s32.totalorder %v464, %v3503
        %vm3520 = vcmp.eq.s32.totalorder %v464, %v3504
        %v3523 = vrot.slane %v3399, 1
        %v3524 = vrot.slane %v3400, 1
        %v3527 = vrot.slane %v3399, 2
        %v3528 = vrot.slane %v3400, 2
        %v3531 = vrot.slane %v3399, 3
        %v3532 = vrot.slane %v3400, 3
        %v3535 = vperm.slane %v3399, 0
        %v3536 = vperm.slane %v3400, 0
        %v3537 = vperm.slane %v3523, 0
        %v3538 = vperm.slane %v3524, 0
        %v3539 = vperm.slane %v3527, 0
        %v3540 = vperm.slane %v3528, 0
        %v3541 = vperm.slane %v3531, 0
        %v3542 = vperm.slane %v3532, 0
        %v3543 = vsel %vm3505, %v3535, 0.0
        %v3544 = vsel %vm3506, %v3536, 0.0
        %v3545 = vsel %vm3507, %v3537, 0.0
        %v3546 = vsel %vm3508, %v3538, 0.0
        %v3547 = vsel %vm3509, %v3539, 0.0
        %v3548 = vsel %vm3510, %v3540, 0.0
        %v3549 = vsel %vm3511, %v3541, 0.0
        %v3550 = vsel %vm3512, %v3542, 0.0
        %v3551 = vsel %vm3513, %v3535, 0.0
        %v3552 = vsel %vm3514, %v3536, 0.0
        %v3553 = vsel %vm3515, %v3537, 0.0
        %v3554 = vsel %vm3516, %v3538, 0.0
        %v3555 = vsel %vm3517, %v3539, 0.0
        %v3556 = vsel %vm3518, %v3540, 0.0
        %v3557 = vsel %vm3519, %v3541, 0.0
        %v3558 = vsel %vm3520, %v3542, 0.0
        %v3559 = vadd.f32 %v3475, %v3543
        %v3560 = vadd.f32 %v3476, %v3544
        %v3561 = vadd.f32 %v3477, %v3545
        %v3562 = vadd.f32 %v3478, %v3546
        %v3563 = vadd.f32 %v3479, %v3547
        %v3564 = vadd.f32 %v3480, %v3548
        %v3565 = vadd.f32 %v3481, %v3549
        %v3566 = vadd.f32 %v3482, %v3550
        %v3567 = vadd.f32 %v3483, %v3551
        %v3568 = vadd.f32 %v3484, %v3552
        %v3569 = vadd.f32 %v3485, %v3553
        %v3570 = vadd.f32 %v3486, %v3554
        %v3571 = vadd.f32 %v3487, %v3555
        %v3572 = vadd.f32 %v3488, %v3556
        %v3573 = vadd.f32 %v3489, %v3557
        %v3574 = vadd.f32 %v3490, %v3558
        %v3575 = vrot.slane %v3417, 1
        %v3576 = vrot.slane %v3418, 1
        %v3577 = vrot.slane %v3417, 2
        %v3578 = vrot.slane %v3418, 2
        %v3579 = vrot.slane %v3417, 3
        %v3580 = vrot.slane %v3418, 3
        %v3581 = vperm.slane %v3417, 0
        %v3582 = vperm.slane %v3418, 0
        %v3583 = vperm.slane %v3575, 0
        %v3584 = vperm.slane %v3576, 0
        %v3585 = vperm.slane %v3577, 0
        %v3586 = vperm.slane %v3578, 0
        %v3587 = vperm.slane %v3579, 0
        %v3588 = vperm.slane %v3580, 0
        %vm3589 = vcmp.eq.s32.totalorder %v463, %v3581
        %vm3590 = vcmp.eq.s32.totalorder %v463, %v3582
        %vm3591 = vcmp.eq.s32.totalorder %v463, %v3583
        %vm3592 = vcmp.eq.s32.totalorder %v463, %v3584
        %vm3593 = vcmp.eq.s32.totalorder %v463, %v3585
        %vm3594 = vcmp.eq.s32.totalorder %v463, %v3586
        %vm3595 = vcmp.eq.s32.totalorder %v463, %v3587
        %vm3596 = vcmp.eq.s32.totalorder %v463, %v3588
        %vm3597 = vcmp.eq.s32.totalorder %v464, %v3581
        %vm3598 = vcmp.eq.s32.totalorder %v464, %v3582
        %vm3599 = vcmp.eq.s32.totalorder %v464, %v3583
        %vm3600 = vcmp.eq.s32.totalorder %v464, %v3584
        %vm3601 = vcmp.eq.s32.totalorder %v464, %v3585
        %vm3602 = vcmp.eq.s32.totalorder %v464, %v3586
        %vm3603 = vcmp.eq.s32.totalorder %v464, %v3587
        %vm3604 = vcmp.eq.s32.totalorder %v464, %v3588
        %v3607 = vrot.slane %v3403, 1
        %v3608 = vrot.slane %v3404, 1
        %v3611 = vrot.slane %v3403, 2
        %v3612 = vrot.slane %v3404, 2
        %v3615 = vrot.slane %v3403, 3
        %v3616 = vrot.slane %v3404, 3
        %v3619 = vperm.slane %v3403, 0
        %v3620 = vperm.slane %v3404, 0
        %v3621 = vperm.slane %v3607, 0
        %v3622 = vperm.slane %v3608, 0
        %v3623 = vperm.slane %v3611, 0
        %v3624 = vperm.slane %v3612, 0
        %v3625 = vperm.slane %v3615, 0
        %v3626 = vperm.slane %v3616, 0
        %v3627 = vsel %vm3589, %v3619, 0.0
        %v3628 = vsel %vm3590, %v3620, 0.0
        %v3629 = vsel %vm3591, %v3621, 0.0
        %v3630 = vsel %vm3592, %v3622, 0.0
        %v3631 = vsel %vm3593, %v3623, 0.0
        %v3632 = vsel %vm3594, %v3624, 0.0
        %v3633 = vsel %vm3595, %v3625, 0.0
        %v3634 = vsel %vm3596, %v3626, 0.0
        %v3635 = vsel %vm3597, %v3619, 0.0
        %v3636 = vsel %vm3598, %v3620, 0.0
        %v3637 = vsel %vm3599, %v3621, 0.0
        %v3638 = vsel %vm3600, %v3622, 0.0
        %v3639 = vsel %vm3601, %v3623, 0.0
        %v3640 = vsel %vm3602, %v3624, 0.0
        %v3641 = vsel %vm3603, %v3625, 0.0
        %v3642 = vsel %vm3604, %v3626, 0.0
        %v3643 = vrot.slane %v3421, 1
        %v3644 = vrot.slane %v3422, 1
        %v3645 = vrot.slane %v3421, 2
        %v3646 = vrot.slane %v3422, 2
        %v3647 = vrot.slane %v3421, 3
        %v3648 = vrot.slane %v3422, 3
        %v3649 = vperm.slane %v3421, 0
        %v3650 = vperm.slane %v3422, 0
        %v3651 = vperm.slane %v3643, 0
        %v3652 = vperm.slane %v3644, 0
        %v3653 = vperm.slane %v3645, 0
        %v3654 = vperm.slane %v3646, 0
        %v3655 = vperm.slane %v3647, 0
        %v3656 = vperm.slane %v3648, 0
        %vm3657 = vcmp.eq.s32.totalorder %v463, %v3649
        %vm3658 = vcmp.eq.s32.totalorder %v463, %v3650
        %vm3659 = vcmp.eq.s32.totalorder %v463, %v3651
        %vm3660 = vcmp.eq.s32.totalorder %v463, %v3652
        %vm3661 = vcmp.eq.s32.totalorder %v463, %v3653
        %vm3662 = vcmp.eq.s32.totalorder %v463, %v3654
        %vm3663 = vcmp.eq.s32.totalorder %v463, %v3655
        %vm3664 = vcmp.eq.s32.totalorder %v463, %v3656
        %vm3665 = vcmp.eq.s32.totalorder %v464, %v3649
        %vm3666 = vcmp.eq.s32.totalorder %v464, %v3650
        %vm3667 = vcmp.eq.s32.totalorder %v464, %v3651
        %vm3668 = vcmp.eq.s32.totalorder %v464, %v3652
        %vm3669 = vcmp.eq.s32.totalorder %v464, %v3653
        %vm3670 = vcmp.eq.s32.totalorder %v464, %v3654
        %vm3671 = vcmp.eq.s32.totalorder %v464, %v3655
        %vm3672 = vcmp.eq.s32.totalorder %v464, %v3656
        %v3675 = vrot.slane %v3405, 1
        %v3676 = vrot.slane %v3406, 1
        %v3679 = vrot.slane %v3405, 2
        %v3680 = vrot.slane %v3406, 2
        %v3683 = vrot.slane %v3405, 3
        %v3684 = vrot.slane %v3406, 3
        %v3687 = vperm.slane %v3405, 0
        %v3688 = vperm.slane %v3406, 0
        %v3689 = vperm.slane %v3675, 0
        %v3690 = vperm.slane %v3676, 0
        %v3691 = vperm.slane %v3679, 0
        %v3692 = vperm.slane %v3680, 0
        %v3693 = vperm.slane %v3683, 0
        %v3694 = vperm.slane %v3684, 0
        %v3695 = vsel %vm3657, %v3687, 0.0
        %v3696 = vsel %vm3658, %v3688, 0.0
        %v3697 = vsel %vm3659, %v3689, 0.0
        %v3698 = vsel %vm3660, %v3690, 0.0
        %v3699 = vsel %vm3661, %v3691, 0.0
        %v3700 = vsel %vm3662, %v3692, 0.0
        %v3701 = vsel %vm3663, %v3693, 0.0
        %v3702 = vsel %vm3664, %v3694, 0.0
        %v3703 = vsel %vm3665, %v3687, 0.0
        %v3704 = vsel %vm3666, %v3688, 0.0
        %v3705 = vsel %vm3667, %v3689, 0.0
        %v3706 = vsel %vm3668, %v3690, 0.0
        %v3707 = vsel %vm3669, %v3691, 0.0
        %v3708 = vsel %vm3670, %v3692, 0.0
        %v3709 = vsel %vm3671, %v3693, 0.0
        %v3710 = vsel %vm3672, %v3694, 0.0
        %v3711 = vadd.f32 %v3627, %v3695
        %v3712 = vadd.f32 %v3628, %v3696
        %v3713 = vadd.f32 %v3629, %v3697
        %v3714 = vadd.f32 %v3630, %v3698
        %v3715 = vadd.f32 %v3631, %v3699
        %v3716 = vadd.f32 %v3632, %v3700
        %v3717 = vadd.f32 %v3633, %v3701
        %v3718 = vadd.f32 %v3634, %v3702
        %v3719 = vadd.f32 %v3635, %v3703
        %v3720 = vadd.f32 %v3636, %v3704
        %v3721 = vadd.f32 %v3637, %v3705
        %v3722 = vadd.f32 %v3638, %v3706
        %v3723 = vadd.f32 %v3639, %v3707
        %v3724 = vadd.f32 %v3640, %v3708
        %v3725 = vadd.f32 %v3641, %v3709
        %v3726 = vadd.f32 %v3642, %v3710
        %v3727 = vld [vmem:[%s443 + $0x80] sm:$0xff]
        %v3728 = vld [vmem:[%s443 + $0x88] sm:$0xff]
        %v3729 = vld [vmem:[%s443 + $0x90] sm:$0xff]
        %v3730 = vld [vmem:[%s443 + $0x98] sm:$0xff]
        %v3731 = vld [vmem:[%s443 + $0xa0] sm:$0xff]
        %v3732 = vld [vmem:[%s443 + $0xa8] sm:$0xff]
        %v3733 = vld [vmem:[%s443 + $0xb0] sm:$0xff]
        %v3734 = vld [vmem:[%s443 + $0xb8] sm:$0xff]
        %v3735 = vld [vmem:[%s443 + $0xc0] sm:$0xff]
        %v3736 = vld [vmem:[%s443 + $0xc8] sm:$0xff]
        %v3737 = vld [vmem:[%s443 + $0xd0] sm:$0xff]
        %v3738 = vld [vmem:[%s443 + $0xd8] sm:$0xff]
        %v3739 = vld [vmem:[%s443 + $0xe0] sm:$0xff]
        %v3740 = vld [vmem:[%s443 + $0xe8] sm:$0xff]
        %v3741 = vld [vmem:[%s443 + $0xf0] sm:$0xff]
        %v3742 = vld [vmem:[%s443 + $0xf8] sm:$0xff]
        %v3744 = vsel %vm974, %v3727, 0
        %v3747 = vsel %vm974, %v3728, 0
        %v3750 = vsel %vm974, %v3729, 0
        %v3753 = vsel %vm974, %v3730, 0
        %v3756 = vsel %vm974, %v3731, 0
        %v3759 = vsel %vm974, %v3732, 0
        %v3762 = vsel %vm974, %v3733, 0
        %v3765 = vsel %vm974, %v3734, 0
        %v3768 = vsel %vm974, %v3735, 0
        %v3771 = vsel %vm974, %v3736, 0
        %v3774 = vsel %vm974, %v3737, 0
        %v3777 = vsel %vm974, %v3738, 0
        %v3780 = vsel %vm974, %v3739, 0
        %v3783 = vsel %vm974, %v3740, 0
        %v3786 = vsel %vm974, %v3741, 0
        %v3789 = vsel %vm974, %v3742, 0
        %3791 = vmatpush.msra.mxu0 0.0
        %3792 = vmatpush.msra.mxu0 0.0
        %3793 = vmatpush.msra.mxu0 0.0
        %3794 = vmatpush.msra.mxu0 0.0
        %3795 = vmatpush.msra.mxu0 0.0
        %3796 = vmatpush.msra.mxu0 0.0
        %3797 = vmatpush.msra.mxu0 0.0
        %3798 = vmatpush.msra.mxu0 0.0
        %3799 = vmatpush.msra.mxu0 0.0
        %3800 = vmatpush.msra.mxu0 0.0
        %3801 = vmatpush.msra.mxu0 0.0
        %3802 = vmatpush.msra.mxu0 0.0
        %3803 = vmatpush.msra.mxu0 0.0
        %3804 = vmatpush.msra.mxu0 0.0
        %3805 = vmatpush.msra.mxu0 %v3567
        %3806 = vmatpush.msra.mxu0 %v3559
        %3807 = vmatmul.f32.gmra.mxu0 %v3744
        %v3808 = vpop.f32.mrf.mxu0
        %v3809 = vadd.f32 0.0, %v3808
        %3810 = vmatmul.f32.gmra.mxu0 %v3747
        %v3811 = vpop.f32.mrf.mxu0
        %v3812 = vadd.f32 0.0, %v3811
        %3813 = vmatmul.f32.gmra.mxu0 %v3750
        %v3814 = vpop.f32.mrf.mxu0
        %v3815 = vadd.f32 0.0, %v3814
        %3816 = vmatmul.f32.gmra.mxu0 %v3753
        %v3817 = vpop.f32.mrf.mxu0
        %v3818 = vadd.f32 0.0, %v3817
        %3819 = vmatmul.f32.gmra.mxu0 %v3756
        %v3820 = vpop.f32.mrf.mxu0
        %v3821 = vadd.f32 0.0, %v3820
        %3822 = vmatmul.f32.gmra.mxu0 %v3759
        %v3823 = vpop.f32.mrf.mxu0
        %v3824 = vadd.f32 0.0, %v3823
        %3825 = vmatmul.f32.gmra.mxu0 %v3762
        %v3826 = vpop.f32.mrf.mxu0
        %v3827 = vadd.f32 0.0, %v3826
        %3828 = vmatmul.f32.gmra.mxu0 %v3765
        %v3829 = vpop.f32.mrf.mxu0
        %v3830 = vadd.f32 0.0, %v3829
        %3831 = vmatmul.f32.gmra.mxu0 %v3768
        %v3832 = vpop.f32.mrf.mxu0
        %v3833 = vadd.f32 0.0, %v3832
        %3834 = vmatmul.f32.gmra.mxu0 %v3771
        %v3835 = vpop.f32.mrf.mxu0
        %v3836 = vadd.f32 0.0, %v3835
        %3837 = vmatmul.f32.gmra.mxu0 %v3774
        %v3838 = vpop.f32.mrf.mxu0
        %v3839 = vadd.f32 0.0, %v3838
        %3840 = vmatmul.f32.gmra.mxu0 %v3777
        %v3841 = vpop.f32.mrf.mxu0
        %v3842 = vadd.f32 0.0, %v3841
        %3843 = vmatmul.f32.gmra.mxu0 %v3780
        %v3844 = vpop.f32.mrf.mxu0
        %v3845 = vadd.f32 0.0, %v3844
        %3846 = vmatmul.f32.gmra.mxu0 %v3783
        %v3847 = vpop.f32.mrf.mxu0
        %v3848 = vadd.f32 0.0, %v3847
        %3849 = vmatmul.f32.gmra.mxu0 %v3786
        %v3850 = vpop.f32.mrf.mxu0
        %v3851 = vadd.f32 0.0, %v3850
        %3852 = vmatmul.f32.gmra.mxu0 %v3789
        %v3853 = vpop.f32.mrf.mxu0
        %v3854 = vadd.f32 0.0, %v3853
        %3855 = vdwg.mxu0
        %3856 = vmatpush.msra.mxu0 0.0
        %3857 = vmatpush.msra.mxu0 0.0
        %3858 = vmatpush.msra.mxu0 0.0
        %3859 = vmatpush.msra.mxu0 0.0
        %3860 = vmatpush.msra.mxu0 0.0
        %3861 = vmatpush.msra.mxu0 0.0
        %3862 = vmatpush.msra.mxu0 0.0
        %3863 = vmatpush.msra.mxu0 0.0
        %3864 = vmatpush.msra.mxu0 0.0
        %3865 = vmatpush.msra.mxu0 0.0
        %3866 = vmatpush.msra.mxu0 0.0
        %3867 = vmatpush.msra.mxu0 0.0
        %3868 = vmatpush.msra.mxu0 0.0
        %3869 = vmatpush.msra.mxu0 0.0
        %3870 = vmatpush.msra.mxu0 %v3568
        %3871 = vmatpush.msra.mxu0 %v3560
        %3872 = vmatmul.f32.gmra.mxu0 %v3744
        %v3873 = vpop.f32.mrf.mxu0
        %v3874 = vadd.f32 0.0, %v3873
        %3875 = vmatmul.f32.gmra.mxu0 %v3747
        %v3876 = vpop.f32.mrf.mxu0
        %v3877 = vadd.f32 0.0, %v3876
        %3878 = vmatmul.f32.gmra.mxu0 %v3750
        %v3879 = vpop.f32.mrf.mxu0
        %v3880 = vadd.f32 0.0, %v3879
        %3881 = vmatmul.f32.gmra.mxu0 %v3753
        %v3882 = vpop.f32.mrf.mxu0
        %v3883 = vadd.f32 0.0, %v3882
        %3884 = vmatmul.f32.gmra.mxu0 %v3756
        %v3885 = vpop.f32.mrf.mxu0
        %v3886 = vadd.f32 0.0, %v3885
        %3887 = vmatmul.f32.gmra.mxu0 %v3759
        %v3888 = vpop.f32.mrf.mxu0
        %v3889 = vadd.f32 0.0, %v3888
        %3890 = vmatmul.f32.gmra.mxu0 %v3762
        %v3891 = vpop.f32.mrf.mxu0
        %v3892 = vadd.f32 0.0, %v3891
        %3893 = vmatmul.f32.gmra.mxu0 %v3765
        %v3894 = vpop.f32.mrf.mxu0
        %v3895 = vadd.f32 0.0, %v3894
        %3896 = vmatmul.f32.gmra.mxu0 %v3768
        %v3897 = vpop.f32.mrf.mxu0
        %v3898 = vadd.f32 0.0, %v3897
        %3899 = vmatmul.f32.gmra.mxu0 %v3771
        %v3900 = vpop.f32.mrf.mxu0
        %v3901 = vadd.f32 0.0, %v3900
        %3902 = vmatmul.f32.gmra.mxu0 %v3774
        %v3903 = vpop.f32.mrf.mxu0
        %v3904 = vadd.f32 0.0, %v3903
        %3905 = vmatmul.f32.gmra.mxu0 %v3777
        %v3906 = vpop.f32.mrf.mxu0
        %v3907 = vadd.f32 0.0, %v3906
        %3908 = vmatmul.f32.gmra.mxu0 %v3780
        %v3909 = vpop.f32.mrf.mxu0
        %v3910 = vadd.f32 0.0, %v3909
        %3911 = vmatmul.f32.gmra.mxu0 %v3783
        %v3912 = vpop.f32.mrf.mxu0
        %v3913 = vadd.f32 0.0, %v3912
        %3914 = vmatmul.f32.gmra.mxu0 %v3786
        %v3915 = vpop.f32.mrf.mxu0
        %v3916 = vadd.f32 0.0, %v3915
        %3917 = vmatmul.f32.gmra.mxu0 %v3789
        %v3918 = vpop.f32.mrf.mxu0
        %v3919 = vadd.f32 0.0, %v3918
        %3920 = vdwg.mxu0
        %3921 = vmatpush.msra.mxu0 0.0
        %3922 = vmatpush.msra.mxu0 0.0
        %3923 = vmatpush.msra.mxu0 0.0
        %3924 = vmatpush.msra.mxu0 0.0
        %3925 = vmatpush.msra.mxu0 0.0
        %3926 = vmatpush.msra.mxu0 0.0
        %3927 = vmatpush.msra.mxu0 0.0
        %3928 = vmatpush.msra.mxu0 0.0
        %3929 = vmatpush.msra.mxu0 0.0
        %3930 = vmatpush.msra.mxu0 0.0
        %3931 = vmatpush.msra.mxu0 0.0
        %3932 = vmatpush.msra.mxu0 0.0
        %3933 = vmatpush.msra.mxu0 0.0
        %3934 = vmatpush.msra.mxu0 0.0
        %3935 = vmatpush.msra.mxu0 %v3569
        %3936 = vmatpush.msra.mxu0 %v3561
        %3937 = vmatmul.f32.gmra.mxu0 %v3744
        %v3938 = vpop.f32.mrf.mxu0
        %v3939 = vadd.f32 0.0, %v3938
        %3940 = vmatmul.f32.gmra.mxu0 %v3747
        %v3941 = vpop.f32.mrf.mxu0
        %v3942 = vadd.f32 0.0, %v3941
        %3943 = vmatmul.f32.gmra.mxu0 %v3750
        %v3944 = vpop.f32.mrf.mxu0
        %v3945 = vadd.f32 0.0, %v3944
        %3946 = vmatmul.f32.gmra.mxu0 %v3753
        %v3947 = vpop.f32.mrf.mxu0
        %v3948 = vadd.f32 0.0, %v3947
        %3949 = vmatmul.f32.gmra.mxu0 %v3756
        %v3950 = vpop.f32.mrf.mxu0
        %v3951 = vadd.f32 0.0, %v3950
        %3952 = vmatmul.f32.gmra.mxu0 %v3759
        %v3953 = vpop.f32.mrf.mxu0
        %v3954 = vadd.f32 0.0, %v3953
        %3955 = vmatmul.f32.gmra.mxu0 %v3762
        %v3956 = vpop.f32.mrf.mxu0
        %v3957 = vadd.f32 0.0, %v3956
        %3958 = vmatmul.f32.gmra.mxu0 %v3765
        %v3959 = vpop.f32.mrf.mxu0
        %v3960 = vadd.f32 0.0, %v3959
        %3961 = vmatmul.f32.gmra.mxu0 %v3768
        %v3962 = vpop.f32.mrf.mxu0
        %v3963 = vadd.f32 0.0, %v3962
        %3964 = vmatmul.f32.gmra.mxu0 %v3771
        %v3965 = vpop.f32.mrf.mxu0
        %v3966 = vadd.f32 0.0, %v3965
        %3967 = vmatmul.f32.gmra.mxu0 %v3774
        %v3968 = vpop.f32.mrf.mxu0
        %v3969 = vadd.f32 0.0, %v3968
        %3970 = vmatmul.f32.gmra.mxu0 %v3777
        %v3971 = vpop.f32.mrf.mxu0
        %v3972 = vadd.f32 0.0, %v3971
        %3973 = vmatmul.f32.gmra.mxu0 %v3780
        %v3974 = vpop.f32.mrf.mxu0
        %v3975 = vadd.f32 0.0, %v3974
        %3976 = vmatmul.f32.gmra.mxu0 %v3783
        %v3977 = vpop.f32.mrf.mxu0
        %v3978 = vadd.f32 0.0, %v3977
        %3979 = vmatmul.f32.gmra.mxu0 %v3786
        %v3980 = vpop.f32.mrf.mxu0
        %v3981 = vadd.f32 0.0, %v3980
        %3982 = vmatmul.f32.gmra.mxu0 %v3789
        %v3983 = vpop.f32.mrf.mxu0
        %v3984 = vadd.f32 0.0, %v3983
        %3985 = vdwg.mxu0
        %3986 = vmatpush.msra.mxu0 0.0
        %3987 = vmatpush.msra.mxu0 0.0
        %3988 = vmatpush.msra.mxu0 0.0
        %3989 = vmatpush.msra.mxu0 0.0
        %3990 = vmatpush.msra.mxu0 0.0
        %3991 = vmatpush.msra.mxu0 0.0
        %3992 = vmatpush.msra.mxu0 0.0
        %3993 = vmatpush.msra.mxu0 0.0
        %3994 = vmatpush.msra.mxu0 0.0
        %3995 = vmatpush.msra.mxu0 0.0
        %3996 = vmatpush.msra.mxu0 0.0
        %3997 = vmatpush.msra.mxu0 0.0
        %3998 = vmatpush.msra.mxu0 0.0
        %3999 = vmatpush.msra.mxu0 0.0
        %4000 = vmatpush.msra.mxu0 %v3570
        %4001 = vmatpush.msra.mxu0 %v3562
        %4002 = vmatmul.f32.gmra.mxu0 %v3744
        %v4003 = vpop.f32.mrf.mxu0
        %v4004 = vadd.f32 0.0, %v4003
        %4005 = vmatmul.f32.gmra.mxu0 %v3747
        %v4006 = vpop.f32.mrf.mxu0
        %v4007 = vadd.f32 0.0, %v4006
        %4008 = vmatmul.f32.gmra.mxu0 %v3750
        %v4009 = vpop.f32.mrf.mxu0
        %v4010 = vadd.f32 0.0, %v4009
        %4011 = vmatmul.f32.gmra.mxu0 %v3753
        %v4012 = vpop.f32.mrf.mxu0
        %v4013 = vadd.f32 0.0, %v4012
        %4014 = vmatmul.f32.gmra.mxu0 %v3756
        %v4015 = vpop.f32.mrf.mxu0
        %v4016 = vadd.f32 0.0, %v4015
        %4017 = vmatmul.f32.gmra.mxu0 %v3759
        %v4018 = vpop.f32.mrf.mxu0
        %v4019 = vadd.f32 0.0, %v4018
        %4020 = vmatmul.f32.gmra.mxu0 %v3762
        %v4021 = vpop.f32.mrf.mxu0
        %v4022 = vadd.f32 0.0, %v4021
        %4023 = vmatmul.f32.gmra.mxu0 %v3765
        %v4024 = vpop.f32.mrf.mxu0
        %v4025 = vadd.f32 0.0, %v4024
        %4026 = vmatmul.f32.gmra.mxu0 %v3768
        %v4027 = vpop.f32.mrf.mxu0
        %v4028 = vadd.f32 0.0, %v4027
        %4029 = vmatmul.f32.gmra.mxu0 %v3771
        %v4030 = vpop.f32.mrf.mxu0
        %v4031 = vadd.f32 0.0, %v4030
        %4032 = vmatmul.f32.gmra.mxu0 %v3774
        %v4033 = vpop.f32.mrf.mxu0
        %v4034 = vadd.f32 0.0, %v4033
        %4035 = vmatmul.f32.gmra.mxu0 %v3777
        %v4036 = vpop.f32.mrf.mxu0
        %v4037 = vadd.f32 0.0, %v4036
        %4038 = vmatmul.f32.gmra.mxu0 %v3780
        %v4039 = vpop.f32.mrf.mxu0
        %v4040 = vadd.f32 0.0, %v4039
        %4041 = vmatmul.f32.gmra.mxu0 %v3783
        %v4042 = vpop.f32.mrf.mxu0
        %v4043 = vadd.f32 0.0, %v4042
        %4044 = vmatmul.f32.gmra.mxu0 %v3786
        %v4045 = vpop.f32.mrf.mxu0
        %v4046 = vadd.f32 0.0, %v4045
        %4047 = vmatmul.f32.gmra.mxu0 %v3789
        %v4048 = vpop.f32.mrf.mxu0
        %v4049 = vadd.f32 0.0, %v4048
        %4050 = vdwg.mxu0
        %4051 = vmatpush.msra.mxu0 0.0
        %4052 = vmatpush.msra.mxu0 0.0
        %4053 = vmatpush.msra.mxu0 0.0
        %4054 = vmatpush.msra.mxu0 0.0
        %4055 = vmatpush.msra.mxu0 0.0
        %4056 = vmatpush.msra.mxu0 0.0
        %4057 = vmatpush.msra.mxu0 0.0
        %4058 = vmatpush.msra.mxu0 0.0
        %4059 = vmatpush.msra.mxu0 0.0
        %4060 = vmatpush.msra.mxu0 0.0
        %4061 = vmatpush.msra.mxu0 0.0
        %4062 = vmatpush.msra.mxu0 0.0
        %4063 = vmatpush.msra.mxu0 0.0
        %4064 = vmatpush.msra.mxu0 0.0
        %4065 = vmatpush.msra.mxu0 %v3571
        %4066 = vmatpush.msra.mxu0 %v3563
        %4067 = vmatmul.f32.gmra.mxu0 %v3744
        %v4068 = vpop.f32.mrf.mxu0
        %v4069 = vadd.f32 0.0, %v4068
        %4070 = vmatmul.f32.gmra.mxu0 %v3747
        %v4071 = vpop.f32.mrf.mxu0
        %v4072 = vadd.f32 0.0, %v4071
        %4073 = vmatmul.f32.gmra.mxu0 %v3750
        %v4074 = vpop.f32.mrf.mxu0
        %v4075 = vadd.f32 0.0, %v4074
        %4076 = vmatmul.f32.gmra.mxu0 %v3753
        %v4077 = vpop.f32.mrf.mxu0
        %v4078 = vadd.f32 0.0, %v4077
        %4079 = vmatmul.f32.gmra.mxu0 %v3756
        %v4080 = vpop.f32.mrf.mxu0
        %v4081 = vadd.f32 0.0, %v4080
        %4082 = vmatmul.f32.gmra.mxu0 %v3759
        %v4083 = vpop.f32.mrf.mxu0
        %v4084 = vadd.f32 0.0, %v4083
        %4085 = vmatmul.f32.gmra.mxu0 %v3762
        %v4086 = vpop.f32.mrf.mxu0
        %v4087 = vadd.f32 0.0, %v4086
        %4088 = vmatmul.f32.gmra.mxu0 %v3765
        %v4089 = vpop.f32.mrf.mxu0
        %v4090 = vadd.f32 0.0, %v4089
        %4091 = vmatmul.f32.gmra.mxu0 %v3768
        %v4092 = vpop.f32.mrf.mxu0
        %v4093 = vadd.f32 0.0, %v4092
        %4094 = vmatmul.f32.gmra.mxu0 %v3771
        %v4095 = vpop.f32.mrf.mxu0
        %v4096 = vadd.f32 0.0, %v4095
        %4097 = vmatmul.f32.gmra.mxu0 %v3774
        %v4098 = vpop.f32.mrf.mxu0
        %v4099 = vadd.f32 0.0, %v4098
        %4100 = vmatmul.f32.gmra.mxu0 %v3777
        %v4101 = vpop.f32.mrf.mxu0
        %v4102 = vadd.f32 0.0, %v4101
        %4103 = vmatmul.f32.gmra.mxu0 %v3780
        %v4104 = vpop.f32.mrf.mxu0
        %v4105 = vadd.f32 0.0, %v4104
        %4106 = vmatmul.f32.gmra.mxu0 %v3783
        %v4107 = vpop.f32.mrf.mxu0
        %v4108 = vadd.f32 0.0, %v4107
        %4109 = vmatmul.f32.gmra.mxu0 %v3786
        %v4110 = vpop.f32.mrf.mxu0
        %v4111 = vadd.f32 0.0, %v4110
        %4112 = vmatmul.f32.gmra.mxu0 %v3789
        %v4113 = vpop.f32.mrf.mxu0
        %v4114 = vadd.f32 0.0, %v4113
        %4115 = vdwg.mxu0
        %4116 = vmatpush.msra.mxu0 0.0
        %4117 = vmatpush.msra.mxu0 0.0
        %4118 = vmatpush.msra.mxu0 0.0
        %4119 = vmatpush.msra.mxu0 0.0
        %4120 = vmatpush.msra.mxu0 0.0
        %4121 = vmatpush.msra.mxu0 0.0
        %4122 = vmatpush.msra.mxu0 0.0
        %4123 = vmatpush.msra.mxu0 0.0
        %4124 = vmatpush.msra.mxu0 0.0
        %4125 = vmatpush.msra.mxu0 0.0
        %4126 = vmatpush.msra.mxu0 0.0
        %4127 = vmatpush.msra.mxu0 0.0
        %4128 = vmatpush.msra.mxu0 0.0
        %4129 = vmatpush.msra.mxu0 0.0
        %4130 = vmatpush.msra.mxu0 %v3572
        %4131 = vmatpush.msra.mxu0 %v3564
        %4132 = vmatmul.f32.gmra.mxu0 %v3744
        %v4133 = vpop.f32.mrf.mxu0
        %v4134 = vadd.f32 0.0, %v4133
        %4135 = vmatmul.f32.gmra.mxu0 %v3747
        %v4136 = vpop.f32.mrf.mxu0
        %v4137 = vadd.f32 0.0, %v4136
        %4138 = vmatmul.f32.gmra.mxu0 %v3750
        %v4139 = vpop.f32.mrf.mxu0
        %v4140 = vadd.f32 0.0, %v4139
        %4141 = vmatmul.f32.gmra.mxu0 %v3753
        %v4142 = vpop.f32.mrf.mxu0
        %v4143 = vadd.f32 0.0, %v4142
        %4144 = vmatmul.f32.gmra.mxu0 %v3756
        %v4145 = vpop.f32.mrf.mxu0
        %v4146 = vadd.f32 0.0, %v4145
        %4147 = vmatmul.f32.gmra.mxu0 %v3759
        %v4148 = vpop.f32.mrf.mxu0
        %v4149 = vadd.f32 0.0, %v4148
        %4150 = vmatmul.f32.gmra.mxu0 %v3762
        %v4151 = vpop.f32.mrf.mxu0
        %v4152 = vadd.f32 0.0, %v4151
        %4153 = vmatmul.f32.gmra.mxu0 %v3765
        %v4154 = vpop.f32.mrf.mxu0
        %v4155 = vadd.f32 0.0, %v4154
        %4156 = vmatmul.f32.gmra.mxu0 %v3768
        %v4157 = vpop.f32.mrf.mxu0
        %v4158 = vadd.f32 0.0, %v4157
        %4159 = vmatmul.f32.gmra.mxu0 %v3771
        %v4160 = vpop.f32.mrf.mxu0
        %v4161 = vadd.f32 0.0, %v4160
        %4162 = vmatmul.f32.gmra.mxu0 %v3774
        %v4163 = vpop.f32.mrf.mxu0
        %v4164 = vadd.f32 0.0, %v4163
        %4165 = vmatmul.f32.gmra.mxu0 %v3777
        %v4166 = vpop.f32.mrf.mxu0
        %v4167 = vadd.f32 0.0, %v4166
        %4168 = vmatmul.f32.gmra.mxu0 %v3780
        %v4169 = vpop.f32.mrf.mxu0
        %v4170 = vadd.f32 0.0, %v4169
        %4171 = vmatmul.f32.gmra.mxu0 %v3783
        %v4172 = vpop.f32.mrf.mxu0
        %v4173 = vadd.f32 0.0, %v4172
        %4174 = vmatmul.f32.gmra.mxu0 %v3786
        %v4175 = vpop.f32.mrf.mxu0
        %v4176 = vadd.f32 0.0, %v4175
        %4177 = vmatmul.f32.gmra.mxu0 %v3789
        %v4178 = vpop.f32.mrf.mxu0
        %v4179 = vadd.f32 0.0, %v4178
        %4180 = vdwg.mxu0
        %4181 = vmatpush.msra.mxu0 0.0
        %4182 = vmatpush.msra.mxu0 0.0
        %4183 = vmatpush.msra.mxu0 0.0
        %4184 = vmatpush.msra.mxu0 0.0
        %4185 = vmatpush.msra.mxu0 0.0
        %4186 = vmatpush.msra.mxu0 0.0
        %4187 = vmatpush.msra.mxu0 0.0
        %4188 = vmatpush.msra.mxu0 0.0
        %4189 = vmatpush.msra.mxu0 0.0
        %4190 = vmatpush.msra.mxu0 0.0
        %4191 = vmatpush.msra.mxu0 0.0
        %4192 = vmatpush.msra.mxu0 0.0
        %4193 = vmatpush.msra.mxu0 0.0
        %4194 = vmatpush.msra.mxu0 0.0
        %4195 = vmatpush.msra.mxu0 %v3573
        %4196 = vmatpush.msra.mxu0 %v3565
        %4197 = vmatmul.f32.gmra.mxu0 %v3744
        %v4198 = vpop.f32.mrf.mxu0
        %v4199 = vadd.f32 0.0, %v4198
        %4200 = vmatmul.f32.gmra.mxu0 %v3747
        %v4201 = vpop.f32.mrf.mxu0
        %v4202 = vadd.f32 0.0, %v4201
        %4203 = vmatmul.f32.gmra.mxu0 %v3750
        %v4204 = vpop.f32.mrf.mxu0
        %v4205 = vadd.f32 0.0, %v4204
        %4206 = vmatmul.f32.gmra.mxu0 %v3753
        %v4207 = vpop.f32.mrf.mxu0
        %v4208 = vadd.f32 0.0, %v4207
        %4209 = vmatmul.f32.gmra.mxu0 %v3756
        %v4210 = vpop.f32.mrf.mxu0
        %v4211 = vadd.f32 0.0, %v4210
        %4212 = vmatmul.f32.gmra.mxu0 %v3759
        %v4213 = vpop.f32.mrf.mxu0
        %v4214 = vadd.f32 0.0, %v4213
        %4215 = vmatmul.f32.gmra.mxu0 %v3762
        %v4216 = vpop.f32.mrf.mxu0
        %v4217 = vadd.f32 0.0, %v4216
        %4218 = vmatmul.f32.gmra.mxu0 %v3765
        %v4219 = vpop.f32.mrf.mxu0
        %v4220 = vadd.f32 0.0, %v4219
        %4221 = vmatmul.f32.gmra.mxu0 %v3768
        %v4222 = vpop.f32.mrf.mxu0
        %v4223 = vadd.f32 0.0, %v4222
        %4224 = vmatmul.f32.gmra.mxu0 %v3771
        %v4225 = vpop.f32.mrf.mxu0
        %v4226 = vadd.f32 0.0, %v4225
        %4227 = vmatmul.f32.gmra.mxu0 %v3774
        %v4228 = vpop.f32.mrf.mxu0
        %v4229 = vadd.f32 0.0, %v4228
        %4230 = vmatmul.f32.gmra.mxu0 %v3777
        %v4231 = vpop.f32.mrf.mxu0
        %v4232 = vadd.f32 0.0, %v4231
        %4233 = vmatmul.f32.gmra.mxu0 %v3780
        %v4234 = vpop.f32.mrf.mxu0
        %v4235 = vadd.f32 0.0, %v4234
        %4236 = vmatmul.f32.gmra.mxu0 %v3783
        %v4237 = vpop.f32.mrf.mxu0
        %v4238 = vadd.f32 0.0, %v4237
        %4239 = vmatmul.f32.gmra.mxu0 %v3786
        %v4240 = vpop.f32.mrf.mxu0
        %v4241 = vadd.f32 0.0, %v4240
        %4242 = vmatmul.f32.gmra.mxu0 %v3789
        %v4243 = vpop.f32.mrf.mxu0
        %v4244 = vadd.f32 0.0, %v4243
        %4245 = vdwg.mxu0
        %4246 = vmatpush.msra.mxu0 0.0
        %4247 = vmatpush.msra.mxu0 0.0
        %4248 = vmatpush.msra.mxu0 0.0
        %4249 = vmatpush.msra.mxu0 0.0
        %4250 = vmatpush.msra.mxu0 0.0
        %4251 = vmatpush.msra.mxu0 0.0
        %4252 = vmatpush.msra.mxu0 0.0
        %4253 = vmatpush.msra.mxu0 0.0
        %4254 = vmatpush.msra.mxu0 0.0
        %4255 = vmatpush.msra.mxu0 0.0
        %4256 = vmatpush.msra.mxu0 0.0
        %4257 = vmatpush.msra.mxu0 0.0
        %4258 = vmatpush.msra.mxu0 0.0
        %4259 = vmatpush.msra.mxu0 0.0
        %4260 = vmatpush.msra.mxu0 %v3574
        %4261 = vmatpush.msra.mxu0 %v3566
        %4262 = vmatmul.f32.gmra.mxu0 %v3744
        %v4263 = vpop.f32.mrf.mxu0
        %v4264 = vadd.f32 0.0, %v4263
        %4265 = vmatmul.f32.gmra.mxu0 %v3747
        %v4266 = vpop.f32.mrf.mxu0
        %v4267 = vadd.f32 0.0, %v4266
        %4268 = vmatmul.f32.gmra.mxu0 %v3750
        %v4269 = vpop.f32.mrf.mxu0
        %v4270 = vadd.f32 0.0, %v4269
        %4271 = vmatmul.f32.gmra.mxu0 %v3753
        %v4272 = vpop.f32.mrf.mxu0
        %v4273 = vadd.f32 0.0, %v4272
        %4274 = vmatmul.f32.gmra.mxu0 %v3756
        %v4275 = vpop.f32.mrf.mxu0
        %v4276 = vadd.f32 0.0, %v4275
        %4277 = vmatmul.f32.gmra.mxu0 %v3759
        %v4278 = vpop.f32.mrf.mxu0
        %v4279 = vadd.f32 0.0, %v4278
        %4280 = vmatmul.f32.gmra.mxu0 %v3762
        %v4281 = vpop.f32.mrf.mxu0
        %v4282 = vadd.f32 0.0, %v4281
        %4283 = vmatmul.f32.gmra.mxu0 %v3765
        %v4284 = vpop.f32.mrf.mxu0
        %v4285 = vadd.f32 0.0, %v4284
        %4286 = vmatmul.f32.gmra.mxu0 %v3768
        %v4287 = vpop.f32.mrf.mxu0
        %v4288 = vadd.f32 0.0, %v4287
        %4289 = vmatmul.f32.gmra.mxu0 %v3771
        %v4290 = vpop.f32.mrf.mxu0
        %v4291 = vadd.f32 0.0, %v4290
        %4292 = vmatmul.f32.gmra.mxu0 %v3774
        %v4293 = vpop.f32.mrf.mxu0
        %v4294 = vadd.f32 0.0, %v4293
        %4295 = vmatmul.f32.gmra.mxu0 %v3777
        %v4296 = vpop.f32.mrf.mxu0
        %v4297 = vadd.f32 0.0, %v4296
        %4298 = vmatmul.f32.gmra.mxu0 %v3780
        %v4299 = vpop.f32.mrf.mxu0
        %v4300 = vadd.f32 0.0, %v4299
        %4301 = vmatmul.f32.gmra.mxu0 %v3783
        %v4302 = vpop.f32.mrf.mxu0
        %v4303 = vadd.f32 0.0, %v4302
        %4304 = vmatmul.f32.gmra.mxu0 %v3786
        %v4305 = vpop.f32.mrf.mxu0
        %v4306 = vadd.f32 0.0, %v4305
        %4307 = vmatmul.f32.gmra.mxu0 %v3789
        %v4308 = vpop.f32.mrf.mxu0
        %v4309 = vadd.f32 0.0, %v4308
        %4310 = vdwg.mxu0
        %v4311 = vmul.f32 %v3809, %v3711
        %v4312 = vmul.f32 %v3874, %v3712
        %v4313 = vmul.f32 %v3939, %v3713
        %v4314 = vmul.f32 %v4004, %v3714
        %v4315 = vmul.f32 %v4069, %v3715
        %v4316 = vmul.f32 %v4134, %v3716
        %v4317 = vmul.f32 %v4199, %v3717
        %v4318 = vmul.f32 %v4264, %v3718
        %v4319 = vmul.f32 %v3812, %v3719
        %v4320 = vmul.f32 %v3877, %v3720
        %v4321 = vmul.f32 %v3942, %v3721
        %v4322 = vmul.f32 %v4007, %v3722
        %v4323 = vmul.f32 %v4072, %v3723
        %v4324 = vmul.f32 %v4137, %v3724
        %v4325 = vmul.f32 %v4202, %v3725
        %v4326 = vmul.f32 %v4267, %v3726
        %v4327 = vmul.f32 %v3815, %v3711
        %v4328 = vmul.f32 %v3880, %v3712
        %v4329 = vmul.f32 %v3945, %v3713
        %v4330 = vmul.f32 %v4010, %v3714
        %v4331 = vmul.f32 %v4075, %v3715
        %v4332 = vmul.f32 %v4140, %v3716
        %v4333 = vmul.f32 %v4205, %v3717
        %v4334 = vmul.f32 %v4270, %v3718
        %v4335 = vmul.f32 %v3818, %v3719
        %v4336 = vmul.f32 %v3883, %v3720
        %v4337 = vmul.f32 %v3948, %v3721
        %v4338 = vmul.f32 %v4013, %v3722
        %v4339 = vmul.f32 %v4078, %v3723
        %v4340 = vmul.f32 %v4143, %v3724
        %v4341 = vmul.f32 %v4208, %v3725
        %v4342 = vmul.f32 %v4273, %v3726
        %v4343 = vmul.f32 %v3821, %v3711
        %v4344 = vmul.f32 %v3886, %v3712
        %v4345 = vmul.f32 %v3951, %v3713
        %v4346 = vmul.f32 %v4016, %v3714
        %v4347 = vmul.f32 %v4081, %v3715
        %v4348 = vmul.f32 %v4146, %v3716
        %v4349 = vmul.f32 %v4211, %v3717
        %v4350 = vmul.f32 %v4276, %v3718
        %v4351 = vmul.f32 %v3824, %v3719
        %v4352 = vmul.f32 %v3889, %v3720
        %v4353 = vmul.f32 %v3954, %v3721
        %v4354 = vmul.f32 %v4019, %v3722
        %v4355 = vmul.f32 %v4084, %v3723
        %v4356 = vmul.f32 %v4149, %v3724
        %v4357 = vmul.f32 %v4214, %v3725
        %v4358 = vmul.f32 %v4279, %v3726
        %v4359 = vmul.f32 %v3827, %v3711
        %v4360 = vmul.f32 %v3892, %v3712
        %v4361 = vmul.f32 %v3957, %v3713
        %v4362 = vmul.f32 %v4022, %v3714
        %v4363 = vmul.f32 %v4087, %v3715
        %v4364 = vmul.f32 %v4152, %v3716
        %v4365 = vmul.f32 %v4217, %v3717
        %v4366 = vmul.f32 %v4282, %v3718
        %v4367 = vmul.f32 %v3830, %v3719
        %v4368 = vmul.f32 %v3895, %v3720
        %v4369 = vmul.f32 %v3960, %v3721
        %v4370 = vmul.f32 %v4025, %v3722
        %v4371 = vmul.f32 %v4090, %v3723
        %v4372 = vmul.f32 %v4155, %v3724
        %v4373 = vmul.f32 %v4220, %v3725
        %v4374 = vmul.f32 %v4285, %v3726
        %v4375 = vmul.f32 %v3833, %v3711
        %v4376 = vmul.f32 %v3898, %v3712
        %v4377 = vmul.f32 %v3963, %v3713
        %v4378 = vmul.f32 %v4028, %v3714
        %v4379 = vmul.f32 %v4093, %v3715
        %v4380 = vmul.f32 %v4158, %v3716
        %v4381 = vmul.f32 %v4223, %v3717
        %v4382 = vmul.f32 %v4288, %v3718
        %v4383 = vmul.f32 %v3836, %v3719
        %v4384 = vmul.f32 %v3901, %v3720
        %v4385 = vmul.f32 %v3966, %v3721
        %v4386 = vmul.f32 %v4031, %v3722
        %v4387 = vmul.f32 %v4096, %v3723
        %v4388 = vmul.f32 %v4161, %v3724
        %v4389 = vmul.f32 %v4226, %v3725
        %v4390 = vmul.f32 %v4291, %v3726
        %v4391 = vmul.f32 %v3839, %v3711
        %v4392 = vmul.f32 %v3904, %v3712
        %v4393 = vmul.f32 %v3969, %v3713
        %v4394 = vmul.f32 %v4034, %v3714
        %v4395 = vmul.f32 %v4099, %v3715
        %v4396 = vmul.f32 %v4164, %v3716
        %v4397 = vmul.f32 %v4229, %v3717
        %v4398 = vmul.f32 %v4294, %v3718
        %v4399 = vmul.f32 %v3842, %v3719
        %v4400 = vmul.f32 %v3907, %v3720
        %v4401 = vmul.f32 %v3972, %v3721
        %v4402 = vmul.f32 %v4037, %v3722
        %v4403 = vmul.f32 %v4102, %v3723
        %v4404 = vmul.f32 %v4167, %v3724
        %v4405 = vmul.f32 %v4232, %v3725
        %v4406 = vmul.f32 %v4297, %v3726
        %v4407 = vmul.f32 %v3845, %v3711
        %v4408 = vmul.f32 %v3910, %v3712
        %v4409 = vmul.f32 %v3975, %v3713
        %v4410 = vmul.f32 %v4040, %v3714
        %v4411 = vmul.f32 %v4105, %v3715
        %v4412 = vmul.f32 %v4170, %v3716
        %v4413 = vmul.f32 %v4235, %v3717
        %v4414 = vmul.f32 %v4300, %v3718
        %v4415 = vmul.f32 %v3848, %v3719
        %v4416 = vmul.f32 %v3913, %v3720
        %v4417 = vmul.f32 %v3978, %v3721
        %v4418 = vmul.f32 %v4043, %v3722
        %v4419 = vmul.f32 %v4108, %v3723
        %v4420 = vmul.f32 %v4173, %v3724
        %v4421 = vmul.f32 %v4238, %v3725
        %v4422 = vmul.f32 %v4303, %v3726
        %v4423 = vmul.f32 %v3851, %v3711
        %v4424 = vmul.f32 %v3916, %v3712
        %v4425 = vmul.f32 %v3981, %v3713
        %v4426 = vmul.f32 %v4046, %v3714
        %v4427 = vmul.f32 %v4111, %v3715
        %v4428 = vmul.f32 %v4176, %v3716
        %v4429 = vmul.f32 %v4241, %v3717
        %v4430 = vmul.f32 %v4306, %v3718
        %v4431 = vmul.f32 %v3854, %v3719
        %v4432 = vmul.f32 %v3919, %v3720
        %v4433 = vmul.f32 %v3984, %v3721
        %v4434 = vmul.f32 %v4049, %v3722
        %v4435 = vmul.f32 %v4114, %v3723
        %v4436 = vmul.f32 %v4179, %v3724
        %v4437 = vmul.f32 %v4244, %v3725
        %v4438 = vmul.f32 %v4309, %v3726
        %v4439 = vadd.f32 %v4311, %v4319
        %v4440 = vrot.slane %v4439, 4
        %v4441 = vadd.f32 %v4439, %v4440
        %v4442 = vrot.slane %v4441, 2
        %v4443 = vadd.f32 %v4441, %v4442
        %v4444 = vrot.slane %v4443, 1
        %v4445 = vadd.f32 %v4443, %v4444
        %v4446 = vadd.f32 %v4312, %v4320
        %v4447 = vrot.slane %v4446, 4
        %v4448 = vadd.f32 %v4446, %v4447
        %v4449 = vrot.slane %v4448, 2
        %v4450 = vadd.f32 %v4448, %v4449
        %v4451 = vrot.slane %v4450, 1
        %v4452 = vadd.f32 %v4450, %v4451
        %v4453 = vadd.f32 %v4313, %v4321
        %v4454 = vrot.slane %v4453, 4
        %v4455 = vadd.f32 %v4453, %v4454
        %v4456 = vrot.slane %v4455, 2
        %v4457 = vadd.f32 %v4455, %v4456
        %v4458 = vrot.slane %v4457, 1
        %v4459 = vadd.f32 %v4457, %v4458
        %v4460 = vadd.f32 %v4314, %v4322
        %v4461 = vrot.slane %v4460, 4
        %v4462 = vadd.f32 %v4460, %v4461
        %v4463 = vrot.slane %v4462, 2
        %v4464 = vadd.f32 %v4462, %v4463
        %v4465 = vrot.slane %v4464, 1
        %v4466 = vadd.f32 %v4464, %v4465
        %v4467 = vadd.f32 %v4315, %v4323
        %v4468 = vrot.slane %v4467, 4
        %v4469 = vadd.f32 %v4467, %v4468
        %v4470 = vrot.slane %v4469, 2
        %v4471 = vadd.f32 %v4469, %v4470
        %v4472 = vrot.slane %v4471, 1
        %v4473 = vadd.f32 %v4471, %v4472
        %v4474 = vadd.f32 %v4316, %v4324
        %v4475 = vrot.slane %v4474, 4
        %v4476 = vadd.f32 %v4474, %v4475
        %v4477 = vrot.slane %v4476, 2
        %v4478 = vadd.f32 %v4476, %v4477
        %v4479 = vrot.slane %v4478, 1
        %v4480 = vadd.f32 %v4478, %v4479
        %v4481 = vadd.f32 %v4317, %v4325
        %v4482 = vrot.slane %v4481, 4
        %v4483 = vadd.f32 %v4481, %v4482
        %v4484 = vrot.slane %v4483, 2
        %v4485 = vadd.f32 %v4483, %v4484
        %v4486 = vrot.slane %v4485, 1
        %v4487 = vadd.f32 %v4485, %v4486
        %v4488 = vadd.f32 %v4318, %v4326
        %v4489 = vrot.slane %v4488, 4
        %v4490 = vadd.f32 %v4488, %v4489
        %v4491 = vrot.slane %v4490, 2
        %v4492 = vadd.f32 %v4490, %v4491
        %v4493 = vrot.slane %v4492, 1
        %v4494 = vadd.f32 %v4492, %v4493
        %v4495 = vadd.f32 %v4327, %v4335
        %v4496 = vrot.slane %v4495, 4
        %v4497 = vadd.f32 %v4495, %v4496
        %v4498 = vrot.slane %v4497, 2
        %v4499 = vadd.f32 %v4497, %v4498
        %v4500 = vrot.slane %v4499, 1
        %v4501 = vadd.f32 %v4499, %v4500
        %v4502 = vadd.f32 %v4328, %v4336
        %v4503 = vrot.slane %v4502, 4
        %v4504 = vadd.f32 %v4502, %v4503
        %v4505 = vrot.slane %v4504, 2
        %v4506 = vadd.f32 %v4504, %v4505
        %v4507 = vrot.slane %v4506, 1
        %v4508 = vadd.f32 %v4506, %v4507
        %v4509 = vadd.f32 %v4329, %v4337
        %v4510 = vrot.slane %v4509, 4
        %v4511 = vadd.f32 %v4509, %v4510
        %v4512 = vrot.slane %v4511, 2
        %v4513 = vadd.f32 %v4511, %v4512
        %v4514 = vrot.slane %v4513, 1
        %v4515 = vadd.f32 %v4513, %v4514
        %v4516 = vadd.f32 %v4330, %v4338
        %v4517 = vrot.slane %v4516, 4
        %v4518 = vadd.f32 %v4516, %v4517
        %v4519 = vrot.slane %v4518, 2
        %v4520 = vadd.f32 %v4518, %v4519
        %v4521 = vrot.slane %v4520, 1
        %v4522 = vadd.f32 %v4520, %v4521
        %v4523 = vadd.f32 %v4331, %v4339
        %v4524 = vrot.slane %v4523, 4
        %v4525 = vadd.f32 %v4523, %v4524
        %v4526 = vrot.slane %v4525, 2
        %v4527 = vadd.f32 %v4525, %v4526
        %v4528 = vrot.slane %v4527, 1
        %v4529 = vadd.f32 %v4527, %v4528
        %v4530 = vadd.f32 %v4332, %v4340
        %v4531 = vrot.slane %v4530, 4
        %v4532 = vadd.f32 %v4530, %v4531
        %v4533 = vrot.slane %v4532, 2
        %v4534 = vadd.f32 %v4532, %v4533
        %v4535 = vrot.slane %v4534, 1
        %v4536 = vadd.f32 %v4534, %v4535
        %v4537 = vadd.f32 %v4333, %v4341
        %v4538 = vrot.slane %v4537, 4
        %v4539 = vadd.f32 %v4537, %v4538
        %v4540 = vrot.slane %v4539, 2
        %v4541 = vadd.f32 %v4539, %v4540
        %v4542 = vrot.slane %v4541, 1
        %v4543 = vadd.f32 %v4541, %v4542
        %v4544 = vadd.f32 %v4334, %v4342
        %v4545 = vrot.slane %v4544, 4
        %v4546 = vadd.f32 %v4544, %v4545
        %v4547 = vrot.slane %v4546, 2
        %v4548 = vadd.f32 %v4546, %v4547
        %v4549 = vrot.slane %v4548, 1
        %v4550 = vadd.f32 %v4548, %v4549
        %v4551 = vadd.f32 %v4343, %v4351
        %v4552 = vrot.slane %v4551, 4
        %v4553 = vadd.f32 %v4551, %v4552
        %v4554 = vrot.slane %v4553, 2
        %v4555 = vadd.f32 %v4553, %v4554
        %v4556 = vrot.slane %v4555, 1
        %v4557 = vadd.f32 %v4555, %v4556
        %v4558 = vadd.f32 %v4344, %v4352
        %v4559 = vrot.slane %v4558, 4
        %v4560 = vadd.f32 %v4558, %v4559
        %v4561 = vrot.slane %v4560, 2
        %v4562 = vadd.f32 %v4560, %v4561
        %v4563 = vrot.slane %v4562, 1
        %v4564 = vadd.f32 %v4562, %v4563
        %v4565 = vadd.f32 %v4345, %v4353
        %v4566 = vrot.slane %v4565, 4
        %v4567 = vadd.f32 %v4565, %v4566
        %v4568 = vrot.slane %v4567, 2
        %v4569 = vadd.f32 %v4567, %v4568
        %v4570 = vrot.slane %v4569, 1
        %v4571 = vadd.f32 %v4569, %v4570
        %v4572 = vadd.f32 %v4346, %v4354
        %v4573 = vrot.slane %v4572, 4
        %v4574 = vadd.f32 %v4572, %v4573
        %v4575 = vrot.slane %v4574, 2
        %v4576 = vadd.f32 %v4574, %v4575
        %v4577 = vrot.slane %v4576, 1
        %v4578 = vadd.f32 %v4576, %v4577
        %v4579 = vadd.f32 %v4347, %v4355
        %v4580 = vrot.slane %v4579, 4
        %v4581 = vadd.f32 %v4579, %v4580
        %v4582 = vrot.slane %v4581, 2
        %v4583 = vadd.f32 %v4581, %v4582
        %v4584 = vrot.slane %v4583, 1
        %v4585 = vadd.f32 %v4583, %v4584
        %v4586 = vadd.f32 %v4348, %v4356
        %v4587 = vrot.slane %v4586, 4
        %v4588 = vadd.f32 %v4586, %v4587
        %v4589 = vrot.slane %v4588, 2
        %v4590 = vadd.f32 %v4588, %v4589
        %v4591 = vrot.slane %v4590, 1
        %v4592 = vadd.f32 %v4590, %v4591
        %v4593 = vadd.f32 %v4349, %v4357
        %v4594 = vrot.slane %v4593, 4
        %v4595 = vadd.f32 %v4593, %v4594
        %v4596 = vrot.slane %v4595, 2
        %v4597 = vadd.f32 %v4595, %v4596
        %v4598 = vrot.slane %v4597, 1
        %v4599 = vadd.f32 %v4597, %v4598
        %v4600 = vadd.f32 %v4350, %v4358
        %v4601 = vrot.slane %v4600, 4
        %v4602 = vadd.f32 %v4600, %v4601
        %v4603 = vrot.slane %v4602, 2
        %v4604 = vadd.f32 %v4602, %v4603
        %v4605 = vrot.slane %v4604, 1
        %v4606 = vadd.f32 %v4604, %v4605
        %v4607 = vadd.f32 %v4359, %v4367
        %v4608 = vrot.slane %v4607, 4
        %v4609 = vadd.f32 %v4607, %v4608
        %v4610 = vrot.slane %v4609, 2
        %v4611 = vadd.f32 %v4609, %v4610
        %v4612 = vrot.slane %v4611, 1
        %v4613 = vadd.f32 %v4611, %v4612
        %v4614 = vadd.f32 %v4360, %v4368
        %v4615 = vrot.slane %v4614, 4
        %v4616 = vadd.f32 %v4614, %v4615
        %v4617 = vrot.slane %v4616, 2
        %v4618 = vadd.f32 %v4616, %v4617
        %v4619 = vrot.slane %v4618, 1
        %v4620 = vadd.f32 %v4618, %v4619
        %v4621 = vadd.f32 %v4361, %v4369
        %v4622 = vrot.slane %v4621, 4
        %v4623 = vadd.f32 %v4621, %v4622
        %v4624 = vrot.slane %v4623, 2
        %v4625 = vadd.f32 %v4623, %v4624
        %v4626 = vrot.slane %v4625, 1
        %v4627 = vadd.f32 %v4625, %v4626
        %v4628 = vadd.f32 %v4362, %v4370
        %v4629 = vrot.slane %v4628, 4
        %v4630 = vadd.f32 %v4628, %v4629
        %v4631 = vrot.slane %v4630, 2
        %v4632 = vadd.f32 %v4630, %v4631
        %v4633 = vrot.slane %v4632, 1
        %v4634 = vadd.f32 %v4632, %v4633
        %v4635 = vadd.f32 %v4363, %v4371
        %v4636 = vrot.slane %v4635, 4
        %v4637 = vadd.f32 %v4635, %v4636
        %v4638 = vrot.slane %v4637, 2
        %v4639 = vadd.f32 %v4637, %v4638
        %v4640 = vrot.slane %v4639, 1
        %v4641 = vadd.f32 %v4639, %v4640
        %v4642 = vadd.f32 %v4364, %v4372
        %v4643 = vrot.slane %v4642, 4
        %v4644 = vadd.f32 %v4642, %v4643
        %v4645 = vrot.slane %v4644, 2
        %v4646 = vadd.f32 %v4644, %v4645
        %v4647 = vrot.slane %v4646, 1
        %v4648 = vadd.f32 %v4646, %v4647
        %v4649 = vadd.f32 %v4365, %v4373
        %v4650 = vrot.slane %v4649, 4
        %v4651 = vadd.f32 %v4649, %v4650
        %v4652 = vrot.slane %v4651, 2
        %v4653 = vadd.f32 %v4651, %v4652
        %v4654 = vrot.slane %v4653, 1
        %v4655 = vadd.f32 %v4653, %v4654
        %v4656 = vadd.f32 %v4366, %v4374
        %v4657 = vrot.slane %v4656, 4
        %v4658 = vadd.f32 %v4656, %v4657
        %v4659 = vrot.slane %v4658, 2
        %v4660 = vadd.f32 %v4658, %v4659
        %v4661 = vrot.slane %v4660, 1
        %v4662 = vadd.f32 %v4660, %v4661
        %v4663 = vadd.f32 %v4375, %v4383
        %v4664 = vrot.slane %v4663, 4
        %v4665 = vadd.f32 %v4663, %v4664
        %v4666 = vrot.slane %v4665, 2
        %v4667 = vadd.f32 %v4665, %v4666
        %v4668 = vrot.slane %v4667, 1
        %v4669 = vadd.f32 %v4667, %v4668
        %v4670 = vadd.f32 %v4376, %v4384
        %v4671 = vrot.slane %v4670, 4
        %v4672 = vadd.f32 %v4670, %v4671
        %v4673 = vrot.slane %v4672, 2
        %v4674 = vadd.f32 %v4672, %v4673
        %v4675 = vrot.slane %v4674, 1
        %v4676 = vadd.f32 %v4674, %v4675
        %v4677 = vadd.f32 %v4377, %v4385
        %v4678 = vrot.slane %v4677, 4
        %v4679 = vadd.f32 %v4677, %v4678
        %v4680 = vrot.slane %v4679, 2
        %v4681 = vadd.f32 %v4679, %v4680
        %v4682 = vrot.slane %v4681, 1
        %v4683 = vadd.f32 %v4681, %v4682
        %v4684 = vadd.f32 %v4378, %v4386
        %v4685 = vrot.slane %v4684, 4
        %v4686 = vadd.f32 %v4684, %v4685
        %v4687 = vrot.slane %v4686, 2
        %v4688 = vadd.f32 %v4686, %v4687
        %v4689 = vrot.slane %v4688, 1
        %v4690 = vadd.f32 %v4688, %v4689
        %v4691 = vadd.f32 %v4379, %v4387
        %v4692 = vrot.slane %v4691, 4
        %v4693 = vadd.f32 %v4691, %v4692
        %v4694 = vrot.slane %v4693, 2
        %v4695 = vadd.f32 %v4693, %v4694
        %v4696 = vrot.slane %v4695, 1
        %v4697 = vadd.f32 %v4695, %v4696
        %v4698 = vadd.f32 %v4380, %v4388
        %v4699 = vrot.slane %v4698, 4
        %v4700 = vadd.f32 %v4698, %v4699
        %v4701 = vrot.slane %v4700, 2
        %v4702 = vadd.f32 %v4700, %v4701
        %v4703 = vrot.slane %v4702, 1
        %v4704 = vadd.f32 %v4702, %v4703
        %v4705 = vadd.f32 %v4381, %v4389
        %v4706 = vrot.slane %v4705, 4
        %v4707 = vadd.f32 %v4705, %v4706
        %v4708 = vrot.slane %v4707, 2
        %v4709 = vadd.f32 %v4707, %v4708
        %v4710 = vrot.slane %v4709, 1
        %v4711 = vadd.f32 %v4709, %v4710
        %v4712 = vadd.f32 %v4382, %v4390
        %v4713 = vrot.slane %v4712, 4
        %v4714 = vadd.f32 %v4712, %v4713
        %v4715 = vrot.slane %v4714, 2
        %v4716 = vadd.f32 %v4714, %v4715
        %v4717 = vrot.slane %v4716, 1
        %v4718 = vadd.f32 %v4716, %v4717
        %v4719 = vadd.f32 %v4391, %v4399
        %v4720 = vrot.slane %v4719, 4
        %v4721 = vadd.f32 %v4719, %v4720
        %v4722 = vrot.slane %v4721, 2
        %v4723 = vadd.f32 %v4721, %v4722
        %v4724 = vrot.slane %v4723, 1
        %v4725 = vadd.f32 %v4723, %v4724
        %v4726 = vadd.f32 %v4392, %v4400
        %v4727 = vrot.slane %v4726, 4
        %v4728 = vadd.f32 %v4726, %v4727
        %v4729 = vrot.slane %v4728, 2
        %v4730 = vadd.f32 %v4728, %v4729
        %v4731 = vrot.slane %v4730, 1
        %v4732 = vadd.f32 %v4730, %v4731
        %v4733 = vadd.f32 %v4393, %v4401
        %v4734 = vrot.slane %v4733, 4
        %v4735 = vadd.f32 %v4733, %v4734
        %v4736 = vrot.slane %v4735, 2
        %v4737 = vadd.f32 %v4735, %v4736
        %v4738 = vrot.slane %v4737, 1
        %v4739 = vadd.f32 %v4737, %v4738
        %v4740 = vadd.f32 %v4394, %v4402
        %v4741 = vrot.slane %v4740, 4
        %v4742 = vadd.f32 %v4740, %v4741
        %v4743 = vrot.slane %v4742, 2
        %v4744 = vadd.f32 %v4742, %v4743
        %v4745 = vrot.slane %v4744, 1
        %v4746 = vadd.f32 %v4744, %v4745
        %v4747 = vadd.f32 %v4395, %v4403
        %v4748 = vrot.slane %v4747, 4
        %v4749 = vadd.f32 %v4747, %v4748
        %v4750 = vrot.slane %v4749, 2
        %v4751 = vadd.f32 %v4749, %v4750
        %v4752 = vrot.slane %v4751, 1
        %v4753 = vadd.f32 %v4751, %v4752
        %v4754 = vadd.f32 %v4396, %v4404
        %v4755 = vrot.slane %v4754, 4
        %v4756 = vadd.f32 %v4754, %v4755
        %v4757 = vrot.slane %v4756, 2
        %v4758 = vadd.f32 %v4756, %v4757
        %v4759 = vrot.slane %v4758, 1
        %v4760 = vadd.f32 %v4758, %v4759
        %v4761 = vadd.f32 %v4397, %v4405
        %v4762 = vrot.slane %v4761, 4
        %v4763 = vadd.f32 %v4761, %v4762
        %v4764 = vrot.slane %v4763, 2
        %v4765 = vadd.f32 %v4763, %v4764
        %v4766 = vrot.slane %v4765, 1
        %v4767 = vadd.f32 %v4765, %v4766
        %v4768 = vadd.f32 %v4398, %v4406
        %v4769 = vrot.slane %v4768, 4
        %v4770 = vadd.f32 %v4768, %v4769
        %v4771 = vrot.slane %v4770, 2
        %v4772 = vadd.f32 %v4770, %v4771
        %v4773 = vrot.slane %v4772, 1
        %v4774 = vadd.f32 %v4772, %v4773
        %v4775 = vadd.f32 %v4407, %v4415
        %v4776 = vrot.slane %v4775, 4
        %v4777 = vadd.f32 %v4775, %v4776
        %v4778 = vrot.slane %v4777, 2
        %v4779 = vadd.f32 %v4777, %v4778
        %v4780 = vrot.slane %v4779, 1
        %v4781 = vadd.f32 %v4779, %v4780
        %v4782 = vadd.f32 %v4408, %v4416
        %v4783 = vrot.slane %v4782, 4
        %v4784 = vadd.f32 %v4782, %v4783
        %v4785 = vrot.slane %v4784, 2
        %v4786 = vadd.f32 %v4784, %v4785
        %v4787 = vrot.slane %v4786, 1
        %v4788 = vadd.f32 %v4786, %v4787
        %v4789 = vadd.f32 %v4409, %v4417
        %v4790 = vrot.slane %v4789, 4
        %v4791 = vadd.f32 %v4789, %v4790
        %v4792 = vrot.slane %v4791, 2
        %v4793 = vadd.f32 %v4791, %v4792
        %v4794 = vrot.slane %v4793, 1
        %v4795 = vadd.f32 %v4793, %v4794
        %v4796 = vadd.f32 %v4410, %v4418
        %v4797 = vrot.slane %v4796, 4
        %v4798 = vadd.f32 %v4796, %v4797
        %v4799 = vrot.slane %v4798, 2
        %v4800 = vadd.f32 %v4798, %v4799
        %v4801 = vrot.slane %v4800, 1
        %v4802 = vadd.f32 %v4800, %v4801
        %v4803 = vadd.f32 %v4411, %v4419
        %v4804 = vrot.slane %v4803, 4
        %v4805 = vadd.f32 %v4803, %v4804
        %v4806 = vrot.slane %v4805, 2
        %v4807 = vadd.f32 %v4805, %v4806
        %v4808 = vrot.slane %v4807, 1
        %v4809 = vadd.f32 %v4807, %v4808
        %v4810 = vadd.f32 %v4412, %v4420
        %v4811 = vrot.slane %v4810, 4
        %v4812 = vadd.f32 %v4810, %v4811
        %v4813 = vrot.slane %v4812, 2
        %v4814 = vadd.f32 %v4812, %v4813
        %v4815 = vrot.slane %v4814, 1
        %v4816 = vadd.f32 %v4814, %v4815
        %v4817 = vadd.f32 %v4413, %v4421
        %v4818 = vrot.slane %v4817, 4
        %v4819 = vadd.f32 %v4817, %v4818
        %v4820 = vrot.slane %v4819, 2
        %v4821 = vadd.f32 %v4819, %v4820
        %v4822 = vrot.slane %v4821, 1
        %v4823 = vadd.f32 %v4821, %v4822
        %v4824 = vadd.f32 %v4414, %v4422
        %v4825 = vrot.slane %v4824, 4
        %v4826 = vadd.f32 %v4824, %v4825
        %v4827 = vrot.slane %v4826, 2
        %v4828 = vadd.f32 %v4826, %v4827
        %v4829 = vrot.slane %v4828, 1
        %v4830 = vadd.f32 %v4828, %v4829
        %v4831 = vadd.f32 %v4423, %v4431
        %v4832 = vrot.slane %v4831, 4
        %v4833 = vadd.f32 %v4831, %v4832
        %v4834 = vrot.slane %v4833, 2
        %v4835 = vadd.f32 %v4833, %v4834
        %v4836 = vrot.slane %v4835, 1
        %v4837 = vadd.f32 %v4835, %v4836
        %v4838 = vadd.f32 %v4424, %v4432
        %v4839 = vrot.slane %v4838, 4
        %v4840 = vadd.f32 %v4838, %v4839
        %v4841 = vrot.slane %v4840, 2
        %v4842 = vadd.f32 %v4840, %v4841
        %v4843 = vrot.slane %v4842, 1
        %v4844 = vadd.f32 %v4842, %v4843
        %v4845 = vadd.f32 %v4425, %v4433
        %v4846 = vrot.slane %v4845, 4
        %v4847 = vadd.f32 %v4845, %v4846
        %v4848 = vrot.slane %v4847, 2
        %v4849 = vadd.f32 %v4847, %v4848
        %v4850 = vrot.slane %v4849, 1
        %v4851 = vadd.f32 %v4849, %v4850
        %v4852 = vadd.f32 %v4426, %v4434
        %v4853 = vrot.slane %v4852, 4
        %v4854 = vadd.f32 %v4852, %v4853
        %v4855 = vrot.slane %v4854, 2
        %v4856 = vadd.f32 %v4854, %v4855
        %v4857 = vrot.slane %v4856, 1
        %v4858 = vadd.f32 %v4856, %v4857
        %v4859 = vadd.f32 %v4427, %v4435
        %v4860 = vrot.slane %v4859, 4
        %v4861 = vadd.f32 %v4859, %v4860
        %v4862 = vrot.slane %v4861, 2
        %v4863 = vadd.f32 %v4861, %v4862
        %v4864 = vrot.slane %v4863, 1
        %v4865 = vadd.f32 %v4863, %v4864
        %v4866 = vadd.f32 %v4428, %v4436
        %v4867 = vrot.slane %v4866, 4
        %v4868 = vadd.f32 %v4866, %v4867
        %v4869 = vrot.slane %v4868, 2
        %v4870 = vadd.f32 %v4868, %v4869
        %v4871 = vrot.slane %v4870, 1
        %v4872 = vadd.f32 %v4870, %v4871
        %v4873 = vadd.f32 %v4429, %v4437
        %v4874 = vrot.slane %v4873, 4
        %v4875 = vadd.f32 %v4873, %v4874
        %v4876 = vrot.slane %v4875, 2
        %v4877 = vadd.f32 %v4875, %v4876
        %v4878 = vrot.slane %v4877, 1
        %v4879 = vadd.f32 %v4877, %v4878
        %v4880 = vadd.f32 %v4430, %v4438
        %v4881 = vrot.slane %v4880, 4
        %v4882 = vadd.f32 %v4880, %v4881
        %v4883 = vrot.slane %v4882, 2
        %v4884 = vadd.f32 %v4882, %v4883
        %v4885 = vrot.slane %v4884, 1
        %v4886 = vadd.f32 %v4884, %v4885
        %v4951 = vsel %vm2183, %v4501, %v4445
        %v4952 = vsel %vm2185, %v4557, %v4951
        %v4953 = vsel %vm2187, %v4613, %v4952
        %v4954 = vsel %vm2189, %v4669, %v4953
        %v4955 = vsel %vm2191, %v4725, %v4954
        %v4956 = vsel %vm2193, %v4781, %v4955
        %v4957 = vsel %vm2195, %v4837, %v4956
        %v4958 = vsel %vm2183, %v4508, %v4452
        %v4959 = vsel %vm2185, %v4564, %v4958
        %v4960 = vsel %vm2187, %v4620, %v4959
        %v4961 = vsel %vm2189, %v4676, %v4960
        %v4962 = vsel %vm2191, %v4732, %v4961
        %v4963 = vsel %vm2193, %v4788, %v4962
        %v4964 = vsel %vm2195, %v4844, %v4963
        %v4965 = vsel %vm2183, %v4515, %v4459
        %v4966 = vsel %vm2185, %v4571, %v4965
        %v4967 = vsel %vm2187, %v4627, %v4966
        %v4968 = vsel %vm2189, %v4683, %v4967
        %v4969 = vsel %vm2191, %v4739, %v4968
        %v4970 = vsel %vm2193, %v4795, %v4969
        %v4971 = vsel %vm2195, %v4851, %v4970
        %v4972 = vsel %vm2183, %v4522, %v4466
        %v4973 = vsel %vm2185, %v4578, %v4972
        %v4974 = vsel %vm2187, %v4634, %v4973
        %v4975 = vsel %vm2189, %v4690, %v4974
        %v4976 = vsel %vm2191, %v4746, %v4975
        %v4977 = vsel %vm2193, %v4802, %v4976
        %v4978 = vsel %vm2195, %v4858, %v4977
        %v4979 = vsel %vm2183, %v4529, %v4473
        %v4980 = vsel %vm2185, %v4585, %v4979
        %v4981 = vsel %vm2187, %v4641, %v4980
        %v4982 = vsel %vm2189, %v4697, %v4981
        %v4983 = vsel %vm2191, %v4753, %v4982
        %v4984 = vsel %vm2193, %v4809, %v4983
        %v4985 = vsel %vm2195, %v4865, %v4984
        %v4986 = vsel %vm2183, %v4536, %v4480
        %v4987 = vsel %vm2185, %v4592, %v4986
        %v4988 = vsel %vm2187, %v4648, %v4987
        %v4989 = vsel %vm2189, %v4704, %v4988
        %v4990 = vsel %vm2191, %v4760, %v4989
        %v4991 = vsel %vm2193, %v4816, %v4990
        %v4992 = vsel %vm2195, %v4872, %v4991
        %v4993 = vsel %vm2183, %v4543, %v4487
        %v4994 = vsel %vm2185, %v4599, %v4993
        %v4995 = vsel %vm2187, %v4655, %v4994
        %v4996 = vsel %vm2189, %v4711, %v4995
        %v4997 = vsel %vm2191, %v4767, %v4996
        %v4998 = vsel %vm2193, %v4823, %v4997
        %v4999 = vsel %vm2195, %v4879, %v4998
        %v5000 = vsel %vm2183, %v4550, %v4494
        %v5001 = vsel %vm2185, %v4606, %v5000
        %v5002 = vsel %vm2187, %v4662, %v5001
        %v5003 = vsel %vm2189, %v4718, %v5002
        %v5004 = vsel %vm2191, %v4774, %v5003
        %v5005 = vsel %vm2193, %v4830, %v5004
        %v5006 = vsel %vm2195, %v4886, %v5005
        %v5015 = vadd.f32 %v2254, %v4957
        %v5016 = vadd.f32 %v2255, %v4964
        %v5017 = vadd.f32 %v2256, %v4971
        %v5018 = vadd.f32 %v2257, %v4978
        %v5019 = vadd.f32 %v2258, %v4985
        %v5020 = vadd.f32 %v2259, %v4992
        %v5021 = vadd.f32 %v2260, %v4999
        %v5022 = vadd.f32 %v2261, %v5006
        %v5023 = vmul.f32 %v4445, %v4445
        %v5024 = vmul.f32 %v4452, %v4452
        %v5025 = vmul.f32 %v4459, %v4459
        %v5026 = vmul.f32 %v4466, %v4466
        %v5027 = vmul.f32 %v4473, %v4473
        %v5028 = vmul.f32 %v4480, %v4480
        %v5029 = vmul.f32 %v4487, %v4487
        %v5030 = vmul.f32 %v4494, %v4494
        %v5031 = vmul.f32 %v4501, %v4501
        %v5032 = vmul.f32 %v4508, %v4508
        %v5033 = vmul.f32 %v4515, %v4515
        %v5034 = vmul.f32 %v4522, %v4522
        %v5035 = vmul.f32 %v4529, %v4529
        %v5036 = vmul.f32 %v4536, %v4536
        %v5037 = vmul.f32 %v4543, %v4543
        %v5038 = vmul.f32 %v4550, %v4550
        %v5039 = vmul.f32 %v4557, %v4557
        %v5040 = vmul.f32 %v4564, %v4564
        %v5041 = vmul.f32 %v4571, %v4571
        %v5042 = vmul.f32 %v4578, %v4578
        %v5043 = vmul.f32 %v4585, %v4585
        %v5044 = vmul.f32 %v4592, %v4592
        %v5045 = vmul.f32 %v4599, %v4599
        %v5046 = vmul.f32 %v4606, %v4606
        %v5047 = vmul.f32 %v4613, %v4613
        %v5048 = vmul.f32 %v4620, %v4620
        %v5049 = vmul.f32 %v4627, %v4627
        %v5050 = vmul.f32 %v4634, %v4634
        %v5051 = vmul.f32 %v4641, %v4641
        %v5052 = vmul.f32 %v4648, %v4648
        %v5053 = vmul.f32 %v4655, %v4655
        %v5054 = vmul.f32 %v4662, %v4662
        %v5055 = vmul.f32 %v4669, %v4669
        %v5056 = vmul.f32 %v4676, %v4676
        %v5057 = vmul.f32 %v4683, %v4683
        %v5058 = vmul.f32 %v4690, %v4690
        %v5059 = vmul.f32 %v4697, %v4697
        %v5060 = vmul.f32 %v4704, %v4704
        %v5061 = vmul.f32 %v4711, %v4711
        %v5062 = vmul.f32 %v4718, %v4718
        %v5063 = vmul.f32 %v4725, %v4725
        %v5064 = vmul.f32 %v4732, %v4732
        %v5065 = vmul.f32 %v4739, %v4739
        %v5066 = vmul.f32 %v4746, %v4746
        %v5067 = vmul.f32 %v4753, %v4753
        %v5068 = vmul.f32 %v4760, %v4760
        %v5069 = vmul.f32 %v4767, %v4767
        %v5070 = vmul.f32 %v4774, %v4774
        %v5071 = vmul.f32 %v4781, %v4781
        %v5072 = vmul.f32 %v4788, %v4788
        %v5073 = vmul.f32 %v4795, %v4795
        %v5074 = vmul.f32 %v4802, %v4802
        %v5075 = vmul.f32 %v4809, %v4809
        %v5076 = vmul.f32 %v4816, %v4816
        %v5077 = vmul.f32 %v4823, %v4823
        %v5078 = vmul.f32 %v4830, %v4830
        %v5079 = vmul.f32 %v4837, %v4837
        %v5080 = vmul.f32 %v4844, %v4844
        %v5081 = vmul.f32 %v4851, %v4851
        %v5082 = vmul.f32 %v4858, %v4858
        %v5083 = vmul.f32 %v4865, %v4865
        %v5084 = vmul.f32 %v4872, %v4872
        %v5085 = vmul.f32 %v4879, %v4879
        %v5086 = vmul.f32 %v4886, %v4886
        %v5151 = vsel %vm2183, %v5031, %v5023
        %v5152 = vsel %vm2185, %v5039, %v5151
        %v5153 = vsel %vm2187, %v5047, %v5152
        %v5154 = vsel %vm2189, %v5055, %v5153
        %v5155 = vsel %vm2191, %v5063, %v5154
        %v5156 = vsel %vm2193, %v5071, %v5155
        %v5157 = vsel %vm2195, %v5079, %v5156
        %v5158 = vsel %vm2183, %v5032, %v5024
        %v5159 = vsel %vm2185, %v5040, %v5158
        %v5160 = vsel %vm2187, %v5048, %v5159
        %v5161 = vsel %vm2189, %v5056, %v5160
        %v5162 = vsel %vm2191, %v5064, %v5161
        %v5163 = vsel %vm2193, %v5072, %v5162
        %v5164 = vsel %vm2195, %v5080, %v5163
        %v5165 = vsel %vm2183, %v5033, %v5025
        %v5166 = vsel %vm2185, %v5041, %v5165
        %v5167 = vsel %vm2187, %v5049, %v5166
        %v5168 = vsel %vm2189, %v5057, %v5167
        %v5169 = vsel %vm2191, %v5065, %v5168
        %v5170 = vsel %vm2193, %v5073, %v5169
        %v5171 = vsel %vm2195, %v5081, %v5170
        %v5172 = vsel %vm2183, %v5034, %v5026
        %v5173 = vsel %vm2185, %v5042, %v5172
        %v5174 = vsel %vm2187, %v5050, %v5173
        %v5175 = vsel %vm2189, %v5058, %v5174
        %v5176 = vsel %vm2191, %v5066, %v5175
        %v5177 = vsel %vm2193, %v5074, %v5176
        %v5178 = vsel %vm2195, %v5082, %v5177
        %v5179 = vsel %vm2183, %v5035, %v5027
        %v5180 = vsel %vm2185, %v5043, %v5179
        %v5181 = vsel %vm2187, %v5051, %v5180
        %v5182 = vsel %vm2189, %v5059, %v5181
        %v5183 = vsel %vm2191, %v5067, %v5182
        %v5184 = vsel %vm2193, %v5075, %v5183
        %v5185 = vsel %vm2195, %v5083, %v5184
        %v5186 = vsel %vm2183, %v5036, %v5028
        %v5187 = vsel %vm2185, %v5044, %v5186
        %v5188 = vsel %vm2187, %v5052, %v5187
        %v5189 = vsel %vm2189, %v5060, %v5188
        %v5190 = vsel %vm2191, %v5068, %v5189
        %v5191 = vsel %vm2193, %v5076, %v5190
        %v5192 = vsel %vm2195, %v5084, %v5191
        %v5193 = vsel %vm2183, %v5037, %v5029
        %v5194 = vsel %vm2185, %v5045, %v5193
        %v5195 = vsel %vm2187, %v5053, %v5194
        %v5196 = vsel %vm2189, %v5061, %v5195
        %v5197 = vsel %vm2191, %v5069, %v5196
        %v5198 = vsel %vm2193, %v5077, %v5197
        %v5199 = vsel %vm2195, %v5085, %v5198
        %v5200 = vsel %vm2183, %v5038, %v5030
        %v5201 = vsel %vm2185, %v5046, %v5200
        %v5202 = vsel %vm2187, %v5054, %v5201
        %v5203 = vsel %vm2189, %v5062, %v5202
        %v5204 = vsel %vm2191, %v5070, %v5203
        %v5205 = vsel %vm2193, %v5078, %v5204
        %v5206 = vsel %vm2195, %v5086, %v5205
        %v5215 = vadd.f32 %v2454, %v5157
        %v5216 = vadd.f32 %v2455, %v5164
        %v5217 = vadd.f32 %v2456, %v5171
        %v5218 = vadd.f32 %v2457, %v5178
        %v5219 = vadd.f32 %v2458, %v5185
        %v5220 = vadd.f32 %v2459, %v5192
        %v5221 = vadd.f32 %v2460, %v5199
        %v5222 = vadd.f32 %v2461, %v5206
        %v5223 = vmul.f32 %v4445, %v453
        %v5224 = vmul.f32 %v4452, %v454
        %v5225 = vmul.f32 %v4459, %v453
        %v5226 = vmul.f32 %v4466, %v454
        %v5227 = vmul.f32 %v4473, %v453
        %v5228 = vmul.f32 %v4480, %v454
        %v5229 = vmul.f32 %v4487, %v453
        %v5230 = vmul.f32 %v4494, %v454
        %v5231 = vmul.f32 %v4501, %v2464
        %v5232 = vmul.f32 %v4508, %v2465
        %v5233 = vmul.f32 %v4515, %v2464
        %v5234 = vmul.f32 %v4522, %v2465
        %v5235 = vmul.f32 %v4529, %v2464
        %v5236 = vmul.f32 %v4536, %v2465
        %v5237 = vmul.f32 %v4543, %v2464
        %v5238 = vmul.f32 %v4550, %v2465
        %v5239 = vmul.f32 %v4557, %v2466
        %v5240 = vmul.f32 %v4564, %v2467
        %v5241 = vmul.f32 %v4571, %v2466
        %v5242 = vmul.f32 %v4578, %v2467
        %v5243 = vmul.f32 %v4585, %v2466
        %v5244 = vmul.f32 %v4592, %v2467
        %v5245 = vmul.f32 %v4599, %v2466
        %v5246 = vmul.f32 %v4606, %v2467
        %v5247 = vmul.f32 %v4613, %v2468
        %v5248 = vmul.f32 %v4620, %v2469
        %v5249 = vmul.f32 %v4627, %v2468
        %v5250 = vmul.f32 %v4634, %v2469
        %v5251 = vmul.f32 %v4641, %v2468
        %v5252 = vmul.f32 %v4648, %v2469
        %v5253 = vmul.f32 %v4655, %v2468
        %v5254 = vmul.f32 %v4662, %v2469
        %v5255 = vmul.f32 %v4669, %v2470
        %v5256 = vmul.f32 %v4676, %v2471
        %v5257 = vmul.f32 %v4683, %v2470
        %v5258 = vmul.f32 %v4690, %v2471
        %v5259 = vmul.f32 %v4697, %v2470
        %v5260 = vmul.f32 %v4704, %v2471
        %v5261 = vmul.f32 %v4711, %v2470
        %v5262 = vmul.f32 %v4718, %v2471
        %v5263 = vmul.f32 %v4725, %v2472
        %v5264 = vmul.f32 %v4732, %v2473
        %v5265 = vmul.f32 %v4739, %v2472
        %v5266 = vmul.f32 %v4746, %v2473
        %v5267 = vmul.f32 %v4753, %v2472
        %v5268 = vmul.f32 %v4760, %v2473
        %v5269 = vmul.f32 %v4767, %v2472
        %v5270 = vmul.f32 %v4774, %v2473
        %v5271 = vmul.f32 %v4781, %v2474
        %v5272 = vmul.f32 %v4788, %v2475
        %v5273 = vmul.f32 %v4795, %v2474
        %v5274 = vmul.f32 %v4802, %v2475
        %v5275 = vmul.f32 %v4809, %v2474
        %v5276 = vmul.f32 %v4816, %v2475
        %v5277 = vmul.f32 %v4823, %v2474
        %v5278 = vmul.f32 %v4830, %v2475
        %v5279 = vmul.f32 %v4837, %v2476
        %v5280 = vmul.f32 %v4844, %v2477
        %v5281 = vmul.f32 %v4851, %v2476
        %v5282 = vmul.f32 %v4858, %v2477
        %v5283 = vmul.f32 %v4865, %v2476
        %v5284 = vmul.f32 %v4872, %v2477
        %v5285 = vmul.f32 %v4879, %v2476
        %v5286 = vmul.f32 %v4886, %v2477
        %v5351 = vrot.slane %v5231, 7
        %v5352 = vsel %vm2183, %v5351, %v5223
        %v5353 = vrot.slane %v5239, 6
        %v5354 = vsel %vm2185, %v5353, %v5352
        %v5355 = vrot.slane %v5247, 5
        %v5356 = vsel %vm2187, %v5355, %v5354
        %v5357 = vrot.slane %v5255, 4
        %v5358 = vsel %vm2189, %v5357, %v5356
        %v5359 = vrot.slane %v5263, 3
        %v5360 = vsel %vm2191, %v5359, %v5358
        %v5361 = vrot.slane %v5271, 2
        %v5362 = vsel %vm2193, %v5361, %v5360
        %v5363 = vrot.slane %v5279, 1
        %v5364 = vsel %vm2195, %v5363, %v5362
        %v5365 = vrot.slane %v5232, 7
        %v5366 = vsel %vm2183, %v5365, %v5224
        %v5367 = vrot.slane %v5240, 6
        %v5368 = vsel %vm2185, %v5367, %v5366
        %v5369 = vrot.slane %v5248, 5
        %v5370 = vsel %vm2187, %v5369, %v5368
        %v5371 = vrot.slane %v5256, 4
        %v5372 = vsel %vm2189, %v5371, %v5370
        %v5373 = vrot.slane %v5264, 3
        %v5374 = vsel %vm2191, %v5373, %v5372
        %v5375 = vrot.slane %v5272, 2
        %v5376 = vsel %vm2193, %v5375, %v5374
        %v5377 = vrot.slane %v5280, 1
        %v5378 = vsel %vm2195, %v5377, %v5376
        %v5379 = vrot.slane %v5233, 7
        %v5380 = vsel %vm2183, %v5379, %v5225
        %v5381 = vrot.slane %v5241, 6
        %v5382 = vsel %vm2185, %v5381, %v5380
        %v5383 = vrot.slane %v5249, 5
        %v5384 = vsel %vm2187, %v5383, %v5382
        %v5385 = vrot.slane %v5257, 4
        %v5386 = vsel %vm2189, %v5385, %v5384
        %v5387 = vrot.slane %v5265, 3
        %v5388 = vsel %vm2191, %v5387, %v5386
        %v5389 = vrot.slane %v5273, 2
        %v5390 = vsel %vm2193, %v5389, %v5388
        %v5391 = vrot.slane %v5281, 1
        %v5392 = vsel %vm2195, %v5391, %v5390
        %v5393 = vrot.slane %v5234, 7
        %v5394 = vsel %vm2183, %v5393, %v5226
        %v5395 = vrot.slane %v5242, 6
        %v5396 = vsel %vm2185, %v5395, %v5394
        %v5397 = vrot.slane %v5250, 5
        %v5398 = vsel %vm2187, %v5397, %v5396
        %v5399 = vrot.slane %v5258, 4
        %v5400 = vsel %vm2189, %v5399, %v5398
        %v5401 = vrot.slane %v5266, 3
        %v5402 = vsel %vm2191, %v5401, %v5400
        %v5403 = vrot.slane %v5274, 2
        %v5404 = vsel %vm2193, %v5403, %v5402
        %v5405 = vrot.slane %v5282, 1
        %v5406 = vsel %vm2195, %v5405, %v5404
        %v5407 = vrot.slane %v5235, 7
        %v5408 = vsel %vm2183, %v5407, %v5227
        %v5409 = vrot.slane %v5243, 6
        %v5410 = vsel %vm2185, %v5409, %v5408
        %v5411 = vrot.slane %v5251, 5
        %v5412 = vsel %vm2187, %v5411, %v5410
        %v5413 = vrot.slane %v5259, 4
        %v5414 = vsel %vm2189, %v5413, %v5412
        %v5415 = vrot.slane %v5267, 3
        %v5416 = vsel %vm2191, %v5415, %v5414
        %v5417 = vrot.slane %v5275, 2
        %v5418 = vsel %vm2193, %v5417, %v5416
        %v5419 = vrot.slane %v5283, 1
        %v5420 = vsel %vm2195, %v5419, %v5418
        %v5421 = vrot.slane %v5236, 7
        %v5422 = vsel %vm2183, %v5421, %v5228
        %v5423 = vrot.slane %v5244, 6
        %v5424 = vsel %vm2185, %v5423, %v5422
        %v5425 = vrot.slane %v5252, 5
        %v5426 = vsel %vm2187, %v5425, %v5424
        %v5427 = vrot.slane %v5260, 4
        %v5428 = vsel %vm2189, %v5427, %v5426
        %v5429 = vrot.slane %v5268, 3
        %v5430 = vsel %vm2191, %v5429, %v5428
        %v5431 = vrot.slane %v5276, 2
        %v5432 = vsel %vm2193, %v5431, %v5430
        %v5433 = vrot.slane %v5284, 1
        %v5434 = vsel %vm2195, %v5433, %v5432
        %v5435 = vrot.slane %v5237, 7
        %v5436 = vsel %vm2183, %v5435, %v5229
        %v5437 = vrot.slane %v5245, 6
        %v5438 = vsel %vm2185, %v5437, %v5436
        %v5439 = vrot.slane %v5253, 5
        %v5440 = vsel %vm2187, %v5439, %v5438
        %v5441 = vrot.slane %v5261, 4
        %v5442 = vsel %vm2189, %v5441, %v5440
        %v5443 = vrot.slane %v5269, 3
        %v5444 = vsel %vm2191, %v5443, %v5442
        %v5445 = vrot.slane %v5277, 2
        %v5446 = vsel %vm2193, %v5445, %v5444
        %v5447 = vrot.slane %v5285, 1
        %v5448 = vsel %vm2195, %v5447, %v5446
        %v5449 = vrot.slane %v5238, 7
        %v5450 = vsel %vm2183, %v5449, %v5230
        %v5451 = vrot.slane %v5246, 6
        %v5452 = vsel %vm2185, %v5451, %v5450
        %v5453 = vrot.slane %v5254, 5
        %v5454 = vsel %vm2187, %v5453, %v5452
        %v5455 = vrot.slane %v5262, 4
        %v5456 = vsel %vm2189, %v5455, %v5454
        %v5457 = vrot.slane %v5270, 3
        %v5458 = vsel %vm2191, %v5457, %v5456
        %v5459 = vrot.slane %v5278, 2
        %v5460 = vsel %vm2193, %v5459, %v5458
        %v5461 = vrot.slane %v5286, 1
        %v5462 = vsel %vm2195, %v5461, %v5460
        %v5471 = vrot.slane %v5364, 4
        %v5472 = vadd.f32 %v5364, %v5471
        %v5473 = vrot.slane %v5472, 2
        %v5474 = vadd.f32 %v5472, %v5473
        %v5475 = vrot.slane %v5474, 1
        %v5476 = vadd.f32 %v5474, %v5475
        %v5477 = vrot.slane %v5378, 4
        %v5478 = vadd.f32 %v5378, %v5477
        %v5479 = vrot.slane %v5478, 2
        %v5480 = vadd.f32 %v5478, %v5479
        %v5481 = vrot.slane %v5480, 1
        %v5482 = vadd.f32 %v5480, %v5481
        %v5483 = vrot.slane %v5392, 4
        %v5484 = vadd.f32 %v5392, %v5483
        %v5485 = vrot.slane %v5484, 2
        %v5486 = vadd.f32 %v5484, %v5485
        %v5487 = vrot.slane %v5486, 1
        %v5488 = vadd.f32 %v5486, %v5487
        %v5489 = vrot.slane %v5406, 4
        %v5490 = vadd.f32 %v5406, %v5489
        %v5491 = vrot.slane %v5490, 2
        %v5492 = vadd.f32 %v5490, %v5491
        %v5493 = vrot.slane %v5492, 1
        %v5494 = vadd.f32 %v5492, %v5493
        %v5495 = vrot.slane %v5420, 4
        %v5496 = vadd.f32 %v5420, %v5495
        %v5497 = vrot.slane %v5496, 2
        %v5498 = vadd.f32 %v5496, %v5497
        %v5499 = vrot.slane %v5498, 1
        %v5500 = vadd.f32 %v5498, %v5499
        %v5501 = vrot.slane %v5434, 4
        %v5502 = vadd.f32 %v5434, %v5501
        %v5503 = vrot.slane %v5502, 2
        %v5504 = vadd.f32 %v5502, %v5503
        %v5505 = vrot.slane %v5504, 1
        %v5506 = vadd.f32 %v5504, %v5505
        %v5507 = vrot.slane %v5448, 4
        %v5508 = vadd.f32 %v5448, %v5507
        %v5509 = vrot.slane %v5508, 2
        %v5510 = vadd.f32 %v5508, %v5509
        %v5511 = vrot.slane %v5510, 1
        %v5512 = vadd.f32 %v5510, %v5511
        %v5513 = vrot.slane %v5462, 4
        %v5514 = vadd.f32 %v5462, %v5513
        %v5515 = vrot.slane %v5514, 2
        %v5516 = vadd.f32 %v5514, %v5515
        %v5517 = vrot.slane %v5516, 1
        %v5518 = vadd.f32 %v5516, %v5517
        %v5519 = vmul.f32 %v5476, 0.25
        %v5520 = vmul.f32 %v5482, 0.25
        %v5521 = vmul.f32 %v5488, 0.25
        %v5522 = vmul.f32 %v5494, 0.25
        %v5523 = vmul.f32 %v5500, 0.25
        %v5524 = vmul.f32 %v5506, 0.25
        %v5525 = vmul.f32 %v5512, 0.25
        %v5526 = vmul.f32 %v5518, 0.25
        %v5529 = vrot.slane %v5521, 7
        %v5530 = vrot.slane %v5522, 7
        %v5535 = vrot.slane %v5523, 6
        %v5536 = vrot.slane %v5524, 6
        %v5541 = vrot.slane %v5525, 5
        %v5542 = vrot.slane %v5526, 5
        %v5545 = vsel %vm2816, %v5519, %v5529
        %v5546 = vsel %vm2816, %v5520, %v5530
        %v5547 = vsel %vm2819, %v5545, %v5535
        %v5548 = vsel %vm2819, %v5546, %v5536
        %v5549 = vsel %vm2822, %v5547, %v5541
        %v5550 = vsel %vm2822, %v5548, %v5542
        %v5551 = vmul.f32 %v5223, %v2828
        %v5552 = vmul.f32 %v5224, %v2828
        %v5553 = vmul.f32 %v5225, %v2828
        %v5554 = vmul.f32 %v5226, %v2828
        %v5555 = vmul.f32 %v5227, %v2828
        %v5556 = vmul.f32 %v5228, %v2828
        %v5557 = vmul.f32 %v5229, %v2828
        %v5558 = vmul.f32 %v5230, %v2828
        %v5559 = vmul.f32 %v5231, %v2829
        %v5560 = vmul.f32 %v5232, %v2829
        %v5561 = vmul.f32 %v5233, %v2829
        %v5562 = vmul.f32 %v5234, %v2829
        %v5563 = vmul.f32 %v5235, %v2829
        %v5564 = vmul.f32 %v5236, %v2829
        %v5565 = vmul.f32 %v5237, %v2829
        %v5566 = vmul.f32 %v5238, %v2829
        %v5567 = vmul.f32 %v5239, %v2830
        %v5568 = vmul.f32 %v5240, %v2830
        %v5569 = vmul.f32 %v5241, %v2830
        %v5570 = vmul.f32 %v5242, %v2830
        %v5571 = vmul.f32 %v5243, %v2830
        %v5572 = vmul.f32 %v5244, %v2830
        %v5573 = vmul.f32 %v5245, %v2830
        %v5574 = vmul.f32 %v5246, %v2830
        %v5575 = vmul.f32 %v5247, %v2831
        %v5576 = vmul.f32 %v5248, %v2831
        %v5577 = vmul.f32 %v5249, %v2831
        %v5578 = vmul.f32 %v5250, %v2831
        %v5579 = vmul.f32 %v5251, %v2831
        %v5580 = vmul.f32 %v5252, %v2831
        %v5581 = vmul.f32 %v5253, %v2831
        %v5582 = vmul.f32 %v5254, %v2831
        %v5583 = vmul.f32 %v5255, %v2832
        %v5584 = vmul.f32 %v5256, %v2832
        %v5585 = vmul.f32 %v5257, %v2832
        %v5586 = vmul.f32 %v5258, %v2832
        %v5587 = vmul.f32 %v5259, %v2832
        %v5588 = vmul.f32 %v5260, %v2832
        %v5589 = vmul.f32 %v5261, %v2832
        %v5590 = vmul.f32 %v5262, %v2832
        %v5591 = vmul.f32 %v5263, %v2833
        %v5592 = vmul.f32 %v5264, %v2833
        %v5593 = vmul.f32 %v5265, %v2833
        %v5594 = vmul.f32 %v5266, %v2833
        %v5595 = vmul.f32 %v5267, %v2833
        %v5596 = vmul.f32 %v5268, %v2833
        %v5597 = vmul.f32 %v5269, %v2833
        %v5598 = vmul.f32 %v5270, %v2833
        %v5599 = vmul.f32 %v5271, %v2834
        %v5600 = vmul.f32 %v5272, %v2834
        %v5601 = vmul.f32 %v5273, %v2834
        %v5602 = vmul.f32 %v5274, %v2834
        %v5603 = vmul.f32 %v5275, %v2834
        %v5604 = vmul.f32 %v5276, %v2834
        %v5605 = vmul.f32 %v5277, %v2834
        %v5606 = vmul.f32 %v5278, %v2834
        %v5607 = vmul.f32 %v5279, %v2835
        %v5608 = vmul.f32 %v5280, %v2835
        %v5609 = vmul.f32 %v5281, %v2835
        %v5610 = vmul.f32 %v5282, %v2835
        %v5611 = vmul.f32 %v5283, %v2835
        %v5612 = vmul.f32 %v5284, %v2835
        %v5613 = vmul.f32 %v5285, %v2835
        %v5614 = vmul.f32 %v5286, %v2835
        %v5679 = vrot.slane %v5559, 7
        %v5680 = vsel %vm2183, %v5679, %v5551
        %v5681 = vrot.slane %v5567, 6
        %v5682 = vsel %vm2185, %v5681, %v5680
        %v5683 = vrot.slane %v5575, 5
        %v5684 = vsel %vm2187, %v5683, %v5682
        %v5685 = vrot.slane %v5583, 4
        %v5686 = vsel %vm2189, %v5685, %v5684
        %v5687 = vrot.slane %v5591, 3
        %v5688 = vsel %vm2191, %v5687, %v5686
        %v5689 = vrot.slane %v5599, 2
        %v5690 = vsel %vm2193, %v5689, %v5688
        %v5691 = vrot.slane %v5607, 1
        %v5692 = vsel %vm2195, %v5691, %v5690
        %v5693 = vrot.slane %v5560, 7
        %v5694 = vsel %vm2183, %v5693, %v5552
        %v5695 = vrot.slane %v5568, 6
        %v5696 = vsel %vm2185, %v5695, %v5694
        %v5697 = vrot.slane %v5576, 5
        %v5698 = vsel %vm2187, %v5697, %v5696
        %v5699 = vrot.slane %v5584, 4
        %v5700 = vsel %vm2189, %v5699, %v5698
        %v5701 = vrot.slane %v5592, 3
        %v5702 = vsel %vm2191, %v5701, %v5700
        %v5703 = vrot.slane %v5600, 2
        %v5704 = vsel %vm2193, %v5703, %v5702
        %v5705 = vrot.slane %v5608, 1
        %v5706 = vsel %vm2195, %v5705, %v5704
        %v5707 = vrot.slane %v5561, 7
        %v5708 = vsel %vm2183, %v5707, %v5553
        %v5709 = vrot.slane %v5569, 6
        %v5710 = vsel %vm2185, %v5709, %v5708
        %v5711 = vrot.slane %v5577, 5
        %v5712 = vsel %vm2187, %v5711, %v5710
        %v5713 = vrot.slane %v5585, 4
        %v5714 = vsel %vm2189, %v5713, %v5712
        %v5715 = vrot.slane %v5593, 3
        %v5716 = vsel %vm2191, %v5715, %v5714
        %v5717 = vrot.slane %v5601, 2
        %v5718 = vsel %vm2193, %v5717, %v5716
        %v5719 = vrot.slane %v5609, 1
        %v5720 = vsel %vm2195, %v5719, %v5718
        %v5721 = vrot.slane %v5562, 7
        %v5722 = vsel %vm2183, %v5721, %v5554
        %v5723 = vrot.slane %v5570, 6
        %v5724 = vsel %vm2185, %v5723, %v5722
        %v5725 = vrot.slane %v5578, 5
        %v5726 = vsel %vm2187, %v5725, %v5724
        %v5727 = vrot.slane %v5586, 4
        %v5728 = vsel %vm2189, %v5727, %v5726
        %v5729 = vrot.slane %v5594, 3
        %v5730 = vsel %vm2191, %v5729, %v5728
        %v5731 = vrot.slane %v5602, 2
        %v5732 = vsel %vm2193, %v5731, %v5730
        %v5733 = vrot.slane %v5610, 1
        %v5734 = vsel %vm2195, %v5733, %v5732
        %v5735 = vrot.slane %v5563, 7
        %v5736 = vsel %vm2183, %v5735, %v5555
        %v5737 = vrot.slane %v5571, 6
        %v5738 = vsel %vm2185, %v5737, %v5736
        %v5739 = vrot.slane %v5579, 5
        %v5740 = vsel %vm2187, %v5739, %v5738
        %v5741 = vrot.slane %v5587, 4
        %v5742 = vsel %vm2189, %v5741, %v5740
        %v5743 = vrot.slane %v5595, 3
        %v5744 = vsel %vm2191, %v5743, %v5742
        %v5745 = vrot.slane %v5603, 2
        %v5746 = vsel %vm2193, %v5745, %v5744
        %v5747 = vrot.slane %v5611, 1
        %v5748 = vsel %vm2195, %v5747, %v5746
        %v5749 = vrot.slane %v5564, 7
        %v5750 = vsel %vm2183, %v5749, %v5556
        %v5751 = vrot.slane %v5572, 6
        %v5752 = vsel %vm2185, %v5751, %v5750
        %v5753 = vrot.slane %v5580, 5
        %v5754 = vsel %vm2187, %v5753, %v5752
        %v5755 = vrot.slane %v5588, 4
        %v5756 = vsel %vm2189, %v5755, %v5754
        %v5757 = vrot.slane %v5596, 3
        %v5758 = vsel %vm2191, %v5757, %v5756
        %v5759 = vrot.slane %v5604, 2
        %v5760 = vsel %vm2193, %v5759, %v5758
        %v5761 = vrot.slane %v5612, 1
        %v5762 = vsel %vm2195, %v5761, %v5760
        %v5763 = vrot.slane %v5565, 7
        %v5764 = vsel %vm2183, %v5763, %v5557
        %v5765 = vrot.slane %v5573, 6
        %v5766 = vsel %vm2185, %v5765, %v5764
        %v5767 = vrot.slane %v5581, 5
        %v5768 = vsel %vm2187, %v5767, %v5766
        %v5769 = vrot.slane %v5589, 4
        %v5770 = vsel %vm2189, %v5769, %v5768
        %v5771 = vrot.slane %v5597, 3
        %v5772 = vsel %vm2191, %v5771, %v5770
        %v5773 = vrot.slane %v5605, 2
        %v5774 = vsel %vm2193, %v5773, %v5772
        %v5775 = vrot.slane %v5613, 1
        %v5776 = vsel %vm2195, %v5775, %v5774
        %v5777 = vrot.slane %v5566, 7
        %v5778 = vsel %vm2183, %v5777, %v5558
        %v5779 = vrot.slane %v5574, 6
        %v5780 = vsel %vm2185, %v5779, %v5778
        %v5781 = vrot.slane %v5582, 5
        %v5782 = vsel %vm2187, %v5781, %v5780
        %v5783 = vrot.slane %v5590, 4
        %v5784 = vsel %vm2189, %v5783, %v5782
        %v5785 = vrot.slane %v5598, 3
        %v5786 = vsel %vm2191, %v5785, %v5784
        %v5787 = vrot.slane %v5606, 2
        %v5788 = vsel %vm2193, %v5787, %v5786
        %v5789 = vrot.slane %v5614, 1
        %v5790 = vsel %vm2195, %v5789, %v5788
        %v5799 = vrot.slane %v5692, 4
        %v5800 = vadd.f32 %v5692, %v5799
        %v5801 = vrot.slane %v5800, 2
        %v5802 = vadd.f32 %v5800, %v5801
        %v5803 = vrot.slane %v5802, 1
        %v5804 = vadd.f32 %v5802, %v5803
        %v5805 = vrot.slane %v5706, 4
        %v5806 = vadd.f32 %v5706, %v5805
        %v5807 = vrot.slane %v5806, 2
        %v5808 = vadd.f32 %v5806, %v5807
        %v5809 = vrot.slane %v5808, 1
        %v5810 = vadd.f32 %v5808, %v5809
        %v5811 = vrot.slane %v5720, 4
        %v5812 = vadd.f32 %v5720, %v5811
        %v5813 = vrot.slane %v5812, 2
        %v5814 = vadd.f32 %v5812, %v5813
        %v5815 = vrot.slane %v5814, 1
        %v5816 = vadd.f32 %v5814, %v5815
        %v5817 = vrot.slane %v5734, 4
        %v5818 = vadd.f32 %v5734, %v5817
        %v5819 = vrot.slane %v5818, 2
        %v5820 = vadd.f32 %v5818, %v5819
        %v5821 = vrot.slane %v5820, 1
        %v5822 = vadd.f32 %v5820, %v5821
        %v5823 = vrot.slane %v5748, 4
        %v5824 = vadd.f32 %v5748, %v5823
        %v5825 = vrot.slane %v5824, 2
        %v5826 = vadd.f32 %v5824, %v5825
        %v5827 = vrot.slane %v5826, 1
        %v5828 = vadd.f32 %v5826, %v5827
        %v5829 = vrot.slane %v5762, 4
        %v5830 = vadd.f32 %v5762, %v5829
        %v5831 = vrot.slane %v5830, 2
        %v5832 = vadd.f32 %v5830, %v5831
        %v5833 = vrot.slane %v5832, 1
        %v5834 = vadd.f32 %v5832, %v5833
        %v5835 = vrot.slane %v5776, 4
        %v5836 = vadd.f32 %v5776, %v5835
        %v5837 = vrot.slane %v5836, 2
        %v5838 = vadd.f32 %v5836, %v5837
        %v5839 = vrot.slane %v5838, 1
        %v5840 = vadd.f32 %v5838, %v5839
        %v5841 = vrot.slane %v5790, 4
        %v5842 = vadd.f32 %v5790, %v5841
        %v5843 = vrot.slane %v5842, 2
        %v5844 = vadd.f32 %v5842, %v5843
        %v5845 = vrot.slane %v5844, 1
        %v5846 = vadd.f32 %v5844, %v5845
        %v5849 = vrot.slane %v5816, 7
        %v5850 = vrot.slane %v5822, 7
        %v5855 = vrot.slane %v5828, 6
        %v5856 = vrot.slane %v5834, 6
        %v5861 = vrot.slane %v5840, 5
        %v5862 = vrot.slane %v5846, 5
        %v5865 = vsel %vm2816, %v5804, %v5849
        %v5866 = vsel %vm2816, %v5810, %v5850
        %v5867 = vsel %vm2819, %v5865, %v5855
        %v5868 = vsel %vm2819, %v5866, %v5856
        %v5869 = vsel %vm2822, %v5867, %v5861
        %v5870 = vsel %vm2822, %v5868, %v5862
        %v5871 = vsel %vm3164, %v5549, -inf
        %v5872 = vrot.slane %v5871, 4
        %v5873 = vmax.f32 %v5871, %v5872
        %v5874 = vrot.slane %v5873, 2
        %v5875 = vmax.f32 %v5873, %v5874
        %v5876 = vrot.slane %v5875, 1
        %v5877 = vmax.f32 %v5875, %v5876
        %v5878 = vsel %vm3164, %v5550, -inf
        %v5879 = vrot.slane %v5878, 4
        %v5880 = vmax.f32 %v5878, %v5879
        %v5881 = vrot.slane %v5880, 2
        %v5882 = vmax.f32 %v5880, %v5881
        %v5883 = vrot.slane %v5882, 1
        %v5884 = vmax.f32 %v5882, %v5883
        %v5885 = vsub.f32 %v5549, %v5877
        %v5886 = vsub.f32 %v5550, %v5884
        %v5887 = vmul.f32 %v5885, 1.442695
        %v5888 = vpow.pop %v5887
        %v5889 = vmul.f32 %v5886, 1.442695
        %v5890 = vpow.pop %v5889
        %v5891 = vsel %vm3164, %v5888, 0.0
        %v5892 = vrot.slane %v5891, 4
        %v5893 = vadd.f32 %v5891, %v5892
        %v5894 = vrot.slane %v5893, 2
        %v5895 = vadd.f32 %v5893, %v5894
        %v5896 = vrot.slane %v5895, 1
        %v5897 = vadd.f32 %v5895, %v5896
        %v5898 = vsel %vm3164, %v5890, 0.0
        %v5899 = vrot.slane %v5898, 4
        %v5900 = vadd.f32 %v5898, %v5899
        %v5901 = vrot.slane %v5900, 2
        %v5902 = vadd.f32 %v5900, %v5901
        %v5903 = vrot.slane %v5902, 1
        %v5904 = vadd.f32 %v5902, %v5903
        %v5905 = vrcp.pop %v5897
        %v5906 = vmul.f32 %v5897, %v5905
        %v5907 = vsub.f32 1.0, %v5906
        %v5908 = vmul.f32 %v5905, %v5907
        %v5909 = vadd.f32 %v5905, %v5908
        %vm5910 = vweird.f32 %v5897
        %vm5911 = vweird.f32 %v5905
        %vm5912 = vmor %vm5910, %vm5911
        %v5913 = vsel %vm5912, %v5905, %v5909
        %v5914 = vand.u32 2147483647, %v5897
        %vm5915 = vcmp.eq.f32.partialorder %v5914, 8.507059e+37
        %v5916 = vand.u32 %v5897, 2147483648
        %v5917 = vor.u32 1.1754944e-38, %v5916
        %v5918 = vsel %vm5915, %v5917, %v5913
        %v5919 = vrcp.pop %v5904
        %v5920 = vmul.f32 %v5904, %v5919
        %v5921 = vsub.f32 1.0, %v5920
        %v5922 = vmul.f32 %v5919, %v5921
        %v5923 = vadd.f32 %v5919, %v5922
        %vm5924 = vweird.f32 %v5904
        %vm5925 = vweird.f32 %v5919
        %vm5926 = vmor %vm5924, %vm5925
        %v5927 = vsel %vm5926, %v5919, %v5923
        %v5928 = vand.u32 2147483647, %v5904
        %vm5929 = vcmp.eq.f32.partialorder %v5928, 8.507059e+37
        %v5930 = vand.u32 %v5904, 2147483648
        %v5931 = vor.u32 1.1754944e-38, %v5930
        %v5932 = vsel %vm5929, %v5931, %v5927
        %v5933 = vmul.f32 %v5888, %v5918
        %v5934 = vmul.f32 %v5890, %v5932
        %v5935 = vmul.f32 %v5933, 0.35355338
        %v5936 = vmul.f32 %v5934, 0.35355338
        %v5937 = vadd.f32 %v3231, %v5935
        %v5938 = vadd.f32 %v3232, %v5936
        %v5939 = vmul.f32 %v5935, %v5869
        %v5940 = vmul.f32 %v5936, %v5870
        %v5941 = vadd.f32 %v3235, %v5939
        %v5942 = vadd.f32 %v3236, %v5940
        %v5943 = vrcp.pop %v5937
        %v5944 = vmul.f32 %v5937, %v5943
        %v5945 = vsub.f32 1.0, %v5944
        %v5946 = vmul.f32 %v5943, %v5945
        %v5947 = vadd.f32 %v5943, %v5946
        %vm5948 = vweird.f32 %v5937
        %vm5949 = vweird.f32 %v5943
        %vm5950 = vmor %vm5948, %vm5949
        %v5951 = vsel %vm5950, %v5943, %v5947
        %v5952 = vand.u32 2147483647, %v5937
        %vm5953 = vcmp.eq.f32.partialorder %v5952, 8.507059e+37
        %v5954 = vand.u32 %v5937, 2147483648
        %v5955 = vor.u32 1.1754944e-38, %v5954
        %v5956 = vsel %vm5953, %v5955, %v5951
        %v5957 = vrcp.pop %v5938
        %v5958 = vmul.f32 %v5938, %v5957
        %v5959 = vsub.f32 1.0, %v5958
        %v5960 = vmul.f32 %v5957, %v5959
        %v5961 = vadd.f32 %v5957, %v5960
        %vm5962 = vweird.f32 %v5938
        %vm5963 = vweird.f32 %v5957
        %vm5964 = vmor %vm5962, %vm5963
        %v5965 = vsel %vm5964, %v5957, %v5961
        %v5966 = vand.u32 2147483647, %v5938
        %vm5967 = vcmp.eq.f32.partialorder %v5966, 8.507059e+37
        %v5968 = vand.u32 %v5938, 2147483648
        %v5969 = vor.u32 1.1754944e-38, %v5968
        %v5970 = vsel %vm5967, %v5969, %v5965
        %v5971 = vmul.f32 %v5941, %v5956
        %v5972 = vmul.f32 %v5942, %v5970
        %s5973 = sld [smem:[#allocation5]]
        %v5974 = vstv %s5973
        %v5975 = vadd.f32 %v5971, %v5974
        %v5976 = vadd.f32 %v5972, %v5974
        %v5977 = vmul.f32 %v5015, 0.33333334
        %v5978 = vmul.f32 %v5016, 0.33333334
        %v5979 = vmul.f32 %v5017, 0.33333334
        %v5980 = vmul.f32 %v5018, 0.33333334
        %v5981 = vmul.f32 %v5019, 0.33333334
        %v5982 = vmul.f32 %v5020, 0.33333334
        %v5983 = vmul.f32 %v5021, 0.33333334
        %v5984 = vmul.f32 %v5022, 0.33333334
        %v5985 = vmul.f32 %v5215, 0.33333334
        %v5986 = vmul.f32 %v5216, 0.33333334
        %v5987 = vmul.f32 %v5217, 0.33333334
        %v5988 = vmul.f32 %v5218, 0.33333334
        %v5989 = vmul.f32 %v5219, 0.33333334
        %v5990 = vmul.f32 %v5220, 0.33333334
        %v5991 = vmul.f32 %v5221, 0.33333334
        %v5992 = vmul.f32 %v5222, 0.33333334
        %v5993 = vmul.f32 %v5977, %v5977
        %v5994 = vmul.f32 %v5978, %v5978
        %v5995 = vmul.f32 %v5979, %v5979
        %v5996 = vmul.f32 %v5980, %v5980
        %v5997 = vmul.f32 %v5981, %v5981
        %v5998 = vmul.f32 %v5982, %v5982
        %v5999 = vmul.f32 %v5983, %v5983
        %v6000 = vmul.f32 %v5984, %v5984
        %v6001 = vsub.f32 %v5985, %v5993
        %v6002 = vsub.f32 %v5986, %v5994
        %v6003 = vsub.f32 %v5987, %v5995
        %v6004 = vsub.f32 %v5988, %v5996
        %v6005 = vsub.f32 %v5989, %v5997
        %v6006 = vsub.f32 %v5990, %v5998
        %v6007 = vsub.f32 %v5991, %v5999
        %v6008 = vsub.f32 %v5992, %v6000
        %6010 = vset.pattern.permute.xlu0 0
        %6011 = vperm.xlu0 %6010, %v461
        %v6012 = vpop.permute.xlu0 %6011
        %v6014 = vmul.f32 %v6001, %v6012
        %v6015 = vmul.f32 %v6002, %v6012
        %v6016 = vmul.f32 %v6003, %v6012
        %v6017 = vmul.f32 %v6004, %v6012
        %v6018 = vmul.f32 %v6005, %v6012
        %v6019 = vmul.f32 %v6006, %v6012
        %v6020 = vmul.f32 %v6007, %v6012
        %v6021 = vmul.f32 %v6008, %v6012
        %v6022 = vrot.slane %v6014, 4
        %v6023 = vadd.f32 %v6014, %v6022
        %v6024 = vrot.slane %v6023, 2
        %v6025 = vadd.f32 %v6023, %v6024
        %v6026 = vrot.slane %v6025, 1
        %v6027 = vadd.f32 %v6025, %v6026
        %v6028 = vrot.slane %v6015, 4
        %v6029 = vadd.f32 %v6015, %v6028
        %v6030 = vrot.slane %v6029, 2
        %v6031 = vadd.f32 %v6029, %v6030
        %v6032 = vrot.slane %v6031, 1
        %v6033 = vadd.f32 %v6031, %v6032
        %v6034 = vrot.slane %v6016, 4
        %v6035 = vadd.f32 %v6016, %v6034
        %v6036 = vrot.slane %v6035, 2
        %v6037 = vadd.f32 %v6035, %v6036
        %v6038 = vrot.slane %v6037, 1
        %v6039 = vadd.f32 %v6037, %v6038
        %v6040 = vrot.slane %v6017, 4
        %v6041 = vadd.f32 %v6017, %v6040
        %v6042 = vrot.slane %v6041, 2
        %v6043 = vadd.f32 %v6041, %v6042
        %v6044 = vrot.slane %v6043, 1
        %v6045 = vadd.f32 %v6043, %v6044
        %v6046 = vrot.slane %v6018, 4
        %v6047 = vadd.f32 %v6018, %v6046
        %v6048 = vrot.slane %v6047, 2
        %v6049 = vadd.f32 %v6047, %v6048
        %v6050 = vrot.slane %v6049, 1
        %v6051 = vadd.f32 %v6049, %v6050
        %v6052 = vrot.slane %v6019, 4
        %v6053 = vadd.f32 %v6019, %v6052
        %v6054 = vrot.slane %v6053, 2
        %v6055 = vadd.f32 %v6053, %v6054
        %v6056 = vrot.slane %v6055, 1
        %v6057 = vadd.f32 %v6055, %v6056
        %v6058 = vrot.slane %v6020, 4
        %v6059 = vadd.f32 %v6020, %v6058
        %v6060 = vrot.slane %v6059, 2
        %v6061 = vadd.f32 %v6059, %v6060
        %v6062 = vrot.slane %v6061, 1
        %v6063 = vadd.f32 %v6061, %v6062
        %v6064 = vrot.slane %v6021, 4
        %v6065 = vadd.f32 %v6021, %v6064
        %v6066 = vrot.slane %v6065, 2
        %v6067 = vadd.f32 %v6065, %v6066
        %v6068 = vrot.slane %v6067, 1
        %v6069 = vadd.f32 %v6067, %v6068
        %v6070 = vsel %vm2816, %v6027, %v6039
        %v6071 = vsel %vm2816, %v6033, %v6045
        %v6072 = vsel %vm2819, %v6070, %v6051
        %v6073 = vsel %vm2819, %v6071, %v6057
        %v6074 = vsel %vm2822, %v6072, %v6063
        %v6075 = vsel %vm2822, %v6073, %v6069
        %s6076 = sld [smem:[#allocation5 + $0x1]]
        %v6077 = vstv %s6076
        %v6078 = vadd.f32 %v6074, %v6077
        %v6079 = vadd.f32 %v6075, %v6077
        %v6080 = vsel %vm3164, %v5975, -inf
        %v6081 = vrot.slane %v6080, 4
        %v6082 = vmax.f32 %v6080, %v6081
        %v6083 = vrot.slane %v6082, 2
        %v6084 = vmax.f32 %v6082, %v6083
        %v6085 = vrot.slane %v6084, 1
        %v6086 = vmax.f32 %v6084, %v6085
        %v6087 = vsel %vm3164, %v5976, -inf
        %v6088 = vrot.slane %v6087, 4
        %v6089 = vmax.f32 %v6087, %v6088
        %v6090 = vrot.slane %v6089, 2
        %v6091 = vmax.f32 %v6089, %v6090
        %v6092 = vrot.slane %v6091, 1
        %v6093 = vmax.f32 %v6091, %v6092
        %v6094 = vsub.f32 %v5975, %v6086
        %v6095 = vsub.f32 %v5976, %v6093
        %v6096 = vmul.f32 %v6094, 1.442695
        %v6097 = vpow.pop %v6096
        %v6098 = vmul.f32 %v6095, 1.442695
        %v6099 = vpow.pop %v6098
        %v6100 = vsel %vm3164, %v6097, 0.0
        %v6101 = vrot.slane %v6100, 4
        %v6102 = vadd.f32 %v6100, %v6101
        %v6103 = vrot.slane %v6102, 2
        %v6104 = vadd.f32 %v6102, %v6103
        %v6105 = vrot.slane %v6104, 1
        %v6106 = vadd.f32 %v6104, %v6105
        %v6107 = vsel %vm3164, %v6099, 0.0
        %v6108 = vrot.slane %v6107, 4
        %v6109 = vadd.f32 %v6107, %v6108
        %v6110 = vrot.slane %v6109, 2
        %v6111 = vadd.f32 %v6109, %v6110
        %v6112 = vrot.slane %v6111, 1
        %v6113 = vadd.f32 %v6111, %v6112
        %v6114 = vrcp.pop %v6106
        %v6115 = vmul.f32 %v6106, %v6114
        %v6116 = vsub.f32 1.0, %v6115
        %v6117 = vmul.f32 %v6114, %v6116
        %v6118 = vadd.f32 %v6114, %v6117
        %vm6119 = vweird.f32 %v6106
        %vm6120 = vweird.f32 %v6114
        %vm6121 = vmor %vm6119, %vm6120
        %v6122 = vsel %vm6121, %v6114, %v6118
        %v6123 = vand.u32 2147483647, %v6106
        %vm6124 = vcmp.eq.f32.partialorder %v6123, 8.507059e+37
        %v6125 = vand.u32 %v6106, 2147483648
        %v6126 = vor.u32 1.1754944e-38, %v6125
        %v6127 = vsel %vm6124, %v6126, %v6122
        %v6128 = vrcp.pop %v6113
        %v6129 = vmul.f32 %v6113, %v6128
        %v6130 = vsub.f32 1.0, %v6129
        %v6131 = vmul.f32 %v6128, %v6130
        %v6132 = vadd.f32 %v6128, %v6131
        %vm6133 = vweird.f32 %v6113
        %vm6134 = vweird.f32 %v6128
        %vm6135 = vmor %vm6133, %vm6134
        %v6136 = vsel %vm6135, %v6128, %v6132
        %v6137 = vand.u32 2147483647, %v6113
        %vm6138 = vcmp.eq.f32.partialorder %v6137, 8.507059e+37
        %v6139 = vand.u32 %v6113, 2147483648
        %v6140 = vor.u32 1.1754944e-38, %v6139
        %v6141 = vsel %vm6138, %v6140, %v6136
        %v6142 = vmul.f32 %v6097, %v6127
        %v6143 = vmul.f32 %v6099, %v6141
        %v6144 = vsel %vm3164, %v6078, -inf
        %v6145 = vrot.slane %v6144, 4
        %v6146 = vmax.f32 %v6144, %v6145
        %v6147 = vrot.slane %v6146, 2
        %v6148 = vmax.f32 %v6146, %v6147
        %v6149 = vrot.slane %v6148, 1
        %v6150 = vmax.f32 %v6148, %v6149
        %v6151 = vsel %vm3164, %v6079, -inf
        %v6152 = vrot.slane %v6151, 4
        %v6153 = vmax.f32 %v6151, %v6152
        %v6154 = vrot.slane %v6153, 2
        %v6155 = vmax.f32 %v6153, %v6154
        %v6156 = vrot.slane %v6155, 1
        %v6157 = vmax.f32 %v6155, %v6156
        %v6158 = vsub.f32 %v6078, %v6150
        %v6159 = vsub.f32 %v6079, %v6157
        %v6160 = vmul.f32 %v6158, 1.442695
        %v6161 = vpow.pop %v6160
        %v6162 = vmul.f32 %v6159, 1.442695
        %v6163 = vpow.pop %v6162
        %v6164 = vsel %vm3164, %v6161, 0.0
        %v6165 = vrot.slane %v6164, 4
        %v6166 = vadd.f32 %v6164, %v6165
        %v6167 = vrot.slane %v6166, 2
        %v6168 = vadd.f32 %v6166, %v6167
        %v6169 = vrot.slane %v6168, 1
        %v6170 = vadd.f32 %v6168, %v6169
        %v6171 = vsel %vm3164, %v6163, 0.0
        %v6172 = vrot.slane %v6171, 4
        %v6173 = vadd.f32 %v6171, %v6172
        %v6174 = vrot.slane %v6173, 2
        %v6175 = vadd.f32 %v6173, %v6174
        %v6176 = vrot.slane %v6175, 1
        %v6177 = vadd.f32 %v6175, %v6176
        %v6178 = vrcp.pop %v6170
        %v6179 = vmul.f32 %v6170, %v6178
        %v6180 = vsub.f32 1.0, %v6179
        %v6181 = vmul.f32 %v6178, %v6180
        %v6182 = vadd.f32 %v6178, %v6181
        %vm6183 = vweird.f32 %v6170
        %vm6184 = vweird.f32 %v6178
        %vm6185 = vmor %vm6183, %vm6184
        %v6186 = vsel %vm6185, %v6178, %v6182
        %v6187 = vand.u32 2147483647, %v6170
        %vm6188 = vcmp.eq.f32.partialorder %v6187, 8.507059e+37
        %v6189 = vand.u32 %v6170, 2147483648
        %v6190 = vor.u32 1.1754944e-38, %v6189
        %v6191 = vsel %vm6188, %v6190, %v6186
        %v6192 = vrcp.pop %v6177
        %v6193 = vmul.f32 %v6177, %v6192
        %v6194 = vsub.f32 1.0, %v6193
        %v6195 = vmul.f32 %v6192, %v6194
        %v6196 = vadd.f32 %v6192, %v6195
        %vm6197 = vweird.f32 %v6177
        %vm6198 = vweird.f32 %v6192
        %vm6199 = vmor %vm6197, %vm6198
        %v6200 = vsel %vm6199, %v6192, %v6196
        %v6201 = vand.u32 2147483647, %v6177
        %vm6202 = vcmp.eq.f32.partialorder %v6201, 8.507059e+37
        %v6203 = vand.u32 %v6177, 2147483648
        %v6204 = vor.u32 1.1754944e-38, %v6203
        %v6205 = vsel %vm6202, %v6204, %v6200
        %v6206 = vmul.f32 %v6161, %v6191
        %v6207 = vmul.f32 %v6163, %v6205
        %v6208 = vsub.f32 1.0, %v456
        %v6210 = vperm.slane %v6208, 0
        %v6211 = vperm.slane %v6208, 1
        %v6214 = vmul.f32 %v6210, %v6142
        %v6215 = vmul.f32 %v6211, %v6143
        %v6217 = vperm.slane %v456, 0
        %v6218 = vperm.slane %v456, 1
        %v6221 = vmul.f32 %v6217, %v6206
        %v6222 = vmul.f32 %v6218, %v6207
        %v6223 = vadd.f32 %v6214, %v6221
        %v6224 = vadd.f32 %v6215, %v6222
        %v6225 = vsel %vm3164, %v6223, -inf
        %v6226 = vrot.slane %v6225, 4
        %v6227 = vmax.f32 %v6225, %v6226
        %v6228 = vrot.slane %v6227, 2
        %v6229 = vmax.f32 %v6227, %v6228
        %v6230 = vrot.slane %v6229, 1
        %v6231 = vmax.f32 %v6229, %v6230
        %v6232 = vsel %vm3164, %v6224, -inf
        %v6233 = vrot.slane %v6232, 4
        %v6234 = vmax.f32 %v6232, %v6233
        %v6235 = vrot.slane %v6234, 2
        %v6236 = vmax.f32 %v6234, %v6235
        %v6237 = vrot.slane %v6236, 1
        %v6238 = vmax.f32 %v6236, %v6237
        %v6239 = vsel %vm3164, %v6206, -inf
        %v6240 = vrot.slane %v6239, 4
        %v6241 = vmax.f32 %v6239, %v6240
        %v6242 = vrot.slane %v6241, 2
        %v6243 = vmax.f32 %v6241, %v6242
        %v6244 = vrot.slane %v6243, 1
        %v6245 = vmax.f32 %v6243, %v6244
        %v6246 = vsel %vm3164, %v6207, -inf
        %v6247 = vrot.slane %v6246, 4
        %v6248 = vmax.f32 %v6246, %v6247
        %v6249 = vrot.slane %v6248, 2
        %v6250 = vmax.f32 %v6248, %v6249
        %v6251 = vrot.slane %v6250, 1
        %v6252 = vmax.f32 %v6250, %v6251
        %v6253 = vsel %vm3164, %v6142, -inf
        %v6254 = vrot.slane %v6253, 4
        %v6255 = vmax.f32 %v6253, %v6254
        %v6256 = vrot.slane %v6255, 2
        %v6257 = vmax.f32 %v6255, %v6256
        %v6258 = vrot.slane %v6257, 1
        %v6259 = vmax.f32 %v6257, %v6258
        %v6260 = vsel %vm3164, %v6143, -inf
        %v6261 = vrot.slane %v6260, 4
        %v6262 = vmax.f32 %v6260, %v6261
        %v6263 = vrot.slane %v6262, 2
        %v6264 = vmax.f32 %v6262, %v6263
        %v6265 = vrot.slane %v6264, 1
        %v6266 = vmax.f32 %v6264, %v6265
        %vm6267 = vcmp.ge.f32.partialorder %v6223, %v6231
        %vm6268 = vcmp.ge.f32.partialorder %v6224, %v6238
        %v6269 = vsel %vm6267, %v463, 4
        %v6270 = vsel %vm6268, %v463, 4
        %v6271 = vsel %vm3164, %v6269, 2147483647
        %v6272 = vrot.slane %v6271, 4
        %vm6273 = vcmp.lt.s32.totalorder %v6271, %v6272
        %v6274 = vsel %vm6273, %v6271, %v6272
        %v6275 = vrot.slane %v6274, 2
        %vm6276 = vcmp.lt.s32.totalorder %v6274, %v6275
        %v6277 = vsel %vm6276, %v6274, %v6275
        %v6278 = vrot.slane %v6277, 1
        %vm6279 = vcmp.lt.s32.totalorder %v6277, %v6278
        %v6280 = vsel %vm6279, %v6277, %v6278
        %v6281 = vsel %vm3164, %v6270, 2147483647
        %v6282 = vrot.slane %v6281, 4
        %vm6283 = vcmp.lt.s32.totalorder %v6281, %v6282
        %v6284 = vsel %vm6283, %v6281, %v6282
        %v6285 = vrot.slane %v6284, 2
        %vm6286 = vcmp.lt.s32.totalorder %v6284, %v6285
        %v6287 = vsel %vm6286, %v6284, %v6285
        %v6288 = vrot.slane %v6287, 1
        %vm6289 = vcmp.lt.s32.totalorder %v6287, %v6288
        %v6290 = vsel %vm6289, %v6287, %v6288
        %vm6291 = vcmp.eq.s32.totalorder %v463, %v6280
        %vm6292 = vcmp.eq.s32.totalorder %v463, %v6290
        %v6293 = vsel %vm6291, 1, 0
        %v6294 = vsel %vm6292, 1, 0
        %v6295 = vcvt.s32.f32 %v6293
        %v6296 = vcvt.s32.f32 %v6294
        %v6299 = vrot.slane %v6296, 4
        %v6300 = vsel %vm3164, %v6295, %v6299
        %v6302 = vmul.f32 %v455, %v6300
        %6304 = vst [vmem:[#allocation1] ss:$2 sm:$0xff] %v6302
        %v6305 = vld.sshfl [vmem:[#allocation1] sm:$0xff pattern:$0x75316420]
        %v6306 = vld.sshfl [vmem:[#allocation1 + $0x8] sm:$0xff pattern:$0x75316420]
        %v6309 = vsel %vm3164, %v6305, 0.0
        %v6310 = vrot.slane %v6309, 4
        %v6311 = vadd.f32 %v6309, %v6310
        %v6312 = vrot.slane %v6311, 2
        %v6313 = vadd.f32 %v6311, %v6312
        %v6314 = vrot.slane %v6313, 1
        %v6315 = vadd.f32 %v6313, %v6314
        %v6316 = vsel %vm3164, %v6306, 0.0
        %v6317 = vrot.slane %v6316, 4
        %v6318 = vadd.f32 %v6316, %v6317
        %v6319 = vrot.slane %v6318, 2
        %v6320 = vadd.f32 %v6318, %v6319
        %v6321 = vrot.slane %v6320, 1
        %v6322 = vadd.f32 %v6320, %v6321
        %v6323 = vrcp.pop %v455
        %v6324 = vmul.f32 %v455, %v6323
        %v6325 = vsub.f32 1.0, %v6324
        %v6326 = vmul.f32 %v6323, %v6325
        %v6327 = vadd.f32 %v6323, %v6326
        %vm6328 = vweird.f32 %v455
        %vm6329 = vweird.f32 %v6323
        %vm6330 = vmor %vm6328, %vm6329
        %v6331 = vsel %vm6330, %v6323, %v6327
        %v6332 = vand.u32 2147483647, %v455
        %vm6333 = vcmp.eq.f32.partialorder %v6332, 8.507059e+37
        %v6334 = vand.u32 %v455, 2147483648
        %v6335 = vor.u32 1.1754944e-38, %v6334
        %v6336 = vsel %vm6333, %v6335, %v6331
        %v6338 = vrot.slane %v6336, 7
        %v6340 = vsub.f32 %v6336, %v6338
        %v6341 = vrcp.pop %v6315
        %v6342 = vmul.f32 %v6315, %v6341
        %v6343 = vsub.f32 1.0, %v6342
        %v6344 = vmul.f32 %v6341, %v6343
        %v6345 = vadd.f32 %v6341, %v6344
        %vm6346 = vweird.f32 %v6315
        %vm6347 = vweird.f32 %v6341
        %vm6348 = vmor %vm6346, %vm6347
        %v6349 = vsel %vm6348, %v6341, %v6345
        %v6350 = vand.u32 2147483647, %v6315
        %vm6351 = vcmp.eq.f32.partialorder %v6350, 8.507059e+37
        %v6352 = vand.u32 %v6315, 2147483648
        %v6353 = vor.u32 1.1754944e-38, %v6352
        %v6354 = vsel %vm6351, %v6353, %v6349
        %v6355 = vrcp.pop %v6322
        %v6356 = vmul.f32 %v6322, %v6355
        %v6357 = vsub.f32 1.0, %v6356
        %v6358 = vmul.f32 %v6355, %v6357
        %v6359 = vadd.f32 %v6355, %v6358
        %vm6360 = vweird.f32 %v6322
        %vm6361 = vweird.f32 %v6355
        %vm6362 = vmor %vm6360, %vm6361
        %v6363 = vsel %vm6362, %v6355, %v6359
        %v6364 = vand.u32 2147483647, %v6322
        %vm6365 = vcmp.eq.f32.partialorder %v6364, 8.507059e+37
        %v6366 = vand.u32 %v6322, 2147483648
        %v6367 = vor.u32 1.1754944e-38, %v6366
        %v6368 = vsel %vm6365, %v6367, %v6363
        %v6369 = vmul.f32 %v6340, 0.5
        %v6371 = vperm.slane %v6369, 2
        %v6372 = vperm.slane %v6369, 6
        %v6375 = vadd.f32 %v6354, %v6371
        %v6376 = vadd.f32 %v6368, %v6372
        %v6377 = vsub.f32 %v6354, %v6371
        %v6378 = vsub.f32 %v6368, %v6372
        %v6380 = vperm.slane %v6340, 2
        %v6381 = vperm.slane %v6340, 6
        %v6386 = vrot.slane %v6375, 3
        %v6387 = vrot.slane %v6376, 3
        %v6392 = vrot.slane %v6377, 2
        %v6393 = vrot.slane %v6378, 2
        %v6396 = vsel %vm2816, %v6315, %v6231
        %v6397 = vsel %vm2816, %v6322, %v6238
        %v6398 = vsel %vm2819, %v6396, %v6245
        %v6399 = vsel %vm2819, %v6397, %v6252
        %v6400 = vsel %vm2822, %v6398, %v6259
        %v6401 = vsel %vm2822, %v6399, %v6266
        %v6402 = vsel %vm3164, %v6400, %v6380
        %v6403 = vsel %vm3164, %v6401, %v6381
        %vm6404 = vcmask 1044480
        %v6405 = vsel %vm6404, %v6402, %v6386
        %v6406 = vsel %vm6404, %v6403, %v6387
        %vm6407 = vcmask 1045504
        %v6408 = vsel %vm6407, %v6405, %v6392
        %v6409 = vsel %vm6407, %v6406, %v6393
        %vm6410 = vcmask 1046528
        %v6411 = vsel %vm6410, %v6408, 0.0
        %v6412 = vsel %vm6410, %v6409, 0.0
        %6413 = vst [vmem:[%s426] sm:$0xff] %v6411
        %6414 = vst [vmem:[%s426 + $0x8] sm:$0xff] %v6412
        %v6417 = vrot.slane %v6224, 4
        %v6418 = vsel %vm3164, %v6223, %v6417
        %6420 = vst [vmem:[%s433] sm:$0xff] %v6418
        %s6421 = sand.u32 %s247, 1
        %s6422 = scalar_lea.sflag [#allocation3], %s6421
        %s6423 = sand.u32 %s247, 1
        %s6424 = smul.addr %s6423, 16
        %s6425 = scalar_lea.vmem [#allocation7], %s6424
        %s6426 = sand.u32 %s273, 1
        %s6427 = scalar_lea.sflag [#allocation9], %s6426
        %s6428 = sand.u32 %s273, 1
        %s6429 = smul.addr %s6428, 8
        %s6430 = scalar_lea.vmem [#allocation8], %s6429
        // Predicated region
        $region65: #{tpu_custom_call.1} parent=55 // pred_check
          %p6431 = pneg %p257
        $region66: #{tpu_custom_call.1} parent=55 // pred_check_branch
          %6433 = sbr.rel (%p6431) target = $region68
        $region67: #{tpu_custom_call.1} parent=55 // pred_region
          %6435 = vsyncadd %s6422, 0
          %s6436 = smul.addr %s30, 2
          %s6437 = smul.addr %s6436, 8
          %s6438 = scalar_lea.hbm %s9, %s6437
          %s6440 = sshll.u32 %s6425, 4
          %s6441 = int_to_ptr.vmem [resolvable:$true] %s6440
          %s6442 = sshll.u32 %s6438, 4
          %s6443 = int_to_ptr.hbm [resolvable:$true] %s6442
          %6445 = dma.vmem_to_hbm [thread:$0]  %s6441, 256, %s6443, %s6422
        $region68: #{tpu_custom_call.1} parent=55 // pred_fallthru
          _
        // Predicated region
        $region69: #{tpu_custom_call.1} parent=55 // pred_check
          %p6446 = pneg %p283
        $region70: #{tpu_custom_call.1} parent=55 // pred_check_branch
          %6448 = sbr.rel (%p6446) target = $region72
        $region71: #{tpu_custom_call.1} parent=55 // pred_region
          %6450 = vsyncadd %s6427, 0
          %s6451 = smul.addr %s30, 2
          %s6452 = smul.addr %s6451, 4
          %s6453 = scalar_lea.hbm %s10, %s6452
          %s6455 = sshll.u32 %s6430, 4
          %s6456 = int_to_ptr.vmem [resolvable:$true] %s6455
          %s6457 = sshll.u32 %s6453, 4
          %s6458 = int_to_ptr.hbm [resolvable:$true] %s6457
          %6460 = dma.vmem_to_hbm [thread:$0]  %s6456, 128, %s6458, %s6427
        $region72: #{tpu_custom_call.1} parent=55 // pred_fallthru
          _
      $region56: #{tpu_custom_call.1} parent=5 // pred_fallthru
        _
      %p6461 = scmp.le.s32.totalorder 2, %s25
      // Predicated region
      $region73: #{tpu_custom_call.1} parent=5 // pred_check
        %p6462 = pneg %p6461
      $region74: #{tpu_custom_call.1} parent=5 // pred_check_branch
        %6464 = sbr.rel (%p6462) target = $region76
      $region75: #{tpu_custom_call.1} parent=5 // pred_region
        %s6465 = ssub.s32 %s25, 2
        // Predicated region
        $region77: #{tpu_custom_call.1} parent=75 // pred_check
          %p6466 = pneg %p263
        $region78: #{tpu_custom_call.1} parent=75 // pred_check_branch
          %6468 = sbr.rel (%p6466) target = $region80
        $region79: #{tpu_custom_call.1} parent=75 // pred_region
          %s6469 = sand.u32 %s248, 1
          %s6470 = scalar_lea.sflag [#allocation3], %s6469
          %s6471 = sand.u32 %s248, 1
          %s6472 = smul.addr %s6471, 16
          %s6473 = scalar_lea.vmem [#allocation7], %s6472
          %6475 = dma.done %s6470, 256
        $region80: #{tpu_custom_call.1} parent=75 // pred_fallthru
          _
        // Predicated region
        $region81: #{tpu_custom_call.1} parent=75 // pred_check
          %p6476 = pneg %p289
        $region82: #{tpu_custom_call.1} parent=75 // pred_check_branch
          %6478 = sbr.rel (%p6476) target = $region84
        $region83: #{tpu_custom_call.1} parent=75 // pred_region
          %s6479 = sand.u32 %s274, 1
          %s6480 = scalar_lea.sflag [#allocation9], %s6479
          %s6481 = sand.u32 %s274, 1
          %s6482 = smul.addr %s6481, 8
          %s6483 = scalar_lea.vmem [#allocation8], %s6482
          %6485 = dma.done %s6480, 128
        $region84: #{tpu_custom_call.1} parent=75 // pred_fallthru
          _
      $region76: #{tpu_custom_call.1} parent=5 // pred_fallthru
        _
    $region6: #{tpu_custom_call.1} parent=1 // loop_footer
      %s29 = sadd.s32 1, %s25
    $region7: #{tpu_custom_call.1} parent=1 // loop_footer_branch
      %24 = sbr.rel target = $region3
    $region8: #{tpu_custom_call.1} parent=1 // loop_exit
      _
    %6486 = vsyncpa [#allocation3], 1
    %s6487 = scalar_lea.sflag [#allocation3], 1
    %6488 = vsyncpa %s6487, 1
    %6489 = vsyncpa [#allocation9], 1
    %s6490 = scalar_lea.sflag [#allocation9], 1
    %6491 = vsyncpa %s6490, 1
    %6492 = vsyncpa [#allocation4], 1
    %s6493 = scalar_lea.sflag [#allocation4], 1
    %6494 = vsyncpa %s6493, 1
    %6495 = vsyncpa [#allocation6], 1

</llo_original>
